<compile_context>
chip_gen: v7x
topology: tpu7x:2x2x1
jax: 0.10.0
libtpu: 0.0.40
codegen_flags: <defaults>
</compile_context>

<pallas_src>
import jax
import jax.numpy as jnp
from jax.experimental import pallas as pl
from jax.experimental.pallas import tpu as pltpu

# ---------------- problem sizes (small, consistent with the module) ----------------
B = 2            # batch
S = 8            # encoder sequence length
H = 32           # hidden_size
E = 16           # embedding_size
V = 32           # vocab size
MAX_LEN = 6      # max_length (number of decode steps incl. SOS)
VS = V + S       # extended vocab (generate + copy positions)
NEG = -1000000.0


# ---------------- batched MXU contraction helpers (flash-attention style einsums) ----------------
def _bmv(vec2, mat3, precision=None):
    """(B, D), (B, S, D) -> (B, S): contract the trailing dim on the MXU."""
    return jnp.einsum('bqd,bkd->bqk', vec2[:, None, :], mat3,
                      preferred_element_type=jnp.float32, precision=precision)[:, 0]


def _bvm(vec2, mat3, precision=None):
    """(B, S), (B, S, D) -> (B, D): contract the S dim on the MXU."""
    return jnp.einsum('bqk,bkd->bqd', vec2[:, None, :], mat3,
                      preferred_element_type=jnp.float32, precision=precision)[:, 0]


# ----------------------------- Pallas kernel (whole decode) -----------------------------
def _copynet_kernel(enc_ref, tok_ref,
                    w_hid_ref, b_hid_ref,      # fused [attn_W.T | W_hh.T] : (H, 4H), (1, 4H)
                    w_ic_ref, w_is_ref,        # GRU input weight blocks   : (H, 3H), (H, 3H)
                    emb_ih_ref, b_ih_ref,      # emb @ W_ie : (V, 3H), GRU input bias (1, 3H)
                    w_out_ref, b_out_ref,      # fused [copy_W.T | out.T | 0] : (H, H+VS), (1, H+VS)
                    logp_out_ref, idx_out_ref):
    enc = enc_ref[...]            # (B, S, H)
    tok = tok_ref[...]            # (B, S, 1) int32 token ids
    w_hid = w_hid_ref[...]
    b_hid = b_hid_ref[...]
    w_ic = w_ic_ref[...]
    w_is = w_is_ref[...]
    emb_ih = emb_ih_ref[...]
    b_ih = b_ih_ref[...]
    w_out = w_out_ref[...]
    b_out = b_out_ref[...]

    vs_iota = jax.lax.broadcasted_iota(jnp.int32, (B, VS), 1)
    v_iota = jax.lax.broadcasted_iota(jnp.int32, (B, V), 1)
    vs_iota3 = jax.lax.broadcasted_iota(jnp.int32, (B, S, VS), 2)

    # one-hot input sequence built once inside the kernel (only int32 ids cross HBM)
    oh = (jnp.broadcast_to(tok, (B, S, VS)) == vs_iota3).astype(jnp.float32)   # (B, S, VS)

    # step-invariant masks — hoisted out of the decode loop (oh never changes)
    missing = jnp.logical_or(jnp.sum(oh, axis=1) == 0.0, vs_iota == 0)    # (B, VS)
    gen_mask = jnp.logical_or(vs_iota == 0, vs_iota >= V)                 # (B, VS)

    # ---- SOS step (row 0 of both outputs), written directly by the kernel ----
    sos = jnp.where(vs_iota == 1, 1.0, 0.0)
    logp_out_ref[:, 0:1, :] = sos[:, None, :]
    idx_out_ref[:, 0:1, :] = jnp.ones((B, 1, 1), jnp.int32)

    # ---- recurrent state carried in vregs across the unrolled loop ----
    hidden = jnp.zeros((B, H), jnp.float32)
    sel = jnp.zeros((B, H), jnp.float32)
    idx = jnp.ones((B, 1), jnp.int32)                                      # SOS == 1

    # fully unrolled decode loop (MAX_LEN - 1 = 5 steps); all store indices static
    for t in range(1, MAX_LEN):
        # ---- fused [attn_W | W_hh] matmul on prev hidden ----
        hg = jnp.dot(hidden, w_hid, preferred_element_type=jnp.float32) + b_hid   # (B, 4H)
        th = hg[:, :H]
        gh = hg[:, H:]

        # ---- attention: scores, softmax over S, context (MXU contractions) ----
        attn_scores = _bmv(th, enc)                                        # (B, S)
        attn_scores = attn_scores - jnp.max(attn_scores, axis=1, keepdims=True)
        ew = jnp.exp(attn_scores)
        attn_w = ew / jnp.sum(ew, axis=1, keepdims=True)
        context = _bvm(attn_w, enc)                                        # (B, H)

        # ---- previous sampled index -> one-hot (embedding folded into emb_ih) ----
        # TODO(synk): torch reference indexes the embedding OOB for idx == V (would
        # raise); here idx > V -> UNK(3) and idx == V silently yields a zero embedding.
        pidx = jnp.where(idx > V, 3, idx)                                  # (B, 1)
        onehot_prev = (v_iota == pidx).astype(jnp.float32)                 # (B, V)

        # ---- GRU cell: three small MXU matmuls (no VMEM staging buffer) ----
        gi = (jnp.dot(context, w_ic, preferred_element_type=jnp.float32)
              + jnp.dot(sel, w_is, preferred_element_type=jnp.float32)
              + jnp.dot(onehot_prev, emb_ih, preferred_element_type=jnp.float32)
              + b_ih)                                                      # (B, 3H)
        r = jax.nn.sigmoid(gi[:, :H] + gh[:, :H])
        z = jax.nn.sigmoid(gi[:, H:2 * H] + gh[:, H:2 * H])
        n = jnp.tanh(gi[:, 2 * H:] + r * gh[:, 2 * H:])
        hidden = (1.0 - z) * n + z * hidden                                # (B, H)

        # ---- fused [copy_W | out(+pad)] matmul on new hidden ----
        cg = jnp.dot(hidden, w_out, preferred_element_type=jnp.float32) + b_out    # (B, H+VS)
        ch = cg[:, :H]
        gen_scores = jnp.where(gen_mask, NEG, cg[:, H:])                   # (B, VS)

        copy_score_seq = _bmv(ch, enc)                                     # (B, S)
        copy_scores = jnp.where(missing, NEG, _bvm(copy_score_seq, oh))    # (B, VS)

        # ---- joint softmax over cat([gen_scores, copy_scores]) without concatenation ----
        m = jnp.maximum(jnp.max(gen_scores, axis=1, keepdims=True),
                        jnp.max(copy_scores, axis=1, keepdims=True))
        eg = jnp.exp(gen_scores - m)                                       # masked cols -> 0
        ec = jnp.exp(copy_scores - m)
        denom = jnp.sum(eg, axis=1, keepdims=True) + jnp.sum(ec, axis=1, keepdims=True)
        log_probs = jnp.log((eg + ec) / denom + 1e-10)                     # (B, VS)

        # ---- greedy sample: topk(1) == argmax (first index on ties) ----
        maxval = jnp.max(log_probs, axis=1, keepdims=True)
        idx = jnp.min(jnp.where(log_probs == maxval, vs_iota, VS),
                      axis=1, keepdims=True)                               # (B, 1) int32

        # ---- selective read for the next step (2-D one-hot gather on the MXU) ----
        onehot_new = (vs_iota == idx).astype(jnp.float32)                  # (B, VS)
        pos = _bmv(onehot_new, oh)                                         # (B, S)
        selected = pos * copy_score_seq
        norm = jnp.maximum(jnp.sum(jnp.abs(selected), axis=1, keepdims=True), 1e-12)
        sel = _bvm(selected / norm, enc)                                   # (B, H)

        # ---- write this step's outputs (static indices; writeback DMA happens once) ----
        logp_out_ref[:, t:t + 1, :] = log_probs[:, None, :]
        idx_out_ref[:, t:t + 1, :] = idx[:, None, :]


# ----------------------------- wrapper -----------------------------
def _full_spec(shape):
    nd = len(shape)
    return pl.BlockSpec(shape, lambda i, _nd=nd: (0,) * _nd)


@jax.jit
def copynet_decode(kernel_args, encoder_outputs, inputs, final_encoder_hidden=None):
    del final_encoder_hidden  # unused in the reference forward (hidden re-initialized to zeros)
    w_hid, b_hid, w_ic, w_is, emb_ih, b_ih, w_out, b_out = kernel_args
    tok = inputs.astype(jnp.int32).reshape(B, S, 1)       # token ids, one-hot built in-kernel

    in_specs = [
        _full_spec((B, S, H)), _full_spec((B, S, 1)),
        _full_spec((H, 4 * H)), _full_spec((1, 4 * H)),
        _full_spec((H, 3 * H)), _full_spec((H, 3 * H)),
        _full_spec((V, 3 * H)), _full_spec((1, 3 * H)),
        _full_spec((H, H + VS)), _full_spec((1, H + VS)),
    ]
    out_specs = [
        pl.BlockSpec((B, MAX_LEN, VS), lambda i: (0, 0, 0)),
        pl.BlockSpec((B, MAX_LEN, 1), lambda i: (0, 0, 0)),
    ]

    decoder_outputs, sampled_idxs = pl.pallas_call(
        _copynet_kernel,
        out_shape=(jax.ShapeDtypeStruct((B, MAX_LEN, VS), jnp.float32),
                   jax.ShapeDtypeStruct((B, MAX_LEN, 1), jnp.int32)),
        grid_spec=pltpu.PrefetchScalarGridSpec(
            num_scalar_prefetch=0,
            grid=(1,),
            in_specs=in_specs,
            out_specs=out_specs),
        compiler_params=pltpu.CompilerParams(dimension_semantics=("arbitrary",)),
    )(encoder_outputs, tok, w_hid, b_hid, w_ic, w_is, emb_ih, b_ih, w_out, b_out)
    return decoder_outputs, sampled_idxs


# ----------------------------- deterministic parameter init -----------------------------
def init_params(key):
    ks = jax.random.split(key, 6)
    emb = jax.random.normal(ks[0], (V, E), jnp.float32) / (E ** 0.5)
    emb = emb.at[0].set(0.0)                       # padding_idx = 0

    def lin(k, fan_in, fan_out):
        k1, k2 = jax.random.split(k)
        bound = 1.0 / (fan_in ** 0.5)
        w = jax.random.uniform(k1, (fan_out, fan_in), jnp.float32, -bound, bound)
        b = jax.random.uniform(k2, (fan_out,), jnp.float32, -bound, bound)
        return w, b

    attn_w, attn_b = lin(ks[1], H, H)
    copy_w, copy_b = lin(ks[2], H, H)
    out_w, out_b = lin(ks[3], H, V)
    w_ih, b_ih = lin(ks[4], 2 * H + E, 3 * H)      # [r; z; n] blocks, PyTorch GRU ordering
    w_hh, b_hh = lin(ks[5], H, 3 * H)

    # fused / pre-transposed weights for the kernel
    w_hid = jnp.concatenate([attn_w.T, w_hh.T], axis=1)                               # (H, 4H)
    b_hid = jnp.concatenate([attn_b, b_hh])[None, :]                                  # (1, 4H)
    w_ih_t = w_ih.T                                                                   # (2H+E, 3H)
    w_ic = w_ih_t[:H]                                                                 # context block
    w_is = w_ih_t[H:2 * H]                                                            # selective-read block
    emb_ih = jnp.dot(emb, w_ih_t[2 * H:],
                     precision=jax.lax.Precision.HIGHEST)                             # (V, 3H)
    b_ih_2 = b_ih[None, :]                                                            # (1, 3H)
    w_out_f = jnp.concatenate([copy_w.T, out_w.T, jnp.zeros((H, S), jnp.float32)], axis=1)   # (H, H+VS)
    b_out_f = jnp.concatenate([copy_b, out_b, jnp.zeros((S,), jnp.float32)])[None, :]        # (1, H+VS)
    return (w_hid, b_hid, w_ic, w_is, emb_ih, b_ih_2, w_out_f, b_out_f)


# ----------------------------- pure-JAX reference (same math, for checking) -----------------------------
def reference_decode(kernel_args, encoder_outputs, inputs):
    w_hid, b_hid, w_ic, w_is, emb_ih, b_ih, w_out, b_out = kernel_args
    hp = jax.lax.Precision.HIGHEST
    oh = jax.nn.one_hot(inputs, VS, dtype=jnp.float32)
    vs_iota = jnp.arange(VS, dtype=jnp.int32)[None, :]
    v_iota = jnp.arange(V, dtype=jnp.int32)[None, :]
    missing = jnp.logical_or(jnp.sum(oh, axis=1) == 0.0, vs_iota == 0)
    gen_mask = jnp.logical_or(vs_iota == 0, vs_iota >= V)
    hidden = jnp.zeros((B, H), jnp.float32)
    sel = jnp.zeros((B, H), jnp.float32)
    idx = jnp.ones((B, 1), jnp.int32)
    logps, idxs = [], []
    for _ in range(MAX_LEN - 1):
        hg = jnp.dot(hidden, w_hid, precision=hp) + b_hid
        th, gh = hg[:, :H], hg[:, H:]
        a = jax.nn.softmax(_bmv(th, encoder_outputs, precision=hp), axis=1)
        context = _bvm(a, encoder_outputs, precision=hp)
        pidx = jnp.where(idx > V, 3, idx)
        gi = (jnp.dot(context, w_ic, precision=hp)
              + jnp.dot(sel, w_is, precision=hp)
              + jnp.dot((v_iota == pidx).astype(jnp.float32), emb_ih, precision=hp)
              + b_ih)
        r = jax.nn.sigmoid(gi[:, :H] + gh[:, :H])
        z = jax.nn.sigmoid(gi[:, H:2 * H] + gh[:, H:2 * H])
        n = jnp.tanh(gi[:, 2 * H:] + r * gh[:, 2 * H:])
        hidden = (1.0 - z) * n + z * hidden
        cg = jnp.dot(hidden, w_out, precision=hp) + b_out
        ch = cg[:, :H]
        gs = jnp.where(gen_mask, NEG, cg[:, H:])
        css = _bmv(ch, encoder_outputs, precision=hp)
        cs = jnp.where(missing, NEG, _bvm(css, oh, precision=hp))
        m = jnp.maximum(jnp.max(gs, axis=1, keepdims=True), jnp.max(cs, axis=1, keepdims=True))
        eg, ec = jnp.exp(gs - m), jnp.exp(cs - m)
        logp = jnp.log((eg + ec) / (jnp.sum(eg, axis=1, keepdims=True)
                                    + jnp.sum(ec, axis=1, keepdims=True)) + 1e-10)
        idx = jnp.argmax(logp, axis=1).astype(jnp.int32)[:, None]
        pos = _bmv((vs_iota == idx).astype(jnp.float32), oh, precision=hp)
        selected = pos * css
        sel = _bvm(selected / jnp.maximum(jnp.sum(jnp.abs(selected), axis=1, keepdims=True), 1e-12),
                   encoder_outputs, precision=hp)
        logps.append(logp)
        idxs.append(idx)
    return jnp.stack(logps, axis=1), jnp.stack(idxs, axis=1)


if __name__ == "__main__":
    key = jax.random.PRNGKey(0)
    kp, ke, ki = jax.random.split(key, 3)
    kernel_args = init_params(kp)

    encoder_outputs = jax.random.normal(ke, (B, S, H), jnp.float32)
    inputs = jax.random.randint(ki, (B, S), 2, V)                   # token ids
    final_encoder_hidden = jnp.zeros((1, B, H), jnp.float32)        # unused by forward

    decoder_outputs, sampled_idxs = copynet_decode(kernel_args, encoder_outputs, inputs,
                                                   final_encoder_hidden)
    jax.block_until_ready(decoder_outputs)
    jax.block_until_ready(sampled_idxs)

    assert decoder_outputs.shape == (B, MAX_LEN, VS)
    assert sampled_idxs.shape == (B, MAX_LEN, 1)

    # correctness check against a pure-JAX reference of the same decode math
    ref_logp, ref_idx = reference_decode(kernel_args, encoder_outputs, inputs)
    assert jnp.allclose(decoder_outputs[:, 1:, :], ref_logp, atol=2e-2, rtol=2e-2)
    assert jnp.array_equal(sampled_idxs[:, 1:, :], ref_idx)
    # SOS row written directly by the kernel
    assert jnp.allclose(decoder_outputs[:, 0, 1], 1.0)
    assert jnp.array_equal(sampled_idxs[:, 0, 0], jnp.ones((B,), jnp.int32))

    print("KERNEL_OK")
</pallas_src>

<mosaic_0001>
module attributes {stable_mosaic.version = 11 : i64} {
  func.func @_copynet_kernel(%arg0: i32, %arg1: memref<2x8x32xf32, #tpu.memory_space<vmem>>, %arg2: memref<2x8x1xi32, #tpu.memory_space<vmem>>, %arg3: memref<32x128xf32, #tpu.memory_space<vmem>>, %arg4: memref<1x128xf32, #tpu.memory_space<vmem>>, %arg5: memref<32x96xf32, #tpu.memory_space<vmem>>, %arg6: memref<32x96xf32, #tpu.memory_space<vmem>>, %arg7: memref<32x96xf32, #tpu.memory_space<vmem>>, %arg8: memref<1x96xf32, #tpu.memory_space<vmem>>, %arg9: memref<32x72xf32, #tpu.memory_space<vmem>>, %arg10: memref<1x72xf32, #tpu.memory_space<vmem>>, %arg11: memref<2x6x40xf32, #tpu.memory_space<vmem>>, %arg12: memref<2x6x1xi32, #tpu.memory_space<vmem>>) attributes {dimension_semantics = [#tpu.dimension_semantics<arbitrary>], iteration_bounds = array<i64: 1>, scalar_prefetch = 0 : i64, scratch_operands = 0 : i64, tpu.core_type = #tpu.core_type<tc>, window_params = [{pipeline_mode = #tpu.pipeline_mode<synchronous>, transform_indices = @transform_0, window_bounds = array<i64: 2, 8, 32>}, {pipeline_mode = #tpu.pipeline_mode<synchronous>, transform_indices = @transform_1, window_bounds = array<i64: 2, 8, 1>}, {pipeline_mode = #tpu.pipeline_mode<synchronous>, transform_indices = @transform_2, window_bounds = array<i64: 32, 128>}, {pipeline_mode = #tpu.pipeline_mode<synchronous>, transform_indices = @transform_3, window_bounds = array<i64: 1, 128>}, {pipeline_mode = #tpu.pipeline_mode<synchronous>, transform_indices = @transform_4, window_bounds = array<i64: 32, 96>}, {pipeline_mode = #tpu.pipeline_mode<synchronous>, transform_indices = @transform_5, window_bounds = array<i64: 32, 96>}, {pipeline_mode = #tpu.pipeline_mode<synchronous>, transform_indices = @transform_6, window_bounds = array<i64: 32, 96>}, {pipeline_mode = #tpu.pipeline_mode<synchronous>, transform_indices = @transform_7, window_bounds = array<i64: 1, 96>}, {pipeline_mode = #tpu.pipeline_mode<synchronous>, transform_indices = @transform_8, window_bounds = array<i64: 32, 72>}, {pipeline_mode = #tpu.pipeline_mode<synchronous>, transform_indices = @transform_9, window_bounds = array<i64: 1, 72>}, {pipeline_mode = #tpu.pipeline_mode<synchronous>, transform_indices = @transform_10, window_bounds = array<i64: 2, 6, 40>}, {pipeline_mode = #tpu.pipeline_mode<synchronous>, transform_indices = @transform_11, window_bounds = array<i64: 2, 6, 1>}]} {
    %c0 = arith.constant 0 : index
    %c0_0 = arith.constant 0 : index
    %c0_1 = arith.constant 0 : index
    %0 = vector.load %arg1[%c0, %c0_0, %c0_1] : memref<2x8x32xf32, #tpu.memory_space<vmem>>, vector<2x8x32xf32>
    %c0_2 = arith.constant 0 : index
    %c0_3 = arith.constant 0 : index
    %c0_4 = arith.constant 0 : index
    %1 = vector.load %arg2[%c0_2, %c0_3, %c0_4] : memref<2x8x1xi32, #tpu.memory_space<vmem>>, vector<2x8x1xi32>
    %c0_5 = arith.constant 0 : index
    %c0_6 = arith.constant 0 : index
    %2 = vector.load %arg3[%c0_5, %c0_6] : memref<32x128xf32, #tpu.memory_space<vmem>>, vector<32x128xf32>
    %c0_7 = arith.constant 0 : index
    %c0_8 = arith.constant 0 : index
    %3 = vector.load %arg4[%c0_7, %c0_8] : memref<1x128xf32, #tpu.memory_space<vmem>>, vector<1x128xf32>
    %c0_9 = arith.constant 0 : index
    %c0_10 = arith.constant 0 : index
    %4 = vector.load %arg5[%c0_9, %c0_10] : memref<32x96xf32, #tpu.memory_space<vmem>>, vector<32x96xf32>
    %c0_11 = arith.constant 0 : index
    %c0_12 = arith.constant 0 : index
    %5 = vector.load %arg6[%c0_11, %c0_12] : memref<32x96xf32, #tpu.memory_space<vmem>>, vector<32x96xf32>
    %c0_13 = arith.constant 0 : index
    %c0_14 = arith.constant 0 : index
    %6 = vector.load %arg7[%c0_13, %c0_14] : memref<32x96xf32, #tpu.memory_space<vmem>>, vector<32x96xf32>
    %c0_15 = arith.constant 0 : index
    %c0_16 = arith.constant 0 : index
    %7 = vector.load %arg8[%c0_15, %c0_16] : memref<1x96xf32, #tpu.memory_space<vmem>>, vector<1x96xf32>
    %c0_17 = arith.constant 0 : index
    %c0_18 = arith.constant 0 : index
    %8 = vector.load %arg9[%c0_17, %c0_18] : memref<32x72xf32, #tpu.memory_space<vmem>>, vector<32x72xf32>
    %c0_19 = arith.constant 0 : index
    %c0_20 = arith.constant 0 : index
    %9 = vector.load %arg10[%c0_19, %c0_20] : memref<1x72xf32, #tpu.memory_space<vmem>>, vector<1x72xf32>
    %10 = tpu.iota {dimensions = array<i32: 1>} : vector<2x40xi32>
    %11 = tpu.iota {dimensions = array<i32: 1>} : vector<2x32xi32>
    %12 = tpu.iota {dimensions = array<i32: 2>} : vector<2x8x40xi32>
    %13 = vector.shape_cast %1 : vector<2x8x1xi32> to vector<2x8x1xi32>
    %14 = vector.broadcast %13 : vector<2x8x1xi32> to vector<2x8x40xi32>
    %15 = arith.cmpi eq, %14, %12 : vector<2x8x40xi32>
    %16 = arith.extui %15 : vector<2x8x40xi1> to vector<2x8x40xi32>
    %17 = arith.sitofp %16 : vector<2x8x40xi32> to vector<2x8x40xf32>
    %cst = arith.constant dense<0.000000e+00> : vector<2x40xf32>
    %18 = vector.multi_reduction <add>, %17, %cst [1] : vector<2x8x40xf32> to vector<2x40xf32>
    %cst_21 = arith.constant 0.000000e+00 : f32
    %19 = vector.broadcast %cst_21 : f32 to vector<2x40xf32>
    %20 = arith.cmpf oeq, %18, %19 : vector<2x40xf32>
    %c0_i32 = arith.constant 0 : i32
    %21 = vector.broadcast %c0_i32 : i32 to vector<2x40xi32>
    %22 = arith.cmpi eq, %10, %21 : vector<2x40xi32>
    %23 = arith.ori %20, %22 : vector<2x40xi1>
    %c0_i32_22 = arith.constant 0 : i32
    %24 = vector.broadcast %c0_i32_22 : i32 to vector<2x40xi32>
    %25 = arith.cmpi eq, %10, %24 : vector<2x40xi32>
    %c32_i32 = arith.constant 32 : i32
    %26 = vector.broadcast %c32_i32 : i32 to vector<2x40xi32>
    %27 = arith.cmpi sge, %10, %26 : vector<2x40xi32>
    %28 = arith.ori %25, %27 : vector<2x40xi1>
    %c1_i32 = arith.constant 1 : i32
    %29 = vector.broadcast %c1_i32 : i32 to vector<2x40xi32>
    %30 = arith.cmpi eq, %10, %29 : vector<2x40xi32>
    %cst_23 = arith.constant 1.000000e+00 : f32
    %cst_24 = arith.constant 0.000000e+00 : f32
    %31 = vector.broadcast %cst_23 : f32 to vector<2x40xf32>
    %32 = vector.broadcast %cst_24 : f32 to vector<2x40xf32>
    %33 = arith.select %30, %31, %32 : vector<2x40xi1>, vector<2x40xf32>
    %34 = vector.shape_cast %33 : vector<2x40xf32> to vector<2x1x40xf32>
    %c0_25 = arith.constant 0 : index
    %c0_26 = arith.constant 0 : index
    %c0_27 = arith.constant 0 : index
    %35 = vector.load %arg11[%c0_25, %c0_26, %c0_27] : memref<2x6x40xf32, #tpu.memory_space<vmem>>, vector<2x1x40xf32>
    tpu.vector_store %arg11[%c0_25, %c0_26, %c0_27], %34 {strides = array<i32>} : memref<2x6x40xf32, #tpu.memory_space<vmem>>, vector<2x1x40xf32>,
    %c1_i32_28 = arith.constant 1 : i32
    %36 = vector.broadcast %c1_i32_28 : i32 to vector<2x1x1xi32>
    %c0_29 = arith.constant 0 : index
    %c0_30 = arith.constant 0 : index
    %c0_31 = arith.constant 0 : index
    %37 = vector.load %arg12[%c0_29, %c0_30, %c0_31] : memref<2x6x1xi32, #tpu.memory_space<vmem>>, vector<2x1x1xi32>
    tpu.vector_store %arg12[%c0_29, %c0_30, %c0_31], %36 {strides = array<i32>} : memref<2x6x1xi32, #tpu.memory_space<vmem>>, vector<2x1x1xi32>,
    %cst_32 = arith.constant 0.000000e+00 : f32
    %38 = vector.broadcast %cst_32 : f32 to vector<2x32xf32>
    %cst_33 = arith.constant 0.000000e+00 : f32
    %39 = vector.broadcast %cst_33 : f32 to vector<2x32xf32>
    %c1_i32_34 = arith.constant 1 : i32
    %40 = vector.broadcast %c1_i32_34 : i32 to vector<2x1xi32>
    %cst_35 = arith.constant dense<0.000000e+00> : vector<2x128xf32>
    %41 = tpu.matmul %38, %2, %cst_35 {dimension_numbers = #tpu.dot_dimension_numbers<[1], [0], [0], [1], [0, 0, 1, 1], [], []>} : vector<2x32xf32>, vector<32x128xf32>, vector<2x128xf32> -> vector<2x128xf32>
    %42 = vector.broadcast %3 : vector<1x128xf32> to vector<2x128xf32>
    %43 = arith.addf %41, %42 : vector<2x128xf32>
    %44 = vector.extract_strided_slice %43 {offsets = [0, 0], sizes = [2, 32], strides = [1, 1]} : vector<2x128xf32> to vector<2x32xf32>
    %45 = vector.extract_strided_slice %43 {offsets = [0, 32], sizes = [2, 96], strides = [1, 1]} : vector<2x128xf32> to vector<2x96xf32>
    %46 = vector.shape_cast %44 : vector<2x32xf32> to vector<2x1x32xf32>
    "tpu.trace_start"() <{level = 10 : i32, message = "bqd,bkd->bqk"}> : () -> ()
    %cst_36 = arith.constant dense<0.000000e+00> : vector<2x1x8xf32>
    %47 = tpu.matmul %46, %0, %cst_36 {dimension_numbers = #tpu.dot_dimension_numbers<[2], [2], [1], [1], [0, 0, 0, 1, 1, 1], [0], [0]>} : vector<2x1x32xf32>, vector<2x8x32xf32>, vector<2x1x8xf32> -> vector<2x1x8xf32>
    "tpu.trace_stop"() : () -> ()
    %48 = vector.shape_cast %47 : vector<2x1x8xf32> to vector<2x8xf32>
    %cst_37 = arith.constant dense<0xFF800000> : vector<2xf32>
    %49 = vector.multi_reduction <maximumf>, %48, %cst_37 [1] : vector<2x8xf32> to vector<2xf32>
    %50 = vector.shape_cast %49 : vector<2xf32> to vector<2x1xf32>
    %51 = vector.broadcast %50 : vector<2x1xf32> to vector<2x8xf32>
    %52 = arith.subf %48, %51 : vector<2x8xf32>
    %53 = math.exp %52 : vector<2x8xf32>
    %cst_38 = arith.constant dense<0.000000e+00> : vector<2xf32>
    %54 = vector.multi_reduction <add>, %53, %cst_38 [1] : vector<2x8xf32> to vector<2xf32>
    %55 = vector.shape_cast %54 : vector<2xf32> to vector<2x1xf32>
    %56 = vector.broadcast %55 : vector<2x1xf32> to vector<2x8xf32>
    %57 = arith.divf %53, %56 : vector<2x8xf32>
    %58 = vector.shape_cast %57 : vector<2x8xf32> to vector<2x1x8xf32>
    "tpu.trace_start"() <{level = 10 : i32, message = "bqk,bkd->bqd"}> : () -> ()
    %cst_39 = arith.constant dense<0.000000e+00> : vector<2x1x32xf32>
    %59 = tpu.matmul %58, %0, %cst_39 {dimension_numbers = #tpu.dot_dimension_numbers<[2], [1], [1], [2], [0, 0, 0, 1, 1, 2], [0], [0]>} : vector<2x1x8xf32>, vector<2x8x32xf32>, vector<2x1x32xf32> -> vector<2x1x32xf32>
    "tpu.trace_stop"() : () -> ()
    %60 = vector.shape_cast %59 : vector<2x1x32xf32> to vector<2x32xf32>
    %c32_i32_40 = arith.constant 32 : i32
    %61 = vector.broadcast %c32_i32_40 : i32 to vector<2x1xi32>
    %62 = arith.cmpi sgt, %40, %61 : vector<2x1xi32>
    %c3_i32 = arith.constant 3 : i32
    %63 = vector.broadcast %c3_i32 : i32 to vector<2x1xi32>
    %64 = arith.select %62, %63, %40 : vector<2x1xi1>, vector<2x1xi32>
    %65 = vector.broadcast %64 : vector<2x1xi32> to vector<2x32xi32>
    %66 = arith.cmpi eq, %11, %65 : vector<2x32xi32>
    %67 = arith.extui %66 : vector<2x32xi1> to vector<2x32xi32>
    %68 = arith.sitofp %67 : vector<2x32xi32> to vector<2x32xf32>
    %cst_41 = arith.constant dense<0.000000e+00> : vector<2x96xf32>
    %69 = tpu.matmul %60, %4, %cst_41 {dimension_numbers = #tpu.dot_dimension_numbers<[1], [0], [0], [1], [0, 0, 1, 1], [], []>} : vector<2x32xf32>, vector<32x96xf32>, vector<2x96xf32> -> vector<2x96xf32>
    %cst_42 = arith.constant dense<0.000000e+00> : vector<2x96xf32>
    %70 = tpu.matmul %39, %5, %cst_42 {dimension_numbers = #tpu.dot_dimension_numbers<[1], [0], [0], [1], [0, 0, 1, 1], [], []>} : vector<2x32xf32>, vector<32x96xf32>, vector<2x96xf32> -> vector<2x96xf32>
    %71 = arith.addf %69, %70 : vector<2x96xf32>
    %cst_43 = arith.constant dense<0.000000e+00> : vector<2x96xf32>
    %72 = tpu.matmul %68, %6, %cst_43 {dimension_numbers = #tpu.dot_dimension_numbers<[1], [0], [0], [1], [0, 0, 1, 1], [], []>} : vector<2x32xf32>, vector<32x96xf32>, vector<2x96xf32> -> vector<2x96xf32>
    %73 = arith.addf %71, %72 : vector<2x96xf32>
    %74 = vector.broadcast %7 : vector<1x96xf32> to vector<2x96xf32>
    %75 = arith.addf %73, %74 : vector<2x96xf32>
    %76 = vector.extract_strided_slice %75 {offsets = [0, 0], sizes = [2, 32], strides = [1, 1]} : vector<2x96xf32> to vector<2x32xf32>
    %77 = vector.extract_strided_slice %45 {offsets = [0, 0], sizes = [2, 32], strides = [1, 1]} : vector<2x96xf32> to vector<2x32xf32>
    %78 = arith.addf %76, %77 : vector<2x32xf32>
    %79 = arith.negf %78 : vector<2x32xf32>
    %80 = math.exp %79 : vector<2x32xf32>
    %cst_44 = arith.constant 1.000000e+00 : f32
    %81 = vector.broadcast %cst_44 : f32 to vector<2x32xf32>
    %82 = arith.addf %81, %80 : vector<2x32xf32>
    %83 = arith.divf %81, %82 : vector<2x32xf32>
    %84 = vector.extract_strided_slice %75 {offsets = [0, 32], sizes = [2, 32], strides = [1, 1]} : vector<2x96xf32> to vector<2x32xf32>
    %85 = vector.extract_strided_slice %45 {offsets = [0, 32], sizes = [2, 32], strides = [1, 1]} : vector<2x96xf32> to vector<2x32xf32>
    %86 = arith.addf %84, %85 : vector<2x32xf32>
    %87 = arith.negf %86 : vector<2x32xf32>
    %88 = math.exp %87 : vector<2x32xf32>
    %cst_45 = arith.constant 1.000000e+00 : f32
    %89 = vector.broadcast %cst_45 : f32 to vector<2x32xf32>
    %90 = arith.addf %89, %88 : vector<2x32xf32>
    %91 = arith.divf %89, %90 : vector<2x32xf32>
    %92 = vector.extract_strided_slice %75 {offsets = [0, 64], sizes = [2, 32], strides = [1, 1]} : vector<2x96xf32> to vector<2x32xf32>
    %93 = vector.extract_strided_slice %45 {offsets = [0, 64], sizes = [2, 32], strides = [1, 1]} : vector<2x96xf32> to vector<2x32xf32>
    %94 = arith.mulf %83, %93 : vector<2x32xf32>
    %95 = arith.addf %92, %94 : vector<2x32xf32>
    %96 = math.tanh %95 : vector<2x32xf32>
    %cst_46 = arith.constant 1.000000e+00 : f32
    %97 = vector.broadcast %cst_46 : f32 to vector<2x32xf32>
    %98 = arith.subf %97, %91 : vector<2x32xf32>
    %99 = arith.mulf %98, %96 : vector<2x32xf32>
    %100 = arith.mulf %91, %38 : vector<2x32xf32>
    %101 = arith.addf %99, %100 : vector<2x32xf32>
    %cst_47 = arith.constant dense<0.000000e+00> : vector<2x72xf32>
    %102 = tpu.matmul %101, %8, %cst_47 {dimension_numbers = #tpu.dot_dimension_numbers<[1], [0], [0], [1], [0, 0, 1, 1], [], []>} : vector<2x32xf32>, vector<32x72xf32>, vector<2x72xf32> -> vector<2x72xf32>
    %103 = vector.broadcast %9 : vector<1x72xf32> to vector<2x72xf32>
    %104 = arith.addf %102, %103 : vector<2x72xf32>
    %105 = vector.extract_strided_slice %104 {offsets = [0, 0], sizes = [2, 32], strides = [1, 1]} : vector<2x72xf32> to vector<2x32xf32>
    %106 = vector.extract_strided_slice %104 {offsets = [0, 32], sizes = [2, 40], strides = [1, 1]} : vector<2x72xf32> to vector<2x40xf32>
    %cst_48 = arith.constant -1.000000e+06 : f32
    %107 = vector.broadcast %cst_48 : f32 to vector<2x40xf32>
    %108 = arith.select %28, %107, %106 : vector<2x40xi1>, vector<2x40xf32>
    %109 = vector.shape_cast %105 : vector<2x32xf32> to vector<2x1x32xf32>
    "tpu.trace_start"() <{level = 10 : i32, message = "bqd,bkd->bqk"}> : () -> ()
    %cst_49 = arith.constant dense<0.000000e+00> : vector<2x1x8xf32>
    %110 = tpu.matmul %109, %0, %cst_49 {dimension_numbers = #tpu.dot_dimension_numbers<[2], [2], [1], [1], [0, 0, 0, 1, 1, 1], [0], [0]>} : vector<2x1x32xf32>, vector<2x8x32xf32>, vector<2x1x8xf32> -> vector<2x1x8xf32>
    "tpu.trace_stop"() : () -> ()
    %111 = vector.shape_cast %110 : vector<2x1x8xf32> to vector<2x8xf32>
    %112 = vector.shape_cast %111 : vector<2x8xf32> to vector<2x1x8xf32>
    "tpu.trace_start"() <{level = 10 : i32, message = "bqk,bkd->bqd"}> : () -> ()
    %cst_50 = arith.constant dense<0.000000e+00> : vector<2x1x40xf32>
    %113 = tpu.matmul %112, %17, %cst_50 {dimension_numbers = #tpu.dot_dimension_numbers<[2], [1], [1], [2], [0, 0, 0, 1, 1, 2], [0], [0]>} : vector<2x1x8xf32>, vector<2x8x40xf32>, vector<2x1x40xf32> -> vector<2x1x40xf32>
    "tpu.trace_stop"() : () -> ()
    %114 = vector.shape_cast %113 : vector<2x1x40xf32> to vector<2x40xf32>
    %cst_51 = arith.constant -1.000000e+06 : f32
    %115 = vector.broadcast %cst_51 : f32 to vector<2x40xf32>
    %116 = arith.select %23, %115, %114 : vector<2x40xi1>, vector<2x40xf32>
    %cst_52 = arith.constant dense<0xFF800000> : vector<2xf32>
    %117 = vector.multi_reduction <maximumf>, %108, %cst_52 [1] : vector<2x40xf32> to vector<2xf32>
    %118 = vector.shape_cast %117 : vector<2xf32> to vector<2x1xf32>
    %cst_53 = arith.constant dense<0xFF800000> : vector<2xf32>
    %119 = vector.multi_reduction <maximumf>, %116, %cst_53 [1] : vector<2x40xf32> to vector<2xf32>
    %120 = vector.shape_cast %119 : vector<2xf32> to vector<2x1xf32>
    %121 = arith.maximumf %118, %120 : vector<2x1xf32>
    %122 = vector.broadcast %121 : vector<2x1xf32> to vector<2x40xf32>
    %123 = arith.subf %108, %122 : vector<2x40xf32>
    %124 = math.exp %123 : vector<2x40xf32>
    %125 = vector.broadcast %121 : vector<2x1xf32> to vector<2x40xf32>
    %126 = arith.subf %116, %125 : vector<2x40xf32>
    %127 = math.exp %126 : vector<2x40xf32>
    %cst_54 = arith.constant dense<0.000000e+00> : vector<2xf32>
    %128 = vector.multi_reduction <add>, %124, %cst_54 [1] : vector<2x40xf32> to vector<2xf32>
    %129 = vector.shape_cast %128 : vector<2xf32> to vector<2x1xf32>
    %cst_55 = arith.constant dense<0.000000e+00> : vector<2xf32>
    %130 = vector.multi_reduction <add>, %127, %cst_55 [1] : vector<2x40xf32> to vector<2xf32>
    %131 = vector.shape_cast %130 : vector<2xf32> to vector<2x1xf32>
    %132 = arith.addf %129, %131 : vector<2x1xf32>
    %133 = arith.addf %124, %127 : vector<2x40xf32>
    %134 = vector.broadcast %132 : vector<2x1xf32> to vector<2x40xf32>
    %135 = arith.divf %133, %134 : vector<2x40xf32>
    %cst_56 = arith.constant 1.000000e-10 : f32
    %136 = vector.broadcast %cst_56 : f32 to vector<2x40xf32>
    %137 = arith.addf %135, %136 : vector<2x40xf32>
    %138 = math.log %137 : vector<2x40xf32>
    %cst_57 = arith.constant dense<0xFF800000> : vector<2xf32>
    %139 = vector.multi_reduction <maximumf>, %138, %cst_57 [1] : vector<2x40xf32> to vector<2xf32>
    %140 = vector.shape_cast %139 : vector<2xf32> to vector<2x1xf32>
    %141 = vector.broadcast %140 : vector<2x1xf32> to vector<2x40xf32>
    %142 = arith.cmpf oeq, %138, %141 : vector<2x40xf32>
    %c40_i32 = arith.constant 40 : i32
    %143 = vector.broadcast %c40_i32 : i32 to vector<2x40xi32>
    %144 = arith.select %142, %10, %143 : vector<2x40xi1>, vector<2x40xi32>
    %cst_58 = arith.constant dense<2147483647> : vector<2xi32>
    %145 = vector.multi_reduction <minsi>, %144, %cst_58 [1] : vector<2x40xi32> to vector<2xi32>
    %146 = vector.shape_cast %145 : vector<2xi32> to vector<2x1xi32>
    %147 = vector.broadcast %146 : vector<2x1xi32> to vector<2x40xi32>
    %148 = arith.cmpi eq, %10, %147 : vector<2x40xi32>
    %149 = arith.extui %148 : vector<2x40xi1> to vector<2x40xi32>
    %150 = arith.sitofp %149 : vector<2x40xi32> to vector<2x40xf32>
    %151 = vector.shape_cast %150 : vector<2x40xf32> to vector<2x1x40xf32>
    "tpu.trace_start"() <{level = 10 : i32, message = "bqd,bkd->bqk"}> : () -> ()
    %cst_59 = arith.constant dense<0.000000e+00> : vector<2x1x8xf32>
    %152 = tpu.matmul %151, %17, %cst_59 {dimension_numbers = #tpu.dot_dimension_numbers<[2], [2], [1], [1], [0, 0, 0, 1, 1, 1], [0], [0]>} : vector<2x1x40xf32>, vector<2x8x40xf32>, vector<2x1x8xf32> -> vector<2x1x8xf32>
    "tpu.trace_stop"() : () -> ()
    %153 = vector.shape_cast %152 : vector<2x1x8xf32> to vector<2x8xf32>
    %154 = arith.mulf %153, %111 : vector<2x8xf32>
    %155 = math.absf %154 : vector<2x8xf32>
    %cst_60 = arith.constant dense<0.000000e+00> : vector<2xf32>
    %156 = vector.multi_reduction <add>, %155, %cst_60 [1] : vector<2x8xf32> to vector<2xf32>
    %157 = vector.shape_cast %156 : vector<2xf32> to vector<2x1xf32>
    %cst_61 = arith.constant 9.99999996E-13 : f32
    %158 = vector.broadcast %cst_61 : f32 to vector<2x1xf32>
    %159 = arith.maximumf %157, %158 : vector<2x1xf32>
    %160 = vector.broadcast %159 : vector<2x1xf32> to vector<2x8xf32>
    %161 = arith.divf %154, %160 : vector<2x8xf32>
    %162 = vector.shape_cast %161 : vector<2x8xf32> to vector<2x1x8xf32>
    "tpu.trace_start"() <{level = 10 : i32, message = "bqk,bkd->bqd"}> : () -> ()
    %cst_62 = arith.constant dense<0.000000e+00> : vector<2x1x32xf32>
    %163 = tpu.matmul %162, %0, %cst_62 {dimension_numbers = #tpu.dot_dimension_numbers<[2], [1], [1], [2], [0, 0, 0, 1, 1, 2], [0], [0]>} : vector<2x1x8xf32>, vector<2x8x32xf32>, vector<2x1x32xf32> -> vector<2x1x32xf32>
    "tpu.trace_stop"() : () -> ()
    %164 = vector.shape_cast %163 : vector<2x1x32xf32> to vector<2x32xf32>
    %165 = vector.shape_cast %138 : vector<2x40xf32> to vector<2x1x40xf32>
    %c0_63 = arith.constant 0 : index
    %c1 = arith.constant 1 : index
    %c0_64 = arith.constant 0 : index
    %166 = vector.load %arg11[%c0_63, %c1, %c0_64] : memref<2x6x40xf32, #tpu.memory_space<vmem>>, vector<2x1x40xf32>
    tpu.vector_store %arg11[%c0_63, %c1, %c0_64], %165 {strides = array<i32>} : memref<2x6x40xf32, #tpu.memory_space<vmem>>, vector<2x1x40xf32>,
    %167 = vector.shape_cast %146 : vector<2x1xi32> to vector<2x1x1xi32>
    %c0_65 = arith.constant 0 : index
    %c1_66 = arith.constant 1 : index
    %c0_67 = arith.constant 0 : index
    %168 = vector.load %arg12[%c0_65, %c1_66, %c0_67] : memref<2x6x1xi32, #tpu.memory_space<vmem>>, vector<2x1x1xi32>
    tpu.vector_store %arg12[%c0_65, %c1_66, %c0_67], %167 {strides = array<i32>} : memref<2x6x1xi32, #tpu.memory_space<vmem>>, vector<2x1x1xi32>,
    %cst_68 = arith.constant dense<0.000000e+00> : vector<2x128xf32>
    %169 = tpu.matmul %101, %2, %cst_68 {dimension_numbers = #tpu.dot_dimension_numbers<[1], [0], [0], [1], [0, 0, 1, 1], [], []>} : vector<2x32xf32>, vector<32x128xf32>, vector<2x128xf32> -> vector<2x128xf32>
    %170 = vector.broadcast %3 : vector<1x128xf32> to vector<2x128xf32>
    %171 = arith.addf %169, %170 : vector<2x128xf32>
    %172 = vector.extract_strided_slice %171 {offsets = [0, 0], sizes = [2, 32], strides = [1, 1]} : vector<2x128xf32> to vector<2x32xf32>
    %173 = vector.extract_strided_slice %171 {offsets = [0, 32], sizes = [2, 96], strides = [1, 1]} : vector<2x128xf32> to vector<2x96xf32>
    %174 = vector.shape_cast %172 : vector<2x32xf32> to vector<2x1x32xf32>
    "tpu.trace_start"() <{level = 10 : i32, message = "bqd,bkd->bqk"}> : () -> ()
    %cst_69 = arith.constant dense<0.000000e+00> : vector<2x1x8xf32>
    %175 = tpu.matmul %174, %0, %cst_69 {dimension_numbers = #tpu.dot_dimension_numbers<[2], [2], [1], [1], [0, 0, 0, 1, 1, 1], [0], [0]>} : vector<2x1x32xf32>, vector<2x8x32xf32>, vector<2x1x8xf32> -> vector<2x1x8xf32>
    "tpu.trace_stop"() : () -> ()
    %176 = vector.shape_cast %175 : vector<2x1x8xf32> to vector<2x8xf32>
    %cst_70 = arith.constant dense<0xFF800000> : vector<2xf32>
    %177 = vector.multi_reduction <maximumf>, %176, %cst_70 [1] : vector<2x8xf32> to vector<2xf32>
    %178 = vector.shape_cast %177 : vector<2xf32> to vector<2x1xf32>
    %179 = vector.broadcast %178 : vector<2x1xf32> to vector<2x8xf32>
    %180 = arith.subf %176, %179 : vector<2x8xf32>
    %181 = math.exp %180 : vector<2x8xf32>
    %cst_71 = arith.constant dense<0.000000e+00> : vector<2xf32>
    %182 = vector.multi_reduction <add>, %181, %cst_71 [1] : vector<2x8xf32> to vector<2xf32>
    %183 = vector.shape_cast %182 : vector<2xf32> to vector<2x1xf32>
    %184 = vector.broadcast %183 : vector<2x1xf32> to vector<2x8xf32>
    %185 = arith.divf %181, %184 : vector<2x8xf32>
    %186 = vector.shape_cast %185 : vector<2x8xf32> to vector<2x1x8xf32>
    "tpu.trace_start"() <{level = 10 : i32, message = "bqk,bkd->bqd"}> : () -> ()
    %cst_72 = arith.constant dense<0.000000e+00> : vector<2x1x32xf32>
    %187 = tpu.matmul %186, %0, %cst_72 {dimension_numbers = #tpu.dot_dimension_numbers<[2], [1], [1], [2], [0, 0, 0, 1, 1, 2], [0], [0]>} : vector<2x1x8xf32>, vector<2x8x32xf32>, vector<2x1x32xf32> -> vector<2x1x32xf32>
    "tpu.trace_stop"() : () -> ()
    %188 = vector.shape_cast %187 : vector<2x1x32xf32> to vector<2x32xf32>
    %c32_i32_73 = arith.constant 32 : i32
    %189 = vector.broadcast %c32_i32_73 : i32 to vector<2x1xi32>
    %190 = arith.cmpi sgt, %146, %189 : vector<2x1xi32>
    %c3_i32_74 = arith.constant 3 : i32
    %191 = vector.broadcast %c3_i32_74 : i32 to vector<2x1xi32>
    %192 = arith.select %190, %191, %146 : vector<2x1xi1>, vector<2x1xi32>
    %193 = vector.broadcast %192 : vector<2x1xi32> to vector<2x32xi32>
    %194 = arith.cmpi eq, %11, %193 : vector<2x32xi32>
    %195 = arith.extui %194 : vector<2x32xi1> to vector<2x32xi32>
    %196 = arith.sitofp %195 : vector<2x32xi32> to vector<2x32xf32>
    %cst_75 = arith.constant dense<0.000000e+00> : vector<2x96xf32>
    %197 = tpu.matmul %188, %4, %cst_75 {dimension_numbers = #tpu.dot_dimension_numbers<[1], [0], [0], [1], [0, 0, 1, 1], [], []>} : vector<2x32xf32>, vector<32x96xf32>, vector<2x96xf32> -> vector<2x96xf32>
    %cst_76 = arith.constant dense<0.000000e+00> : vector<2x96xf32>
    %198 = tpu.matmul %164, %5, %cst_76 {dimension_numbers = #tpu.dot_dimension_numbers<[1], [0], [0], [1], [0, 0, 1, 1], [], []>} : vector<2x32xf32>, vector<32x96xf32>, vector<2x96xf32> -> vector<2x96xf32>
    %199 = arith.addf %197, %198 : vector<2x96xf32>
    %cst_77 = arith.constant dense<0.000000e+00> : vector<2x96xf32>
    %200 = tpu.matmul %196, %6, %cst_77 {dimension_numbers = #tpu.dot_dimension_numbers<[1], [0], [0], [1], [0, 0, 1, 1], [], []>} : vector<2x32xf32>, vector<32x96xf32>, vector<2x96xf32> -> vector<2x96xf32>
    %201 = arith.addf %199, %200 : vector<2x96xf32>
    %202 = vector.broadcast %7 : vector<1x96xf32> to vector<2x96xf32>
    %203 = arith.addf %201, %202 : vector<2x96xf32>
    %204 = vector.extract_strided_slice %203 {offsets = [0, 0], sizes = [2, 32], strides = [1, 1]} : vector<2x96xf32> to vector<2x32xf32>
    %205 = vector.extract_strided_slice %173 {offsets = [0, 0], sizes = [2, 32], strides = [1, 1]} : vector<2x96xf32> to vector<2x32xf32>
    %206 = arith.addf %204, %205 : vector<2x32xf32>
    %207 = arith.negf %206 : vector<2x32xf32>
    %208 = math.exp %207 : vector<2x32xf32>
    %cst_78 = arith.constant 1.000000e+00 : f32
    %209 = vector.broadcast %cst_78 : f32 to vector<2x32xf32>
    %210 = arith.addf %209, %208 : vector<2x32xf32>
    %211 = arith.divf %209, %210 : vector<2x32xf32>
    %212 = vector.extract_strided_slice %203 {offsets = [0, 32], sizes = [2, 32], strides = [1, 1]} : vector<2x96xf32> to vector<2x32xf32>
    %213 = vector.extract_strided_slice %173 {offsets = [0, 32], sizes = [2, 32], strides = [1, 1]} : vector<2x96xf32> to vector<2x32xf32>
    %214 = arith.addf %212, %213 : vector<2x32xf32>
    %215 = arith.negf %214 : vector<2x32xf32>
    %216 = math.exp %215 : vector<2x32xf32>
    %cst_79 = arith.constant 1.000000e+00 : f32
    %217 = vector.broadcast %cst_79 : f32 to vector<2x32xf32>
    %218 = arith.addf %217, %216 : vector<2x32xf32>
    %219 = arith.divf %217, %218 : vector<2x32xf32>
    %220 = vector.extract_strided_slice %203 {offsets = [0, 64], sizes = [2, 32], strides = [1, 1]} : vector<2x96xf32> to vector<2x32xf32>
    %221 = vector.extract_strided_slice %173 {offsets = [0, 64], sizes = [2, 32], strides = [1, 1]} : vector<2x96xf32> to vector<2x32xf32>
    %222 = arith.mulf %211, %221 : vector<2x32xf32>
    %223 = arith.addf %220, %222 : vector<2x32xf32>
    %224 = math.tanh %223 : vector<2x32xf32>
    %cst_80 = arith.constant 1.000000e+00 : f32
    %225 = vector.broadcast %cst_80 : f32 to vector<2x32xf32>
    %226 = arith.subf %225, %219 : vector<2x32xf32>
    %227 = arith.mulf %226, %224 : vector<2x32xf32>
    %228 = arith.mulf %219, %101 : vector<2x32xf32>
    %229 = arith.addf %227, %228 : vector<2x32xf32>
    %cst_81 = arith.constant dense<0.000000e+00> : vector<2x72xf32>
    %230 = tpu.matmul %229, %8, %cst_81 {dimension_numbers = #tpu.dot_dimension_numbers<[1], [0], [0], [1], [0, 0, 1, 1], [], []>} : vector<2x32xf32>, vector<32x72xf32>, vector<2x72xf32> -> vector<2x72xf32>
    %231 = vector.broadcast %9 : vector<1x72xf32> to vector<2x72xf32>
    %232 = arith.addf %230, %231 : vector<2x72xf32>
    %233 = vector.extract_strided_slice %232 {offsets = [0, 0], sizes = [2, 32], strides = [1, 1]} : vector<2x72xf32> to vector<2x32xf32>
    %234 = vector.extract_strided_slice %232 {offsets = [0, 32], sizes = [2, 40], strides = [1, 1]} : vector<2x72xf32> to vector<2x40xf32>
    %cst_82 = arith.constant -1.000000e+06 : f32
    %235 = vector.broadcast %cst_82 : f32 to vector<2x40xf32>
    %236 = arith.select %28, %235, %234 : vector<2x40xi1>, vector<2x40xf32>
    %237 = vector.shape_cast %233 : vector<2x32xf32> to vector<2x1x32xf32>
    "tpu.trace_start"() <{level = 10 : i32, message = "bqd,bkd->bqk"}> : () -> ()
    %cst_83 = arith.constant dense<0.000000e+00> : vector<2x1x8xf32>
    %238 = tpu.matmul %237, %0, %cst_83 {dimension_numbers = #tpu.dot_dimension_numbers<[2], [2], [1], [1], [0, 0, 0, 1, 1, 1], [0], [0]>} : vector<2x1x32xf32>, vector<2x8x32xf32>, vector<2x1x8xf32> -> vector<2x1x8xf32>
    "tpu.trace_stop"() : () -> ()
    %239 = vector.shape_cast %238 : vector<2x1x8xf32> to vector<2x8xf32>
    %240 = vector.shape_cast %239 : vector<2x8xf32> to vector<2x1x8xf32>
    "tpu.trace_start"() <{level = 10 : i32, message = "bqk,bkd->bqd"}> : () -> ()
    %cst_84 = arith.constant dense<0.000000e+00> : vector<2x1x40xf32>
    %241 = tpu.matmul %240, %17, %cst_84 {dimension_numbers = #tpu.dot_dimension_numbers<[2], [1], [1], [2], [0, 0, 0, 1, 1, 2], [0], [0]>} : vector<2x1x8xf32>, vector<2x8x40xf32>, vector<2x1x40xf32> -> vector<2x1x40xf32>
    "tpu.trace_stop"() : () -> ()
    %242 = vector.shape_cast %241 : vector<2x1x40xf32> to vector<2x40xf32>
    %cst_85 = arith.constant -1.000000e+06 : f32
    %243 = vector.broadcast %cst_85 : f32 to vector<2x40xf32>
    %244 = arith.select %23, %243, %242 : vector<2x40xi1>, vector<2x40xf32>
    %cst_86 = arith.constant dense<0xFF800000> : vector<2xf32>
    %245 = vector.multi_reduction <maximumf>, %236, %cst_86 [1] : vector<2x40xf32> to vector<2xf32>
    %246 = vector.shape_cast %245 : vector<2xf32> to vector<2x1xf32>
    %cst_87 = arith.constant dense<0xFF800000> : vector<2xf32>
    %247 = vector.multi_reduction <maximumf>, %244, %cst_87 [1] : vector<2x40xf32> to vector<2xf32>
    %248 = vector.shape_cast %247 : vector<2xf32> to vector<2x1xf32>
    %249 = arith.maximumf %246, %248 : vector<2x1xf32>
    %250 = vector.broadcast %249 : vector<2x1xf32> to vector<2x40xf32>
    %251 = arith.subf %236, %250 : vector<2x40xf32>
    %252 = math.exp %251 : vector<2x40xf32>
    %253 = vector.broadcast %249 : vector<2x1xf32> to vector<2x40xf32>
    %254 = arith.subf %244, %253 : vector<2x40xf32>
    %255 = math.exp %254 : vector<2x40xf32>
    %cst_88 = arith.constant dense<0.000000e+00> : vector<2xf32>
    %256 = vector.multi_reduction <add>, %252, %cst_88 [1] : vector<2x40xf32> to vector<2xf32>
    %257 = vector.shape_cast %256 : vector<2xf32> to vector<2x1xf32>
    %cst_89 = arith.constant dense<0.000000e+00> : vector<2xf32>
    %258 = vector.multi_reduction <add>, %255, %cst_89 [1] : vector<2x40xf32> to vector<2xf32>
    %259 = vector.shape_cast %258 : vector<2xf32> to vector<2x1xf32>
    %260 = arith.addf %257, %259 : vector<2x1xf32>
    %261 = arith.addf %252, %255 : vector<2x40xf32>
    %262 = vector.broadcast %260 : vector<2x1xf32> to vector<2x40xf32>
    %263 = arith.divf %261, %262 : vector<2x40xf32>
    %cst_90 = arith.constant 1.000000e-10 : f32
    %264 = vector.broadcast %cst_90 : f32 to vector<2x40xf32>
    %265 = arith.addf %263, %264 : vector<2x40xf32>
    %266 = math.log %265 : vector<2x40xf32>
    %cst_91 = arith.constant dense<0xFF800000> : vector<2xf32>
    %267 = vector.multi_reduction <maximumf>, %266, %cst_91 [1] : vector<2x40xf32> to vector<2xf32>
    %268 = vector.shape_cast %267 : vector<2xf32> to vector<2x1xf32>
    %269 = vector.broadcast %268 : vector<2x1xf32> to vector<2x40xf32>
    %270 = arith.cmpf oeq, %266, %269 : vector<2x40xf32>
    %c40_i32_92 = arith.constant 40 : i32
    %271 = vector.broadcast %c40_i32_92 : i32 to vector<2x40xi32>
    %272 = arith.select %270, %10, %271 : vector<2x40xi1>, vector<2x40xi32>
    %cst_93 = arith.constant dense<2147483647> : vector<2xi32>
    %273 = vector.multi_reduction <minsi>, %272, %cst_93 [1] : vector<2x40xi32> to vector<2xi32>
    %274 = vector.shape_cast %273 : vector<2xi32> to vector<2x1xi32>
    %275 = vector.broadcast %274 : vector<2x1xi32> to vector<2x40xi32>
    %276 = arith.cmpi eq, %10, %275 : vector<2x40xi32>
    %277 = arith.extui %276 : vector<2x40xi1> to vector<2x40xi32>
    %278 = arith.sitofp %277 : vector<2x40xi32> to vector<2x40xf32>
    %279 = vector.shape_cast %278 : vector<2x40xf32> to vector<2x1x40xf32>
    "tpu.trace_start"() <{level = 10 : i32, message = "bqd,bkd->bqk"}> : () -> ()
    %cst_94 = arith.constant dense<0.000000e+00> : vector<2x1x8xf32>
    %280 = tpu.matmul %279, %17, %cst_94 {dimension_numbers = #tpu.dot_dimension_numbers<[2], [2], [1], [1], [0, 0, 0, 1, 1, 1], [0], [0]>} : vector<2x1x40xf32>, vector<2x8x40xf32>, vector<2x1x8xf32> -> vector<2x1x8xf32>
    "tpu.trace_stop"() : () -> ()
    %281 = vector.shape_cast %280 : vector<2x1x8xf32> to vector<2x8xf32>
    %282 = arith.mulf %281, %239 : vector<2x8xf32>
    %283 = math.absf %282 : vector<2x8xf32>
    %cst_95 = arith.constant dense<0.000000e+00> : vector<2xf32>
    %284 = vector.multi_reduction <add>, %283, %cst_95 [1] : vector<2x8xf32> to vector<2xf32>
    %285 = vector.shape_cast %284 : vector<2xf32> to vector<2x1xf32>
    %cst_96 = arith.constant 9.99999996E-13 : f32
    %286 = vector.broadcast %cst_96 : f32 to vector<2x1xf32>
    %287 = arith.maximumf %285, %286 : vector<2x1xf32>
    %288 = vector.broadcast %287 : vector<2x1xf32> to vector<2x8xf32>
    %289 = arith.divf %282, %288 : vector<2x8xf32>
    %290 = vector.shape_cast %289 : vector<2x8xf32> to vector<2x1x8xf32>
    "tpu.trace_start"() <{level = 10 : i32, message = "bqk,bkd->bqd"}> : () -> ()
    %cst_97 = arith.constant dense<0.000000e+00> : vector<2x1x32xf32>
    %291 = tpu.matmul %290, %0, %cst_97 {dimension_numbers = #tpu.dot_dimension_numbers<[2], [1], [1], [2], [0, 0, 0, 1, 1, 2], [0], [0]>} : vector<2x1x8xf32>, vector<2x8x32xf32>, vector<2x1x32xf32> -> vector<2x1x32xf32>
    "tpu.trace_stop"() : () -> ()
    %292 = vector.shape_cast %291 : vector<2x1x32xf32> to vector<2x32xf32>
    %293 = vector.shape_cast %266 : vector<2x40xf32> to vector<2x1x40xf32>
    %c0_98 = arith.constant 0 : index
    %c2 = arith.constant 2 : index
    %c0_99 = arith.constant 0 : index
    %294 = vector.load %arg11[%c0_98, %c2, %c0_99] : memref<2x6x40xf32, #tpu.memory_space<vmem>>, vector<2x1x40xf32>
    tpu.vector_store %arg11[%c0_98, %c2, %c0_99], %293 {strides = array<i32>} : memref<2x6x40xf32, #tpu.memory_space<vmem>>, vector<2x1x40xf32>,
    %295 = vector.shape_cast %274 : vector<2x1xi32> to vector<2x1x1xi32>
    %c0_100 = arith.constant 0 : index
    %c2_101 = arith.constant 2 : index
    %c0_102 = arith.constant 0 : index
    %296 = vector.load %arg12[%c0_100, %c2_101, %c0_102] : memref<2x6x1xi32, #tpu.memory_space<vmem>>, vector<2x1x1xi32>
    tpu.vector_store %arg12[%c0_100, %c2_101, %c0_102], %295 {strides = array<i32>} : memref<2x6x1xi32, #tpu.memory_space<vmem>>, vector<2x1x1xi32>,
    %cst_103 = arith.constant dense<0.000000e+00> : vector<2x128xf32>
    %297 = tpu.matmul %229, %2, %cst_103 {dimension_numbers = #tpu.dot_dimension_numbers<[1], [0], [0], [1], [0, 0, 1, 1], [], []>} : vector<2x32xf32>, vector<32x128xf32>, vector<2x128xf32> -> vector<2x128xf32>
    %298 = vector.broadcast %3 : vector<1x128xf32> to vector<2x128xf32>
    %299 = arith.addf %297, %298 : vector<2x128xf32>
    %300 = vector.extract_strided_slice %299 {offsets = [0, 0], sizes = [2, 32], strides = [1, 1]} : vector<2x128xf32> to vector<2x32xf32>
    %301 = vector.extract_strided_slice %299 {offsets = [0, 32], sizes = [2, 96], strides = [1, 1]} : vector<2x128xf32> to vector<2x96xf32>
    %302 = vector.shape_cast %300 : vector<2x32xf32> to vector<2x1x32xf32>
    "tpu.trace_start"() <{level = 10 : i32, message = "bqd,bkd->bqk"}> : () -> ()
    %cst_104 = arith.constant dense<0.000000e+00> : vector<2x1x8xf32>
    %303 = tpu.matmul %302, %0, %cst_104 {dimension_numbers = #tpu.dot_dimension_numbers<[2], [2], [1], [1], [0, 0, 0, 1, 1, 1], [0], [0]>} : vector<2x1x32xf32>, vector<2x8x32xf32>, vector<2x1x8xf32> -> vector<2x1x8xf32>
    "tpu.trace_stop"() : () -> ()
    %304 = vector.shape_cast %303 : vector<2x1x8xf32> to vector<2x8xf32>
    %cst_105 = arith.constant dense<0xFF800000> : vector<2xf32>
    %305 = vector.multi_reduction <maximumf>, %304, %cst_105 [1] : vector<2x8xf32> to vector<2xf32>
    %306 = vector.shape_cast %305 : vector<2xf32> to vector<2x1xf32>
    %307 = vector.broadcast %306 : vector<2x1xf32> to vector<2x8xf32>
    %308 = arith.subf %304, %307 : vector<2x8xf32>
    %309 = math.exp %308 : vector<2x8xf32>
    %cst_106 = arith.constant dense<0.000000e+00> : vector<2xf32>
    %310 = vector.multi_reduction <add>, %309, %cst_106 [1] : vector<2x8xf32> to vector<2xf32>
    %311 = vector.shape_cast %310 : vector<2xf32> to vector<2x1xf32>
    %312 = vector.broadcast %311 : vector<2x1xf32> to vector<2x8xf32>
    %313 = arith.divf %309, %312 : vector<2x8xf32>
    %314 = vector.shape_cast %313 : vector<2x8xf32> to vector<2x1x8xf32>
    "tpu.trace_start"() <{level = 10 : i32, message = "bqk,bkd->bqd"}> : () -> ()
    %cst_107 = arith.constant dense<0.000000e+00> : vector<2x1x32xf32>
    %315 = tpu.matmul %314, %0, %cst_107 {dimension_numbers = #tpu.dot_dimension_numbers<[2], [1], [1], [2], [0, 0, 0, 1, 1, 2], [0], [0]>} : vector<2x1x8xf32>, vector<2x8x32xf32>, vector<2x1x32xf32> -> vector<2x1x32xf32>
    "tpu.trace_stop"() : () -> ()
    %316 = vector.shape_cast %315 : vector<2x1x32xf32> to vector<2x32xf32>
    %c32_i32_108 = arith.constant 32 : i32
    %317 = vector.broadcast %c32_i32_108 : i32 to vector<2x1xi32>
    %318 = arith.cmpi sgt, %274, %317 : vector<2x1xi32>
    %c3_i32_109 = arith.constant 3 : i32
    %319 = vector.broadcast %c3_i32_109 : i32 to vector<2x1xi32>
    %320 = arith.select %318, %319, %274 : vector<2x1xi1>, vector<2x1xi32>
    %321 = vector.broadcast %320 : vector<2x1xi32> to vector<2x32xi32>
    %322 = arith.cmpi eq, %11, %321 : vector<2x32xi32>
    %323 = arith.extui %322 : vector<2x32xi1> to vector<2x32xi32>
    %324 = arith.sitofp %323 : vector<2x32xi32> to vector<2x32xf32>
    %cst_110 = arith.constant dense<0.000000e+00> : vector<2x96xf32>
    %325 = tpu.matmul %316, %4, %cst_110 {dimension_numbers = #tpu.dot_dimension_numbers<[1], [0], [0], [1], [0, 0, 1, 1], [], []>} : vector<2x32xf32>, vector<32x96xf32>, vector<2x96xf32> -> vector<2x96xf32>
    %cst_111 = arith.constant dense<0.000000e+00> : vector<2x96xf32>
    %326 = tpu.matmul %292, %5, %cst_111 {dimension_numbers = #tpu.dot_dimension_numbers<[1], [0], [0], [1], [0, 0, 1, 1], [], []>} : vector<2x32xf32>, vector<32x96xf32>, vector<2x96xf32> -> vector<2x96xf32>
    %327 = arith.addf %325, %326 : vector<2x96xf32>
    %cst_112 = arith.constant dense<0.000000e+00> : vector<2x96xf32>
    %328 = tpu.matmul %324, %6, %cst_112 {dimension_numbers = #tpu.dot_dimension_numbers<[1], [0], [0], [1], [0, 0, 1, 1], [], []>} : vector<2x32xf32>, vector<32x96xf32>, vector<2x96xf32> -> vector<2x96xf32>
    %329 = arith.addf %327, %328 : vector<2x96xf32>
    %330 = vector.broadcast %7 : vector<1x96xf32> to vector<2x96xf32>
    %331 = arith.addf %329, %330 : vector<2x96xf32>
    %332 = vector.extract_strided_slice %331 {offsets = [0, 0], sizes = [2, 32], strides = [1, 1]} : vector<2x96xf32> to vector<2x32xf32>
    %333 = vector.extract_strided_slice %301 {offsets = [0, 0], sizes = [2, 32], strides = [1, 1]} : vector<2x96xf32> to vector<2x32xf32>
    %334 = arith.addf %332, %333 : vector<2x32xf32>
    %335 = arith.negf %334 : vector<2x32xf32>
    %336 = math.exp %335 : vector<2x32xf32>
    %cst_113 = arith.constant 1.000000e+00 : f32
    %337 = vector.broadcast %cst_113 : f32 to vector<2x32xf32>
    %338 = arith.addf %337, %336 : vector<2x32xf32>
    %339 = arith.divf %337, %338 : vector<2x32xf32>
    %340 = vector.extract_strided_slice %331 {offsets = [0, 32], sizes = [2, 32], strides = [1, 1]} : vector<2x96xf32> to vector<2x32xf32>
    %341 = vector.extract_strided_slice %301 {offsets = [0, 32], sizes = [2, 32], strides = [1, 1]} : vector<2x96xf32> to vector<2x32xf32>
    %342 = arith.addf %340, %341 : vector<2x32xf32>
    %343 = arith.negf %342 : vector<2x32xf32>
    %344 = math.exp %343 : vector<2x32xf32>
    %cst_114 = arith.constant 1.000000e+00 : f32
    %345 = vector.broadcast %cst_114 : f32 to vector<2x32xf32>
    %346 = arith.addf %345, %344 : vector<2x32xf32>
    %347 = arith.divf %345, %346 : vector<2x32xf32>
    %348 = vector.extract_strided_slice %331 {offsets = [0, 64], sizes = [2, 32], strides = [1, 1]} : vector<2x96xf32> to vector<2x32xf32>
    %349 = vector.extract_strided_slice %301 {offsets = [0, 64], sizes = [2, 32], strides = [1, 1]} : vector<2x96xf32> to vector<2x32xf32>
    %350 = arith.mulf %339, %349 : vector<2x32xf32>
    %351 = arith.addf %348, %350 : vector<2x32xf32>
    %352 = math.tanh %351 : vector<2x32xf32>
    %cst_115 = arith.constant 1.000000e+00 : f32
    %353 = vector.broadcast %cst_115 : f32 to vector<2x32xf32>
    %354 = arith.subf %353, %347 : vector<2x32xf32>
    %355 = arith.mulf %354, %352 : vector<2x32xf32>
    %356 = arith.mulf %347, %229 : vector<2x32xf32>
    %357 = arith.addf %355, %356 : vector<2x32xf32>
    %cst_116 = arith.constant dense<0.000000e+00> : vector<2x72xf32>
    %358 = tpu.matmul %357, %8, %cst_116 {dimension_numbers = #tpu.dot_dimension_numbers<[1], [0], [0], [1], [0, 0, 1, 1], [], []>} : vector<2x32xf32>, vector<32x72xf32>, vector<2x72xf32> -> vector<2x72xf32>
    %359 = vector.broadcast %9 : vector<1x72xf32> to vector<2x72xf32>
    %360 = arith.addf %358, %359 : vector<2x72xf32>
    %361 = vector.extract_strided_slice %360 {offsets = [0, 0], sizes = [2, 32], strides = [1, 1]} : vector<2x72xf32> to vector<2x32xf32>
    %362 = vector.extract_strided_slice %360 {offsets = [0, 32], sizes = [2, 40], strides = [1, 1]} : vector<2x72xf32> to vector<2x40xf32>
    %cst_117 = arith.constant -1.000000e+06 : f32
    %363 = vector.broadcast %cst_117 : f32 to vector<2x40xf32>
    %364 = arith.select %28, %363, %362 : vector<2x40xi1>, vector<2x40xf32>
    %365 = vector.shape_cast %361 : vector<2x32xf32> to vector<2x1x32xf32>
    "tpu.trace_start"() <{level = 10 : i32, message = "bqd,bkd->bqk"}> : () -> ()
    %cst_118 = arith.constant dense<0.000000e+00> : vector<2x1x8xf32>
    %366 = tpu.matmul %365, %0, %cst_118 {dimension_numbers = #tpu.dot_dimension_numbers<[2], [2], [1], [1], [0, 0, 0, 1, 1, 1], [0], [0]>} : vector<2x1x32xf32>, vector<2x8x32xf32>, vector<2x1x8xf32> -> vector<2x1x8xf32>
    "tpu.trace_stop"() : () -> ()
    %367 = vector.shape_cast %366 : vector<2x1x8xf32> to vector<2x8xf32>
    %368 = vector.shape_cast %367 : vector<2x8xf32> to vector<2x1x8xf32>
    "tpu.trace_start"() <{level = 10 : i32, message = "bqk,bkd->bqd"}> : () -> ()
    %cst_119 = arith.constant dense<0.000000e+00> : vector<2x1x40xf32>
    %369 = tpu.matmul %368, %17, %cst_119 {dimension_numbers = #tpu.dot_dimension_numbers<[2], [1], [1], [2], [0, 0, 0, 1, 1, 2], [0], [0]>} : vector<2x1x8xf32>, vector<2x8x40xf32>, vector<2x1x40xf32> -> vector<2x1x40xf32>
    "tpu.trace_stop"() : () -> ()
    %370 = vector.shape_cast %369 : vector<2x1x40xf32> to vector<2x40xf32>
    %cst_120 = arith.constant -1.000000e+06 : f32
    %371 = vector.broadcast %cst_120 : f32 to vector<2x40xf32>
    %372 = arith.select %23, %371, %370 : vector<2x40xi1>, vector<2x40xf32>
    %cst_121 = arith.constant dense<0xFF800000> : vector<2xf32>
    %373 = vector.multi_reduction <maximumf>, %364, %cst_121 [1] : vector<2x40xf32> to vector<2xf32>
    %374 = vector.shape_cast %373 : vector<2xf32> to vector<2x1xf32>
    %cst_122 = arith.constant dense<0xFF800000> : vector<2xf32>
    %375 = vector.multi_reduction <maximumf>, %372, %cst_122 [1] : vector<2x40xf32> to vector<2xf32>
    %376 = vector.shape_cast %375 : vector<2xf32> to vector<2x1xf32>
    %377 = arith.maximumf %374, %376 : vector<2x1xf32>
    %378 = vector.broadcast %377 : vector<2x1xf32> to vector<2x40xf32>
    %379 = arith.subf %364, %378 : vector<2x40xf32>
    %380 = math.exp %379 : vector<2x40xf32>
    %381 = vector.broadcast %377 : vector<2x1xf32> to vector<2x40xf32>
    %382 = arith.subf %372, %381 : vector<2x40xf32>
    %383 = math.exp %382 : vector<2x40xf32>
    %cst_123 = arith.constant dense<0.000000e+00> : vector<2xf32>
    %384 = vector.multi_reduction <add>, %380, %cst_123 [1] : vector<2x40xf32> to vector<2xf32>
    %385 = vector.shape_cast %384 : vector<2xf32> to vector<2x1xf32>
    %cst_124 = arith.constant dense<0.000000e+00> : vector<2xf32>
    %386 = vector.multi_reduction <add>, %383, %cst_124 [1] : vector<2x40xf32> to vector<2xf32>
    %387 = vector.shape_cast %386 : vector<2xf32> to vector<2x1xf32>
    %388 = arith.addf %385, %387 : vector<2x1xf32>
    %389 = arith.addf %380, %383 : vector<2x40xf32>
    %390 = vector.broadcast %388 : vector<2x1xf32> to vector<2x40xf32>
    %391 = arith.divf %389, %390 : vector<2x40xf32>
    %cst_125 = arith.constant 1.000000e-10 : f32
    %392 = vector.broadcast %cst_125 : f32 to vector<2x40xf32>
    %393 = arith.addf %391, %392 : vector<2x40xf32>
    %394 = math.log %393 : vector<2x40xf32>
    %cst_126 = arith.constant dense<0xFF800000> : vector<2xf32>
    %395 = vector.multi_reduction <maximumf>, %394, %cst_126 [1] : vector<2x40xf32> to vector<2xf32>
    %396 = vector.shape_cast %395 : vector<2xf32> to vector<2x1xf32>
    %397 = vector.broadcast %396 : vector<2x1xf32> to vector<2x40xf32>
    %398 = arith.cmpf oeq, %394, %397 : vector<2x40xf32>
    %c40_i32_127 = arith.constant 40 : i32
    %399 = vector.broadcast %c40_i32_127 : i32 to vector<2x40xi32>
    %400 = arith.select %398, %10, %399 : vector<2x40xi1>, vector<2x40xi32>
    %cst_128 = arith.constant dense<2147483647> : vector<2xi32>
    %401 = vector.multi_reduction <minsi>, %400, %cst_128 [1] : vector<2x40xi32> to vector<2xi32>
    %402 = vector.shape_cast %401 : vector<2xi32> to vector<2x1xi32>
    %403 = vector.broadcast %402 : vector<2x1xi32> to vector<2x40xi32>
    %404 = arith.cmpi eq, %10, %403 : vector<2x40xi32>
    %405 = arith.extui %404 : vector<2x40xi1> to vector<2x40xi32>
    %406 = arith.sitofp %405 : vector<2x40xi32> to vector<2x40xf32>
    %407 = vector.shape_cast %406 : vector<2x40xf32> to vector<2x1x40xf32>
    "tpu.trace_start"() <{level = 10 : i32, message = "bqd,bkd->bqk"}> : () -> ()
    %cst_129 = arith.constant dense<0.000000e+00> : vector<2x1x8xf32>
    %408 = tpu.matmul %407, %17, %cst_129 {dimension_numbers = #tpu.dot_dimension_numbers<[2], [2], [1], [1], [0, 0, 0, 1, 1, 1], [0], [0]>} : vector<2x1x40xf32>, vector<2x8x40xf32>, vector<2x1x8xf32> -> vector<2x1x8xf32>
    "tpu.trace_stop"() : () -> ()
    %409 = vector.shape_cast %408 : vector<2x1x8xf32> to vector<2x8xf32>
    %410 = arith.mulf %409, %367 : vector<2x8xf32>
    %411 = math.absf %410 : vector<2x8xf32>
    %cst_130 = arith.constant dense<0.000000e+00> : vector<2xf32>
    %412 = vector.multi_reduction <add>, %411, %cst_130 [1] : vector<2x8xf32> to vector<2xf32>
    %413 = vector.shape_cast %412 : vector<2xf32> to vector<2x1xf32>
    %cst_131 = arith.constant 9.99999996E-13 : f32
    %414 = vector.broadcast %cst_131 : f32 to vector<2x1xf32>
    %415 = arith.maximumf %413, %414 : vector<2x1xf32>
    %416 = vector.broadcast %415 : vector<2x1xf32> to vector<2x8xf32>
    %417 = arith.divf %410, %416 : vector<2x8xf32>
    %418 = vector.shape_cast %417 : vector<2x8xf32> to vector<2x1x8xf32>
    "tpu.trace_start"() <{level = 10 : i32, message = "bqk,bkd->bqd"}> : () -> ()
    %cst_132 = arith.constant dense<0.000000e+00> : vector<2x1x32xf32>
    %419 = tpu.matmul %418, %0, %cst_132 {dimension_numbers = #tpu.dot_dimension_numbers<[2], [1], [1], [2], [0, 0, 0, 1, 1, 2], [0], [0]>} : vector<2x1x8xf32>, vector<2x8x32xf32>, vector<2x1x32xf32> -> vector<2x1x32xf32>
    "tpu.trace_stop"() : () -> ()
    %420 = vector.shape_cast %419 : vector<2x1x32xf32> to vector<2x32xf32>
    %421 = vector.shape_cast %394 : vector<2x40xf32> to vector<2x1x40xf32>
    %c0_133 = arith.constant 0 : index
    %c3 = arith.constant 3 : index
    %c0_134 = arith.constant 0 : index
    %422 = vector.load %arg11[%c0_133, %c3, %c0_134] : memref<2x6x40xf32, #tpu.memory_space<vmem>>, vector<2x1x40xf32>
    tpu.vector_store %arg11[%c0_133, %c3, %c0_134], %421 {strides = array<i32>} : memref<2x6x40xf32, #tpu.memory_space<vmem>>, vector<2x1x40xf32>,
    %423 = vector.shape_cast %402 : vector<2x1xi32> to vector<2x1x1xi32>
    %c0_135 = arith.constant 0 : index
    %c3_136 = arith.constant 3 : index
    %c0_137 = arith.constant 0 : index
    %424 = vector.load %arg12[%c0_135, %c3_136, %c0_137] : memref<2x6x1xi32, #tpu.memory_space<vmem>>, vector<2x1x1xi32>
    tpu.vector_store %arg12[%c0_135, %c3_136, %c0_137], %423 {strides = array<i32>} : memref<2x6x1xi32, #tpu.memory_space<vmem>>, vector<2x1x1xi32>,
    %cst_138 = arith.constant dense<0.000000e+00> : vector<2x128xf32>
    %425 = tpu.matmul %357, %2, %cst_138 {dimension_numbers = #tpu.dot_dimension_numbers<[1], [0], [0], [1], [0, 0, 1, 1], [], []>} : vector<2x32xf32>, vector<32x128xf32>, vector<2x128xf32> -> vector<2x128xf32>
    %426 = vector.broadcast %3 : vector<1x128xf32> to vector<2x128xf32>
    %427 = arith.addf %425, %426 : vector<2x128xf32>
    %428 = vector.extract_strided_slice %427 {offsets = [0, 0], sizes = [2, 32], strides = [1, 1]} : vector<2x128xf32> to vector<2x32xf32>
    %429 = vector.extract_strided_slice %427 {offsets = [0, 32], sizes = [2, 96], strides = [1, 1]} : vector<2x128xf32> to vector<2x96xf32>
    %430 = vector.shape_cast %428 : vector<2x32xf32> to vector<2x1x32xf32>
    "tpu.trace_start"() <{level = 10 : i32, message = "bqd,bkd->bqk"}> : () -> ()
    %cst_139 = arith.constant dense<0.000000e+00> : vector<2x1x8xf32>
    %431 = tpu.matmul %430, %0, %cst_139 {dimension_numbers = #tpu.dot_dimension_numbers<[2], [2], [1], [1], [0, 0, 0, 1, 1, 1], [0], [0]>} : vector<2x1x32xf32>, vector<2x8x32xf32>, vector<2x1x8xf32> -> vector<2x1x8xf32>
    "tpu.trace_stop"() : () -> ()
    %432 = vector.shape_cast %431 : vector<2x1x8xf32> to vector<2x8xf32>
    %cst_140 = arith.constant dense<0xFF800000> : vector<2xf32>
    %433 = vector.multi_reduction <maximumf>, %432, %cst_140 [1] : vector<2x8xf32> to vector<2xf32>
    %434 = vector.shape_cast %433 : vector<2xf32> to vector<2x1xf32>
    %435 = vector.broadcast %434 : vector<2x1xf32> to vector<2x8xf32>
    %436 = arith.subf %432, %435 : vector<2x8xf32>
    %437 = math.exp %436 : vector<2x8xf32>
    %cst_141 = arith.constant dense<0.000000e+00> : vector<2xf32>
    %438 = vector.multi_reduction <add>, %437, %cst_141 [1] : vector<2x8xf32> to vector<2xf32>
    %439 = vector.shape_cast %438 : vector<2xf32> to vector<2x1xf32>
    %440 = vector.broadcast %439 : vector<2x1xf32> to vector<2x8xf32>
    %441 = arith.divf %437, %440 : vector<2x8xf32>
    %442 = vector.shape_cast %441 : vector<2x8xf32> to vector<2x1x8xf32>
    "tpu.trace_start"() <{level = 10 : i32, message = "bqk,bkd->bqd"}> : () -> ()
    %cst_142 = arith.constant dense<0.000000e+00> : vector<2x1x32xf32>
    %443 = tpu.matmul %442, %0, %cst_142 {dimension_numbers = #tpu.dot_dimension_numbers<[2], [1], [1], [2], [0, 0, 0, 1, 1, 2], [0], [0]>} : vector<2x1x8xf32>, vector<2x8x32xf32>, vector<2x1x32xf32> -> vector<2x1x32xf32>
    "tpu.trace_stop"() : () -> ()
    %444 = vector.shape_cast %443 : vector<2x1x32xf32> to vector<2x32xf32>
    %c32_i32_143 = arith.constant 32 : i32
    %445 = vector.broadcast %c32_i32_143 : i32 to vector<2x1xi32>
    %446 = arith.cmpi sgt, %402, %445 : vector<2x1xi32>
    %c3_i32_144 = arith.constant 3 : i32
    %447 = vector.broadcast %c3_i32_144 : i32 to vector<2x1xi32>
    %448 = arith.select %446, %447, %402 : vector<2x1xi1>, vector<2x1xi32>
    %449 = vector.broadcast %448 : vector<2x1xi32> to vector<2x32xi32>
    %450 = arith.cmpi eq, %11, %449 : vector<2x32xi32>
    %451 = arith.extui %450 : vector<2x32xi1> to vector<2x32xi32>
    %452 = arith.sitofp %451 : vector<2x32xi32> to vector<2x32xf32>
    %cst_145 = arith.constant dense<0.000000e+00> : vector<2x96xf32>
    %453 = tpu.matmul %444, %4, %cst_145 {dimension_numbers = #tpu.dot_dimension_numbers<[1], [0], [0], [1], [0, 0, 1, 1], [], []>} : vector<2x32xf32>, vector<32x96xf32>, vector<2x96xf32> -> vector<2x96xf32>
    %cst_146 = arith.constant dense<0.000000e+00> : vector<2x96xf32>
    %454 = tpu.matmul %420, %5, %cst_146 {dimension_numbers = #tpu.dot_dimension_numbers<[1], [0], [0], [1], [0, 0, 1, 1], [], []>} : vector<2x32xf32>, vector<32x96xf32>, vector<2x96xf32> -> vector<2x96xf32>
    %455 = arith.addf %453, %454 : vector<2x96xf32>
    %cst_147 = arith.constant dense<0.000000e+00> : vector<2x96xf32>
    %456 = tpu.matmul %452, %6, %cst_147 {dimension_numbers = #tpu.dot_dimension_numbers<[1], [0], [0], [1], [0, 0, 1, 1], [], []>} : vector<2x32xf32>, vector<32x96xf32>, vector<2x96xf32> -> vector<2x96xf32>
    %457 = arith.addf %455, %456 : vector<2x96xf32>
    %458 = vector.broadcast %7 : vector<1x96xf32> to vector<2x96xf32>
    %459 = arith.addf %457, %458 : vector<2x96xf32>
    %460 = vector.extract_strided_slice %459 {offsets = [0, 0], sizes = [2, 32], strides = [1, 1]} : vector<2x96xf32> to vector<2x32xf32>
    %461 = vector.extract_strided_slice %429 {offsets = [0, 0], sizes = [2, 32], strides = [1, 1]} : vector<2x96xf32> to vector<2x32xf32>
    %462 = arith.addf %460, %461 : vector<2x32xf32>
    %463 = arith.negf %462 : vector<2x32xf32>
    %464 = math.exp %463 : vector<2x32xf32>
    %cst_148 = arith.constant 1.000000e+00 : f32
    %465 = vector.broadcast %cst_148 : f32 to vector<2x32xf32>
    %466 = arith.addf %465, %464 : vector<2x32xf32>
    %467 = arith.divf %465, %466 : vector<2x32xf32>
    %468 = vector.extract_strided_slice %459 {offsets = [0, 32], sizes = [2, 32], strides = [1, 1]} : vector<2x96xf32> to vector<2x32xf32>
    %469 = vector.extract_strided_slice %429 {offsets = [0, 32], sizes = [2, 32], strides = [1, 1]} : vector<2x96xf32> to vector<2x32xf32>
    %470 = arith.addf %468, %469 : vector<2x32xf32>
    %471 = arith.negf %470 : vector<2x32xf32>
    %472 = math.exp %471 : vector<2x32xf32>
    %cst_149 = arith.constant 1.000000e+00 : f32
    %473 = vector.broadcast %cst_149 : f32 to vector<2x32xf32>
    %474 = arith.addf %473, %472 : vector<2x32xf32>
    %475 = arith.divf %473, %474 : vector<2x32xf32>
    %476 = vector.extract_strided_slice %459 {offsets = [0, 64], sizes = [2, 32], strides = [1, 1]} : vector<2x96xf32> to vector<2x32xf32>
    %477 = vector.extract_strided_slice %429 {offsets = [0, 64], sizes = [2, 32], strides = [1, 1]} : vector<2x96xf32> to vector<2x32xf32>
    %478 = arith.mulf %467, %477 : vector<2x32xf32>
    %479 = arith.addf %476, %478 : vector<2x32xf32>
    %480 = math.tanh %479 : vector<2x32xf32>
    %cst_150 = arith.constant 1.000000e+00 : f32
    %481 = vector.broadcast %cst_150 : f32 to vector<2x32xf32>
    %482 = arith.subf %481, %475 : vector<2x32xf32>
    %483 = arith.mulf %482, %480 : vector<2x32xf32>
    %484 = arith.mulf %475, %357 : vector<2x32xf32>
    %485 = arith.addf %483, %484 : vector<2x32xf32>
    %cst_151 = arith.constant dense<0.000000e+00> : vector<2x72xf32>
    %486 = tpu.matmul %485, %8, %cst_151 {dimension_numbers = #tpu.dot_dimension_numbers<[1], [0], [0], [1], [0, 0, 1, 1], [], []>} : vector<2x32xf32>, vector<32x72xf32>, vector<2x72xf32> -> vector<2x72xf32>
    %487 = vector.broadcast %9 : vector<1x72xf32> to vector<2x72xf32>
    %488 = arith.addf %486, %487 : vector<2x72xf32>
    %489 = vector.extract_strided_slice %488 {offsets = [0, 0], sizes = [2, 32], strides = [1, 1]} : vector<2x72xf32> to vector<2x32xf32>
    %490 = vector.extract_strided_slice %488 {offsets = [0, 32], sizes = [2, 40], strides = [1, 1]} : vector<2x72xf32> to vector<2x40xf32>
    %cst_152 = arith.constant -1.000000e+06 : f32
    %491 = vector.broadcast %cst_152 : f32 to vector<2x40xf32>
    %492 = arith.select %28, %491, %490 : vector<2x40xi1>, vector<2x40xf32>
    %493 = vector.shape_cast %489 : vector<2x32xf32> to vector<2x1x32xf32>
    "tpu.trace_start"() <{level = 10 : i32, message = "bqd,bkd->bqk"}> : () -> ()
    %cst_153 = arith.constant dense<0.000000e+00> : vector<2x1x8xf32>
    %494 = tpu.matmul %493, %0, %cst_153 {dimension_numbers = #tpu.dot_dimension_numbers<[2], [2], [1], [1], [0, 0, 0, 1, 1, 1], [0], [0]>} : vector<2x1x32xf32>, vector<2x8x32xf32>, vector<2x1x8xf32> -> vector<2x1x8xf32>
    "tpu.trace_stop"() : () -> ()
    %495 = vector.shape_cast %494 : vector<2x1x8xf32> to vector<2x8xf32>
    %496 = vector.shape_cast %495 : vector<2x8xf32> to vector<2x1x8xf32>
    "tpu.trace_start"() <{level = 10 : i32, message = "bqk,bkd->bqd"}> : () -> ()
    %cst_154 = arith.constant dense<0.000000e+00> : vector<2x1x40xf32>
    %497 = tpu.matmul %496, %17, %cst_154 {dimension_numbers = #tpu.dot_dimension_numbers<[2], [1], [1], [2], [0, 0, 0, 1, 1, 2], [0], [0]>} : vector<2x1x8xf32>, vector<2x8x40xf32>, vector<2x1x40xf32> -> vector<2x1x40xf32>
    "tpu.trace_stop"() : () -> ()
    %498 = vector.shape_cast %497 : vector<2x1x40xf32> to vector<2x40xf32>
    %cst_155 = arith.constant -1.000000e+06 : f32
    %499 = vector.broadcast %cst_155 : f32 to vector<2x40xf32>
    %500 = arith.select %23, %499, %498 : vector<2x40xi1>, vector<2x40xf32>
    %cst_156 = arith.constant dense<0xFF800000> : vector<2xf32>
    %501 = vector.multi_reduction <maximumf>, %492, %cst_156 [1] : vector<2x40xf32> to vector<2xf32>
    %502 = vector.shape_cast %501 : vector<2xf32> to vector<2x1xf32>
    %cst_157 = arith.constant dense<0xFF800000> : vector<2xf32>
    %503 = vector.multi_reduction <maximumf>, %500, %cst_157 [1] : vector<2x40xf32> to vector<2xf32>
    %504 = vector.shape_cast %503 : vector<2xf32> to vector<2x1xf32>
    %505 = arith.maximumf %502, %504 : vector<2x1xf32>
    %506 = vector.broadcast %505 : vector<2x1xf32> to vector<2x40xf32>
    %507 = arith.subf %492, %506 : vector<2x40xf32>
    %508 = math.exp %507 : vector<2x40xf32>
    %509 = vector.broadcast %505 : vector<2x1xf32> to vector<2x40xf32>
    %510 = arith.subf %500, %509 : vector<2x40xf32>
    %511 = math.exp %510 : vector<2x40xf32>
    %cst_158 = arith.constant dense<0.000000e+00> : vector<2xf32>
    %512 = vector.multi_reduction <add>, %508, %cst_158 [1] : vector<2x40xf32> to vector<2xf32>
    %513 = vector.shape_cast %512 : vector<2xf32> to vector<2x1xf32>
    %cst_159 = arith.constant dense<0.000000e+00> : vector<2xf32>
    %514 = vector.multi_reduction <add>, %511, %cst_159 [1] : vector<2x40xf32> to vector<2xf32>
    %515 = vector.shape_cast %514 : vector<2xf32> to vector<2x1xf32>
    %516 = arith.addf %513, %515 : vector<2x1xf32>
    %517 = arith.addf %508, %511 : vector<2x40xf32>
    %518 = vector.broadcast %516 : vector<2x1xf32> to vector<2x40xf32>
    %519 = arith.divf %517, %518 : vector<2x40xf32>
    %cst_160 = arith.constant 1.000000e-10 : f32
    %520 = vector.broadcast %cst_160 : f32 to vector<2x40xf32>
    %521 = arith.addf %519, %520 : vector<2x40xf32>
    %522 = math.log %521 : vector<2x40xf32>
    %cst_161 = arith.constant dense<0xFF800000> : vector<2xf32>
    %523 = vector.multi_reduction <maximumf>, %522, %cst_161 [1] : vector<2x40xf32> to vector<2xf32>
    %524 = vector.shape_cast %523 : vector<2xf32> to vector<2x1xf32>
    %525 = vector.broadcast %524 : vector<2x1xf32> to vector<2x40xf32>
    %526 = arith.cmpf oeq, %522, %525 : vector<2x40xf32>
    %c40_i32_162 = arith.constant 40 : i32
    %527 = vector.broadcast %c40_i32_162 : i32 to vector<2x40xi32>
    %528 = arith.select %526, %10, %527 : vector<2x40xi1>, vector<2x40xi32>
    %cst_163 = arith.constant dense<2147483647> : vector<2xi32>
    %529 = vector.multi_reduction <minsi>, %528, %cst_163 [1] : vector<2x40xi32> to vector<2xi32>
    %530 = vector.shape_cast %529 : vector<2xi32> to vector<2x1xi32>
    %531 = vector.broadcast %530 : vector<2x1xi32> to vector<2x40xi32>
    %532 = arith.cmpi eq, %10, %531 : vector<2x40xi32>
    %533 = arith.extui %532 : vector<2x40xi1> to vector<2x40xi32>
    %534 = arith.sitofp %533 : vector<2x40xi32> to vector<2x40xf32>
    %535 = vector.shape_cast %534 : vector<2x40xf32> to vector<2x1x40xf32>
    "tpu.trace_start"() <{level = 10 : i32, message = "bqd,bkd->bqk"}> : () -> ()
    %cst_164 = arith.constant dense<0.000000e+00> : vector<2x1x8xf32>
    %536 = tpu.matmul %535, %17, %cst_164 {dimension_numbers = #tpu.dot_dimension_numbers<[2], [2], [1], [1], [0, 0, 0, 1, 1, 1], [0], [0]>} : vector<2x1x40xf32>, vector<2x8x40xf32>, vector<2x1x8xf32> -> vector<2x1x8xf32>
    "tpu.trace_stop"() : () -> ()
    %537 = vector.shape_cast %536 : vector<2x1x8xf32> to vector<2x8xf32>
    %538 = arith.mulf %537, %495 : vector<2x8xf32>
    %539 = math.absf %538 : vector<2x8xf32>
    %cst_165 = arith.constant dense<0.000000e+00> : vector<2xf32>
    %540 = vector.multi_reduction <add>, %539, %cst_165 [1] : vector<2x8xf32> to vector<2xf32>
    %541 = vector.shape_cast %540 : vector<2xf32> to vector<2x1xf32>
    %cst_166 = arith.constant 9.99999996E-13 : f32
    %542 = vector.broadcast %cst_166 : f32 to vector<2x1xf32>
    %543 = arith.maximumf %541, %542 : vector<2x1xf32>
    %544 = vector.broadcast %543 : vector<2x1xf32> to vector<2x8xf32>
    %545 = arith.divf %538, %544 : vector<2x8xf32>
    %546 = vector.shape_cast %545 : vector<2x8xf32> to vector<2x1x8xf32>
    "tpu.trace_start"() <{level = 10 : i32, message = "bqk,bkd->bqd"}> : () -> ()
    %cst_167 = arith.constant dense<0.000000e+00> : vector<2x1x32xf32>
    %547 = tpu.matmul %546, %0, %cst_167 {dimension_numbers = #tpu.dot_dimension_numbers<[2], [1], [1], [2], [0, 0, 0, 1, 1, 2], [0], [0]>} : vector<2x1x8xf32>, vector<2x8x32xf32>, vector<2x1x32xf32> -> vector<2x1x32xf32>
    "tpu.trace_stop"() : () -> ()
    %548 = vector.shape_cast %547 : vector<2x1x32xf32> to vector<2x32xf32>
    %549 = vector.shape_cast %522 : vector<2x40xf32> to vector<2x1x40xf32>
    %c0_168 = arith.constant 0 : index
    %c4 = arith.constant 4 : index
    %c0_169 = arith.constant 0 : index
    %550 = vector.load %arg11[%c0_168, %c4, %c0_169] : memref<2x6x40xf32, #tpu.memory_space<vmem>>, vector<2x1x40xf32>
    tpu.vector_store %arg11[%c0_168, %c4, %c0_169], %549 {strides = array<i32>} : memref<2x6x40xf32, #tpu.memory_space<vmem>>, vector<2x1x40xf32>,
    %551 = vector.shape_cast %530 : vector<2x1xi32> to vector<2x1x1xi32>
    %c0_170 = arith.constant 0 : index
    %c4_171 = arith.constant 4 : index
    %c0_172 = arith.constant 0 : index
    %552 = vector.load %arg12[%c0_170, %c4_171, %c0_172] : memref<2x6x1xi32, #tpu.memory_space<vmem>>, vector<2x1x1xi32>
    tpu.vector_store %arg12[%c0_170, %c4_171, %c0_172], %551 {strides = array<i32>} : memref<2x6x1xi32, #tpu.memory_space<vmem>>, vector<2x1x1xi32>,
    %cst_173 = arith.constant dense<0.000000e+00> : vector<2x128xf32>
    %553 = tpu.matmul %485, %2, %cst_173 {dimension_numbers = #tpu.dot_dimension_numbers<[1], [0], [0], [1], [0, 0, 1, 1], [], []>} : vector<2x32xf32>, vector<32x128xf32>, vector<2x128xf32> -> vector<2x128xf32>
    %554 = vector.broadcast %3 : vector<1x128xf32> to vector<2x128xf32>
    %555 = arith.addf %553, %554 : vector<2x128xf32>
    %556 = vector.extract_strided_slice %555 {offsets = [0, 0], sizes = [2, 32], strides = [1, 1]} : vector<2x128xf32> to vector<2x32xf32>
    %557 = vector.extract_strided_slice %555 {offsets = [0, 32], sizes = [2, 96], strides = [1, 1]} : vector<2x128xf32> to vector<2x96xf32>
    %558 = vector.shape_cast %556 : vector<2x32xf32> to vector<2x1x32xf32>
    "tpu.trace_start"() <{level = 10 : i32, message = "bqd,bkd->bqk"}> : () -> ()
    %cst_174 = arith.constant dense<0.000000e+00> : vector<2x1x8xf32>
    %559 = tpu.matmul %558, %0, %cst_174 {dimension_numbers = #tpu.dot_dimension_numbers<[2], [2], [1], [1], [0, 0, 0, 1, 1, 1], [0], [0]>} : vector<2x1x32xf32>, vector<2x8x32xf32>, vector<2x1x8xf32> -> vector<2x1x8xf32>
    "tpu.trace_stop"() : () -> ()
    %560 = vector.shape_cast %559 : vector<2x1x8xf32> to vector<2x8xf32>
    %cst_175 = arith.constant dense<0xFF800000> : vector<2xf32>
    %561 = vector.multi_reduction <maximumf>, %560, %cst_175 [1] : vector<2x8xf32> to vector<2xf32>
    %562 = vector.shape_cast %561 : vector<2xf32> to vector<2x1xf32>
    %563 = vector.broadcast %562 : vector<2x1xf32> to vector<2x8xf32>
    %564 = arith.subf %560, %563 : vector<2x8xf32>
    %565 = math.exp %564 : vector<2x8xf32>
    %cst_176 = arith.constant dense<0.000000e+00> : vector<2xf32>
    %566 = vector.multi_reduction <add>, %565, %cst_176 [1] : vector<2x8xf32> to vector<2xf32>
    %567 = vector.shape_cast %566 : vector<2xf32> to vector<2x1xf32>
    %568 = vector.broadcast %567 : vector<2x1xf32> to vector<2x8xf32>
    %569 = arith.divf %565, %568 : vector<2x8xf32>
    %570 = vector.shape_cast %569 : vector<2x8xf32> to vector<2x1x8xf32>
    "tpu.trace_start"() <{level = 10 : i32, message = "bqk,bkd->bqd"}> : () -> ()
    %cst_177 = arith.constant dense<0.000000e+00> : vector<2x1x32xf32>
    %571 = tpu.matmul %570, %0, %cst_177 {dimension_numbers = #tpu.dot_dimension_numbers<[2], [1], [1], [2], [0, 0, 0, 1, 1, 2], [0], [0]>} : vector<2x1x8xf32>, vector<2x8x32xf32>, vector<2x1x32xf32> -> vector<2x1x32xf32>
    "tpu.trace_stop"() : () -> ()
    %572 = vector.shape_cast %571 : vector<2x1x32xf32> to vector<2x32xf32>
    %c32_i32_178 = arith.constant 32 : i32
    %573 = vector.broadcast %c32_i32_178 : i32 to vector<2x1xi32>
    %574 = arith.cmpi sgt, %530, %573 : vector<2x1xi32>
    %c3_i32_179 = arith.constant 3 : i32
    %575 = vector.broadcast %c3_i32_179 : i32 to vector<2x1xi32>
    %576 = arith.select %574, %575, %530 : vector<2x1xi1>, vector<2x1xi32>
    %577 = vector.broadcast %576 : vector<2x1xi32> to vector<2x32xi32>
    %578 = arith.cmpi eq, %11, %577 : vector<2x32xi32>
    %579 = arith.extui %578 : vector<2x32xi1> to vector<2x32xi32>
    %580 = arith.sitofp %579 : vector<2x32xi32> to vector<2x32xf32>
    %cst_180 = arith.constant dense<0.000000e+00> : vector<2x96xf32>
    %581 = tpu.matmul %572, %4, %cst_180 {dimension_numbers = #tpu.dot_dimension_numbers<[1], [0], [0], [1], [0, 0, 1, 1], [], []>} : vector<2x32xf32>, vector<32x96xf32>, vector<2x96xf32> -> vector<2x96xf32>
    %cst_181 = arith.constant dense<0.000000e+00> : vector<2x96xf32>
    %582 = tpu.matmul %548, %5, %cst_181 {dimension_numbers = #tpu.dot_dimension_numbers<[1], [0], [0], [1], [0, 0, 1, 1], [], []>} : vector<2x32xf32>, vector<32x96xf32>, vector<2x96xf32> -> vector<2x96xf32>
    %583 = arith.addf %581, %582 : vector<2x96xf32>
    %cst_182 = arith.constant dense<0.000000e+00> : vector<2x96xf32>
    %584 = tpu.matmul %580, %6, %cst_182 {dimension_numbers = #tpu.dot_dimension_numbers<[1], [0], [0], [1], [0, 0, 1, 1], [], []>} : vector<2x32xf32>, vector<32x96xf32>, vector<2x96xf32> -> vector<2x96xf32>
    %585 = arith.addf %583, %584 : vector<2x96xf32>
    %586 = vector.broadcast %7 : vector<1x96xf32> to vector<2x96xf32>
    %587 = arith.addf %585, %586 : vector<2x96xf32>
    %588 = vector.extract_strided_slice %587 {offsets = [0, 0], sizes = [2, 32], strides = [1, 1]} : vector<2x96xf32> to vector<2x32xf32>
    %589 = vector.extract_strided_slice %557 {offsets = [0, 0], sizes = [2, 32], strides = [1, 1]} : vector<2x96xf32> to vector<2x32xf32>
    %590 = arith.addf %588, %589 : vector<2x32xf32>
    %591 = arith.negf %590 : vector<2x32xf32>
    %592 = math.exp %591 : vector<2x32xf32>
    %cst_183 = arith.constant 1.000000e+00 : f32
    %593 = vector.broadcast %cst_183 : f32 to vector<2x32xf32>
    %594 = arith.addf %593, %592 : vector<2x32xf32>
    %595 = arith.divf %593, %594 : vector<2x32xf32>
    %596 = vector.extract_strided_slice %587 {offsets = [0, 32], sizes = [2, 32], strides = [1, 1]} : vector<2x96xf32> to vector<2x32xf32>
    %597 = vector.extract_strided_slice %557 {offsets = [0, 32], sizes = [2, 32], strides = [1, 1]} : vector<2x96xf32> to vector<2x32xf32>
    %598 = arith.addf %596, %597 : vector<2x32xf32>
    %599 = arith.negf %598 : vector<2x32xf32>
    %600 = math.exp %599 : vector<2x32xf32>
    %cst_184 = arith.constant 1.000000e+00 : f32
    %601 = vector.broadcast %cst_184 : f32 to vector<2x32xf32>
    %602 = arith.addf %601, %600 : vector<2x32xf32>
    %603 = arith.divf %601, %602 : vector<2x32xf32>
    %604 = vector.extract_strided_slice %587 {offsets = [0, 64], sizes = [2, 32], strides = [1, 1]} : vector<2x96xf32> to vector<2x32xf32>
    %605 = vector.extract_strided_slice %557 {offsets = [0, 64], sizes = [2, 32], strides = [1, 1]} : vector<2x96xf32> to vector<2x32xf32>
    %606 = arith.mulf %595, %605 : vector<2x32xf32>
    %607 = arith.addf %604, %606 : vector<2x32xf32>
    %608 = math.tanh %607 : vector<2x32xf32>
    %cst_185 = arith.constant 1.000000e+00 : f32
    %609 = vector.broadcast %cst_185 : f32 to vector<2x32xf32>
    %610 = arith.subf %609, %603 : vector<2x32xf32>
    %611 = arith.mulf %610, %608 : vector<2x32xf32>
    %612 = arith.mulf %603, %485 : vector<2x32xf32>
    %613 = arith.addf %611, %612 : vector<2x32xf32>
    %cst_186 = arith.constant dense<0.000000e+00> : vector<2x72xf32>
    %614 = tpu.matmul %613, %8, %cst_186 {dimension_numbers = #tpu.dot_dimension_numbers<[1], [0], [0], [1], [0, 0, 1, 1], [], []>} : vector<2x32xf32>, vector<32x72xf32>, vector<2x72xf32> -> vector<2x72xf32>
    %615 = vector.broadcast %9 : vector<1x72xf32> to vector<2x72xf32>
    %616 = arith.addf %614, %615 : vector<2x72xf32>
    %617 = vector.extract_strided_slice %616 {offsets = [0, 0], sizes = [2, 32], strides = [1, 1]} : vector<2x72xf32> to vector<2x32xf32>
    %618 = vector.extract_strided_slice %616 {offsets = [0, 32], sizes = [2, 40], strides = [1, 1]} : vector<2x72xf32> to vector<2x40xf32>
    %cst_187 = arith.constant -1.000000e+06 : f32
    %619 = vector.broadcast %cst_187 : f32 to vector<2x40xf32>
    %620 = arith.select %28, %619, %618 : vector<2x40xi1>, vector<2x40xf32>
    %621 = vector.shape_cast %617 : vector<2x32xf32> to vector<2x1x32xf32>
    "tpu.trace_start"() <{level = 10 : i32, message = "bqd,bkd->bqk"}> : () -> ()
    %cst_188 = arith.constant dense<0.000000e+00> : vector<2x1x8xf32>
    %622 = tpu.matmul %621, %0, %cst_188 {dimension_numbers = #tpu.dot_dimension_numbers<[2], [2], [1], [1], [0, 0, 0, 1, 1, 1], [0], [0]>} : vector<2x1x32xf32>, vector<2x8x32xf32>, vector<2x1x8xf32> -> vector<2x1x8xf32>
    "tpu.trace_stop"() : () -> ()
    %623 = vector.shape_cast %622 : vector<2x1x8xf32> to vector<2x8xf32>
    %624 = vector.shape_cast %623 : vector<2x8xf32> to vector<2x1x8xf32>
    "tpu.trace_start"() <{level = 10 : i32, message = "bqk,bkd->bqd"}> : () -> ()
    %cst_189 = arith.constant dense<0.000000e+00> : vector<2x1x40xf32>
    %625 = tpu.matmul %624, %17, %cst_189 {dimension_numbers = #tpu.dot_dimension_numbers<[2], [1], [1], [2], [0, 0, 0, 1, 1, 2], [0], [0]>} : vector<2x1x8xf32>, vector<2x8x40xf32>, vector<2x1x40xf32> -> vector<2x1x40xf32>
    "tpu.trace_stop"() : () -> ()
    %626 = vector.shape_cast %625 : vector<2x1x40xf32> to vector<2x40xf32>
    %cst_190 = arith.constant -1.000000e+06 : f32
    %627 = vector.broadcast %cst_190 : f32 to vector<2x40xf32>
    %628 = arith.select %23, %627, %626 : vector<2x40xi1>, vector<2x40xf32>
    %cst_191 = arith.constant dense<0xFF800000> : vector<2xf32>
    %629 = vector.multi_reduction <maximumf>, %620, %cst_191 [1] : vector<2x40xf32> to vector<2xf32>
    %630 = vector.shape_cast %629 : vector<2xf32> to vector<2x1xf32>
    %cst_192 = arith.constant dense<0xFF800000> : vector<2xf32>
    %631 = vector.multi_reduction <maximumf>, %628, %cst_192 [1] : vector<2x40xf32> to vector<2xf32>
    %632 = vector.shape_cast %631 : vector<2xf32> to vector<2x1xf32>
    %633 = arith.maximumf %630, %632 : vector<2x1xf32>
    %634 = vector.broadcast %633 : vector<2x1xf32> to vector<2x40xf32>
    %635 = arith.subf %620, %634 : vector<2x40xf32>
    %636 = math.exp %635 : vector<2x40xf32>
    %637 = vector.broadcast %633 : vector<2x1xf32> to vector<2x40xf32>
    %638 = arith.subf %628, %637 : vector<2x40xf32>
    %639 = math.exp %638 : vector<2x40xf32>
    %cst_193 = arith.constant dense<0.000000e+00> : vector<2xf32>
    %640 = vector.multi_reduction <add>, %636, %cst_193 [1] : vector<2x40xf32> to vector<2xf32>
    %641 = vector.shape_cast %640 : vector<2xf32> to vector<2x1xf32>
    %cst_194 = arith.constant dense<0.000000e+00> : vector<2xf32>
    %642 = vector.multi_reduction <add>, %639, %cst_194 [1] : vector<2x40xf32> to vector<2xf32>
    %643 = vector.shape_cast %642 : vector<2xf32> to vector<2x1xf32>
    %644 = arith.addf %641, %643 : vector<2x1xf32>
    %645 = arith.addf %636, %639 : vector<2x40xf32>
    %646 = vector.broadcast %644 : vector<2x1xf32> to vector<2x40xf32>
    %647 = arith.divf %645, %646 : vector<2x40xf32>
    %cst_195 = arith.constant 1.000000e-10 : f32
    %648 = vector.broadcast %cst_195 : f32 to vector<2x40xf32>
    %649 = arith.addf %647, %648 : vector<2x40xf32>
    %650 = math.log %649 : vector<2x40xf32>
    %cst_196 = arith.constant dense<0xFF800000> : vector<2xf32>
    %651 = vector.multi_reduction <maximumf>, %650, %cst_196 [1] : vector<2x40xf32> to vector<2xf32>
    %652 = vector.shape_cast %651 : vector<2xf32> to vector<2x1xf32>
    %653 = vector.broadcast %652 : vector<2x1xf32> to vector<2x40xf32>
    %654 = arith.cmpf oeq, %650, %653 : vector<2x40xf32>
    %c40_i32_197 = arith.constant 40 : i32
    %655 = vector.broadcast %c40_i32_197 : i32 to vector<2x40xi32>
    %656 = arith.select %654, %10, %655 : vector<2x40xi1>, vector<2x40xi32>
    %cst_198 = arith.constant dense<2147483647> : vector<2xi32>
    %657 = vector.multi_reduction <minsi>, %656, %cst_198 [1] : vector<2x40xi32> to vector<2xi32>
    %658 = vector.shape_cast %657 : vector<2xi32> to vector<2x1xi32>
    %659 = vector.shape_cast %650 : vector<2x40xf32> to vector<2x1x40xf32>
    %c0_199 = arith.constant 0 : index
    %c5 = arith.constant 5 : index
    %c0_200 = arith.constant 0 : index
    %660 = vector.load %arg11[%c0_199, %c5, %c0_200] : memref<2x6x40xf32, #tpu.memory_space<vmem>>, vector<2x1x40xf32>
    tpu.vector_store %arg11[%c0_199, %c5, %c0_200], %659 {strides = array<i32>} : memref<2x6x40xf32, #tpu.memory_space<vmem>>, vector<2x1x40xf32>,
    %661 = vector.shape_cast %658 : vector<2x1xi32> to vector<2x1x1xi32>
    %c0_201 = arith.constant 0 : index
    %c5_202 = arith.constant 5 : index
    %c0_203 = arith.constant 0 : index
    %662 = vector.load %arg12[%c0_201, %c5_202, %c0_203] : memref<2x6x1xi32, #tpu.memory_space<vmem>>, vector<2x1x1xi32>
    tpu.vector_store %arg12[%c0_201, %c5_202, %c0_203], %661 {strides = array<i32>} : memref<2x6x1xi32, #tpu.memory_space<vmem>>, vector<2x1x1xi32>,
    return
  }
  func.func @transform_0(%arg0: i32) -> (i32, i32, i32) {
    %c0_i32 = arith.constant 0 : i32
    %c0_i32_0 = arith.constant 0 : i32
    %c0_i32_1 = arith.constant 0 : i32
    %c0_i32_2 = arith.constant 0 : i32
    return %c0_i32, %c0_i32_0, %c0_i32_1 : i32, i32, i32
  }
  func.func @transform_1(%arg0: i32) -> (i32, i32, i32) {
    %c0_i32 = arith.constant 0 : i32
    %c0_i32_0 = arith.constant 0 : i32
    %c0_i32_1 = arith.constant 0 : i32
    %c0_i32_2 = arith.constant 0 : i32
    return %c0_i32, %c0_i32_0, %c0_i32_1 : i32, i32, i32
  }
  func.func @transform_2(%arg0: i32) -> (i32, i32) {
    %c0_i32 = arith.constant 0 : i32
    %c0_i32_0 = arith.constant 0 : i32
    %c0_i32_1 = arith.constant 0 : i32
    return %c0_i32, %c0_i32_0 : i32, i32
  }
  func.func @transform_3(%arg0: i32) -> (i32, i32) {
    %c0_i32 = arith.constant 0 : i32
    %c0_i32_0 = arith.constant 0 : i32
    %c0_i32_1 = arith.constant 0 : i32
    return %c0_i32, %c0_i32_0 : i32, i32
  }
  func.func @transform_4(%arg0: i32) -> (i32, i32) {
    %c0_i32 = arith.constant 0 : i32
    %c0_i32_0 = arith.constant 0 : i32
    %c0_i32_1 = arith.constant 0 : i32
    return %c0_i32, %c0_i32_0 : i32, i32
  }
  func.func @transform_5(%arg0: i32) -> (i32, i32) {
    %c0_i32 = arith.constant 0 : i32
    %c0_i32_0 = arith.constant 0 : i32
    %c0_i32_1 = arith.constant 0 : i32
    return %c0_i32, %c0_i32_0 : i32, i32
  }
  func.func @transform_6(%arg0: i32) -> (i32, i32) {
    %c0_i32 = arith.constant 0 : i32
    %c0_i32_0 = arith.constant 0 : i32
    %c0_i32_1 = arith.constant 0 : i32
    return %c0_i32, %c0_i32_0 : i32, i32
  }
  func.func @transform_7(%arg0: i32) -> (i32, i32) {
    %c0_i32 = arith.constant 0 : i32
    %c0_i32_0 = arith.constant 0 : i32
    %c0_i32_1 = arith.constant 0 : i32
    return %c0_i32, %c0_i32_0 : i32, i32
  }
  func.func @transform_8(%arg0: i32) -> (i32, i32) {
    %c0_i32 = arith.constant 0 : i32
    %c0_i32_0 = arith.constant 0 : i32
    %c0_i32_1 = arith.constant 0 : i32
    return %c0_i32, %c0_i32_0 : i32, i32
  }
  func.func @transform_9(%arg0: i32) -> (i32, i32) {
    %c0_i32 = arith.constant 0 : i32
    %c0_i32_0 = arith.constant 0 : i32
    %c0_i32_1 = arith.constant 0 : i32
    return %c0_i32, %c0_i32_0 : i32, i32
  }
  func.func @transform_10(%arg0: i32) -> (i32, i32, i32) {
    %c0_i32 = arith.constant 0 : i32
    %c0_i32_0 = arith.constant 0 : i32
    %c0_i32_1 = arith.constant 0 : i32
    %c0_i32_2 = arith.constant 0 : i32
    return %c0_i32, %c0_i32_0, %c0_i32_1 : i32, i32, i32
  }
  func.func @transform_11(%arg0: i32) -> (i32, i32, i32) {
    %c0_i32 = arith.constant 0 : i32
    %c0_i32_0 = arith.constant 0 : i32
    %c0_i32_1 = arith.constant 0 : i32
    %c0_i32_2 = arith.constant 0 : i32
    return %c0_i32, %c0_i32_0, %c0_i32_1 : i32, i32, i32
  }
}

</mosaic_0001>

<llo_original>
// kernel: copynet_decode.1
$region0: #{copynet_decode.1}
  #allocation0 [shape = 'u32[]', space=smem, size = 0x4, offset = 0x4, fixed_abs, tag = 'smem constant byte address 0x4 - core index']
  #allocation1 [shape = 'u32[144,128]{1,0:T(1,128)}', space=vmem, size = 0x12000, scoped, tag = 'internal scratch']
  %s0 = inlined_call_operand.vmem [shape: f32[2,8,32], index: 0, kind: input, shape index: {}]
  %s1 = inlined_call_operand.vmem [shape: s32[2,8,1], index: 1, kind: input, shape index: {}]
  %s2 = inlined_call_operand.hbm [shape: f32[32,128], index: 2, kind: input, shape index: {}]
  %s3 = inlined_call_operand.hbm [shape: f32[1,128], index: 3, kind: input, shape index: {}]
  %s4 = inlined_call_operand.hbm [shape: f32[32,96], index: 4, kind: input, shape index: {}]
  %s5 = inlined_call_operand.vmem [shape: f32[32,96], index: 5, kind: input, shape index: {}]
  %s6 = inlined_call_operand.hbm [shape: f32[32,96], index: 6, kind: input, shape index: {}]
  %s7 = inlined_call_operand.hbm [shape: f32[1,96], index: 7, kind: input, shape index: {}]
  %s8 = inlined_call_operand.hbm [shape: f32[32,72], index: 8, kind: input, shape index: {}]
  %s9 = inlined_call_operand.hbm [shape: f32[1,72], index: 9, kind: input, shape index: {}]
  %s10 = inlined_call_operand.vmem [shape: f32[2,6,40], index: 10, kind: output, shape index: {0}]
  %s11 = inlined_call_operand.vmem [shape: s32[2,6,1], index: 11, kind: output, shape index: {1}]
  %12 = xla_tuple %s10, %s11
  %s13 = sld [smem:[#allocation0]]
  $region86: #{copynet_decode.1} parent=0
    _
  %s15 = ssub.s32 1, %s13
  %s16 = scalar_select 0, %s15, %s13
  $region1: #{copynet_decode.1} parent=0
    #allocation2 [shape = 'u8[16384]{0}', space=vmem, size = 0x4000, scoped, tag = 'input window, operand 2, single buffered']
    #allocation3 [shape = 's32[1]{0}', space=sflag, size = 0x4, scoped, tag = 'scoped memory for copynet_decode.1']
    #allocation4 [shape = 'u8[512]{0}', space=vmem, size = 0x400, scoped, tag = 'input window, operand 3, single buffered']
    #allocation5 [shape = 's32[1]{0}', space=sflag, size = 0x4, scoped, tag = 'scoped memory for copynet_decode.1']
    #allocation6 [shape = 'u8[16384]{0}', space=vmem, size = 0x4000, scoped, tag = 'input window, operand 4, single buffered']
    #allocation7 [shape = 'u8[16384]{0}', space=vmem, size = 0x4000, scoped, tag = 'input window, operand 6, single buffered']
    #allocation8 [shape = 's32[1]{0}', space=sflag, size = 0x4, scoped, tag = 'scoped memory for copynet_decode.1']
    #allocation9 [shape = 'u8[512]{0}', space=vmem, size = 0x400, scoped, tag = 'input window, operand 7, single buffered']
    #allocation10 [shape = 'u8[16384]{0}', space=vmem, size = 0x4000, scoped, tag = 'input window, operand 8, single buffered']
    #allocation11 [shape = 's32[1]{0}', space=sflag, size = 0x4, scoped, tag = 'scoped memory for copynet_decode.1']
    #allocation12 [shape = 'u8[512]{0}', space=vmem, size = 0x400, scoped, tag = 'input window, operand 9, single buffered']
    %17 = vsyncpa [#allocation3], 0
    %18 = vsyncpa [#allocation5], 0
    %19 = vsyncpa [#allocation8], 0
    %20 = vsyncpa [#allocation11], 0
    // Predicated region
    $region2: #{copynet_decode.1} parent=1 // pred_check
      _
    $region3: #{copynet_decode.1} parent=1 // pred_check_branch
      %22 = sbr.rel (0) target = $region5
    $region4: #{copynet_decode.1} parent=1 // pred_region
      _
    $region5: #{copynet_decode.1} parent=1 // pred_fallthru
      _
    // Predicated region
    $region6: #{copynet_decode.1} parent=1 // pred_check
      _
    $region7: #{copynet_decode.1} parent=1 // pred_check_branch
      %24 = sbr.rel (0) target = $region9
    $region8: #{copynet_decode.1} parent=1 // pred_region
      _
    $region9: #{copynet_decode.1} parent=1 // pred_fallthru
      _
    // Predicated region
    $region10: #{copynet_decode.1} parent=1 // pred_check
      _
    $region11: #{copynet_decode.1} parent=1 // pred_check_branch
      %26 = sbr.rel (0) target = $region13
    $region12: #{copynet_decode.1} parent=1 // pred_region
      %s28 = ssub.s32 512, 512
      %29 = vsyncadd [#allocation3], %s28
      %s30 = sshll.u32 [#allocation2], 4
      %s31 = int_to_ptr.vmem [resolvable:$true] %s30
      %36 = dma.hbm_to_vmem [thread:$0]  %s2, 512, %s31, [#allocation3], 128, 128, 8
    $region13: #{copynet_decode.1} parent=1 // pred_fallthru
      _
    // Predicated region
    $region14: #{copynet_decode.1} parent=1 // pred_check
      _
    $region15: #{copynet_decode.1} parent=1 // pred_check_branch
      %38 = sbr.rel (0) target = $region17
    $region16: #{copynet_decode.1} parent=1 // pred_region
      %s40 = ssub.s32 16, 16
      %41 = vsyncadd [#allocation5], %s40
      %s43 = sshll.u32 [#allocation4], 4
      %s44 = int_to_ptr.vmem [resolvable:$true] %s43
      %46 = dma.hbm_to_vmem [thread:$0]  %s3, 16, %s44, [#allocation5]
    $region17: #{copynet_decode.1} parent=1 // pred_fallthru
      _
    // Predicated region
    $region18: #{copynet_decode.1} parent=1 // pred_check
      _
    $region19: #{copynet_decode.1} parent=1 // pred_check_branch
      %48 = sbr.rel (0) target = $region21
    $region20: #{copynet_decode.1} parent=1 // pred_region
      %s50 = ssub.s32 512, 512
      %51 = vsyncadd [#allocation5], %s50
      %s52 = sshll.u32 [#allocation6], 4
      %s53 = int_to_ptr.vmem [resolvable:$true] %s52
      %58 = dma.hbm_to_vmem [thread:$0]  %s4, 512, %s53, [#allocation5], 128, 128, 8
    $region21: #{copynet_decode.1} parent=1 // pred_fallthru
      _
    // Predicated region
    $region22: #{copynet_decode.1} parent=1 // pred_check
      _
    $region23: #{copynet_decode.1} parent=1 // pred_check_branch
      %60 = sbr.rel (0) target = $region25
    $region24: #{copynet_decode.1} parent=1 // pred_region
      _
    $region25: #{copynet_decode.1} parent=1 // pred_fallthru
      _
    // Predicated region
    $region26: #{copynet_decode.1} parent=1 // pred_check
      _
    $region27: #{copynet_decode.1} parent=1 // pred_check_branch
      %62 = sbr.rel (0) target = $region29
    $region28: #{copynet_decode.1} parent=1 // pred_region
      %s64 = ssub.s32 512, 512
      %65 = vsyncadd [#allocation8], %s64
      %s66 = sshll.u32 [#allocation7], 4
      %s67 = int_to_ptr.vmem [resolvable:$true] %s66
      %72 = dma.hbm_to_vmem [thread:$0]  %s6, 512, %s67, [#allocation8], 128, 128, 8
    $region29: #{copynet_decode.1} parent=1 // pred_fallthru
      _
    // Predicated region
    $region30: #{copynet_decode.1} parent=1 // pred_check
      _
    $region31: #{copynet_decode.1} parent=1 // pred_check_branch
      %74 = sbr.rel (0) target = $region33
    $region32: #{copynet_decode.1} parent=1 // pred_region
      %s76 = ssub.s32 16, 16
      %77 = vsyncadd [#allocation8], %s76
      %s79 = sshll.u32 [#allocation9], 4
      %s80 = int_to_ptr.vmem [resolvable:$true] %s79
      %82 = dma.hbm_to_vmem [thread:$0]  %s7, 16, %s80, [#allocation8]
    $region33: #{copynet_decode.1} parent=1 // pred_fallthru
      _
    // Predicated region
    $region34: #{copynet_decode.1} parent=1 // pred_check
      _
    $region35: #{copynet_decode.1} parent=1 // pred_check_branch
      %84 = sbr.rel (0) target = $region37
    $region36: #{copynet_decode.1} parent=1 // pred_region
      %s86 = ssub.s32 512, 512
      %87 = vsyncadd [#allocation11], %s86
      %s88 = sshll.u32 [#allocation10], 4
      %s89 = int_to_ptr.vmem [resolvable:$true] %s88
      %94 = dma.hbm_to_vmem [thread:$0]  %s8, 512, %s89, [#allocation11], 128, 128, 8
    $region37: #{copynet_decode.1} parent=1 // pred_fallthru
      _
    // Predicated region
    $region38: #{copynet_decode.1} parent=1 // pred_check
      _
    $region39: #{copynet_decode.1} parent=1 // pred_check_branch
      %96 = sbr.rel (0) target = $region41
    $region40: #{copynet_decode.1} parent=1 // pred_region
      %s98 = ssub.s32 16, 16
      %99 = vsyncadd [#allocation11], %s98
      %s101 = sshll.u32 [#allocation12], 4
      %s102 = int_to_ptr.vmem [resolvable:$true] %s101
      %104 = dma.hbm_to_vmem [thread:$0]  %s9, 16, %s102, [#allocation11]
    $region41: #{copynet_decode.1} parent=1 // pred_fallthru
      _
    // Predicated region
    $region42: #{copynet_decode.1} parent=1 // pred_check
      _
    $region43: #{copynet_decode.1} parent=1 // pred_check_branch
      %106 = sbr.rel (0) target = $region45
    $region44: #{copynet_decode.1} parent=1 // pred_region
      %107 = dma.done [#allocation3], 512
    $region45: #{copynet_decode.1} parent=1 // pred_fallthru
      _
    // Predicated region
    $region46: #{copynet_decode.1} parent=1 // pred_check
      _
    $region47: #{copynet_decode.1} parent=1 // pred_check_branch
      %109 = sbr.rel (0) target = $region49
    $region48: #{copynet_decode.1} parent=1 // pred_region
      %110 = dma.done [#allocation5], 16
    $region49: #{copynet_decode.1} parent=1 // pred_fallthru
      _
    // Predicated region
    $region50: #{copynet_decode.1} parent=1 // pred_check
      _
    $region51: #{copynet_decode.1} parent=1 // pred_check_branch
      %112 = sbr.rel (0) target = $region53
    $region52: #{copynet_decode.1} parent=1 // pred_region
      %113 = dma.done [#allocation5], 512
    $region53: #{copynet_decode.1} parent=1 // pred_fallthru
      _
    // Predicated region
    $region54: #{copynet_decode.1} parent=1 // pred_check
      _
    $region55: #{copynet_decode.1} parent=1 // pred_check_branch
      %115 = sbr.rel (0) target = $region57
    $region56: #{copynet_decode.1} parent=1 // pred_region
      %116 = dma.done [#allocation8], 512
    $region57: #{copynet_decode.1} parent=1 // pred_fallthru
      _
    // Predicated region
    $region58: #{copynet_decode.1} parent=1 // pred_check
      _
    $region59: #{copynet_decode.1} parent=1 // pred_check_branch
      %118 = sbr.rel (0) target = $region61
    $region60: #{copynet_decode.1} parent=1 // pred_region
      %119 = dma.done [#allocation8], 16
    $region61: #{copynet_decode.1} parent=1 // pred_fallthru
      _
    // Predicated region
    $region62: #{copynet_decode.1} parent=1 // pred_check
      _
    $region63: #{copynet_decode.1} parent=1 // pred_check_branch
      %121 = sbr.rel (0) target = $region65
    $region64: #{copynet_decode.1} parent=1 // pred_region
      %122 = dma.done [#allocation11], 512
    $region65: #{copynet_decode.1} parent=1 // pred_fallthru
      _
    // Predicated region
    $region66: #{copynet_decode.1} parent=1 // pred_check
      _
    $region67: #{copynet_decode.1} parent=1 // pred_check_branch
      %124 = sbr.rel (0) target = $region69
    $region68: #{copynet_decode.1} parent=1 // pred_region
      %125 = dma.done [#allocation11], 16
    $region69: #{copynet_decode.1} parent=1 // pred_fallthru
      _
    %v126 = vld [vmem:[%s0] sm:$0xff]
    %v127 = vld [vmem:[%s0 + $0x8] sm:$0xff]
    %v128 = vld [vmem:[%s1] sm:$0xff]
    %v129 = vld [vmem:[%s1 + $0x8] sm:$0xff]
    %v130 = vld [vmem:[#allocation2] sm:$0xff]
    %v131 = vld [vmem:[#allocation2 + $0x8] sm:$0xff]
    %v132 = vld [vmem:[#allocation2 + $0x10] sm:$0xff]
    %v133 = vld [vmem:[#allocation2 + $0x18] sm:$0xff]
    %v134 = vld [vmem:[#allocation4] sm:$0x1]
    %v135 = vld [vmem:[#allocation6] sm:$0xff]
    %v136 = vld [vmem:[#allocation6 + $0x8] sm:$0xff]
    %v137 = vld [vmem:[#allocation6 + $0x10] sm:$0xff]
    %v138 = vld [vmem:[#allocation6 + $0x18] sm:$0xff]
    %v139 = vld [vmem:[%s5] sm:$0xff]
    %v140 = vld [vmem:[%s5 + $0x8] sm:$0xff]
    %v141 = vld [vmem:[%s5 + $0x10] sm:$0xff]
    %v142 = vld [vmem:[%s5 + $0x18] sm:$0xff]
    %v143 = vld [vmem:[#allocation7] sm:$0xff]
    %v144 = vld [vmem:[#allocation7 + $0x8] sm:$0xff]
    %v145 = vld [vmem:[#allocation7 + $0x10] sm:$0xff]
    %v146 = vld [vmem:[#allocation7 + $0x18] sm:$0xff]
    %v147 = vld [vmem:[#allocation9] sm:$0x1]
    %v148 = vld [vmem:[#allocation10] sm:$0xff]
    %v149 = vld [vmem:[#allocation10 + $0x8] sm:$0xff]
    %v150 = vld [vmem:[#allocation10 + $0x10] sm:$0xff]
    %v151 = vld [vmem:[#allocation10 + $0x18] sm:$0xff]
    %v152 = vld [vmem:[#allocation12] sm:$0x1]
    %v153 = vlaneseq
    %v154 = vand.u32 %v153, 127
    %155 = vset.pattern.permute.xlu0 0
    %156 = vperm.xlu0 %155, %v128
    %v157 = vpop.permute.xlu0 %156
    %158 = vset.pattern.permute.xlu0 0
    %159 = vperm.xlu0 %158, %v129
    %v160 = vpop.permute.xlu0 %159
    %vm161 = vcmp.eq.s32.totalorder %v157, %v154
    %vm162 = vcmp.eq.s32.totalorder %v160, %v154
    %v163 = vsel %vm161, 1, 0
    %v164 = vsel %vm162, 1, 0
    %v165 = vcvt.s32.f32 %v163
    %v166 = vcvt.s32.f32 %v164
    %vm167 = vcmask 326656
    %v168 = vsel %vm167, %v165, 0.0
    %v169 = vrot.slane %v168, 4
    %v170 = vadd.f32 %v168, %v169
    %v171 = vrot.slane %v170, 2
    %v172 = vadd.f32 %v170, %v171
    %v173 = vrot.slane %v172, 1
    %v174 = vadd.f32 %v172, %v173
    %v175 = vsel %vm167, %v166, 0.0
    %v176 = vrot.slane %v175, 4
    %v177 = vadd.f32 %v175, %v176
    %v178 = vrot.slane %v177, 2
    %v179 = vadd.f32 %v177, %v178
    %v180 = vrot.slane %v179, 1
    %v181 = vadd.f32 %v179, %v180
    %vm182 = vcmp.eq.f32.partialorder %v174, 0.0
    %vm183 = vcmp.eq.f32.partialorder %v181, 0.0
    %vm184 = vcmp.eq.s32.totalorder %v154, 0
    %vm185 = vmor %vm182, %vm184
    %vm186 = vmor %vm183, %vm184
    %vm187 = vcmp.ge.s32.totalorder %v154, 32
    %vm188 = vmor %vm184, %vm187
    %vm189 = vcmp.eq.s32.totalorder %v154, 1
    %v190 = vsel %vm189, 1.0, 0.0
    %v193 = vunpack.c.l.s4 1966171168
    %v194 = vunpack.c.0.s8 %v193
    %v195 = vlaneseq
    %v196 = vshrl.u32 %v195, 7
    %v197 = vsub.s32 %v194, %v196
    %v198 = vrot.slane %v190, %v197
    %v199 = vcombine.high %v198, %v198
    %v201 = vunpack.c.l.s4 1966171168
    %v202 = vunpack.c.0.s8 %v201
    %v203 = vlaneseq
    %v204 = vshrl.u32 %v203, 7
    %v205 = vsub.s32 %v202, %v204
    %v206 = vrot.slane %v198, %v205
    %v208 = vunpack.c.l.s4 1966171168
    %v209 = vunpack.c.0.s8 %v208
    %v210 = vlaneseq
    %v211 = vshrl.u32 %v210, 7
    %v212 = vsub.s32 %v209, %v211
    %v213 = vrot.slane %v199, %v212
    %vm216 = vcmask 319488
    %217 = vst.msk [vmem:[%s10] sm:$0x1] %vm216, %v206
    %218 = vst.msk [vmem:[%s10 + $0x8] sm:$0x1] %vm216, %v213
    %vm219 = vcmask 0
    %220 = vst.msk [vmem:[%s11] sm:$0x1] %vm219, 1
    %221 = vst.msk [vmem:[%s11 + $0x8] sm:$0x1] %vm219, 1
    %v223 = vlaneseq
    %v224 = vshrl.u32 %v223, 7
    %v225 = vsub.s32 0, %v224
    %v226 = vrot.slane %v134, %v225
    %vm228 = vcmask 261120
    %v230 = vsel %vm228, 0.0, 0
    %232 = vmatprep.subr.mxu0 0.0
    %233 = vmatpush1.msra.mxu0 %v130
    %234 = vmatprep.subr.mxu0 0.0
    %235 = vmatpush1.msra.mxu0 %v131
    %236 = vmatprep.subr.mxu0 0.0
    %237 = vmatpush1.msra.mxu0 %v132
    %238 = vmatprep.subr.mxu0 0.0
    %239 = vmatpush1.msra.mxu0 %v133
    %240 = vmatprep.subr.mxu0 0.0
    %241 = vmatpush1.msra.mxu0 0.0
    %242 = vmatprep.subr.mxu0 0.0
    %243 = vmatpush1.msra.mxu0 0.0
    %244 = vmatprep.subr.mxu0 0.0
    %245 = vmatpush1.msra.mxu0 0.0
    %246 = vmatprep.subr.mxu0 0.0
    %247 = vmatpush1.msra.mxu0 0.0
    %248 = vmatprep.subr.mxu0 0.0
    %249 = vmatpush1.msra.mxu0 0.0
    %250 = vmatprep.subr.mxu0 0.0
    %251 = vmatpush1.msra.mxu0 0.0
    %252 = vmatprep.subr.mxu0 0.0
    %253 = vmatpush1.msra.mxu0 0.0
    %254 = vmatprep.subr.mxu0 0.0
    %255 = vmatpush1.msra.mxu0 0.0
    %256 = vmatprep.subr.mxu0 0.0
    %257 = vmatpush1.msra.mxu0 0.0
    %258 = vmatprep.subr.mxu0 0.0
    %259 = vmatpush1.msra.mxu0 0.0
    %260 = vmatprep.subr.mxu0 0.0
    %261 = vmatpush1.msra.mxu0 0.0
    %262 = vmatprep.subr.mxu0 0.0
    %263 = vmatpush1.msra.mxu0 0.0
    %264 = vmatprep.subr.mxu0 0.0
    %265 = vmatpush1.msra.mxu0 0.0
    %266 = vmatprep.subr.mxu0 0.0
    %267 = vmatpush1.msra.mxu0 0.0
    %268 = vmatprep.subr.mxu0 0.0
    %269 = vmatpush1.msra.mxu0 0.0
    %270 = vmatprep.subr.mxu0 0.0
    %271 = vmatpush1.msra.mxu0 0.0
    %272 = vmatprep.subr.mxu0 0.0
    %273 = vmatpush1.msra.mxu0 0.0
    %274 = vmatprep.subr.mxu0 0.0
    %275 = vmatpush1.msra.mxu0 0.0
    %276 = vmatprep.subr.mxu0 0.0
    %277 = vmatpush1.msra.mxu0 0.0
    %278 = vmatprep.subr.mxu0 0.0
    %279 = vmatpush1.msra.mxu0 0.0
    %280 = vmatprep.subr.mxu0 0.0
    %281 = vmatpush1.msra.mxu0 0.0
    %282 = vmatprep.subr.mxu0 0.0
    %283 = vmatpush1.msra.mxu0 0.0
    %284 = vmatprep.subr.mxu0 0.0
    %285 = vmatpush1.msra.mxu0 0.0
    %286 = vmatprep.subr.mxu0 0.0
    %287 = vmatpush1.msra.mxu0 0.0
    %288 = vmatprep.subr.mxu0 0.0
    %289 = vmatpush1.msra.mxu0 0.0
    %290 = vmatprep.subr.mxu0 0.0
    %291 = vmatpush1.msra.mxu0 0.0
    %292 = vmatprep.subr.mxu0 0.0
    %293 = vmatpush1.msra.mxu0 0.0
    %294 = vmatprep.subr.mxu0 0.0
    %295 = vmatpush1.msra.mxu0 0.0
    %296 = vmatprep.mubr.f32.mxu0 0.0
    %297 = vmatmul.mubr.f32.gmra.mrb[0].mxu0 %v230
    %v298 = vpop.f32.mrb[0].mxu0
    %v299 = vadd.f32 %v226, %v298
    %v300 = vpop.f32.mrb[0].mxu0
    %301 = vdwg.mxu0
    %v304 = vunpack.c.l.s4 1966171168
    %v305 = vunpack.c.0.s8 %v304
    %v306 = vlaneseq
    %v307 = vshrl.u32 %v306, 7
    %v308 = vsub.s32 %v305, %v307
    %v309 = vrot.slane %v299, %v308
    %v310 = vcombine.high %v309, %v309
    %v312 = vunpack.c.l.s4 1966171168
    %v313 = vunpack.c.0.s8 %v312
    %v314 = vlaneseq
    %v315 = vshrl.u32 %v314, 7
    %v316 = vsub.s32 %v313, %v315
    %v317 = vrot.slane %v309, %v316
    %v319 = vunpack.c.l.s4 1966171168
    %v320 = vunpack.c.0.s8 %v319
    %v321 = vlaneseq
    %v322 = vshrl.u32 %v321, 7
    %v323 = vsub.s32 %v320, %v322
    %v324 = vrot.slane %v310, %v323
    %v325 = vsel %vm228, %v317, 0
    %v328 = vsel %vm228, %v126, 0
    %330 = vmatprep.subr.mxu0 0.0
    %331 = vmatpush1.xpose.msra.mxu0 %v328
    %332 = vmatprep.subr.mxu0 0.0
    %333 = vmatpush1.xpose.msra.mxu0 0.0
    %334 = vmatprep.subr.mxu0 0.0
    %335 = vmatpush1.xpose.msra.mxu0 0.0
    %336 = vmatprep.subr.mxu0 0.0
    %337 = vmatpush1.xpose.msra.mxu0 0.0
    %338 = vmatprep.subr.mxu0 0.0
    %339 = vmatpush1.xpose.msra.mxu0 0.0
    %340 = vmatprep.subr.mxu0 0.0
    %341 = vmatpush1.xpose.msra.mxu0 0.0
    %342 = vmatprep.subr.mxu0 0.0
    %343 = vmatpush1.xpose.msra.mxu0 0.0
    %344 = vmatprep.subr.mxu0 0.0
    %345 = vmatpush1.xpose.msra.mxu0 0.0
    %346 = vmatprep.subr.mxu0 0.0
    %347 = vmatpush1.xpose.msra.mxu0 0.0
    %348 = vmatprep.subr.mxu0 0.0
    %349 = vmatpush1.xpose.msra.mxu0 0.0
    %350 = vmatprep.subr.mxu0 0.0
    %351 = vmatpush1.xpose.msra.mxu0 0.0
    %352 = vmatprep.subr.mxu0 0.0
    %353 = vmatpush1.xpose.msra.mxu0 0.0
    %354 = vmatprep.subr.mxu0 0.0
    %355 = vmatpush1.xpose.msra.mxu0 0.0
    %356 = vmatprep.subr.mxu0 0.0
    %357 = vmatpush1.xpose.msra.mxu0 0.0
    %358 = vmatprep.subr.mxu0 0.0
    %359 = vmatpush1.xpose.msra.mxu0 0.0
    %360 = vmatprep.subr.mxu0 0.0
    %361 = vmatpush1.xpose.msra.mxu0 0.0
    %362 = vmatprep.subr.mxu0 0.0
    %363 = vmatpush1.xpose.msra.mxu0 0.0
    %364 = vmatprep.subr.mxu0 0.0
    %365 = vmatpush1.xpose.msra.mxu0 0.0
    %366 = vmatprep.subr.mxu0 0.0
    %367 = vmatpush1.xpose.msra.mxu0 0.0
    %368 = vmatprep.subr.mxu0 0.0
    %369 = vmatpush1.xpose.msra.mxu0 0.0
    %370 = vmatprep.subr.mxu0 0.0
    %371 = vmatpush1.xpose.msra.mxu0 0.0
    %372 = vmatprep.subr.mxu0 0.0
    %373 = vmatpush1.xpose.msra.mxu0 0.0
    %374 = vmatprep.subr.mxu0 0.0
    %375 = vmatpush1.xpose.msra.mxu0 0.0
    %376 = vmatprep.subr.mxu0 0.0
    %377 = vmatpush1.xpose.msra.mxu0 0.0
    %378 = vmatprep.subr.mxu0 0.0
    %379 = vmatpush1.xpose.msra.mxu0 0.0
    %380 = vmatprep.subr.mxu0 0.0
    %381 = vmatpush1.xpose.msra.mxu0 0.0
    %382 = vmatprep.subr.mxu0 0.0
    %383 = vmatpush1.xpose.msra.mxu0 0.0
    %384 = vmatprep.subr.mxu0 0.0
    %385 = vmatpush1.xpose.msra.mxu0 0.0
    %386 = vmatprep.subr.mxu0 0.0
    %387 = vmatpush1.xpose.msra.mxu0 0.0
    %388 = vmatprep.subr.mxu0 0.0
    %389 = vmatpush1.xpose.msra.mxu0 0.0
    %390 = vmatprep.subr.mxu0 0.0
    %391 = vmatpush1.xpose.msra.mxu0 0.0
    %392 = vmatprep.subr.mxu0 0.0
    %393 = vmatpush1.xpose.msra.mxu0 0.0
    %394 = vmatprep.mubr.f32.mxu0 0.0
    %395 = vmatmul.mubr.f32.gmra.mrb[0].mxu0 %v325
    %v396 = vpop.f32.mrb[0].mxu0
    %v397 = vadd.f32 0.0, %v396
    %v398 = vpop.f32.mrb[0].mxu0
    %399 = vdwg.mxu0
    %v400 = vsel %vm228, %v324, 0
    %v403 = vsel %vm228, %v127, 0
    %405 = vmatprep.subr.mxu0 0.0
    %406 = vmatpush1.xpose.msra.mxu0 %v403
    %407 = vmatprep.subr.mxu0 0.0
    %408 = vmatpush1.xpose.msra.mxu0 0.0
    %409 = vmatprep.subr.mxu0 0.0
    %410 = vmatpush1.xpose.msra.mxu0 0.0
    %411 = vmatprep.subr.mxu0 0.0
    %412 = vmatpush1.xpose.msra.mxu0 0.0
    %413 = vmatprep.subr.mxu0 0.0
    %414 = vmatpush1.xpose.msra.mxu0 0.0
    %415 = vmatprep.subr.mxu0 0.0
    %416 = vmatpush1.xpose.msra.mxu0 0.0
    %417 = vmatprep.subr.mxu0 0.0
    %418 = vmatpush1.xpose.msra.mxu0 0.0
    %419 = vmatprep.subr.mxu0 0.0
    %420 = vmatpush1.xpose.msra.mxu0 0.0
    %421 = vmatprep.subr.mxu0 0.0
    %422 = vmatpush1.xpose.msra.mxu0 0.0
    %423 = vmatprep.subr.mxu0 0.0
    %424 = vmatpush1.xpose.msra.mxu0 0.0
    %425 = vmatprep.subr.mxu0 0.0
    %426 = vmatpush1.xpose.msra.mxu0 0.0
    %427 = vmatprep.subr.mxu0 0.0
    %428 = vmatpush1.xpose.msra.mxu0 0.0
    %429 = vmatprep.subr.mxu0 0.0
    %430 = vmatpush1.xpose.msra.mxu0 0.0
    %431 = vmatprep.subr.mxu0 0.0
    %432 = vmatpush1.xpose.msra.mxu0 0.0
    %433 = vmatprep.subr.mxu0 0.0
    %434 = vmatpush1.xpose.msra.mxu0 0.0
    %435 = vmatprep.subr.mxu0 0.0
    %436 = vmatpush1.xpose.msra.mxu0 0.0
    %437 = vmatprep.subr.mxu0 0.0
    %438 = vmatpush1.xpose.msra.mxu0 0.0
    %439 = vmatprep.subr.mxu0 0.0
    %440 = vmatpush1.xpose.msra.mxu0 0.0
    %441 = vmatprep.subr.mxu0 0.0
    %442 = vmatpush1.xpose.msra.mxu0 0.0
    %443 = vmatprep.subr.mxu0 0.0
    %444 = vmatpush1.xpose.msra.mxu0 0.0
    %445 = vmatprep.subr.mxu0 0.0
    %446 = vmatpush1.xpose.msra.mxu0 0.0
    %447 = vmatprep.subr.mxu0 0.0
    %448 = vmatpush1.xpose.msra.mxu0 0.0
    %449 = vmatprep.subr.mxu0 0.0
    %450 = vmatpush1.xpose.msra.mxu0 0.0
    %451 = vmatprep.subr.mxu0 0.0
    %452 = vmatpush1.xpose.msra.mxu0 0.0
    %453 = vmatprep.subr.mxu0 0.0
    %454 = vmatpush1.xpose.msra.mxu0 0.0
    %455 = vmatprep.subr.mxu0 0.0
    %456 = vmatpush1.xpose.msra.mxu0 0.0
    %457 = vmatprep.subr.mxu0 0.0
    %458 = vmatpush1.xpose.msra.mxu0 0.0
    %459 = vmatprep.subr.mxu0 0.0
    %460 = vmatpush1.xpose.msra.mxu0 0.0
    %461 = vmatprep.subr.mxu0 0.0
    %462 = vmatpush1.xpose.msra.mxu0 0.0
    %463 = vmatprep.subr.mxu0 0.0
    %464 = vmatpush1.xpose.msra.mxu0 0.0
    %465 = vmatprep.subr.mxu0 0.0
    %466 = vmatpush1.xpose.msra.mxu0 0.0
    %467 = vmatprep.subr.mxu0 0.0
    %468 = vmatpush1.xpose.msra.mxu0 0.0
    %469 = vmatprep.mubr.f32.mxu0 0.0
    %470 = vmatmul.mubr.f32.gmra.mrb[0].mxu0 %v400
    %v471 = vpop.f32.mrb[0].mxu0
    %v472 = vadd.f32 0.0, %v471
    %v473 = vpop.f32.mrb[0].mxu0
    %474 = vdwg.mxu0
    %v477 = vrot.slane %v472, 7
    %vm478 = vcmask 1041409
    %v479 = vsel %vm478, %v477, %v397
    %vm481 = vcmask 58368
    %v482 = vsel %vm481, %v479, -inf
    %483 = vmax.xlane.f32.xlu0 %v482
    %v484 = vpop.xlane.xlu0 %483
    %v486 = vrot.slane %v484, 1
    %v489 = vsub.f32 %v397, %v484
    %v490 = vsub.f32 %v472, %v486
    %v491 = vmul.f32 %v489, 1.442695
    %v492 = vpow.pop %v491
    %v493 = vmul.f32 %v490, 1.442695
    %v494 = vpow.pop %v493
    %v497 = vrot.slane %v494, 7
    %v498 = vsel %vm478, %v497, %v492
    %v500 = vsel %vm481, %v498, 0.0
    %501 = vadd.xlane.f32.xlu0 %v500
    %v502 = vpop.xlane.xlu0 %501
    %v504 = vrot.slane %v502, 1
    %v507 = vrcp.pop %v502
    %v508 = vmul.f32 %v492, %v507
    %v509 = vrcp.pop %v504
    %v510 = vmul.f32 %v494, %v509
    %vm511 = vcmask 64512
    %v513 = vsel %vm511, %v508, 0
    %515 = vmatprep.subr.mxu0 0.0
    %516 = vmatpush1.msra.mxu0 %v126
    %517 = vmatprep.subr.mxu0 0.0
    %518 = vmatpush1.msra.mxu0 0.0
    %519 = vmatprep.subr.mxu0 0.0
    %520 = vmatpush1.msra.mxu0 0.0
    %521 = vmatprep.subr.mxu0 0.0
    %522 = vmatpush1.msra.mxu0 0.0
    %523 = vmatprep.subr.mxu0 0.0
    %524 = vmatpush1.msra.mxu0 0.0
    %525 = vmatprep.subr.mxu0 0.0
    %526 = vmatpush1.msra.mxu0 0.0
    %527 = vmatprep.subr.mxu0 0.0
    %528 = vmatpush1.msra.mxu0 0.0
    %529 = vmatprep.subr.mxu0 0.0
    %530 = vmatpush1.msra.mxu0 0.0
    %531 = vmatprep.subr.mxu0 0.0
    %532 = vmatpush1.msra.mxu0 0.0
    %533 = vmatprep.subr.mxu0 0.0
    %534 = vmatpush1.msra.mxu0 0.0
    %535 = vmatprep.subr.mxu0 0.0
    %536 = vmatpush1.msra.mxu0 0.0
    %537 = vmatprep.subr.mxu0 0.0
    %538 = vmatpush1.msra.mxu0 0.0
    %539 = vmatprep.subr.mxu0 0.0
    %540 = vmatpush1.msra.mxu0 0.0
    %541 = vmatprep.subr.mxu0 0.0
    %542 = vmatpush1.msra.mxu0 0.0
    %543 = vmatprep.subr.mxu0 0.0
    %544 = vmatpush1.msra.mxu0 0.0
    %545 = vmatprep.subr.mxu0 0.0
    %546 = vmatpush1.msra.mxu0 0.0
    %547 = vmatprep.subr.mxu0 0.0
    %548 = vmatpush1.msra.mxu0 0.0
    %549 = vmatprep.subr.mxu0 0.0
    %550 = vmatpush1.msra.mxu0 0.0
    %551 = vmatprep.subr.mxu0 0.0
    %552 = vmatpush1.msra.mxu0 0.0
    %553 = vmatprep.subr.mxu0 0.0
    %554 = vmatpush1.msra.mxu0 0.0
    %555 = vmatprep.subr.mxu0 0.0
    %556 = vmatpush1.msra.mxu0 0.0
    %557 = vmatprep.subr.mxu0 0.0
    %558 = vmatpush1.msra.mxu0 0.0
    %559 = vmatprep.subr.mxu0 0.0
    %560 = vmatpush1.msra.mxu0 0.0
    %561 = vmatprep.subr.mxu0 0.0
    %562 = vmatpush1.msra.mxu0 0.0
    %563 = vmatprep.subr.mxu0 0.0
    %564 = vmatpush1.msra.mxu0 0.0
    %565 = vmatprep.subr.mxu0 0.0
    %566 = vmatpush1.msra.mxu0 0.0
    %567 = vmatprep.subr.mxu0 0.0
    %568 = vmatpush1.msra.mxu0 0.0
    %569 = vmatprep.subr.mxu0 0.0
    %570 = vmatpush1.msra.mxu0 0.0
    %571 = vmatprep.subr.mxu0 0.0
    %572 = vmatpush1.msra.mxu0 0.0
    %573 = vmatprep.subr.mxu0 0.0
    %574 = vmatpush1.msra.mxu0 0.0
    %575 = vmatprep.subr.mxu0 0.0
    %576 = vmatpush1.msra.mxu0 0.0
    %577 = vmatprep.subr.mxu0 0.0
    %578 = vmatpush1.msra.mxu0 0.0
    %579 = vmatprep.mubr.f32.mxu0 0.0
    %580 = vmatmul.mubr.f32.gmra.mrb[0].mxu0 %v513
    %v581 = vpop.f32.mrb[0].mxu0
    %v582 = vadd.f32 0.0, %v581
    %v583 = vpop.f32.mrb[0].mxu0
    %584 = vdwg.mxu0
    %v586 = vsel %vm511, %v510, 0
    %588 = vmatprep.subr.mxu0 0.0
    %589 = vmatpush1.msra.mxu0 %v127
    %590 = vmatprep.subr.mxu0 0.0
    %591 = vmatpush1.msra.mxu0 0.0
    %592 = vmatprep.subr.mxu0 0.0
    %593 = vmatpush1.msra.mxu0 0.0
    %594 = vmatprep.subr.mxu0 0.0
    %595 = vmatpush1.msra.mxu0 0.0
    %596 = vmatprep.subr.mxu0 0.0
    %597 = vmatpush1.msra.mxu0 0.0
    %598 = vmatprep.subr.mxu0 0.0
    %599 = vmatpush1.msra.mxu0 0.0
    %600 = vmatprep.subr.mxu0 0.0
    %601 = vmatpush1.msra.mxu0 0.0
    %602 = vmatprep.subr.mxu0 0.0
    %603 = vmatpush1.msra.mxu0 0.0
    %604 = vmatprep.subr.mxu0 0.0
    %605 = vmatpush1.msra.mxu0 0.0
    %606 = vmatprep.subr.mxu0 0.0
    %607 = vmatpush1.msra.mxu0 0.0
    %608 = vmatprep.subr.mxu0 0.0
    %609 = vmatpush1.msra.mxu0 0.0
    %610 = vmatprep.subr.mxu0 0.0
    %611 = vmatpush1.msra.mxu0 0.0
    %612 = vmatprep.subr.mxu0 0.0
    %613 = vmatpush1.msra.mxu0 0.0
    %614 = vmatprep.subr.mxu0 0.0
    %615 = vmatpush1.msra.mxu0 0.0
    %616 = vmatprep.subr.mxu0 0.0
    %617 = vmatpush1.msra.mxu0 0.0
    %618 = vmatprep.subr.mxu0 0.0
    %619 = vmatpush1.msra.mxu0 0.0
    %620 = vmatprep.subr.mxu0 0.0
    %621 = vmatpush1.msra.mxu0 0.0
    %622 = vmatprep.subr.mxu0 0.0
    %623 = vmatpush1.msra.mxu0 0.0
    %624 = vmatprep.subr.mxu0 0.0
    %625 = vmatpush1.msra.mxu0 0.0
    %626 = vmatprep.subr.mxu0 0.0
    %627 = vmatpush1.msra.mxu0 0.0
    %628 = vmatprep.subr.mxu0 0.0
    %629 = vmatpush1.msra.mxu0 0.0
    %630 = vmatprep.subr.mxu0 0.0
    %631 = vmatpush1.msra.mxu0 0.0
    %632 = vmatprep.subr.mxu0 0.0
    %633 = vmatpush1.msra.mxu0 0.0
    %634 = vmatprep.subr.mxu0 0.0
    %635 = vmatpush1.msra.mxu0 0.0
    %636 = vmatprep.subr.mxu0 0.0
    %637 = vmatpush1.msra.mxu0 0.0
    %638 = vmatprep.subr.mxu0 0.0
    %639 = vmatpush1.msra.mxu0 0.0
    %640 = vmatprep.subr.mxu0 0.0
    %641 = vmatpush1.msra.mxu0 0.0
    %642 = vmatprep.subr.mxu0 0.0
    %643 = vmatpush1.msra.mxu0 0.0
    %644 = vmatprep.subr.mxu0 0.0
    %645 = vmatpush1.msra.mxu0 0.0
    %646 = vmatprep.subr.mxu0 0.0
    %647 = vmatpush1.msra.mxu0 0.0
    %648 = vmatprep.subr.mxu0 0.0
    %649 = vmatpush1.msra.mxu0 0.0
    %650 = vmatprep.subr.mxu0 0.0
    %651 = vmatpush1.msra.mxu0 0.0
    %652 = vmatprep.mubr.f32.mxu0 0.0
    %653 = vmatmul.mubr.f32.gmra.mrb[0].mxu0 %v586
    %v654 = vpop.f32.mrb[0].mxu0
    %v655 = vadd.f32 0.0, %v654
    %v656 = vpop.f32.mrb[0].mxu0
    %657 = vdwg.mxu0
    %v658 = vsel %vm189, 1, 0
    %v659 = vcvt.s32.f32 %v658
    %660 = vmatprep.subr.mxu0 0.0
    %661 = vmatpush1.msra.mxu0 %v139
    %662 = vmatprep.subr.mxu0 0.0
    %663 = vmatpush1.msra.mxu0 %v140
    %664 = vmatprep.subr.mxu0 0.0
    %665 = vmatpush1.msra.mxu0 %v141
    %666 = vmatprep.subr.mxu0 0.0
    %667 = vmatpush1.msra.mxu0 %v142
    %668 = vmatprep.subr.mxu0 0.0
    %669 = vmatpush1.msra.mxu0 0.0
    %670 = vmatprep.subr.mxu0 0.0
    %671 = vmatpush1.msra.mxu0 0.0
    %672 = vmatprep.subr.mxu0 0.0
    %673 = vmatpush1.msra.mxu0 0.0
    %674 = vmatprep.subr.mxu0 0.0
    %675 = vmatpush1.msra.mxu0 0.0
    %676 = vmatprep.subr.mxu0 0.0
    %677 = vmatpush1.msra.mxu0 0.0
    %678 = vmatprep.subr.mxu0 0.0
    %679 = vmatpush1.msra.mxu0 0.0
    %680 = vmatprep.subr.mxu0 0.0
    %681 = vmatpush1.msra.mxu0 0.0
    %682 = vmatprep.subr.mxu0 0.0
    %683 = vmatpush1.msra.mxu0 0.0
    %684 = vmatprep.subr.mxu0 0.0
    %685 = vmatpush1.msra.mxu0 0.0
    %686 = vmatprep.subr.mxu0 0.0
    %687 = vmatpush1.msra.mxu0 0.0
    %688 = vmatprep.subr.mxu0 0.0
    %689 = vmatpush1.msra.mxu0 0.0
    %690 = vmatprep.subr.mxu0 0.0
    %691 = vmatpush1.msra.mxu0 0.0
    %692 = vmatprep.subr.mxu0 0.0
    %693 = vmatpush1.msra.mxu0 0.0
    %694 = vmatprep.subr.mxu0 0.0
    %695 = vmatpush1.msra.mxu0 0.0
    %696 = vmatprep.subr.mxu0 0.0
    %697 = vmatpush1.msra.mxu0 0.0
    %698 = vmatprep.subr.mxu0 0.0
    %699 = vmatpush1.msra.mxu0 0.0
    %700 = vmatprep.subr.mxu0 0.0
    %701 = vmatpush1.msra.mxu0 0.0
    %702 = vmatprep.subr.mxu0 0.0
    %703 = vmatpush1.msra.mxu0 0.0
    %704 = vmatprep.subr.mxu0 0.0
    %705 = vmatpush1.msra.mxu0 0.0
    %706 = vmatprep.subr.mxu0 0.0
    %707 = vmatpush1.msra.mxu0 0.0
    %708 = vmatprep.subr.mxu0 0.0
    %709 = vmatpush1.msra.mxu0 0.0
    %710 = vmatprep.subr.mxu0 0.0
    %711 = vmatpush1.msra.mxu0 0.0
    %712 = vmatprep.subr.mxu0 0.0
    %713 = vmatpush1.msra.mxu0 0.0
    %714 = vmatprep.subr.mxu0 0.0
    %715 = vmatpush1.msra.mxu0 0.0
    %716 = vmatprep.subr.mxu0 0.0
    %717 = vmatpush1.msra.mxu0 0.0
    %718 = vmatprep.subr.mxu0 0.0
    %719 = vmatpush1.msra.mxu0 0.0
    %720 = vmatprep.subr.mxu0 0.0
    %721 = vmatpush1.msra.mxu0 0.0
    %722 = vmatprep.subr.mxu0 0.0
    %723 = vmatpush1.msra.mxu0 0.0
    %724 = vmatprep.mubr.f32.mxu0 0.0
    %725 = vmatmul.mubr.f32.gmra.mrb[0].mxu0 %v230
    %v726 = vpop.f32.mrb[0].mxu0
    %v727 = vadd.f32 0.0, %v726
    %v728 = vpop.f32.mrb[0].mxu0
    %729 = vdwg.mxu0
    %v732 = vrot.slane %v655, 7
    %v733 = vsel %vm478, %v732, %v582
    %v734 = vsel %vm228, %v733, 0
    %736 = vmatprep.subr.mxu0 0.0
    %737 = vmatpush1.msra.mxu0 %v135
    %738 = vmatprep.subr.mxu0 0.0
    %739 = vmatpush1.msra.mxu0 %v136
    %740 = vmatprep.subr.mxu0 0.0
    %741 = vmatpush1.msra.mxu0 %v137
    %742 = vmatprep.subr.mxu0 0.0
    %743 = vmatpush1.msra.mxu0 %v138
    %744 = vmatprep.subr.mxu0 0.0
    %745 = vmatpush1.msra.mxu0 0.0
    %746 = vmatprep.subr.mxu0 0.0
    %747 = vmatpush1.msra.mxu0 0.0
    %748 = vmatprep.subr.mxu0 0.0
    %749 = vmatpush1.msra.mxu0 0.0
    %750 = vmatprep.subr.mxu0 0.0
    %751 = vmatpush1.msra.mxu0 0.0
    %752 = vmatprep.subr.mxu0 0.0
    %753 = vmatpush1.msra.mxu0 0.0
    %754 = vmatprep.subr.mxu0 0.0
    %755 = vmatpush1.msra.mxu0 0.0
    %756 = vmatprep.subr.mxu0 0.0
    %757 = vmatpush1.msra.mxu0 0.0
    %758 = vmatprep.subr.mxu0 0.0
    %759 = vmatpush1.msra.mxu0 0.0
    %760 = vmatprep.subr.mxu0 0.0
    %761 = vmatpush1.msra.mxu0 0.0
    %762 = vmatprep.subr.mxu0 0.0
    %763 = vmatpush1.msra.mxu0 0.0
    %764 = vmatprep.subr.mxu0 0.0
    %765 = vmatpush1.msra.mxu0 0.0
    %766 = vmatprep.subr.mxu0 0.0
    %767 = vmatpush1.msra.mxu0 0.0
    %768 = vmatprep.subr.mxu0 0.0
    %769 = vmatpush1.msra.mxu0 0.0
    %770 = vmatprep.subr.mxu0 0.0
    %771 = vmatpush1.msra.mxu0 0.0
    %772 = vmatprep.subr.mxu0 0.0
    %773 = vmatpush1.msra.mxu0 0.0
    %774 = vmatprep.subr.mxu0 0.0
    %775 = vmatpush1.msra.mxu0 0.0
    %776 = vmatprep.subr.mxu0 0.0
    %777 = vmatpush1.msra.mxu0 0.0
    %778 = vmatprep.subr.mxu0 0.0
    %779 = vmatpush1.msra.mxu0 0.0
    %780 = vmatprep.subr.mxu0 0.0
    %781 = vmatpush1.msra.mxu0 0.0
    %782 = vmatprep.subr.mxu0 0.0
    %783 = vmatpush1.msra.mxu0 0.0
    %784 = vmatprep.subr.mxu0 0.0
    %785 = vmatpush1.msra.mxu0 0.0
    %786 = vmatprep.subr.mxu0 0.0
    %787 = vmatpush1.msra.mxu0 0.0
    %788 = vmatprep.subr.mxu0 0.0
    %789 = vmatpush1.msra.mxu0 0.0
    %790 = vmatprep.subr.mxu0 0.0
    %791 = vmatpush1.msra.mxu0 0.0
    %792 = vmatprep.subr.mxu0 0.0
    %793 = vmatpush1.msra.mxu0 0.0
    %794 = vmatprep.subr.mxu0 0.0
    %795 = vmatpush1.msra.mxu0 0.0
    %796 = vmatprep.subr.mxu0 0.0
    %797 = vmatpush1.msra.mxu0 0.0
    %798 = vmatprep.subr.mxu0 0.0
    %799 = vmatpush1.msra.mxu0 0.0
    %800 = vmatprep.mubr.f32.mxu0 0.0
    %801 = vmatmul.mubr.f32.gmra.mrb[0].mxu0 %v734
    %v802 = vpop.f32.mrb[0].mxu0
    %v803 = vadd.f32 %v727, %v802
    %v804 = vpop.f32.mrb[0].mxu0
    %805 = vdwg.mxu0
    %v807 = vsel %vm228, %v659, 0
    %809 = vmatprep.subr.mxu0 0.0
    %810 = vmatpush1.msra.mxu0 %v143
    %811 = vmatprep.subr.mxu0 0.0
    %812 = vmatpush1.msra.mxu0 %v144
    %813 = vmatprep.subr.mxu0 0.0
    %814 = vmatpush1.msra.mxu0 %v145
    %815 = vmatprep.subr.mxu0 0.0
    %816 = vmatpush1.msra.mxu0 %v146
    %817 = vmatprep.subr.mxu0 0.0
    %818 = vmatpush1.msra.mxu0 0.0
    %819 = vmatprep.subr.mxu0 0.0
    %820 = vmatpush1.msra.mxu0 0.0
    %821 = vmatprep.subr.mxu0 0.0
    %822 = vmatpush1.msra.mxu0 0.0
    %823 = vmatprep.subr.mxu0 0.0
    %824 = vmatpush1.msra.mxu0 0.0
    %825 = vmatprep.subr.mxu0 0.0
    %826 = vmatpush1.msra.mxu0 0.0
    %827 = vmatprep.subr.mxu0 0.0
    %828 = vmatpush1.msra.mxu0 0.0
    %829 = vmatprep.subr.mxu0 0.0
    %830 = vmatpush1.msra.mxu0 0.0
    %831 = vmatprep.subr.mxu0 0.0
    %832 = vmatpush1.msra.mxu0 0.0
    %833 = vmatprep.subr.mxu0 0.0
    %834 = vmatpush1.msra.mxu0 0.0
    %835 = vmatprep.subr.mxu0 0.0
    %836 = vmatpush1.msra.mxu0 0.0
    %837 = vmatprep.subr.mxu0 0.0
    %838 = vmatpush1.msra.mxu0 0.0
    %839 = vmatprep.subr.mxu0 0.0
    %840 = vmatpush1.msra.mxu0 0.0
    %841 = vmatprep.subr.mxu0 0.0
    %842 = vmatpush1.msra.mxu0 0.0
    %843 = vmatprep.subr.mxu0 0.0
    %844 = vmatpush1.msra.mxu0 0.0
    %845 = vmatprep.subr.mxu0 0.0
    %846 = vmatpush1.msra.mxu0 0.0
    %847 = vmatprep.subr.mxu0 0.0
    %848 = vmatpush1.msra.mxu0 0.0
    %849 = vmatprep.subr.mxu0 0.0
    %850 = vmatpush1.msra.mxu0 0.0
    %851 = vmatprep.subr.mxu0 0.0
    %852 = vmatpush1.msra.mxu0 0.0
    %853 = vmatprep.subr.mxu0 0.0
    %854 = vmatpush1.msra.mxu0 0.0
    %855 = vmatprep.subr.mxu0 0.0
    %856 = vmatpush1.msra.mxu0 0.0
    %857 = vmatprep.subr.mxu0 0.0
    %858 = vmatpush1.msra.mxu0 0.0
    %859 = vmatprep.subr.mxu0 0.0
    %860 = vmatpush1.msra.mxu0 0.0
    %861 = vmatprep.subr.mxu0 0.0
    %862 = vmatpush1.msra.mxu0 0.0
    %863 = vmatprep.subr.mxu0 0.0
    %864 = vmatpush1.msra.mxu0 0.0
    %865 = vmatprep.subr.mxu0 0.0
    %866 = vmatpush1.msra.mxu0 0.0
    %867 = vmatprep.subr.mxu0 0.0
    %868 = vmatpush1.msra.mxu0 0.0
    %869 = vmatprep.subr.mxu0 0.0
    %870 = vmatpush1.msra.mxu0 0.0
    %871 = vmatprep.subr.mxu0 0.0
    %872 = vmatpush1.msra.mxu0 0.0
    %873 = vmatprep.mubr.f32.mxu0 0.0
    %874 = vmatmul.mubr.f32.gmra.mrb[0].mxu0 %v807
    %v875 = vpop.f32.mrb[0].mxu0
    %v876 = vadd.f32 0.0, %v875
    %v877 = vpop.f32.mrb[0].mxu0
    %878 = vdwg.mxu0
    %v879 = vadd.f32 %v803, %v876
    %v881 = vlaneseq
    %v882 = vshrl.u32 %v881, 7
    %v883 = vsub.s32 0, %v882
    %v884 = vrot.slane %v147, %v883
    %v886 = vadd.f32 %v879, %v884
    %887 = vrot.lane.b32.xlu0 %v299, 96
    %v888 = vpop.permute.xlu0 %887
    %v890 = vadd.f32 %v886, %v888
    %v891 = vxor.u32 %v890, 2147483648
    %v892 = vmul.f32 %v891, 1.442695
    %v893 = vpow.pop %v892
    %v894 = vadd.f32 %v893, 1.0
    %v895 = vrcp.pop %v894
    %v896 = vmul.f32 1.0, %v895
    %897 = vrot.lane.b32.xlu0 %v299, 32
    %v898 = vpop.permute.xlu0 %897
    %v900 = vmul.f32 %v896, %v898
    %902 = vrot.lane.b32.xlu0 %v900, 64
    %v903 = vpop.permute.xlu0 %902
    %v905 = vadd.f32 %v886, %v903
    %v906 = vtanh.pop %v905
    %v907 = vsub.f32 1.0, %v896
    %909 = vrot.lane.b32.xlu0 %v906, 96
    %v910 = vpop.permute.xlu0 %909
    %v912 = vmul.f32 %v907, %v910
    %v913 = vmul.f32 %v896, 0.0
    %v914 = vadd.f32 %v912, %v913
    %v916 = vlaneseq
    %v917 = vshrl.u32 %v916, 7
    %v918 = vsub.s32 0, %v917
    %v919 = vrot.slane %v152, %v918
    %922 = vrot.lane.b32.xlu0 %v914, 96
    %v923 = vpop.permute.xlu0 %922
    %v924 = vsel %vm228, %v923, 0
    %926 = vmatprep.subr.mxu0 0.0
    %927 = vmatpush1.msra.mxu0 %v148
    %928 = vmatprep.subr.mxu0 0.0
    %929 = vmatpush1.msra.mxu0 %v149
    %930 = vmatprep.subr.mxu0 0.0
    %931 = vmatpush1.msra.mxu0 %v150
    %932 = vmatprep.subr.mxu0 0.0
    %933 = vmatpush1.msra.mxu0 %v151
    %934 = vmatprep.subr.mxu0 0.0
    %935 = vmatpush1.msra.mxu0 0.0
    %936 = vmatprep.subr.mxu0 0.0
    %937 = vmatpush1.msra.mxu0 0.0
    %938 = vmatprep.subr.mxu0 0.0
    %939 = vmatpush1.msra.mxu0 0.0
    %940 = vmatprep.subr.mxu0 0.0
    %941 = vmatpush1.msra.mxu0 0.0
    %942 = vmatprep.subr.mxu0 0.0
    %943 = vmatpush1.msra.mxu0 0.0
    %944 = vmatprep.subr.mxu0 0.0
    %945 = vmatpush1.msra.mxu0 0.0
    %946 = vmatprep.subr.mxu0 0.0
    %947 = vmatpush1.msra.mxu0 0.0
    %948 = vmatprep.subr.mxu0 0.0
    %949 = vmatpush1.msra.mxu0 0.0
    %950 = vmatprep.subr.mxu0 0.0
    %951 = vmatpush1.msra.mxu0 0.0
    %952 = vmatprep.subr.mxu0 0.0
    %953 = vmatpush1.msra.mxu0 0.0
    %954 = vmatprep.subr.mxu0 0.0
    %955 = vmatpush1.msra.mxu0 0.0
    %956 = vmatprep.subr.mxu0 0.0
    %957 = vmatpush1.msra.mxu0 0.0
    %958 = vmatprep.subr.mxu0 0.0
    %959 = vmatpush1.msra.mxu0 0.0
    %960 = vmatprep.subr.mxu0 0.0
    %961 = vmatpush1.msra.mxu0 0.0
    %962 = vmatprep.subr.mxu0 0.0
    %963 = vmatpush1.msra.mxu0 0.0
    %964 = vmatprep.subr.mxu0 0.0
    %965 = vmatpush1.msra.mxu0 0.0
    %966 = vmatprep.subr.mxu0 0.0
    %967 = vmatpush1.msra.mxu0 0.0
    %968 = vmatprep.subr.mxu0 0.0
    %969 = vmatpush1.msra.mxu0 0.0
    %970 = vmatprep.subr.mxu0 0.0
    %971 = vmatpush1.msra.mxu0 0.0
    %972 = vmatprep.subr.mxu0 0.0
    %973 = vmatpush1.msra.mxu0 0.0
    %974 = vmatprep.subr.mxu0 0.0
    %975 = vmatpush1.msra.mxu0 0.0
    %976 = vmatprep.subr.mxu0 0.0
    %977 = vmatpush1.msra.mxu0 0.0
    %978 = vmatprep.subr.mxu0 0.0
    %979 = vmatpush1.msra.mxu0 0.0
    %980 = vmatprep.subr.mxu0 0.0
    %981 = vmatpush1.msra.mxu0 0.0
    %982 = vmatprep.subr.mxu0 0.0
    %983 = vmatpush1.msra.mxu0 0.0
    %984 = vmatprep.subr.mxu0 0.0
    %985 = vmatpush1.msra.mxu0 0.0
    %986 = vmatprep.subr.mxu0 0.0
    %987 = vmatpush1.msra.mxu0 0.0
    %988 = vmatprep.subr.mxu0 0.0
    %989 = vmatpush1.msra.mxu0 0.0
    %990 = vmatprep.mubr.f32.mxu0 0.0
    %991 = vmatmul.mubr.f32.gmra.mrb[0].mxu0 %v924
    %v992 = vpop.f32.mrb[0].mxu0
    %v993 = vadd.f32 %v919, %v992
    %v994 = vpop.f32.mrb[0].mxu0
    %995 = vdwg.mxu0
    %997 = vrot.lane.b32.xlu0 %v993, 96
    %v998 = vpop.permute.xlu0 %997
    %v1000 = vsel %vm188, -1000000.0, %v998
    %v1002 = vunpack.c.l.s4 1966171168
    %v1003 = vunpack.c.0.s8 %v1002
    %v1004 = vlaneseq
    %v1005 = vshrl.u32 %v1004, 7
    %v1006 = vsub.s32 %v1003, %v1005
    %v1007 = vrot.slane %v993, %v1006
    %v1008 = vcombine.high %v1007, %v1007
    %v1010 = vunpack.c.l.s4 1966171168
    %v1011 = vunpack.c.0.s8 %v1010
    %v1012 = vlaneseq
    %v1013 = vshrl.u32 %v1012, 7
    %v1014 = vsub.s32 %v1011, %v1013
    %v1015 = vrot.slane %v1007, %v1014
    %v1017 = vunpack.c.l.s4 1966171168
    %v1018 = vunpack.c.0.s8 %v1017
    %v1019 = vlaneseq
    %v1020 = vshrl.u32 %v1019, 7
    %v1021 = vsub.s32 %v1018, %v1020
    %v1022 = vrot.slane %v1008, %v1021
    %v1023 = vsel %vm228, %v1015, 0
    %1025 = vmatprep.subr.mxu0 0.0
    %1026 = vmatpush1.xpose.msra.mxu0 %v328
    %1027 = vmatprep.subr.mxu0 0.0
    %1028 = vmatpush1.xpose.msra.mxu0 0.0
    %1029 = vmatprep.subr.mxu0 0.0
    %1030 = vmatpush1.xpose.msra.mxu0 0.0
    %1031 = vmatprep.subr.mxu0 0.0
    %1032 = vmatpush1.xpose.msra.mxu0 0.0
    %1033 = vmatprep.subr.mxu0 0.0
    %1034 = vmatpush1.xpose.msra.mxu0 0.0
    %1035 = vmatprep.subr.mxu0 0.0
    %1036 = vmatpush1.xpose.msra.mxu0 0.0
    %1037 = vmatprep.subr.mxu0 0.0
    %1038 = vmatpush1.xpose.msra.mxu0 0.0
    %1039 = vmatprep.subr.mxu0 0.0
    %1040 = vmatpush1.xpose.msra.mxu0 0.0
    %1041 = vmatprep.subr.mxu0 0.0
    %1042 = vmatpush1.xpose.msra.mxu0 0.0
    %1043 = vmatprep.subr.mxu0 0.0
    %1044 = vmatpush1.xpose.msra.mxu0 0.0
    %1045 = vmatprep.subr.mxu0 0.0
    %1046 = vmatpush1.xpose.msra.mxu0 0.0
    %1047 = vmatprep.subr.mxu0 0.0
    %1048 = vmatpush1.xpose.msra.mxu0 0.0
    %1049 = vmatprep.subr.mxu0 0.0
    %1050 = vmatpush1.xpose.msra.mxu0 0.0
    %1051 = vmatprep.subr.mxu0 0.0
    %1052 = vmatpush1.xpose.msra.mxu0 0.0
    %1053 = vmatprep.subr.mxu0 0.0
    %1054 = vmatpush1.xpose.msra.mxu0 0.0
    %1055 = vmatprep.subr.mxu0 0.0
    %1056 = vmatpush1.xpose.msra.mxu0 0.0
    %1057 = vmatprep.subr.mxu0 0.0
    %1058 = vmatpush1.xpose.msra.mxu0 0.0
    %1059 = vmatprep.subr.mxu0 0.0
    %1060 = vmatpush1.xpose.msra.mxu0 0.0
    %1061 = vmatprep.subr.mxu0 0.0
    %1062 = vmatpush1.xpose.msra.mxu0 0.0
    %1063 = vmatprep.subr.mxu0 0.0
    %1064 = vmatpush1.xpose.msra.mxu0 0.0
    %1065 = vmatprep.subr.mxu0 0.0
    %1066 = vmatpush1.xpose.msra.mxu0 0.0
    %1067 = vmatprep.subr.mxu0 0.0
    %1068 = vmatpush1.xpose.msra.mxu0 0.0
    %1069 = vmatprep.subr.mxu0 0.0
    %1070 = vmatpush1.xpose.msra.mxu0 0.0
    %1071 = vmatprep.subr.mxu0 0.0
    %1072 = vmatpush1.xpose.msra.mxu0 0.0
    %1073 = vmatprep.subr.mxu0 0.0
    %1074 = vmatpush1.xpose.msra.mxu0 0.0
    %1075 = vmatprep.subr.mxu0 0.0
    %1076 = vmatpush1.xpose.msra.mxu0 0.0
    %1077 = vmatprep.subr.mxu0 0.0
    %1078 = vmatpush1.xpose.msra.mxu0 0.0
    %1079 = vmatprep.subr.mxu0 0.0
    %1080 = vmatpush1.xpose.msra.mxu0 0.0
    %1081 = vmatprep.subr.mxu0 0.0
    %1082 = vmatpush1.xpose.msra.mxu0 0.0
    %1083 = vmatprep.subr.mxu0 0.0
    %1084 = vmatpush1.xpose.msra.mxu0 0.0
    %1085 = vmatprep.subr.mxu0 0.0
    %1086 = vmatpush1.xpose.msra.mxu0 0.0
    %1087 = vmatprep.subr.mxu0 0.0
    %1088 = vmatpush1.xpose.msra.mxu0 0.0
    %1089 = vmatprep.mubr.f32.mxu0 0.0
    %1090 = vmatmul.mubr.f32.gmra.mrb[0].mxu0 %v1023
    %v1091 = vpop.f32.mrb[0].mxu0
    %v1092 = vadd.f32 0.0, %v1091
    %v1093 = vpop.f32.mrb[0].mxu0
    %1094 = vdwg.mxu0
    %v1095 = vsel %vm228, %v1022, 0
    %1097 = vmatprep.subr.mxu0 0.0
    %1098 = vmatpush1.xpose.msra.mxu0 %v403
    %1099 = vmatprep.subr.mxu0 0.0
    %1100 = vmatpush1.xpose.msra.mxu0 0.0
    %1101 = vmatprep.subr.mxu0 0.0
    %1102 = vmatpush1.xpose.msra.mxu0 0.0
    %1103 = vmatprep.subr.mxu0 0.0
    %1104 = vmatpush1.xpose.msra.mxu0 0.0
    %1105 = vmatprep.subr.mxu0 0.0
    %1106 = vmatpush1.xpose.msra.mxu0 0.0
    %1107 = vmatprep.subr.mxu0 0.0
    %1108 = vmatpush1.xpose.msra.mxu0 0.0
    %1109 = vmatprep.subr.mxu0 0.0
    %1110 = vmatpush1.xpose.msra.mxu0 0.0
    %1111 = vmatprep.subr.mxu0 0.0
    %1112 = vmatpush1.xpose.msra.mxu0 0.0
    %1113 = vmatprep.subr.mxu0 0.0
    %1114 = vmatpush1.xpose.msra.mxu0 0.0
    %1115 = vmatprep.subr.mxu0 0.0
    %1116 = vmatpush1.xpose.msra.mxu0 0.0
    %1117 = vmatprep.subr.mxu0 0.0
    %1118 = vmatpush1.xpose.msra.mxu0 0.0
    %1119 = vmatprep.subr.mxu0 0.0
    %1120 = vmatpush1.xpose.msra.mxu0 0.0
    %1121 = vmatprep.subr.mxu0 0.0
    %1122 = vmatpush1.xpose.msra.mxu0 0.0
    %1123 = vmatprep.subr.mxu0 0.0
    %1124 = vmatpush1.xpose.msra.mxu0 0.0
    %1125 = vmatprep.subr.mxu0 0.0
    %1126 = vmatpush1.xpose.msra.mxu0 0.0
    %1127 = vmatprep.subr.mxu0 0.0
    %1128 = vmatpush1.xpose.msra.mxu0 0.0
    %1129 = vmatprep.subr.mxu0 0.0
    %1130 = vmatpush1.xpose.msra.mxu0 0.0
    %1131 = vmatprep.subr.mxu0 0.0
    %1132 = vmatpush1.xpose.msra.mxu0 0.0
    %1133 = vmatprep.subr.mxu0 0.0
    %1134 = vmatpush1.xpose.msra.mxu0 0.0
    %1135 = vmatprep.subr.mxu0 0.0
    %1136 = vmatpush1.xpose.msra.mxu0 0.0
    %1137 = vmatprep.subr.mxu0 0.0
    %1138 = vmatpush1.xpose.msra.mxu0 0.0
    %1139 = vmatprep.subr.mxu0 0.0
    %1140 = vmatpush1.xpose.msra.mxu0 0.0
    %1141 = vmatprep.subr.mxu0 0.0
    %1142 = vmatpush1.xpose.msra.mxu0 0.0
    %1143 = vmatprep.subr.mxu0 0.0
    %1144 = vmatpush1.xpose.msra.mxu0 0.0
    %1145 = vmatprep.subr.mxu0 0.0
    %1146 = vmatpush1.xpose.msra.mxu0 0.0
    %1147 = vmatprep.subr.mxu0 0.0
    %1148 = vmatpush1.xpose.msra.mxu0 0.0
    %1149 = vmatprep.subr.mxu0 0.0
    %1150 = vmatpush1.xpose.msra.mxu0 0.0
    %1151 = vmatprep.subr.mxu0 0.0
    %1152 = vmatpush1.xpose.msra.mxu0 0.0
    %1153 = vmatprep.subr.mxu0 0.0
    %1154 = vmatpush1.xpose.msra.mxu0 0.0
    %1155 = vmatprep.subr.mxu0 0.0
    %1156 = vmatpush1.xpose.msra.mxu0 0.0
    %1157 = vmatprep.subr.mxu0 0.0
    %1158 = vmatpush1.xpose.msra.mxu0 0.0
    %1159 = vmatprep.subr.mxu0 0.0
    %1160 = vmatpush1.xpose.msra.mxu0 0.0
    %1161 = vmatprep.mubr.f32.mxu0 0.0
    %1162 = vmatmul.mubr.f32.gmra.mrb[0].mxu0 %v1095
    %v1163 = vpop.f32.mrb[0].mxu0
    %v1164 = vadd.f32 0.0, %v1163
    %v1165 = vpop.f32.mrb[0].mxu0
    %1166 = vdwg.mxu0
    %v1168 = vsel %vm511, %v1092, 0
    %1170 = vmatprep.subr.mxu0 0.0
    %1171 = vmatpush1.msra.mxu0 %v165
    %1172 = vmatprep.subr.mxu0 0.0
    %1173 = vmatpush1.msra.mxu0 0.0
    %1174 = vmatprep.subr.mxu0 0.0
    %1175 = vmatpush1.msra.mxu0 0.0
    %1176 = vmatprep.subr.mxu0 0.0
    %1177 = vmatpush1.msra.mxu0 0.0
    %1178 = vmatprep.subr.mxu0 0.0
    %1179 = vmatpush1.msra.mxu0 0.0
    %1180 = vmatprep.subr.mxu0 0.0
    %1181 = vmatpush1.msra.mxu0 0.0
    %1182 = vmatprep.subr.mxu0 0.0
    %1183 = vmatpush1.msra.mxu0 0.0
    %1184 = vmatprep.subr.mxu0 0.0
    %1185 = vmatpush1.msra.mxu0 0.0
    %1186 = vmatprep.subr.mxu0 0.0
    %1187 = vmatpush1.msra.mxu0 0.0
    %1188 = vmatprep.subr.mxu0 0.0
    %1189 = vmatpush1.msra.mxu0 0.0
    %1190 = vmatprep.subr.mxu0 0.0
    %1191 = vmatpush1.msra.mxu0 0.0
    %1192 = vmatprep.subr.mxu0 0.0
    %1193 = vmatpush1.msra.mxu0 0.0
    %1194 = vmatprep.subr.mxu0 0.0
    %1195 = vmatpush1.msra.mxu0 0.0
    %1196 = vmatprep.subr.mxu0 0.0
    %1197 = vmatpush1.msra.mxu0 0.0
    %1198 = vmatprep.subr.mxu0 0.0
    %1199 = vmatpush1.msra.mxu0 0.0
    %1200 = vmatprep.subr.mxu0 0.0
    %1201 = vmatpush1.msra.mxu0 0.0
    %1202 = vmatprep.subr.mxu0 0.0
    %1203 = vmatpush1.msra.mxu0 0.0
    %1204 = vmatprep.subr.mxu0 0.0
    %1205 = vmatpush1.msra.mxu0 0.0
    %1206 = vmatprep.subr.mxu0 0.0
    %1207 = vmatpush1.msra.mxu0 0.0
    %1208 = vmatprep.subr.mxu0 0.0
    %1209 = vmatpush1.msra.mxu0 0.0
    %1210 = vmatprep.subr.mxu0 0.0
    %1211 = vmatpush1.msra.mxu0 0.0
    %1212 = vmatprep.subr.mxu0 0.0
    %1213 = vmatpush1.msra.mxu0 0.0
    %1214 = vmatprep.subr.mxu0 0.0
    %1215 = vmatpush1.msra.mxu0 0.0
    %1216 = vmatprep.subr.mxu0 0.0
    %1217 = vmatpush1.msra.mxu0 0.0
    %1218 = vmatprep.subr.mxu0 0.0
    %1219 = vmatpush1.msra.mxu0 0.0
    %1220 = vmatprep.subr.mxu0 0.0
    %1221 = vmatpush1.msra.mxu0 0.0
    %1222 = vmatprep.subr.mxu0 0.0
    %1223 = vmatpush1.msra.mxu0 0.0
    %1224 = vmatprep.subr.mxu0 0.0
    %1225 = vmatpush1.msra.mxu0 0.0
    %1226 = vmatprep.subr.mxu0 0.0
    %1227 = vmatpush1.msra.mxu0 0.0
    %1228 = vmatprep.subr.mxu0 0.0
    %1229 = vmatpush1.msra.mxu0 0.0
    %1230 = vmatprep.subr.mxu0 0.0
    %1231 = vmatpush1.msra.mxu0 0.0
    %1232 = vmatprep.subr.mxu0 0.0
    %1233 = vmatpush1.msra.mxu0 0.0
    %1234 = vmatprep.mubr.f32.mxu0 0.0
    %1235 = vmatmul.mubr.f32.gmra.mrb[0].mxu0 %v1168
    %v1236 = vpop.f32.mrb[0].mxu0
    %v1237 = vadd.f32 0.0, %v1236
    %v1238 = vpop.f32.mrb[0].mxu0
    %1239 = vdwg.mxu0
    %v1241 = vsel %vm511, %v1164, 0
    %1243 = vmatprep.subr.mxu0 0.0
    %1244 = vmatpush1.msra.mxu0 %v166
    %1245 = vmatprep.subr.mxu0 0.0
    %1246 = vmatpush1.msra.mxu0 0.0
    %1247 = vmatprep.subr.mxu0 0.0
    %1248 = vmatpush1.msra.mxu0 0.0
    %1249 = vmatprep.subr.mxu0 0.0
    %1250 = vmatpush1.msra.mxu0 0.0
    %1251 = vmatprep.subr.mxu0 0.0
    %1252 = vmatpush1.msra.mxu0 0.0
    %1253 = vmatprep.subr.mxu0 0.0
    %1254 = vmatpush1.msra.mxu0 0.0
    %1255 = vmatprep.subr.mxu0 0.0
    %1256 = vmatpush1.msra.mxu0 0.0
    %1257 = vmatprep.subr.mxu0 0.0
    %1258 = vmatpush1.msra.mxu0 0.0
    %1259 = vmatprep.subr.mxu0 0.0
    %1260 = vmatpush1.msra.mxu0 0.0
    %1261 = vmatprep.subr.mxu0 0.0
    %1262 = vmatpush1.msra.mxu0 0.0
    %1263 = vmatprep.subr.mxu0 0.0
    %1264 = vmatpush1.msra.mxu0 0.0
    %1265 = vmatprep.subr.mxu0 0.0
    %1266 = vmatpush1.msra.mxu0 0.0
    %1267 = vmatprep.subr.mxu0 0.0
    %1268 = vmatpush1.msra.mxu0 0.0
    %1269 = vmatprep.subr.mxu0 0.0
    %1270 = vmatpush1.msra.mxu0 0.0
    %1271 = vmatprep.subr.mxu0 0.0
    %1272 = vmatpush1.msra.mxu0 0.0
    %1273 = vmatprep.subr.mxu0 0.0
    %1274 = vmatpush1.msra.mxu0 0.0
    %1275 = vmatprep.subr.mxu0 0.0
    %1276 = vmatpush1.msra.mxu0 0.0
    %1277 = vmatprep.subr.mxu0 0.0
    %1278 = vmatpush1.msra.mxu0 0.0
    %1279 = vmatprep.subr.mxu0 0.0
    %1280 = vmatpush1.msra.mxu0 0.0
    %1281 = vmatprep.subr.mxu0 0.0
    %1282 = vmatpush1.msra.mxu0 0.0
    %1283 = vmatprep.subr.mxu0 0.0
    %1284 = vmatpush1.msra.mxu0 0.0
    %1285 = vmatprep.subr.mxu0 0.0
    %1286 = vmatpush1.msra.mxu0 0.0
    %1287 = vmatprep.subr.mxu0 0.0
    %1288 = vmatpush1.msra.mxu0 0.0
    %1289 = vmatprep.subr.mxu0 0.0
    %1290 = vmatpush1.msra.mxu0 0.0
    %1291 = vmatprep.subr.mxu0 0.0
    %1292 = vmatpush1.msra.mxu0 0.0
    %1293 = vmatprep.subr.mxu0 0.0
    %1294 = vmatpush1.msra.mxu0 0.0
    %1295 = vmatprep.subr.mxu0 0.0
    %1296 = vmatpush1.msra.mxu0 0.0
    %1297 = vmatprep.subr.mxu0 0.0
    %1298 = vmatpush1.msra.mxu0 0.0
    %1299 = vmatprep.subr.mxu0 0.0
    %1300 = vmatpush1.msra.mxu0 0.0
    %1301 = vmatprep.subr.mxu0 0.0
    %1302 = vmatpush1.msra.mxu0 0.0
    %1303 = vmatprep.subr.mxu0 0.0
    %1304 = vmatpush1.msra.mxu0 0.0
    %1305 = vmatprep.subr.mxu0 0.0
    %1306 = vmatpush1.msra.mxu0 0.0
    %1307 = vmatprep.mubr.f32.mxu0 0.0
    %1308 = vmatmul.mubr.f32.gmra.mrb[0].mxu0 %v1241
    %v1309 = vpop.f32.mrb[0].mxu0
    %v1310 = vadd.f32 0.0, %v1309
    %v1311 = vpop.f32.mrb[0].mxu0
    %1312 = vdwg.mxu0
    %v1313 = vsel %vm185, -1000000.0, %v1237
    %v1314 = vsel %vm186, -1000000.0, %v1310
    %vm1315 = vcmask 320512
    %v1316 = vsel %vm1315, %v1000, -inf
    %1317 = vmax.xlane.f32.xlu0 %v1316
    %v1318 = vpop.xlane.xlu0 %1317
    %v1321 = vrot.slane %v1314, 7
    %v1322 = vsel %vm478, %v1321, %v1313
    %v1324 = vsel %vm1315, %v1322, -inf
    %1325 = vmax.xlane.f32.xlu0 %v1324
    %v1326 = vpop.xlane.xlu0 %1325
    %v1327 = vmax.f32 %v1318, %v1326
    %v1328 = vsub.f32 %v1000, %v1327
    %v1329 = vmul.f32 %v1328, 1.442695
    %v1330 = vpow.pop %v1329
    %v1332 = vrot.slane %v1327, 1
    %v1335 = vsub.f32 %v1313, %v1327
    %v1336 = vsub.f32 %v1314, %v1332
    %v1337 = vmul.f32 %v1335, 1.442695
    %v1338 = vpow.pop %v1337
    %v1339 = vmul.f32 %v1336, 1.442695
    %v1340 = vpow.pop %v1339
    %v1341 = vsel %vm1315, %v1330, 0.0
    %1342 = vadd.xlane.f32.xlu0 %v1341
    %v1343 = vpop.xlane.xlu0 %1342
    %v1346 = vrot.slane %v1340, 7
    %v1347 = vsel %vm478, %v1346, %v1338
    %v1349 = vsel %vm1315, %v1347, 0.0
    %1350 = vadd.xlane.f32.xlu0 %v1349
    %v1351 = vpop.xlane.xlu0 %1350
    %v1352 = vadd.f32 %v1343, %v1351
    %v1353 = vadd.f32 %v1330, %v1347
    %v1354 = vrcp.pop %v1352
    %v1355 = vmul.f32 %v1353, %v1354
    %v1356 = vadd.f32 %v1355, 1e-10
    %v1357 = vlog2.pop %v1356
    %v1358 = vmul.f32 %v1357, 0.6931472
    %v1359 = vsel %vm1315, %v1358, -inf
    %1360 = vmax.xlane.f32.xlu0 %v1359
    %v1361 = vpop.xlane.xlu0 %1360
    %vm1362 = vcmp.eq.f32.partialorder %v1358, %v1361
    %v1363 = vsel %vm1362, %v154, 40
    %v1364 = vsel %vm1315, %v1363, 2147483647
    %v1365 = vand.u32 %v1364, 65535
    %v1366 = vshra.s32 %v1364, 16
    %v1367 = vcvt.s32.f32 %v1365
    %v1368 = vcvt.s32.f32 %v1366
    %1369 = vmin.xlane.f32.xlu0 %v1368
    %v1370 = vpop.xlane.xlu0 %1369
    %vm1371 = vcmp.eq.f32.partialorder %v1368, %v1370
    %v1372 = vsel %vm1371, %v1367, inf
    %1373 = vmin.xlane.f32.xlu0 %v1372
    %v1374 = vpop.xlane.xlu0 %1373
    %v1375 = vcvt.f32.s32 %v1374
    %v1376 = vcvt.f32.s32 %v1370
    %v1377 = vshll.u32 %v1376, 16
    %v1378 = vadd.s32 %v1377, %v1375
    %vm1379 = vcmp.eq.s32.totalorder %v154, %v1378
    %v1380 = vsel %vm1379, 1, 0
    %v1381 = vcvt.s32.f32 %v1380
    %v1384 = vunpack.c.l.s4 1966171168
    %v1385 = vunpack.c.0.s8 %v1384
    %v1386 = vlaneseq
    %v1387 = vshrl.u32 %v1386, 7
    %v1388 = vsub.s32 %v1385, %v1387
    %v1389 = vrot.slane %v1381, %v1388
    %v1390 = vcombine.high %v1389, %v1389
    %v1392 = vunpack.c.l.s4 1966171168
    %v1393 = vunpack.c.0.s8 %v1392
    %v1394 = vlaneseq
    %v1395 = vshrl.u32 %v1394, 7
    %v1396 = vsub.s32 %v1393, %v1395
    %v1397 = vrot.slane %v1389, %v1396
    %v1399 = vunpack.c.l.s4 1966171168
    %v1400 = vunpack.c.0.s8 %v1399
    %v1401 = vlaneseq
    %v1402 = vshrl.u32 %v1401, 7
    %v1403 = vsub.s32 %v1400, %v1402
    %v1404 = vrot.slane %v1390, %v1403
    %v1405 = vsel %vm167, %v1397, 0
    %v1408 = vsel %vm167, %v165, 0
    %1410 = vmatprep.subr.mxu0 0.0
    %1411 = vmatpush1.xpose.msra.mxu0 %v1408
    %1412 = vmatprep.subr.mxu0 0.0
    %1413 = vmatpush1.xpose.msra.mxu0 0.0
    %1414 = vmatprep.subr.mxu0 0.0
    %1415 = vmatpush1.xpose.msra.mxu0 0.0
    %1416 = vmatprep.subr.mxu0 0.0
    %1417 = vmatpush1.xpose.msra.mxu0 0.0
    %1418 = vmatprep.subr.mxu0 0.0
    %1419 = vmatpush1.xpose.msra.mxu0 0.0
    %1420 = vmatprep.subr.mxu0 0.0
    %1421 = vmatpush1.xpose.msra.mxu0 0.0
    %1422 = vmatprep.subr.mxu0 0.0
    %1423 = vmatpush1.xpose.msra.mxu0 0.0
    %1424 = vmatprep.subr.mxu0 0.0
    %1425 = vmatpush1.xpose.msra.mxu0 0.0
    %1426 = vmatprep.subr.mxu0 0.0
    %1427 = vmatpush1.xpose.msra.mxu0 0.0
    %1428 = vmatprep.subr.mxu0 0.0
    %1429 = vmatpush1.xpose.msra.mxu0 0.0
    %1430 = vmatprep.subr.mxu0 0.0
    %1431 = vmatpush1.xpose.msra.mxu0 0.0
    %1432 = vmatprep.subr.mxu0 0.0
    %1433 = vmatpush1.xpose.msra.mxu0 0.0
    %1434 = vmatprep.subr.mxu0 0.0
    %1435 = vmatpush1.xpose.msra.mxu0 0.0
    %1436 = vmatprep.subr.mxu0 0.0
    %1437 = vmatpush1.xpose.msra.mxu0 0.0
    %1438 = vmatprep.subr.mxu0 0.0
    %1439 = vmatpush1.xpose.msra.mxu0 0.0
    %1440 = vmatprep.subr.mxu0 0.0
    %1441 = vmatpush1.xpose.msra.mxu0 0.0
    %1442 = vmatprep.subr.mxu0 0.0
    %1443 = vmatpush1.xpose.msra.mxu0 0.0
    %1444 = vmatprep.subr.mxu0 0.0
    %1445 = vmatpush1.xpose.msra.mxu0 0.0
    %1446 = vmatprep.subr.mxu0 0.0
    %1447 = vmatpush1.xpose.msra.mxu0 0.0
    %1448 = vmatprep.subr.mxu0 0.0
    %1449 = vmatpush1.xpose.msra.mxu0 0.0
    %1450 = vmatprep.subr.mxu0 0.0
    %1451 = vmatpush1.xpose.msra.mxu0 0.0
    %1452 = vmatprep.subr.mxu0 0.0
    %1453 = vmatpush1.xpose.msra.mxu0 0.0
    %1454 = vmatprep.subr.mxu0 0.0
    %1455 = vmatpush1.xpose.msra.mxu0 0.0
    %1456 = vmatprep.subr.mxu0 0.0
    %1457 = vmatpush1.xpose.msra.mxu0 0.0
    %1458 = vmatprep.subr.mxu0 0.0
    %1459 = vmatpush1.xpose.msra.mxu0 0.0
    %1460 = vmatprep.subr.mxu0 0.0
    %1461 = vmatpush1.xpose.msra.mxu0 0.0
    %1462 = vmatprep.subr.mxu0 0.0
    %1463 = vmatpush1.xpose.msra.mxu0 0.0
    %1464 = vmatprep.subr.mxu0 0.0
    %1465 = vmatpush1.xpose.msra.mxu0 0.0
    %1466 = vmatprep.subr.mxu0 0.0
    %1467 = vmatpush1.xpose.msra.mxu0 0.0
    %1468 = vmatprep.subr.mxu0 0.0
    %1469 = vmatpush1.xpose.msra.mxu0 0.0
    %1470 = vmatprep.subr.mxu0 0.0
    %1471 = vmatpush1.xpose.msra.mxu0 0.0
    %1472 = vmatprep.subr.mxu0 0.0
    %1473 = vmatpush1.xpose.msra.mxu0 0.0
    %1474 = vmatprep.mubr.f32.mxu0 0.0
    %1475 = vmatmul.mubr.f32.gmra.mrb[0].mxu0 %v1405
    %v1476 = vpop.f32.mrb[0].mxu0
    %v1477 = vadd.f32 0.0, %v1476
    %v1478 = vpop.f32.mrb[0].mxu0
    %1479 = vdwg.mxu0
    %v1480 = vsel %vm167, %v1404, 0
    %v1483 = vsel %vm167, %v166, 0
    %1485 = vmatprep.subr.mxu0 0.0
    %1486 = vmatpush1.xpose.msra.mxu0 %v1483
    %1487 = vmatprep.subr.mxu0 0.0
    %1488 = vmatpush1.xpose.msra.mxu0 0.0
    %1489 = vmatprep.subr.mxu0 0.0
    %1490 = vmatpush1.xpose.msra.mxu0 0.0
    %1491 = vmatprep.subr.mxu0 0.0
    %1492 = vmatpush1.xpose.msra.mxu0 0.0
    %1493 = vmatprep.subr.mxu0 0.0
    %1494 = vmatpush1.xpose.msra.mxu0 0.0
    %1495 = vmatprep.subr.mxu0 0.0
    %1496 = vmatpush1.xpose.msra.mxu0 0.0
    %1497 = vmatprep.subr.mxu0 0.0
    %1498 = vmatpush1.xpose.msra.mxu0 0.0
    %1499 = vmatprep.subr.mxu0 0.0
    %1500 = vmatpush1.xpose.msra.mxu0 0.0
    %1501 = vmatprep.subr.mxu0 0.0
    %1502 = vmatpush1.xpose.msra.mxu0 0.0
    %1503 = vmatprep.subr.mxu0 0.0
    %1504 = vmatpush1.xpose.msra.mxu0 0.0
    %1505 = vmatprep.subr.mxu0 0.0
    %1506 = vmatpush1.xpose.msra.mxu0 0.0
    %1507 = vmatprep.subr.mxu0 0.0
    %1508 = vmatpush1.xpose.msra.mxu0 0.0
    %1509 = vmatprep.subr.mxu0 0.0
    %1510 = vmatpush1.xpose.msra.mxu0 0.0
    %1511 = vmatprep.subr.mxu0 0.0
    %1512 = vmatpush1.xpose.msra.mxu0 0.0
    %1513 = vmatprep.subr.mxu0 0.0
    %1514 = vmatpush1.xpose.msra.mxu0 0.0
    %1515 = vmatprep.subr.mxu0 0.0
    %1516 = vmatpush1.xpose.msra.mxu0 0.0
    %1517 = vmatprep.subr.mxu0 0.0
    %1518 = vmatpush1.xpose.msra.mxu0 0.0
    %1519 = vmatprep.subr.mxu0 0.0
    %1520 = vmatpush1.xpose.msra.mxu0 0.0
    %1521 = vmatprep.subr.mxu0 0.0
    %1522 = vmatpush1.xpose.msra.mxu0 0.0
    %1523 = vmatprep.subr.mxu0 0.0
    %1524 = vmatpush1.xpose.msra.mxu0 0.0
    %1525 = vmatprep.subr.mxu0 0.0
    %1526 = vmatpush1.xpose.msra.mxu0 0.0
    %1527 = vmatprep.subr.mxu0 0.0
    %1528 = vmatpush1.xpose.msra.mxu0 0.0
    %1529 = vmatprep.subr.mxu0 0.0
    %1530 = vmatpush1.xpose.msra.mxu0 0.0
    %1531 = vmatprep.subr.mxu0 0.0
    %1532 = vmatpush1.xpose.msra.mxu0 0.0
    %1533 = vmatprep.subr.mxu0 0.0
    %1534 = vmatpush1.xpose.msra.mxu0 0.0
    %1535 = vmatprep.subr.mxu0 0.0
    %1536 = vmatpush1.xpose.msra.mxu0 0.0
    %1537 = vmatprep.subr.mxu0 0.0
    %1538 = vmatpush1.xpose.msra.mxu0 0.0
    %1539 = vmatprep.subr.mxu0 0.0
    %1540 = vmatpush1.xpose.msra.mxu0 0.0
    %1541 = vmatprep.subr.mxu0 0.0
    %1542 = vmatpush1.xpose.msra.mxu0 0.0
    %1543 = vmatprep.subr.mxu0 0.0
    %1544 = vmatpush1.xpose.msra.mxu0 0.0
    %1545 = vmatprep.subr.mxu0 0.0
    %1546 = vmatpush1.xpose.msra.mxu0 0.0
    %1547 = vmatprep.subr.mxu0 0.0
    %1548 = vmatpush1.xpose.msra.mxu0 0.0
    %1549 = vmatprep.mubr.f32.mxu0 0.0
    %1550 = vmatmul.mubr.f32.gmra.mrb[0].mxu0 %v1480
    %v1551 = vpop.f32.mrb[0].mxu0
    %v1552 = vadd.f32 0.0, %v1551
    %v1553 = vpop.f32.mrb[0].mxu0
    %1554 = vdwg.mxu0
    %v1555 = vmul.f32 %v1477, %v1092
    %v1556 = vmul.f32 %v1552, %v1164
    %v1557 = vand.u32 2147483647, %v1555
    %v1558 = vand.u32 2147483647, %v1556
    %v1561 = vrot.slane %v1558, 7
    %v1562 = vsel %vm478, %v1561, %v1557
    %v1564 = vsel %vm481, %v1562, 0.0
    %1565 = vadd.xlane.f32.xlu0 %v1564
    %v1566 = vpop.xlane.xlu0 %1565
    %v1567 = vmax.f32 %v1566, 1e-12
    %v1569 = vrot.slane %v1567, 1
    %v1572 = vrcp.pop %v1567
    %v1573 = vmul.f32 %v1555, %v1572
    %v1574 = vrcp.pop %v1569
    %v1575 = vmul.f32 %v1556, %v1574
    %v1577 = vsel %vm511, %v1573, 0
    %1579 = vmatprep.subr.mxu0 0.0
    %1580 = vmatpush1.msra.mxu0 %v126
    %1581 = vmatprep.subr.mxu0 0.0
    %1582 = vmatpush1.msra.mxu0 0.0
    %1583 = vmatprep.subr.mxu0 0.0
    %1584 = vmatpush1.msra.mxu0 0.0
    %1585 = vmatprep.subr.mxu0 0.0
    %1586 = vmatpush1.msra.mxu0 0.0
    %1587 = vmatprep.subr.mxu0 0.0
    %1588 = vmatpush1.msra.mxu0 0.0
    %1589 = vmatprep.subr.mxu0 0.0
    %1590 = vmatpush1.msra.mxu0 0.0
    %1591 = vmatprep.subr.mxu0 0.0
    %1592 = vmatpush1.msra.mxu0 0.0
    %1593 = vmatprep.subr.mxu0 0.0
    %1594 = vmatpush1.msra.mxu0 0.0
    %1595 = vmatprep.subr.mxu0 0.0
    %1596 = vmatpush1.msra.mxu0 0.0
    %1597 = vmatprep.subr.mxu0 0.0
    %1598 = vmatpush1.msra.mxu0 0.0
    %1599 = vmatprep.subr.mxu0 0.0
    %1600 = vmatpush1.msra.mxu0 0.0
    %1601 = vmatprep.subr.mxu0 0.0
    %1602 = vmatpush1.msra.mxu0 0.0
    %1603 = vmatprep.subr.mxu0 0.0
    %1604 = vmatpush1.msra.mxu0 0.0
    %1605 = vmatprep.subr.mxu0 0.0
    %1606 = vmatpush1.msra.mxu0 0.0
    %1607 = vmatprep.subr.mxu0 0.0
    %1608 = vmatpush1.msra.mxu0 0.0
    %1609 = vmatprep.subr.mxu0 0.0
    %1610 = vmatpush1.msra.mxu0 0.0
    %1611 = vmatprep.subr.mxu0 0.0
    %1612 = vmatpush1.msra.mxu0 0.0
    %1613 = vmatprep.subr.mxu0 0.0
    %1614 = vmatpush1.msra.mxu0 0.0
    %1615 = vmatprep.subr.mxu0 0.0
    %1616 = vmatpush1.msra.mxu0 0.0
    %1617 = vmatprep.subr.mxu0 0.0
    %1618 = vmatpush1.msra.mxu0 0.0
    %1619 = vmatprep.subr.mxu0 0.0
    %1620 = vmatpush1.msra.mxu0 0.0
    %1621 = vmatprep.subr.mxu0 0.0
    %1622 = vmatpush1.msra.mxu0 0.0
    %1623 = vmatprep.subr.mxu0 0.0
    %1624 = vmatpush1.msra.mxu0 0.0
    %1625 = vmatprep.subr.mxu0 0.0
    %1626 = vmatpush1.msra.mxu0 0.0
    %1627 = vmatprep.subr.mxu0 0.0
    %1628 = vmatpush1.msra.mxu0 0.0
    %1629 = vmatprep.subr.mxu0 0.0
    %1630 = vmatpush1.msra.mxu0 0.0
    %1631 = vmatprep.subr.mxu0 0.0
    %1632 = vmatpush1.msra.mxu0 0.0
    %1633 = vmatprep.subr.mxu0 0.0
    %1634 = vmatpush1.msra.mxu0 0.0
    %1635 = vmatprep.subr.mxu0 0.0
    %1636 = vmatpush1.msra.mxu0 0.0
    %1637 = vmatprep.subr.mxu0 0.0
    %1638 = vmatpush1.msra.mxu0 0.0
    %1639 = vmatprep.subr.mxu0 0.0
    %1640 = vmatpush1.msra.mxu0 0.0
    %1641 = vmatprep.subr.mxu0 0.0
    %1642 = vmatpush1.msra.mxu0 0.0
    %1643 = vmatprep.mubr.f32.mxu0 0.0
    %1644 = vmatmul.mubr.f32.gmra.mrb[0].mxu0 %v1577
    %v1645 = vpop.f32.mrb[0].mxu0
    %v1646 = vadd.f32 0.0, %v1645
    %v1647 = vpop.f32.mrb[0].mxu0
    %1648 = vdwg.mxu0
    %v1650 = vsel %vm511, %v1575, 0
    %1652 = vmatprep.subr.mxu0 0.0
    %1653 = vmatpush1.msra.mxu0 %v127
    %1654 = vmatprep.subr.mxu0 0.0
    %1655 = vmatpush1.msra.mxu0 0.0
    %1656 = vmatprep.subr.mxu0 0.0
    %1657 = vmatpush1.msra.mxu0 0.0
    %1658 = vmatprep.subr.mxu0 0.0
    %1659 = vmatpush1.msra.mxu0 0.0
    %1660 = vmatprep.subr.mxu0 0.0
    %1661 = vmatpush1.msra.mxu0 0.0
    %1662 = vmatprep.subr.mxu0 0.0
    %1663 = vmatpush1.msra.mxu0 0.0
    %1664 = vmatprep.subr.mxu0 0.0
    %1665 = vmatpush1.msra.mxu0 0.0
    %1666 = vmatprep.subr.mxu0 0.0
    %1667 = vmatpush1.msra.mxu0 0.0
    %1668 = vmatprep.subr.mxu0 0.0
    %1669 = vmatpush1.msra.mxu0 0.0
    %1670 = vmatprep.subr.mxu0 0.0
    %1671 = vmatpush1.msra.mxu0 0.0
    %1672 = vmatprep.subr.mxu0 0.0
    %1673 = vmatpush1.msra.mxu0 0.0
    %1674 = vmatprep.subr.mxu0 0.0
    %1675 = vmatpush1.msra.mxu0 0.0
    %1676 = vmatprep.subr.mxu0 0.0
    %1677 = vmatpush1.msra.mxu0 0.0
    %1678 = vmatprep.subr.mxu0 0.0
    %1679 = vmatpush1.msra.mxu0 0.0
    %1680 = vmatprep.subr.mxu0 0.0
    %1681 = vmatpush1.msra.mxu0 0.0
    %1682 = vmatprep.subr.mxu0 0.0
    %1683 = vmatpush1.msra.mxu0 0.0
    %1684 = vmatprep.subr.mxu0 0.0
    %1685 = vmatpush1.msra.mxu0 0.0
    %1686 = vmatprep.subr.mxu0 0.0
    %1687 = vmatpush1.msra.mxu0 0.0
    %1688 = vmatprep.subr.mxu0 0.0
    %1689 = vmatpush1.msra.mxu0 0.0
    %1690 = vmatprep.subr.mxu0 0.0
    %1691 = vmatpush1.msra.mxu0 0.0
    %1692 = vmatprep.subr.mxu0 0.0
    %1693 = vmatpush1.msra.mxu0 0.0
    %1694 = vmatprep.subr.mxu0 0.0
    %1695 = vmatpush1.msra.mxu0 0.0
    %1696 = vmatprep.subr.mxu0 0.0
    %1697 = vmatpush1.msra.mxu0 0.0
    %1698 = vmatprep.subr.mxu0 0.0
    %1699 = vmatpush1.msra.mxu0 0.0
    %1700 = vmatprep.subr.mxu0 0.0
    %1701 = vmatpush1.msra.mxu0 0.0
    %1702 = vmatprep.subr.mxu0 0.0
    %1703 = vmatpush1.msra.mxu0 0.0
    %1704 = vmatprep.subr.mxu0 0.0
    %1705 = vmatpush1.msra.mxu0 0.0
    %1706 = vmatprep.subr.mxu0 0.0
    %1707 = vmatpush1.msra.mxu0 0.0
    %1708 = vmatprep.subr.mxu0 0.0
    %1709 = vmatpush1.msra.mxu0 0.0
    %1710 = vmatprep.subr.mxu0 0.0
    %1711 = vmatpush1.msra.mxu0 0.0
    %1712 = vmatprep.subr.mxu0 0.0
    %1713 = vmatpush1.msra.mxu0 0.0
    %1714 = vmatprep.subr.mxu0 0.0
    %1715 = vmatpush1.msra.mxu0 0.0
    %1716 = vmatprep.mubr.f32.mxu0 0.0
    %1717 = vmatmul.mubr.f32.gmra.mrb[0].mxu0 %v1650
    %v1718 = vpop.f32.mrb[0].mxu0
    %v1719 = vadd.f32 0.0, %v1718
    %v1720 = vpop.f32.mrb[0].mxu0
    %1721 = vdwg.mxu0
    %v1724 = vunpack.c.l.s4 1966171168
    %v1725 = vunpack.c.0.s8 %v1724
    %v1726 = vlaneseq
    %v1727 = vshrl.u32 %v1726, 7
    %v1728 = vsub.s32 %v1725, %v1727
    %v1729 = vrot.slane %v1358, %v1728
    %v1730 = vcombine.high %v1729, %v1729
    %v1732 = vunpack.c.l.s4 1966171168
    %v1733 = vunpack.c.0.s8 %v1732
    %v1734 = vlaneseq
    %v1735 = vshrl.u32 %v1734, 7
    %v1736 = vsub.s32 %v1733, %v1735
    %v1737 = vrot.slane %v1729, %v1736
    %v1739 = vunpack.c.l.s4 1966171168
    %v1740 = vunpack.c.0.s8 %v1739
    %v1741 = vlaneseq
    %v1742 = vshrl.u32 %v1741, 7
    %v1743 = vsub.s32 %v1740, %v1742
    %v1744 = vrot.slane %v1730, %v1743
    %1747 = vst.msk [vmem:[%s10 + $0x1] sm:$0x1] %vm216, %v1737
    %1748 = vst.msk [vmem:[%s10 + $0x9] sm:$0x1] %vm216, %v1744
    %v1749 = vlaneseq
    %v1750 = vshrl.u32 %v1749, 7
    %v1751 = vsub.s32 0, %v1750
    %v1752 = vrot.slane %v1378, %v1751
    %v1753 = vlaneseq
    %v1754 = vshrl.u32 %v1753, 7
    %v1755 = vsub.s32 1, %v1754
    %v1756 = vrot.slane %v1378, %v1755
    %1757 = vst.msk [vmem:[%s11 + $0x1] sm:$0x1] %vm219, %v1752
    %1758 = vst.msk [vmem:[%s11 + $0x9] sm:$0x1] %vm219, %v1756
    %1759 = vmatprep.subr.mxu0 0.0
    %1760 = vmatpush1.msra.mxu0 %v130
    %1761 = vmatprep.subr.mxu0 0.0
    %1762 = vmatpush1.msra.mxu0 %v131
    %1763 = vmatprep.subr.mxu0 0.0
    %1764 = vmatpush1.msra.mxu0 %v132
    %1765 = vmatprep.subr.mxu0 0.0
    %1766 = vmatpush1.msra.mxu0 %v133
    %1767 = vmatprep.subr.mxu0 0.0
    %1768 = vmatpush1.msra.mxu0 0.0
    %1769 = vmatprep.subr.mxu0 0.0
    %1770 = vmatpush1.msra.mxu0 0.0
    %1771 = vmatprep.subr.mxu0 0.0
    %1772 = vmatpush1.msra.mxu0 0.0
    %1773 = vmatprep.subr.mxu0 0.0
    %1774 = vmatpush1.msra.mxu0 0.0
    %1775 = vmatprep.subr.mxu0 0.0
    %1776 = vmatpush1.msra.mxu0 0.0
    %1777 = vmatprep.subr.mxu0 0.0
    %1778 = vmatpush1.msra.mxu0 0.0
    %1779 = vmatprep.subr.mxu0 0.0
    %1780 = vmatpush1.msra.mxu0 0.0
    %1781 = vmatprep.subr.mxu0 0.0
    %1782 = vmatpush1.msra.mxu0 0.0
    %1783 = vmatprep.subr.mxu0 0.0
    %1784 = vmatpush1.msra.mxu0 0.0
    %1785 = vmatprep.subr.mxu0 0.0
    %1786 = vmatpush1.msra.mxu0 0.0
    %1787 = vmatprep.subr.mxu0 0.0
    %1788 = vmatpush1.msra.mxu0 0.0
    %1789 = vmatprep.subr.mxu0 0.0
    %1790 = vmatpush1.msra.mxu0 0.0
    %1791 = vmatprep.subr.mxu0 0.0
    %1792 = vmatpush1.msra.mxu0 0.0
    %1793 = vmatprep.subr.mxu0 0.0
    %1794 = vmatpush1.msra.mxu0 0.0
    %1795 = vmatprep.subr.mxu0 0.0
    %1796 = vmatpush1.msra.mxu0 0.0
    %1797 = vmatprep.subr.mxu0 0.0
    %1798 = vmatpush1.msra.mxu0 0.0
    %1799 = vmatprep.subr.mxu0 0.0
    %1800 = vmatpush1.msra.mxu0 0.0
    %1801 = vmatprep.subr.mxu0 0.0
    %1802 = vmatpush1.msra.mxu0 0.0
    %1803 = vmatprep.subr.mxu0 0.0
    %1804 = vmatpush1.msra.mxu0 0.0
    %1805 = vmatprep.subr.mxu0 0.0
    %1806 = vmatpush1.msra.mxu0 0.0
    %1807 = vmatprep.subr.mxu0 0.0
    %1808 = vmatpush1.msra.mxu0 0.0
    %1809 = vmatprep.subr.mxu0 0.0
    %1810 = vmatpush1.msra.mxu0 0.0
    %1811 = vmatprep.subr.mxu0 0.0
    %1812 = vmatpush1.msra.mxu0 0.0
    %1813 = vmatprep.subr.mxu0 0.0
    %1814 = vmatpush1.msra.mxu0 0.0
    %1815 = vmatprep.subr.mxu0 0.0
    %1816 = vmatpush1.msra.mxu0 0.0
    %1817 = vmatprep.subr.mxu0 0.0
    %1818 = vmatpush1.msra.mxu0 0.0
    %1819 = vmatprep.subr.mxu0 0.0
    %1820 = vmatpush1.msra.mxu0 0.0
    %1821 = vmatprep.subr.mxu0 0.0
    %1822 = vmatpush1.msra.mxu0 0.0
    %1823 = vmatprep.mubr.f32.mxu0 0.0
    %1824 = vmatmul.mubr.f32.gmra.mrb[0].mxu0 %v924
    %v1825 = vpop.f32.mrb[0].mxu0
    %v1826 = vadd.f32 %v226, %v1825
    %v1827 = vpop.f32.mrb[0].mxu0
    %1828 = vdwg.mxu0
    %v1831 = vunpack.c.l.s4 1966171168
    %v1832 = vunpack.c.0.s8 %v1831
    %v1833 = vlaneseq
    %v1834 = vshrl.u32 %v1833, 7
    %v1835 = vsub.s32 %v1832, %v1834
    %v1836 = vrot.slane %v1826, %v1835
    %v1837 = vcombine.high %v1836, %v1836
    %v1839 = vunpack.c.l.s4 1966171168
    %v1840 = vunpack.c.0.s8 %v1839
    %v1841 = vlaneseq
    %v1842 = vshrl.u32 %v1841, 7
    %v1843 = vsub.s32 %v1840, %v1842
    %v1844 = vrot.slane %v1836, %v1843
    %v1846 = vunpack.c.l.s4 1966171168
    %v1847 = vunpack.c.0.s8 %v1846
    %v1848 = vlaneseq
    %v1849 = vshrl.u32 %v1848, 7
    %v1850 = vsub.s32 %v1847, %v1849
    %v1851 = vrot.slane %v1837, %v1850
    %v1852 = vsel %vm228, %v1844, 0
    %1854 = vmatprep.subr.mxu0 0.0
    %1855 = vmatpush1.xpose.msra.mxu0 %v328
    %1856 = vmatprep.subr.mxu0 0.0
    %1857 = vmatpush1.xpose.msra.mxu0 0.0
    %1858 = vmatprep.subr.mxu0 0.0
    %1859 = vmatpush1.xpose.msra.mxu0 0.0
    %1860 = vmatprep.subr.mxu0 0.0
    %1861 = vmatpush1.xpose.msra.mxu0 0.0
    %1862 = vmatprep.subr.mxu0 0.0
    %1863 = vmatpush1.xpose.msra.mxu0 0.0
    %1864 = vmatprep.subr.mxu0 0.0
    %1865 = vmatpush1.xpose.msra.mxu0 0.0
    %1866 = vmatprep.subr.mxu0 0.0
    %1867 = vmatpush1.xpose.msra.mxu0 0.0
    %1868 = vmatprep.subr.mxu0 0.0
    %1869 = vmatpush1.xpose.msra.mxu0 0.0
    %1870 = vmatprep.subr.mxu0 0.0
    %1871 = vmatpush1.xpose.msra.mxu0 0.0
    %1872 = vmatprep.subr.mxu0 0.0
    %1873 = vmatpush1.xpose.msra.mxu0 0.0
    %1874 = vmatprep.subr.mxu0 0.0
    %1875 = vmatpush1.xpose.msra.mxu0 0.0
    %1876 = vmatprep.subr.mxu0 0.0
    %1877 = vmatpush1.xpose.msra.mxu0 0.0
    %1878 = vmatprep.subr.mxu0 0.0
    %1879 = vmatpush1.xpose.msra.mxu0 0.0
    %1880 = vmatprep.subr.mxu0 0.0
    %1881 = vmatpush1.xpose.msra.mxu0 0.0
    %1882 = vmatprep.subr.mxu0 0.0
    %1883 = vmatpush1.xpose.msra.mxu0 0.0
    %1884 = vmatprep.subr.mxu0 0.0
    %1885 = vmatpush1.xpose.msra.mxu0 0.0
    %1886 = vmatprep.subr.mxu0 0.0
    %1887 = vmatpush1.xpose.msra.mxu0 0.0
    %1888 = vmatprep.subr.mxu0 0.0
    %1889 = vmatpush1.xpose.msra.mxu0 0.0
    %1890 = vmatprep.subr.mxu0 0.0
    %1891 = vmatpush1.xpose.msra.mxu0 0.0
    %1892 = vmatprep.subr.mxu0 0.0
    %1893 = vmatpush1.xpose.msra.mxu0 0.0
    %1894 = vmatprep.subr.mxu0 0.0
    %1895 = vmatpush1.xpose.msra.mxu0 0.0
    %1896 = vmatprep.subr.mxu0 0.0
    %1897 = vmatpush1.xpose.msra.mxu0 0.0
    %1898 = vmatprep.subr.mxu0 0.0
    %1899 = vmatpush1.xpose.msra.mxu0 0.0
    %1900 = vmatprep.subr.mxu0 0.0
    %1901 = vmatpush1.xpose.msra.mxu0 0.0
    %1902 = vmatprep.subr.mxu0 0.0
    %1903 = vmatpush1.xpose.msra.mxu0 0.0
    %1904 = vmatprep.subr.mxu0 0.0
    %1905 = vmatpush1.xpose.msra.mxu0 0.0
    %1906 = vmatprep.subr.mxu0 0.0
    %1907 = vmatpush1.xpose.msra.mxu0 0.0
    %1908 = vmatprep.subr.mxu0 0.0
    %1909 = vmatpush1.xpose.msra.mxu0 0.0
    %1910 = vmatprep.subr.mxu0 0.0
    %1911 = vmatpush1.xpose.msra.mxu0 0.0
    %1912 = vmatprep.subr.mxu0 0.0
    %1913 = vmatpush1.xpose.msra.mxu0 0.0
    %1914 = vmatprep.subr.mxu0 0.0
    %1915 = vmatpush1.xpose.msra.mxu0 0.0
    %1916 = vmatprep.subr.mxu0 0.0
    %1917 = vmatpush1.xpose.msra.mxu0 0.0
    %1918 = vmatprep.mubr.f32.mxu0 0.0
    %1919 = vmatmul.mubr.f32.gmra.mrb[0].mxu0 %v1852
    %v1920 = vpop.f32.mrb[0].mxu0
    %v1921 = vadd.f32 0.0, %v1920
    %v1922 = vpop.f32.mrb[0].mxu0
    %1923 = vdwg.mxu0
    %v1924 = vsel %vm228, %v1851, 0
    %1926 = vmatprep.subr.mxu0 0.0
    %1927 = vmatpush1.xpose.msra.mxu0 %v403
    %1928 = vmatprep.subr.mxu0 0.0
    %1929 = vmatpush1.xpose.msra.mxu0 0.0
    %1930 = vmatprep.subr.mxu0 0.0
    %1931 = vmatpush1.xpose.msra.mxu0 0.0
    %1932 = vmatprep.subr.mxu0 0.0
    %1933 = vmatpush1.xpose.msra.mxu0 0.0
    %1934 = vmatprep.subr.mxu0 0.0
    %1935 = vmatpush1.xpose.msra.mxu0 0.0
    %1936 = vmatprep.subr.mxu0 0.0
    %1937 = vmatpush1.xpose.msra.mxu0 0.0
    %1938 = vmatprep.subr.mxu0 0.0
    %1939 = vmatpush1.xpose.msra.mxu0 0.0
    %1940 = vmatprep.subr.mxu0 0.0
    %1941 = vmatpush1.xpose.msra.mxu0 0.0
    %1942 = vmatprep.subr.mxu0 0.0
    %1943 = vmatpush1.xpose.msra.mxu0 0.0
    %1944 = vmatprep.subr.mxu0 0.0
    %1945 = vmatpush1.xpose.msra.mxu0 0.0
    %1946 = vmatprep.subr.mxu0 0.0
    %1947 = vmatpush1.xpose.msra.mxu0 0.0
    %1948 = vmatprep.subr.mxu0 0.0
    %1949 = vmatpush1.xpose.msra.mxu0 0.0
    %1950 = vmatprep.subr.mxu0 0.0
    %1951 = vmatpush1.xpose.msra.mxu0 0.0
    %1952 = vmatprep.subr.mxu0 0.0
    %1953 = vmatpush1.xpose.msra.mxu0 0.0
    %1954 = vmatprep.subr.mxu0 0.0
    %1955 = vmatpush1.xpose.msra.mxu0 0.0
    %1956 = vmatprep.subr.mxu0 0.0
    %1957 = vmatpush1.xpose.msra.mxu0 0.0
    %1958 = vmatprep.subr.mxu0 0.0
    %1959 = vmatpush1.xpose.msra.mxu0 0.0
    %1960 = vmatprep.subr.mxu0 0.0
    %1961 = vmatpush1.xpose.msra.mxu0 0.0
    %1962 = vmatprep.subr.mxu0 0.0
    %1963 = vmatpush1.xpose.msra.mxu0 0.0
    %1964 = vmatprep.subr.mxu0 0.0
    %1965 = vmatpush1.xpose.msra.mxu0 0.0
    %1966 = vmatprep.subr.mxu0 0.0
    %1967 = vmatpush1.xpose.msra.mxu0 0.0
    %1968 = vmatprep.subr.mxu0 0.0
    %1969 = vmatpush1.xpose.msra.mxu0 0.0
    %1970 = vmatprep.subr.mxu0 0.0
    %1971 = vmatpush1.xpose.msra.mxu0 0.0
    %1972 = vmatprep.subr.mxu0 0.0
    %1973 = vmatpush1.xpose.msra.mxu0 0.0
    %1974 = vmatprep.subr.mxu0 0.0
    %1975 = vmatpush1.xpose.msra.mxu0 0.0
    %1976 = vmatprep.subr.mxu0 0.0
    %1977 = vmatpush1.xpose.msra.mxu0 0.0
    %1978 = vmatprep.subr.mxu0 0.0
    %1979 = vmatpush1.xpose.msra.mxu0 0.0
    %1980 = vmatprep.subr.mxu0 0.0
    %1981 = vmatpush1.xpose.msra.mxu0 0.0
    %1982 = vmatprep.subr.mxu0 0.0
    %1983 = vmatpush1.xpose.msra.mxu0 0.0
    %1984 = vmatprep.subr.mxu0 0.0
    %1985 = vmatpush1.xpose.msra.mxu0 0.0
    %1986 = vmatprep.subr.mxu0 0.0
    %1987 = vmatpush1.xpose.msra.mxu0 0.0
    %1988 = vmatprep.subr.mxu0 0.0
    %1989 = vmatpush1.xpose.msra.mxu0 0.0
    %1990 = vmatprep.mubr.f32.mxu0 0.0
    %1991 = vmatmul.mubr.f32.gmra.mrb[0].mxu0 %v1924
    %v1992 = vpop.f32.mrb[0].mxu0
    %v1993 = vadd.f32 0.0, %v1992
    %v1994 = vpop.f32.mrb[0].mxu0
    %1995 = vdwg.mxu0
    %v1998 = vrot.slane %v1993, 7
    %v1999 = vsel %vm478, %v1998, %v1921
    %v2001 = vsel %vm481, %v1999, -inf
    %2002 = vmax.xlane.f32.xlu0 %v2001
    %v2003 = vpop.xlane.xlu0 %2002
    %v2005 = vrot.slane %v2003, 1
    %v2008 = vsub.f32 %v1921, %v2003
    %v2009 = vsub.f32 %v1993, %v2005
    %v2010 = vmul.f32 %v2008, 1.442695
    %v2011 = vpow.pop %v2010
    %v2012 = vmul.f32 %v2009, 1.442695
    %v2013 = vpow.pop %v2012
    %v2016 = vrot.slane %v2013, 7
    %v2017 = vsel %vm478, %v2016, %v2011
    %v2019 = vsel %vm481, %v2017, 0.0
    %2020 = vadd.xlane.f32.xlu0 %v2019
    %v2021 = vpop.xlane.xlu0 %2020
    %v2023 = vrot.slane %v2021, 1
    %v2026 = vrcp.pop %v2021
    %v2027 = vmul.f32 %v2011, %v2026
    %v2028 = vrcp.pop %v2023
    %v2029 = vmul.f32 %v2013, %v2028
    %v2031 = vsel %vm511, %v2027, 0
    %2033 = vmatprep.subr.mxu0 0.0
    %2034 = vmatpush1.msra.mxu0 %v126
    %2035 = vmatprep.subr.mxu0 0.0
    %2036 = vmatpush1.msra.mxu0 0.0
    %2037 = vmatprep.subr.mxu0 0.0
    %2038 = vmatpush1.msra.mxu0 0.0
    %2039 = vmatprep.subr.mxu0 0.0
    %2040 = vmatpush1.msra.mxu0 0.0
    %2041 = vmatprep.subr.mxu0 0.0
    %2042 = vmatpush1.msra.mxu0 0.0
    %2043 = vmatprep.subr.mxu0 0.0
    %2044 = vmatpush1.msra.mxu0 0.0
    %2045 = vmatprep.subr.mxu0 0.0
    %2046 = vmatpush1.msra.mxu0 0.0
    %2047 = vmatprep.subr.mxu0 0.0
    %2048 = vmatpush1.msra.mxu0 0.0
    %2049 = vmatprep.subr.mxu0 0.0
    %2050 = vmatpush1.msra.mxu0 0.0
    %2051 = vmatprep.subr.mxu0 0.0
    %2052 = vmatpush1.msra.mxu0 0.0
    %2053 = vmatprep.subr.mxu0 0.0
    %2054 = vmatpush1.msra.mxu0 0.0
    %2055 = vmatprep.subr.mxu0 0.0
    %2056 = vmatpush1.msra.mxu0 0.0
    %2057 = vmatprep.subr.mxu0 0.0
    %2058 = vmatpush1.msra.mxu0 0.0
    %2059 = vmatprep.subr.mxu0 0.0
    %2060 = vmatpush1.msra.mxu0 0.0
    %2061 = vmatprep.subr.mxu0 0.0
    %2062 = vmatpush1.msra.mxu0 0.0
    %2063 = vmatprep.subr.mxu0 0.0
    %2064 = vmatpush1.msra.mxu0 0.0
    %2065 = vmatprep.subr.mxu0 0.0
    %2066 = vmatpush1.msra.mxu0 0.0
    %2067 = vmatprep.subr.mxu0 0.0
    %2068 = vmatpush1.msra.mxu0 0.0
    %2069 = vmatprep.subr.mxu0 0.0
    %2070 = vmatpush1.msra.mxu0 0.0
    %2071 = vmatprep.subr.mxu0 0.0
    %2072 = vmatpush1.msra.mxu0 0.0
    %2073 = vmatprep.subr.mxu0 0.0
    %2074 = vmatpush1.msra.mxu0 0.0
    %2075 = vmatprep.subr.mxu0 0.0
    %2076 = vmatpush1.msra.mxu0 0.0
    %2077 = vmatprep.subr.mxu0 0.0
    %2078 = vmatpush1.msra.mxu0 0.0
    %2079 = vmatprep.subr.mxu0 0.0
    %2080 = vmatpush1.msra.mxu0 0.0
    %2081 = vmatprep.subr.mxu0 0.0
    %2082 = vmatpush1.msra.mxu0 0.0
    %2083 = vmatprep.subr.mxu0 0.0
    %2084 = vmatpush1.msra.mxu0 0.0
    %2085 = vmatprep.subr.mxu0 0.0
    %2086 = vmatpush1.msra.mxu0 0.0
    %2087 = vmatprep.subr.mxu0 0.0
    %2088 = vmatpush1.msra.mxu0 0.0
    %2089 = vmatprep.subr.mxu0 0.0
    %2090 = vmatpush1.msra.mxu0 0.0
    %2091 = vmatprep.subr.mxu0 0.0
    %2092 = vmatpush1.msra.mxu0 0.0
    %2093 = vmatprep.subr.mxu0 0.0
    %2094 = vmatpush1.msra.mxu0 0.0
    %2095 = vmatprep.subr.mxu0 0.0
    %2096 = vmatpush1.msra.mxu0 0.0
    %2097 = vmatprep.mubr.f32.mxu0 0.0
    %2098 = vmatmul.mubr.f32.gmra.mrb[0].mxu0 %v2031
    %v2099 = vpop.f32.mrb[0].mxu0
    %v2100 = vadd.f32 0.0, %v2099
    %v2101 = vpop.f32.mrb[0].mxu0
    %2102 = vdwg.mxu0
    %v2104 = vsel %vm511, %v2029, 0
    %2106 = vmatprep.subr.mxu0 0.0
    %2107 = vmatpush1.msra.mxu0 %v127
    %2108 = vmatprep.subr.mxu0 0.0
    %2109 = vmatpush1.msra.mxu0 0.0
    %2110 = vmatprep.subr.mxu0 0.0
    %2111 = vmatpush1.msra.mxu0 0.0
    %2112 = vmatprep.subr.mxu0 0.0
    %2113 = vmatpush1.msra.mxu0 0.0
    %2114 = vmatprep.subr.mxu0 0.0
    %2115 = vmatpush1.msra.mxu0 0.0
    %2116 = vmatprep.subr.mxu0 0.0
    %2117 = vmatpush1.msra.mxu0 0.0
    %2118 = vmatprep.subr.mxu0 0.0
    %2119 = vmatpush1.msra.mxu0 0.0
    %2120 = vmatprep.subr.mxu0 0.0
    %2121 = vmatpush1.msra.mxu0 0.0
    %2122 = vmatprep.subr.mxu0 0.0
    %2123 = vmatpush1.msra.mxu0 0.0
    %2124 = vmatprep.subr.mxu0 0.0
    %2125 = vmatpush1.msra.mxu0 0.0
    %2126 = vmatprep.subr.mxu0 0.0
    %2127 = vmatpush1.msra.mxu0 0.0
    %2128 = vmatprep.subr.mxu0 0.0
    %2129 = vmatpush1.msra.mxu0 0.0
    %2130 = vmatprep.subr.mxu0 0.0
    %2131 = vmatpush1.msra.mxu0 0.0
    %2132 = vmatprep.subr.mxu0 0.0
    %2133 = vmatpush1.msra.mxu0 0.0
    %2134 = vmatprep.subr.mxu0 0.0
    %2135 = vmatpush1.msra.mxu0 0.0
    %2136 = vmatprep.subr.mxu0 0.0
    %2137 = vmatpush1.msra.mxu0 0.0
    %2138 = vmatprep.subr.mxu0 0.0
    %2139 = vmatpush1.msra.mxu0 0.0
    %2140 = vmatprep.subr.mxu0 0.0
    %2141 = vmatpush1.msra.mxu0 0.0
    %2142 = vmatprep.subr.mxu0 0.0
    %2143 = vmatpush1.msra.mxu0 0.0
    %2144 = vmatprep.subr.mxu0 0.0
    %2145 = vmatpush1.msra.mxu0 0.0
    %2146 = vmatprep.subr.mxu0 0.0
    %2147 = vmatpush1.msra.mxu0 0.0
    %2148 = vmatprep.subr.mxu0 0.0
    %2149 = vmatpush1.msra.mxu0 0.0
    %2150 = vmatprep.subr.mxu0 0.0
    %2151 = vmatpush1.msra.mxu0 0.0
    %2152 = vmatprep.subr.mxu0 0.0
    %2153 = vmatpush1.msra.mxu0 0.0
    %2154 = vmatprep.subr.mxu0 0.0
    %2155 = vmatpush1.msra.mxu0 0.0
    %2156 = vmatprep.subr.mxu0 0.0
    %2157 = vmatpush1.msra.mxu0 0.0
    %2158 = vmatprep.subr.mxu0 0.0
    %2159 = vmatpush1.msra.mxu0 0.0
    %2160 = vmatprep.subr.mxu0 0.0
    %2161 = vmatpush1.msra.mxu0 0.0
    %2162 = vmatprep.subr.mxu0 0.0
    %2163 = vmatpush1.msra.mxu0 0.0
    %2164 = vmatprep.subr.mxu0 0.0
    %2165 = vmatpush1.msra.mxu0 0.0
    %2166 = vmatprep.subr.mxu0 0.0
    %2167 = vmatpush1.msra.mxu0 0.0
    %2168 = vmatprep.subr.mxu0 0.0
    %2169 = vmatpush1.msra.mxu0 0.0
    %2170 = vmatprep.mubr.f32.mxu0 0.0
    %2171 = vmatmul.mubr.f32.gmra.mrb[0].mxu0 %v2104
    %v2172 = vpop.f32.mrb[0].mxu0
    %v2173 = vadd.f32 0.0, %v2172
    %v2174 = vpop.f32.mrb[0].mxu0
    %2175 = vdwg.mxu0
    %vm2176 = vcmp.gt.s32.totalorder %v1378, 32
    %v2177 = vsel %vm2176, 3, %v1378
    %vm2178 = vcmp.eq.s32.totalorder %v154, %v2177
    %v2179 = vsel %vm2178, 1, 0
    %v2180 = vcvt.s32.f32 %v2179
    %v2183 = vrot.slane %v1719, 7
    %v2184 = vsel %vm478, %v2183, %v1646
    %v2185 = vsel %vm228, %v2184, 0
    %2187 = vmatprep.subr.mxu0 0.0
    %2188 = vmatpush1.msra.mxu0 %v139
    %2189 = vmatprep.subr.mxu0 0.0
    %2190 = vmatpush1.msra.mxu0 %v140
    %2191 = vmatprep.subr.mxu0 0.0
    %2192 = vmatpush1.msra.mxu0 %v141
    %2193 = vmatprep.subr.mxu0 0.0
    %2194 = vmatpush1.msra.mxu0 %v142
    %2195 = vmatprep.subr.mxu0 0.0
    %2196 = vmatpush1.msra.mxu0 0.0
    %2197 = vmatprep.subr.mxu0 0.0
    %2198 = vmatpush1.msra.mxu0 0.0
    %2199 = vmatprep.subr.mxu0 0.0
    %2200 = vmatpush1.msra.mxu0 0.0
    %2201 = vmatprep.subr.mxu0 0.0
    %2202 = vmatpush1.msra.mxu0 0.0
    %2203 = vmatprep.subr.mxu0 0.0
    %2204 = vmatpush1.msra.mxu0 0.0
    %2205 = vmatprep.subr.mxu0 0.0
    %2206 = vmatpush1.msra.mxu0 0.0
    %2207 = vmatprep.subr.mxu0 0.0
    %2208 = vmatpush1.msra.mxu0 0.0
    %2209 = vmatprep.subr.mxu0 0.0
    %2210 = vmatpush1.msra.mxu0 0.0
    %2211 = vmatprep.subr.mxu0 0.0
    %2212 = vmatpush1.msra.mxu0 0.0
    %2213 = vmatprep.subr.mxu0 0.0
    %2214 = vmatpush1.msra.mxu0 0.0
    %2215 = vmatprep.subr.mxu0 0.0
    %2216 = vmatpush1.msra.mxu0 0.0
    %2217 = vmatprep.subr.mxu0 0.0
    %2218 = vmatpush1.msra.mxu0 0.0
    %2219 = vmatprep.subr.mxu0 0.0
    %2220 = vmatpush1.msra.mxu0 0.0
    %2221 = vmatprep.subr.mxu0 0.0
    %2222 = vmatpush1.msra.mxu0 0.0
    %2223 = vmatprep.subr.mxu0 0.0
    %2224 = vmatpush1.msra.mxu0 0.0
    %2225 = vmatprep.subr.mxu0 0.0
    %2226 = vmatpush1.msra.mxu0 0.0
    %2227 = vmatprep.subr.mxu0 0.0
    %2228 = vmatpush1.msra.mxu0 0.0
    %2229 = vmatprep.subr.mxu0 0.0
    %2230 = vmatpush1.msra.mxu0 0.0
    %2231 = vmatprep.subr.mxu0 0.0
    %2232 = vmatpush1.msra.mxu0 0.0
    %2233 = vmatprep.subr.mxu0 0.0
    %2234 = vmatpush1.msra.mxu0 0.0
    %2235 = vmatprep.subr.mxu0 0.0
    %2236 = vmatpush1.msra.mxu0 0.0
    %2237 = vmatprep.subr.mxu0 0.0
    %2238 = vmatpush1.msra.mxu0 0.0
    %2239 = vmatprep.subr.mxu0 0.0
    %2240 = vmatpush1.msra.mxu0 0.0
    %2241 = vmatprep.subr.mxu0 0.0
    %2242 = vmatpush1.msra.mxu0 0.0
    %2243 = vmatprep.subr.mxu0 0.0
    %2244 = vmatpush1.msra.mxu0 0.0
    %2245 = vmatprep.subr.mxu0 0.0
    %2246 = vmatpush1.msra.mxu0 0.0
    %2247 = vmatprep.subr.mxu0 0.0
    %2248 = vmatpush1.msra.mxu0 0.0
    %2249 = vmatprep.subr.mxu0 0.0
    %2250 = vmatpush1.msra.mxu0 0.0
    %2251 = vmatprep.mubr.f32.mxu0 0.0
    %2252 = vmatmul.mubr.f32.gmra.mrb[0].mxu0 %v2185
    %v2253 = vpop.f32.mrb[0].mxu0
    %v2254 = vadd.f32 0.0, %v2253
    %v2255 = vpop.f32.mrb[0].mxu0
    %2256 = vdwg.mxu0
    %v2259 = vrot.slane %v2173, 7
    %v2260 = vsel %vm478, %v2259, %v2100
    %v2261 = vsel %vm228, %v2260, 0
    %2263 = vmatprep.subr.mxu0 0.0
    %2264 = vmatpush1.msra.mxu0 %v135
    %2265 = vmatprep.subr.mxu0 0.0
    %2266 = vmatpush1.msra.mxu0 %v136
    %2267 = vmatprep.subr.mxu0 0.0
    %2268 = vmatpush1.msra.mxu0 %v137
    %2269 = vmatprep.subr.mxu0 0.0
    %2270 = vmatpush1.msra.mxu0 %v138
    %2271 = vmatprep.subr.mxu0 0.0
    %2272 = vmatpush1.msra.mxu0 0.0
    %2273 = vmatprep.subr.mxu0 0.0
    %2274 = vmatpush1.msra.mxu0 0.0
    %2275 = vmatprep.subr.mxu0 0.0
    %2276 = vmatpush1.msra.mxu0 0.0
    %2277 = vmatprep.subr.mxu0 0.0
    %2278 = vmatpush1.msra.mxu0 0.0
    %2279 = vmatprep.subr.mxu0 0.0
    %2280 = vmatpush1.msra.mxu0 0.0
    %2281 = vmatprep.subr.mxu0 0.0
    %2282 = vmatpush1.msra.mxu0 0.0
    %2283 = vmatprep.subr.mxu0 0.0
    %2284 = vmatpush1.msra.mxu0 0.0
    %2285 = vmatprep.subr.mxu0 0.0
    %2286 = vmatpush1.msra.mxu0 0.0
    %2287 = vmatprep.subr.mxu0 0.0
    %2288 = vmatpush1.msra.mxu0 0.0
    %2289 = vmatprep.subr.mxu0 0.0
    %2290 = vmatpush1.msra.mxu0 0.0
    %2291 = vmatprep.subr.mxu0 0.0
    %2292 = vmatpush1.msra.mxu0 0.0
    %2293 = vmatprep.subr.mxu0 0.0
    %2294 = vmatpush1.msra.mxu0 0.0
    %2295 = vmatprep.subr.mxu0 0.0
    %2296 = vmatpush1.msra.mxu0 0.0
    %2297 = vmatprep.subr.mxu0 0.0
    %2298 = vmatpush1.msra.mxu0 0.0
    %2299 = vmatprep.subr.mxu0 0.0
    %2300 = vmatpush1.msra.mxu0 0.0
    %2301 = vmatprep.subr.mxu0 0.0
    %2302 = vmatpush1.msra.mxu0 0.0
    %2303 = vmatprep.subr.mxu0 0.0
    %2304 = vmatpush1.msra.mxu0 0.0
    %2305 = vmatprep.subr.mxu0 0.0
    %2306 = vmatpush1.msra.mxu0 0.0
    %2307 = vmatprep.subr.mxu0 0.0
    %2308 = vmatpush1.msra.mxu0 0.0
    %2309 = vmatprep.subr.mxu0 0.0
    %2310 = vmatpush1.msra.mxu0 0.0
    %2311 = vmatprep.subr.mxu0 0.0
    %2312 = vmatpush1.msra.mxu0 0.0
    %2313 = vmatprep.subr.mxu0 0.0
    %2314 = vmatpush1.msra.mxu0 0.0
    %2315 = vmatprep.subr.mxu0 0.0
    %2316 = vmatpush1.msra.mxu0 0.0
    %2317 = vmatprep.subr.mxu0 0.0
    %2318 = vmatpush1.msra.mxu0 0.0
    %2319 = vmatprep.subr.mxu0 0.0
    %2320 = vmatpush1.msra.mxu0 0.0
    %2321 = vmatprep.subr.mxu0 0.0
    %2322 = vmatpush1.msra.mxu0 0.0
    %2323 = vmatprep.subr.mxu0 0.0
    %2324 = vmatpush1.msra.mxu0 0.0
    %2325 = vmatprep.subr.mxu0 0.0
    %2326 = vmatpush1.msra.mxu0 0.0
    %2327 = vmatprep.mubr.f32.mxu0 0.0
    %2328 = vmatmul.mubr.f32.gmra.mrb[0].mxu0 %v2261
    %v2329 = vpop.f32.mrb[0].mxu0
    %v2330 = vadd.f32 %v2254, %v2329
    %v2331 = vpop.f32.mrb[0].mxu0
    %2332 = vdwg.mxu0
    %v2334 = vsel %vm228, %v2180, 0
    %2336 = vmatprep.subr.mxu0 0.0
    %2337 = vmatpush1.msra.mxu0 %v143
    %2338 = vmatprep.subr.mxu0 0.0
    %2339 = vmatpush1.msra.mxu0 %v144
    %2340 = vmatprep.subr.mxu0 0.0
    %2341 = vmatpush1.msra.mxu0 %v145
    %2342 = vmatprep.subr.mxu0 0.0
    %2343 = vmatpush1.msra.mxu0 %v146
    %2344 = vmatprep.subr.mxu0 0.0
    %2345 = vmatpush1.msra.mxu0 0.0
    %2346 = vmatprep.subr.mxu0 0.0
    %2347 = vmatpush1.msra.mxu0 0.0
    %2348 = vmatprep.subr.mxu0 0.0
    %2349 = vmatpush1.msra.mxu0 0.0
    %2350 = vmatprep.subr.mxu0 0.0
    %2351 = vmatpush1.msra.mxu0 0.0
    %2352 = vmatprep.subr.mxu0 0.0
    %2353 = vmatpush1.msra.mxu0 0.0
    %2354 = vmatprep.subr.mxu0 0.0
    %2355 = vmatpush1.msra.mxu0 0.0
    %2356 = vmatprep.subr.mxu0 0.0
    %2357 = vmatpush1.msra.mxu0 0.0
    %2358 = vmatprep.subr.mxu0 0.0
    %2359 = vmatpush1.msra.mxu0 0.0
    %2360 = vmatprep.subr.mxu0 0.0
    %2361 = vmatpush1.msra.mxu0 0.0
    %2362 = vmatprep.subr.mxu0 0.0
    %2363 = vmatpush1.msra.mxu0 0.0
    %2364 = vmatprep.subr.mxu0 0.0
    %2365 = vmatpush1.msra.mxu0 0.0
    %2366 = vmatprep.subr.mxu0 0.0
    %2367 = vmatpush1.msra.mxu0 0.0
    %2368 = vmatprep.subr.mxu0 0.0
    %2369 = vmatpush1.msra.mxu0 0.0
    %2370 = vmatprep.subr.mxu0 0.0
    %2371 = vmatpush1.msra.mxu0 0.0
    %2372 = vmatprep.subr.mxu0 0.0
    %2373 = vmatpush1.msra.mxu0 0.0
    %2374 = vmatprep.subr.mxu0 0.0
    %2375 = vmatpush1.msra.mxu0 0.0
    %2376 = vmatprep.subr.mxu0 0.0
    %2377 = vmatpush1.msra.mxu0 0.0
    %2378 = vmatprep.subr.mxu0 0.0
    %2379 = vmatpush1.msra.mxu0 0.0
    %2380 = vmatprep.subr.mxu0 0.0
    %2381 = vmatpush1.msra.mxu0 0.0
    %2382 = vmatprep.subr.mxu0 0.0
    %2383 = vmatpush1.msra.mxu0 0.0
    %2384 = vmatprep.subr.mxu0 0.0
    %2385 = vmatpush1.msra.mxu0 0.0
    %2386 = vmatprep.subr.mxu0 0.0
    %2387 = vmatpush1.msra.mxu0 0.0
    %2388 = vmatprep.subr.mxu0 0.0
    %2389 = vmatpush1.msra.mxu0 0.0
    %2390 = vmatprep.subr.mxu0 0.0
    %2391 = vmatpush1.msra.mxu0 0.0
    %2392 = vmatprep.subr.mxu0 0.0
    %2393 = vmatpush1.msra.mxu0 0.0
    %2394 = vmatprep.subr.mxu0 0.0
    %2395 = vmatpush1.msra.mxu0 0.0
    %2396 = vmatprep.subr.mxu0 0.0
    %2397 = vmatpush1.msra.mxu0 0.0
    %2398 = vmatprep.subr.mxu0 0.0
    %2399 = vmatpush1.msra.mxu0 0.0
    %2400 = vmatprep.mubr.f32.mxu0 0.0
    %2401 = vmatmul.mubr.f32.gmra.mrb[0].mxu0 %v2334
    %v2402 = vpop.f32.mrb[0].mxu0
    %v2403 = vadd.f32 0.0, %v2402
    %v2404 = vpop.f32.mrb[0].mxu0
    %2405 = vdwg.mxu0
    %v2406 = vadd.f32 %v2330, %v2403
    %v2407 = vadd.f32 %v2406, %v884
    %2408 = vrot.lane.b32.xlu0 %v1826, 96
    %v2409 = vpop.permute.xlu0 %2408
    %v2411 = vadd.f32 %v2407, %v2409
    %v2412 = vxor.u32 %v2411, 2147483648
    %v2413 = vmul.f32 %v2412, 1.442695
    %v2414 = vpow.pop %v2413
    %v2415 = vadd.f32 %v2414, 1.0
    %v2416 = vrcp.pop %v2415
    %v2417 = vmul.f32 1.0, %v2416
    %2418 = vrot.lane.b32.xlu0 %v1826, 32
    %v2419 = vpop.permute.xlu0 %2418
    %v2421 = vmul.f32 %v2417, %v2419
    %2423 = vrot.lane.b32.xlu0 %v2421, 64
    %v2424 = vpop.permute.xlu0 %2423
    %v2426 = vadd.f32 %v2407, %v2424
    %v2427 = vtanh.pop %v2426
    %v2428 = vsub.f32 1.0, %v2417
    %2430 = vrot.lane.b32.xlu0 %v2427, 96
    %v2431 = vpop.permute.xlu0 %2430
    %v2433 = vmul.f32 %v2428, %v2431
    %v2434 = vmul.f32 %v2417, %v914
    %v2435 = vadd.f32 %v2433, %v2434
    %2437 = vrot.lane.b32.xlu0 %v2435, 96
    %v2438 = vpop.permute.xlu0 %2437
    %v2439 = vsel %vm228, %v2438, 0
    %2441 = vmatprep.subr.mxu0 0.0
    %2442 = vmatpush1.msra.mxu0 %v148
    %2443 = vmatprep.subr.mxu0 0.0
    %2444 = vmatpush1.msra.mxu0 %v149
    %2445 = vmatprep.subr.mxu0 0.0
    %2446 = vmatpush1.msra.mxu0 %v150
    %2447 = vmatprep.subr.mxu0 0.0
    %2448 = vmatpush1.msra.mxu0 %v151
    %2449 = vmatprep.subr.mxu0 0.0
    %2450 = vmatpush1.msra.mxu0 0.0
    %2451 = vmatprep.subr.mxu0 0.0
    %2452 = vmatpush1.msra.mxu0 0.0
    %2453 = vmatprep.subr.mxu0 0.0
    %2454 = vmatpush1.msra.mxu0 0.0
    %2455 = vmatprep.subr.mxu0 0.0
    %2456 = vmatpush1.msra.mxu0 0.0
    %2457 = vmatprep.subr.mxu0 0.0
    %2458 = vmatpush1.msra.mxu0 0.0
    %2459 = vmatprep.subr.mxu0 0.0
    %2460 = vmatpush1.msra.mxu0 0.0
    %2461 = vmatprep.subr.mxu0 0.0
    %2462 = vmatpush1.msra.mxu0 0.0
    %2463 = vmatprep.subr.mxu0 0.0
    %2464 = vmatpush1.msra.mxu0 0.0
    %2465 = vmatprep.subr.mxu0 0.0
    %2466 = vmatpush1.msra.mxu0 0.0
    %2467 = vmatprep.subr.mxu0 0.0
    %2468 = vmatpush1.msra.mxu0 0.0
    %2469 = vmatprep.subr.mxu0 0.0
    %2470 = vmatpush1.msra.mxu0 0.0
    %2471 = vmatprep.subr.mxu0 0.0
    %2472 = vmatpush1.msra.mxu0 0.0
    %2473 = vmatprep.subr.mxu0 0.0
    %2474 = vmatpush1.msra.mxu0 0.0
    %2475 = vmatprep.subr.mxu0 0.0
    %2476 = vmatpush1.msra.mxu0 0.0
    %2477 = vmatprep.subr.mxu0 0.0
    %2478 = vmatpush1.msra.mxu0 0.0
    %2479 = vmatprep.subr.mxu0 0.0
    %2480 = vmatpush1.msra.mxu0 0.0
    %2481 = vmatprep.subr.mxu0 0.0
    %2482 = vmatpush1.msra.mxu0 0.0
    %2483 = vmatprep.subr.mxu0 0.0
    %2484 = vmatpush1.msra.mxu0 0.0
    %2485 = vmatprep.subr.mxu0 0.0
    %2486 = vmatpush1.msra.mxu0 0.0
    %2487 = vmatprep.subr.mxu0 0.0
    %2488 = vmatpush1.msra.mxu0 0.0
    %2489 = vmatprep.subr.mxu0 0.0
    %2490 = vmatpush1.msra.mxu0 0.0
    %2491 = vmatprep.subr.mxu0 0.0
    %2492 = vmatpush1.msra.mxu0 0.0
    %2493 = vmatprep.subr.mxu0 0.0
    %2494 = vmatpush1.msra.mxu0 0.0
    %2495 = vmatprep.subr.mxu0 0.0
    %2496 = vmatpush1.msra.mxu0 0.0
    %2497 = vmatprep.subr.mxu0 0.0
    %2498 = vmatpush1.msra.mxu0 0.0
    %2499 = vmatprep.subr.mxu0 0.0
    %2500 = vmatpush1.msra.mxu0 0.0
    %2501 = vmatprep.subr.mxu0 0.0
    %2502 = vmatpush1.msra.mxu0 0.0
    %2503 = vmatprep.subr.mxu0 0.0
    %2504 = vmatpush1.msra.mxu0 0.0
    %2505 = vmatprep.mubr.f32.mxu0 0.0
    %2506 = vmatmul.mubr.f32.gmra.mrb[0].mxu0 %v2439
    %v2507 = vpop.f32.mrb[0].mxu0
    %v2508 = vadd.f32 %v919, %v2507
    %v2509 = vpop.f32.mrb[0].mxu0
    %2510 = vdwg.mxu0
    %2512 = vrot.lane.b32.xlu0 %v2508, 96
    %v2513 = vpop.permute.xlu0 %2512
    %v2515 = vsel %vm188, -1000000.0, %v2513
    %v2517 = vunpack.c.l.s4 1966171168
    %v2518 = vunpack.c.0.s8 %v2517
    %v2519 = vlaneseq
    %v2520 = vshrl.u32 %v2519, 7
    %v2521 = vsub.s32 %v2518, %v2520
    %v2522 = vrot.slane %v2508, %v2521
    %v2523 = vcombine.high %v2522, %v2522
    %v2525 = vunpack.c.l.s4 1966171168
    %v2526 = vunpack.c.0.s8 %v2525
    %v2527 = vlaneseq
    %v2528 = vshrl.u32 %v2527, 7
    %v2529 = vsub.s32 %v2526, %v2528
    %v2530 = vrot.slane %v2522, %v2529
    %v2532 = vunpack.c.l.s4 1966171168
    %v2533 = vunpack.c.0.s8 %v2532
    %v2534 = vlaneseq
    %v2535 = vshrl.u32 %v2534, 7
    %v2536 = vsub.s32 %v2533, %v2535
    %v2537 = vrot.slane %v2523, %v2536
    %v2538 = vsel %vm228, %v2530, 0
    %2540 = vmatprep.subr.mxu0 0.0
    %2541 = vmatpush1.xpose.msra.mxu0 %v328
    %2542 = vmatprep.subr.mxu0 0.0
    %2543 = vmatpush1.xpose.msra.mxu0 0.0
    %2544 = vmatprep.subr.mxu0 0.0
    %2545 = vmatpush1.xpose.msra.mxu0 0.0
    %2546 = vmatprep.subr.mxu0 0.0
    %2547 = vmatpush1.xpose.msra.mxu0 0.0
    %2548 = vmatprep.subr.mxu0 0.0
    %2549 = vmatpush1.xpose.msra.mxu0 0.0
    %2550 = vmatprep.subr.mxu0 0.0
    %2551 = vmatpush1.xpose.msra.mxu0 0.0
    %2552 = vmatprep.subr.mxu0 0.0
    %2553 = vmatpush1.xpose.msra.mxu0 0.0
    %2554 = vmatprep.subr.mxu0 0.0
    %2555 = vmatpush1.xpose.msra.mxu0 0.0
    %2556 = vmatprep.subr.mxu0 0.0
    %2557 = vmatpush1.xpose.msra.mxu0 0.0
    %2558 = vmatprep.subr.mxu0 0.0
    %2559 = vmatpush1.xpose.msra.mxu0 0.0
    %2560 = vmatprep.subr.mxu0 0.0
    %2561 = vmatpush1.xpose.msra.mxu0 0.0
    %2562 = vmatprep.subr.mxu0 0.0
    %2563 = vmatpush1.xpose.msra.mxu0 0.0
    %2564 = vmatprep.subr.mxu0 0.0
    %2565 = vmatpush1.xpose.msra.mxu0 0.0
    %2566 = vmatprep.subr.mxu0 0.0
    %2567 = vmatpush1.xpose.msra.mxu0 0.0
    %2568 = vmatprep.subr.mxu0 0.0
    %2569 = vmatpush1.xpose.msra.mxu0 0.0
    %2570 = vmatprep.subr.mxu0 0.0
    %2571 = vmatpush1.xpose.msra.mxu0 0.0
    %2572 = vmatprep.subr.mxu0 0.0
    %2573 = vmatpush1.xpose.msra.mxu0 0.0
    %2574 = vmatprep.subr.mxu0 0.0
    %2575 = vmatpush1.xpose.msra.mxu0 0.0
    %2576 = vmatprep.subr.mxu0 0.0
    %2577 = vmatpush1.xpose.msra.mxu0 0.0
    %2578 = vmatprep.subr.mxu0 0.0
    %2579 = vmatpush1.xpose.msra.mxu0 0.0
    %2580 = vmatprep.subr.mxu0 0.0
    %2581 = vmatpush1.xpose.msra.mxu0 0.0
    %2582 = vmatprep.subr.mxu0 0.0
    %2583 = vmatpush1.xpose.msra.mxu0 0.0
    %2584 = vmatprep.subr.mxu0 0.0
    %2585 = vmatpush1.xpose.msra.mxu0 0.0
    %2586 = vmatprep.subr.mxu0 0.0
    %2587 = vmatpush1.xpose.msra.mxu0 0.0
    %2588 = vmatprep.subr.mxu0 0.0
    %2589 = vmatpush1.xpose.msra.mxu0 0.0
    %2590 = vmatprep.subr.mxu0 0.0
    %2591 = vmatpush1.xpose.msra.mxu0 0.0
    %2592 = vmatprep.subr.mxu0 0.0
    %2593 = vmatpush1.xpose.msra.mxu0 0.0
    %2594 = vmatprep.subr.mxu0 0.0
    %2595 = vmatpush1.xpose.msra.mxu0 0.0
    %2596 = vmatprep.subr.mxu0 0.0
    %2597 = vmatpush1.xpose.msra.mxu0 0.0
    %2598 = vmatprep.subr.mxu0 0.0
    %2599 = vmatpush1.xpose.msra.mxu0 0.0
    %2600 = vmatprep.subr.mxu0 0.0
    %2601 = vmatpush1.xpose.msra.mxu0 0.0
    %2602 = vmatprep.subr.mxu0 0.0
    %2603 = vmatpush1.xpose.msra.mxu0 0.0
    %2604 = vmatprep.mubr.f32.mxu0 0.0
    %2605 = vmatmul.mubr.f32.gmra.mrb[0].mxu0 %v2538
    %v2606 = vpop.f32.mrb[0].mxu0
    %v2607 = vadd.f32 0.0, %v2606
    %v2608 = vpop.f32.mrb[0].mxu0
    %2609 = vdwg.mxu0
    %v2610 = vsel %vm228, %v2537, 0
    %2612 = vmatprep.subr.mxu0 0.0
    %2613 = vmatpush1.xpose.msra.mxu0 %v403
    %2614 = vmatprep.subr.mxu0 0.0
    %2615 = vmatpush1.xpose.msra.mxu0 0.0
    %2616 = vmatprep.subr.mxu0 0.0
    %2617 = vmatpush1.xpose.msra.mxu0 0.0
    %2618 = vmatprep.subr.mxu0 0.0
    %2619 = vmatpush1.xpose.msra.mxu0 0.0
    %2620 = vmatprep.subr.mxu0 0.0
    %2621 = vmatpush1.xpose.msra.mxu0 0.0
    %2622 = vmatprep.subr.mxu0 0.0
    %2623 = vmatpush1.xpose.msra.mxu0 0.0
    %2624 = vmatprep.subr.mxu0 0.0
    %2625 = vmatpush1.xpose.msra.mxu0 0.0
    %2626 = vmatprep.subr.mxu0 0.0
    %2627 = vmatpush1.xpose.msra.mxu0 0.0
    %2628 = vmatprep.subr.mxu0 0.0
    %2629 = vmatpush1.xpose.msra.mxu0 0.0
    %2630 = vmatprep.subr.mxu0 0.0
    %2631 = vmatpush1.xpose.msra.mxu0 0.0
    %2632 = vmatprep.subr.mxu0 0.0
    %2633 = vmatpush1.xpose.msra.mxu0 0.0
    %2634 = vmatprep.subr.mxu0 0.0
    %2635 = vmatpush1.xpose.msra.mxu0 0.0
    %2636 = vmatprep.subr.mxu0 0.0
    %2637 = vmatpush1.xpose.msra.mxu0 0.0
    %2638 = vmatprep.subr.mxu0 0.0
    %2639 = vmatpush1.xpose.msra.mxu0 0.0
    %2640 = vmatprep.subr.mxu0 0.0
    %2641 = vmatpush1.xpose.msra.mxu0 0.0
    %2642 = vmatprep.subr.mxu0 0.0
    %2643 = vmatpush1.xpose.msra.mxu0 0.0
    %2644 = vmatprep.subr.mxu0 0.0
    %2645 = vmatpush1.xpose.msra.mxu0 0.0
    %2646 = vmatprep.subr.mxu0 0.0
    %2647 = vmatpush1.xpose.msra.mxu0 0.0
    %2648 = vmatprep.subr.mxu0 0.0
    %2649 = vmatpush1.xpose.msra.mxu0 0.0
    %2650 = vmatprep.subr.mxu0 0.0
    %2651 = vmatpush1.xpose.msra.mxu0 0.0
    %2652 = vmatprep.subr.mxu0 0.0
    %2653 = vmatpush1.xpose.msra.mxu0 0.0
    %2654 = vmatprep.subr.mxu0 0.0
    %2655 = vmatpush1.xpose.msra.mxu0 0.0
    %2656 = vmatprep.subr.mxu0 0.0
    %2657 = vmatpush1.xpose.msra.mxu0 0.0
    %2658 = vmatprep.subr.mxu0 0.0
    %2659 = vmatpush1.xpose.msra.mxu0 0.0
    %2660 = vmatprep.subr.mxu0 0.0
    %2661 = vmatpush1.xpose.msra.mxu0 0.0
    %2662 = vmatprep.subr.mxu0 0.0
    %2663 = vmatpush1.xpose.msra.mxu0 0.0
    %2664 = vmatprep.subr.mxu0 0.0
    %2665 = vmatpush1.xpose.msra.mxu0 0.0
    %2666 = vmatprep.subr.mxu0 0.0
    %2667 = vmatpush1.xpose.msra.mxu0 0.0
    %2668 = vmatprep.subr.mxu0 0.0
    %2669 = vmatpush1.xpose.msra.mxu0 0.0
    %2670 = vmatprep.subr.mxu0 0.0
    %2671 = vmatpush1.xpose.msra.mxu0 0.0
    %2672 = vmatprep.subr.mxu0 0.0
    %2673 = vmatpush1.xpose.msra.mxu0 0.0
    %2674 = vmatprep.subr.mxu0 0.0
    %2675 = vmatpush1.xpose.msra.mxu0 0.0
    %2676 = vmatprep.mubr.f32.mxu0 0.0
    %2677 = vmatmul.mubr.f32.gmra.mrb[0].mxu0 %v2610
    %v2678 = vpop.f32.mrb[0].mxu0
    %v2679 = vadd.f32 0.0, %v2678
    %v2680 = vpop.f32.mrb[0].mxu0
    %2681 = vdwg.mxu0
    %v2683 = vsel %vm511, %v2607, 0
    %2685 = vmatprep.subr.mxu0 0.0
    %2686 = vmatpush1.msra.mxu0 %v165
    %2687 = vmatprep.subr.mxu0 0.0
    %2688 = vmatpush1.msra.mxu0 0.0
    %2689 = vmatprep.subr.mxu0 0.0
    %2690 = vmatpush1.msra.mxu0 0.0
    %2691 = vmatprep.subr.mxu0 0.0
    %2692 = vmatpush1.msra.mxu0 0.0
    %2693 = vmatprep.subr.mxu0 0.0
    %2694 = vmatpush1.msra.mxu0 0.0
    %2695 = vmatprep.subr.mxu0 0.0
    %2696 = vmatpush1.msra.mxu0 0.0
    %2697 = vmatprep.subr.mxu0 0.0
    %2698 = vmatpush1.msra.mxu0 0.0
    %2699 = vmatprep.subr.mxu0 0.0
    %2700 = vmatpush1.msra.mxu0 0.0
    %2701 = vmatprep.subr.mxu0 0.0
    %2702 = vmatpush1.msra.mxu0 0.0
    %2703 = vmatprep.subr.mxu0 0.0
    %2704 = vmatpush1.msra.mxu0 0.0
    %2705 = vmatprep.subr.mxu0 0.0
    %2706 = vmatpush1.msra.mxu0 0.0
    %2707 = vmatprep.subr.mxu0 0.0
    %2708 = vmatpush1.msra.mxu0 0.0
    %2709 = vmatprep.subr.mxu0 0.0
    %2710 = vmatpush1.msra.mxu0 0.0
    %2711 = vmatprep.subr.mxu0 0.0
    %2712 = vmatpush1.msra.mxu0 0.0
    %2713 = vmatprep.subr.mxu0 0.0
    %2714 = vmatpush1.msra.mxu0 0.0
    %2715 = vmatprep.subr.mxu0 0.0
    %2716 = vmatpush1.msra.mxu0 0.0
    %2717 = vmatprep.subr.mxu0 0.0
    %2718 = vmatpush1.msra.mxu0 0.0
    %2719 = vmatprep.subr.mxu0 0.0
    %2720 = vmatpush1.msra.mxu0 0.0
    %2721 = vmatprep.subr.mxu0 0.0
    %2722 = vmatpush1.msra.mxu0 0.0
    %2723 = vmatprep.subr.mxu0 0.0
    %2724 = vmatpush1.msra.mxu0 0.0
    %2725 = vmatprep.subr.mxu0 0.0
    %2726 = vmatpush1.msra.mxu0 0.0
    %2727 = vmatprep.subr.mxu0 0.0
    %2728 = vmatpush1.msra.mxu0 0.0
    %2729 = vmatprep.subr.mxu0 0.0
    %2730 = vmatpush1.msra.mxu0 0.0
    %2731 = vmatprep.subr.mxu0 0.0
    %2732 = vmatpush1.msra.mxu0 0.0
    %2733 = vmatprep.subr.mxu0 0.0
    %2734 = vmatpush1.msra.mxu0 0.0
    %2735 = vmatprep.subr.mxu0 0.0
    %2736 = vmatpush1.msra.mxu0 0.0
    %2737 = vmatprep.subr.mxu0 0.0
    %2738 = vmatpush1.msra.mxu0 0.0
    %2739 = vmatprep.subr.mxu0 0.0
    %2740 = vmatpush1.msra.mxu0 0.0
    %2741 = vmatprep.subr.mxu0 0.0
    %2742 = vmatpush1.msra.mxu0 0.0
    %2743 = vmatprep.subr.mxu0 0.0
    %2744 = vmatpush1.msra.mxu0 0.0
    %2745 = vmatprep.subr.mxu0 0.0
    %2746 = vmatpush1.msra.mxu0 0.0
    %2747 = vmatprep.subr.mxu0 0.0
    %2748 = vmatpush1.msra.mxu0 0.0
    %2749 = vmatprep.mubr.f32.mxu0 0.0
    %2750 = vmatmul.mubr.f32.gmra.mrb[0].mxu0 %v2683
    %v2751 = vpop.f32.mrb[0].mxu0
    %v2752 = vadd.f32 0.0, %v2751
    %v2753 = vpop.f32.mrb[0].mxu0
    %2754 = vdwg.mxu0
    %v2756 = vsel %vm511, %v2679, 0
    %2758 = vmatprep.subr.mxu0 0.0
    %2759 = vmatpush1.msra.mxu0 %v166
    %2760 = vmatprep.subr.mxu0 0.0
    %2761 = vmatpush1.msra.mxu0 0.0
    %2762 = vmatprep.subr.mxu0 0.0
    %2763 = vmatpush1.msra.mxu0 0.0
    %2764 = vmatprep.subr.mxu0 0.0
    %2765 = vmatpush1.msra.mxu0 0.0
    %2766 = vmatprep.subr.mxu0 0.0
    %2767 = vmatpush1.msra.mxu0 0.0
    %2768 = vmatprep.subr.mxu0 0.0
    %2769 = vmatpush1.msra.mxu0 0.0
    %2770 = vmatprep.subr.mxu0 0.0
    %2771 = vmatpush1.msra.mxu0 0.0
    %2772 = vmatprep.subr.mxu0 0.0
    %2773 = vmatpush1.msra.mxu0 0.0
    %2774 = vmatprep.subr.mxu0 0.0
    %2775 = vmatpush1.msra.mxu0 0.0
    %2776 = vmatprep.subr.mxu0 0.0
    %2777 = vmatpush1.msra.mxu0 0.0
    %2778 = vmatprep.subr.mxu0 0.0
    %2779 = vmatpush1.msra.mxu0 0.0
    %2780 = vmatprep.subr.mxu0 0.0
    %2781 = vmatpush1.msra.mxu0 0.0
    %2782 = vmatprep.subr.mxu0 0.0
    %2783 = vmatpush1.msra.mxu0 0.0
    %2784 = vmatprep.subr.mxu0 0.0
    %2785 = vmatpush1.msra.mxu0 0.0
    %2786 = vmatprep.subr.mxu0 0.0
    %2787 = vmatpush1.msra.mxu0 0.0
    %2788 = vmatprep.subr.mxu0 0.0
    %2789 = vmatpush1.msra.mxu0 0.0
    %2790 = vmatprep.subr.mxu0 0.0
    %2791 = vmatpush1.msra.mxu0 0.0
    %2792 = vmatprep.subr.mxu0 0.0
    %2793 = vmatpush1.msra.mxu0 0.0
    %2794 = vmatprep.subr.mxu0 0.0
    %2795 = vmatpush1.msra.mxu0 0.0
    %2796 = vmatprep.subr.mxu0 0.0
    %2797 = vmatpush1.msra.mxu0 0.0
    %2798 = vmatprep.subr.mxu0 0.0
    %2799 = vmatpush1.msra.mxu0 0.0
    %2800 = vmatprep.subr.mxu0 0.0
    %2801 = vmatpush1.msra.mxu0 0.0
    %2802 = vmatprep.subr.mxu0 0.0
    %2803 = vmatpush1.msra.mxu0 0.0
    %2804 = vmatprep.subr.mxu0 0.0
    %2805 = vmatpush1.msra.mxu0 0.0
    %2806 = vmatprep.subr.mxu0 0.0
    %2807 = vmatpush1.msra.mxu0 0.0
    %2808 = vmatprep.subr.mxu0 0.0
    %2809 = vmatpush1.msra.mxu0 0.0
    %2810 = vmatprep.subr.mxu0 0.0
    %2811 = vmatpush1.msra.mxu0 0.0
    %2812 = vmatprep.subr.mxu0 0.0
    %2813 = vmatpush1.msra.mxu0 0.0
    %2814 = vmatprep.subr.mxu0 0.0
    %2815 = vmatpush1.msra.mxu0 0.0
    %2816 = vmatprep.subr.mxu0 0.0
    %2817 = vmatpush1.msra.mxu0 0.0
    %2818 = vmatprep.subr.mxu0 0.0
    %2819 = vmatpush1.msra.mxu0 0.0
    %2820 = vmatprep.subr.mxu0 0.0
    %2821 = vmatpush1.msra.mxu0 0.0
    %2822 = vmatprep.mubr.f32.mxu0 0.0
    %2823 = vmatmul.mubr.f32.gmra.mrb[0].mxu0 %v2756
    %v2824 = vpop.f32.mrb[0].mxu0
    %v2825 = vadd.f32 0.0, %v2824
    %v2826 = vpop.f32.mrb[0].mxu0
    %2827 = vdwg.mxu0
    %v2828 = vsel %vm185, -1000000.0, %v2752
    %v2829 = vsel %vm186, -1000000.0, %v2825
    %v2830 = vsel %vm1315, %v2515, -inf
    %2831 = vmax.xlane.f32.xlu0 %v2830
    %v2832 = vpop.xlane.xlu0 %2831
    %v2835 = vrot.slane %v2829, 7
    %v2836 = vsel %vm478, %v2835, %v2828
    %v2838 = vsel %vm1315, %v2836, -inf
    %2839 = vmax.xlane.f32.xlu0 %v2838
    %v2840 = vpop.xlane.xlu0 %2839
    %v2841 = vmax.f32 %v2832, %v2840
    %v2842 = vsub.f32 %v2515, %v2841
    %v2843 = vmul.f32 %v2842, 1.442695
    %v2844 = vpow.pop %v2843
    %v2846 = vrot.slane %v2841, 1
    %v2849 = vsub.f32 %v2828, %v2841
    %v2850 = vsub.f32 %v2829, %v2846
    %v2851 = vmul.f32 %v2849, 1.442695
    %v2852 = vpow.pop %v2851
    %v2853 = vmul.f32 %v2850, 1.442695
    %v2854 = vpow.pop %v2853
    %v2855 = vsel %vm1315, %v2844, 0.0
    %2856 = vadd.xlane.f32.xlu0 %v2855
    %v2857 = vpop.xlane.xlu0 %2856
    %v2860 = vrot.slane %v2854, 7
    %v2861 = vsel %vm478, %v2860, %v2852
    %v2863 = vsel %vm1315, %v2861, 0.0
    %2864 = vadd.xlane.f32.xlu0 %v2863
    %v2865 = vpop.xlane.xlu0 %2864
    %v2866 = vadd.f32 %v2857, %v2865
    %v2867 = vadd.f32 %v2844, %v2861
    %v2868 = vrcp.pop %v2866
    %v2869 = vmul.f32 %v2867, %v2868
    %v2870 = vadd.f32 %v2869, 1e-10
    %v2871 = vlog2.pop %v2870
    %v2872 = vmul.f32 %v2871, 0.6931472
    %v2873 = vsel %vm1315, %v2872, -inf
    %2874 = vmax.xlane.f32.xlu0 %v2873
    %v2875 = vpop.xlane.xlu0 %2874
    %vm2876 = vcmp.eq.f32.partialorder %v2872, %v2875
    %v2877 = vsel %vm2876, %v154, 40
    %v2878 = vsel %vm1315, %v2877, 2147483647
    %v2879 = vand.u32 %v2878, 65535
    %v2880 = vshra.s32 %v2878, 16
    %v2881 = vcvt.s32.f32 %v2879
    %v2882 = vcvt.s32.f32 %v2880
    %2883 = vmin.xlane.f32.xlu0 %v2882
    %v2884 = vpop.xlane.xlu0 %2883
    %vm2885 = vcmp.eq.f32.partialorder %v2882, %v2884
    %v2886 = vsel %vm2885, %v2881, inf
    %2887 = vmin.xlane.f32.xlu0 %v2886
    %v2888 = vpop.xlane.xlu0 %2887
    %v2889 = vcvt.f32.s32 %v2888
    %v2890 = vcvt.f32.s32 %v2884
    %v2891 = vshll.u32 %v2890, 16
    %v2892 = vadd.s32 %v2891, %v2889
    %vm2893 = vcmp.eq.s32.totalorder %v154, %v2892
    %v2894 = vsel %vm2893, 1, 0
    %v2895 = vcvt.s32.f32 %v2894
    %v2898 = vunpack.c.l.s4 1966171168
    %v2899 = vunpack.c.0.s8 %v2898
    %v2900 = vlaneseq
    %v2901 = vshrl.u32 %v2900, 7
    %v2902 = vsub.s32 %v2899, %v2901
    %v2903 = vrot.slane %v2895, %v2902
    %v2904 = vcombine.high %v2903, %v2903
    %v2906 = vunpack.c.l.s4 1966171168
    %v2907 = vunpack.c.0.s8 %v2906
    %v2908 = vlaneseq
    %v2909 = vshrl.u32 %v2908, 7
    %v2910 = vsub.s32 %v2907, %v2909
    %v2911 = vrot.slane %v2903, %v2910
    %v2913 = vunpack.c.l.s4 1966171168
    %v2914 = vunpack.c.0.s8 %v2913
    %v2915 = vlaneseq
    %v2916 = vshrl.u32 %v2915, 7
    %v2917 = vsub.s32 %v2914, %v2916
    %v2918 = vrot.slane %v2904, %v2917
    %v2919 = vsel %vm167, %v2911, 0
    %2921 = vmatprep.subr.mxu0 0.0
    %2922 = vmatpush1.xpose.msra.mxu0 %v1408
    %2923 = vmatprep.subr.mxu0 0.0
    %2924 = vmatpush1.xpose.msra.mxu0 0.0
    %2925 = vmatprep.subr.mxu0 0.0
    %2926 = vmatpush1.xpose.msra.mxu0 0.0
    %2927 = vmatprep.subr.mxu0 0.0
    %2928 = vmatpush1.xpose.msra.mxu0 0.0
    %2929 = vmatprep.subr.mxu0 0.0
    %2930 = vmatpush1.xpose.msra.mxu0 0.0
    %2931 = vmatprep.subr.mxu0 0.0
    %2932 = vmatpush1.xpose.msra.mxu0 0.0
    %2933 = vmatprep.subr.mxu0 0.0
    %2934 = vmatpush1.xpose.msra.mxu0 0.0
    %2935 = vmatprep.subr.mxu0 0.0
    %2936 = vmatpush1.xpose.msra.mxu0 0.0
    %2937 = vmatprep.subr.mxu0 0.0
    %2938 = vmatpush1.xpose.msra.mxu0 0.0
    %2939 = vmatprep.subr.mxu0 0.0
    %2940 = vmatpush1.xpose.msra.mxu0 0.0
    %2941 = vmatprep.subr.mxu0 0.0
    %2942 = vmatpush1.xpose.msra.mxu0 0.0
    %2943 = vmatprep.subr.mxu0 0.0
    %2944 = vmatpush1.xpose.msra.mxu0 0.0
    %2945 = vmatprep.subr.mxu0 0.0
    %2946 = vmatpush1.xpose.msra.mxu0 0.0
    %2947 = vmatprep.subr.mxu0 0.0
    %2948 = vmatpush1.xpose.msra.mxu0 0.0
    %2949 = vmatprep.subr.mxu0 0.0
    %2950 = vmatpush1.xpose.msra.mxu0 0.0
    %2951 = vmatprep.subr.mxu0 0.0
    %2952 = vmatpush1.xpose.msra.mxu0 0.0
    %2953 = vmatprep.subr.mxu0 0.0
    %2954 = vmatpush1.xpose.msra.mxu0 0.0
    %2955 = vmatprep.subr.mxu0 0.0
    %2956 = vmatpush1.xpose.msra.mxu0 0.0
    %2957 = vmatprep.subr.mxu0 0.0
    %2958 = vmatpush1.xpose.msra.mxu0 0.0
    %2959 = vmatprep.subr.mxu0 0.0
    %2960 = vmatpush1.xpose.msra.mxu0 0.0
    %2961 = vmatprep.subr.mxu0 0.0
    %2962 = vmatpush1.xpose.msra.mxu0 0.0
    %2963 = vmatprep.subr.mxu0 0.0
    %2964 = vmatpush1.xpose.msra.mxu0 0.0
    %2965 = vmatprep.subr.mxu0 0.0
    %2966 = vmatpush1.xpose.msra.mxu0 0.0
    %2967 = vmatprep.subr.mxu0 0.0
    %2968 = vmatpush1.xpose.msra.mxu0 0.0
    %2969 = vmatprep.subr.mxu0 0.0
    %2970 = vmatpush1.xpose.msra.mxu0 0.0
    %2971 = vmatprep.subr.mxu0 0.0
    %2972 = vmatpush1.xpose.msra.mxu0 0.0
    %2973 = vmatprep.subr.mxu0 0.0
    %2974 = vmatpush1.xpose.msra.mxu0 0.0
    %2975 = vmatprep.subr.mxu0 0.0
    %2976 = vmatpush1.xpose.msra.mxu0 0.0
    %2977 = vmatprep.subr.mxu0 0.0
    %2978 = vmatpush1.xpose.msra.mxu0 0.0
    %2979 = vmatprep.subr.mxu0 0.0
    %2980 = vmatpush1.xpose.msra.mxu0 0.0
    %2981 = vmatprep.subr.mxu0 0.0
    %2982 = vmatpush1.xpose.msra.mxu0 0.0
    %2983 = vmatprep.subr.mxu0 0.0
    %2984 = vmatpush1.xpose.msra.mxu0 0.0
    %2985 = vmatprep.mubr.f32.mxu0 0.0
    %2986 = vmatmul.mubr.f32.gmra.mrb[0].mxu0 %v2919
    %v2987 = vpop.f32.mrb[0].mxu0
    %v2988 = vadd.f32 0.0, %v2987
    %v2989 = vpop.f32.mrb[0].mxu0
    %2990 = vdwg.mxu0
    %v2991 = vsel %vm167, %v2918, 0
    %2993 = vmatprep.subr.mxu0 0.0
    %2994 = vmatpush1.xpose.msra.mxu0 %v1483
    %2995 = vmatprep.subr.mxu0 0.0
    %2996 = vmatpush1.xpose.msra.mxu0 0.0
    %2997 = vmatprep.subr.mxu0 0.0
    %2998 = vmatpush1.xpose.msra.mxu0 0.0
    %2999 = vmatprep.subr.mxu0 0.0
    %3000 = vmatpush1.xpose.msra.mxu0 0.0
    %3001 = vmatprep.subr.mxu0 0.0
    %3002 = vmatpush1.xpose.msra.mxu0 0.0
    %3003 = vmatprep.subr.mxu0 0.0
    %3004 = vmatpush1.xpose.msra.mxu0 0.0
    %3005 = vmatprep.subr.mxu0 0.0
    %3006 = vmatpush1.xpose.msra.mxu0 0.0
    %3007 = vmatprep.subr.mxu0 0.0
    %3008 = vmatpush1.xpose.msra.mxu0 0.0
    %3009 = vmatprep.subr.mxu0 0.0
    %3010 = vmatpush1.xpose.msra.mxu0 0.0
    %3011 = vmatprep.subr.mxu0 0.0
    %3012 = vmatpush1.xpose.msra.mxu0 0.0
    %3013 = vmatprep.subr.mxu0 0.0
    %3014 = vmatpush1.xpose.msra.mxu0 0.0
    %3015 = vmatprep.subr.mxu0 0.0
    %3016 = vmatpush1.xpose.msra.mxu0 0.0
    %3017 = vmatprep.subr.mxu0 0.0
    %3018 = vmatpush1.xpose.msra.mxu0 0.0
    %3019 = vmatprep.subr.mxu0 0.0
    %3020 = vmatpush1.xpose.msra.mxu0 0.0
    %3021 = vmatprep.subr.mxu0 0.0
    %3022 = vmatpush1.xpose.msra.mxu0 0.0
    %3023 = vmatprep.subr.mxu0 0.0
    %3024 = vmatpush1.xpose.msra.mxu0 0.0
    %3025 = vmatprep.subr.mxu0 0.0
    %3026 = vmatpush1.xpose.msra.mxu0 0.0
    %3027 = vmatprep.subr.mxu0 0.0
    %3028 = vmatpush1.xpose.msra.mxu0 0.0
    %3029 = vmatprep.subr.mxu0 0.0
    %3030 = vmatpush1.xpose.msra.mxu0 0.0
    %3031 = vmatprep.subr.mxu0 0.0
    %3032 = vmatpush1.xpose.msra.mxu0 0.0
    %3033 = vmatprep.subr.mxu0 0.0
    %3034 = vmatpush1.xpose.msra.mxu0 0.0
    %3035 = vmatprep.subr.mxu0 0.0
    %3036 = vmatpush1.xpose.msra.mxu0 0.0
    %3037 = vmatprep.subr.mxu0 0.0
    %3038 = vmatpush1.xpose.msra.mxu0 0.0
    %3039 = vmatprep.subr.mxu0 0.0
    %3040 = vmatpush1.xpose.msra.mxu0 0.0
    %3041 = vmatprep.subr.mxu0 0.0
    %3042 = vmatpush1.xpose.msra.mxu0 0.0
    %3043 = vmatprep.subr.mxu0 0.0
    %3044 = vmatpush1.xpose.msra.mxu0 0.0
    %3045 = vmatprep.subr.mxu0 0.0
    %3046 = vmatpush1.xpose.msra.mxu0 0.0
    %3047 = vmatprep.subr.mxu0 0.0
    %3048 = vmatpush1.xpose.msra.mxu0 0.0
    %3049 = vmatprep.subr.mxu0 0.0
    %3050 = vmatpush1.xpose.msra.mxu0 0.0
    %3051 = vmatprep.subr.mxu0 0.0
    %3052 = vmatpush1.xpose.msra.mxu0 0.0
    %3053 = vmatprep.subr.mxu0 0.0
    %3054 = vmatpush1.xpose.msra.mxu0 0.0
    %3055 = vmatprep.subr.mxu0 0.0
    %3056 = vmatpush1.xpose.msra.mxu0 0.0
    %3057 = vmatprep.mubr.f32.mxu0 0.0
    %3058 = vmatmul.mubr.f32.gmra.mrb[0].mxu0 %v2991
    %v3059 = vpop.f32.mrb[0].mxu0
    %v3060 = vadd.f32 0.0, %v3059
    %v3061 = vpop.f32.mrb[0].mxu0
    %3062 = vdwg.mxu0
    %v3063 = vmul.f32 %v2988, %v2607
    %v3064 = vmul.f32 %v3060, %v2679
    %v3065 = vand.u32 2147483647, %v3063
    %v3066 = vand.u32 2147483647, %v3064
    %v3069 = vrot.slane %v3066, 7
    %v3070 = vsel %vm478, %v3069, %v3065
    %v3072 = vsel %vm481, %v3070, 0.0
    %3073 = vadd.xlane.f32.xlu0 %v3072
    %v3074 = vpop.xlane.xlu0 %3073
    %v3075 = vmax.f32 %v3074, 1e-12
    %v3077 = vrot.slane %v3075, 1
    %v3080 = vrcp.pop %v3075
    %v3081 = vmul.f32 %v3063, %v3080
    %v3082 = vrcp.pop %v3077
    %v3083 = vmul.f32 %v3064, %v3082
    %v3085 = vsel %vm511, %v3081, 0
    %3087 = vmatprep.subr.mxu0 0.0
    %3088 = vmatpush1.msra.mxu0 %v126
    %3089 = vmatprep.subr.mxu0 0.0
    %3090 = vmatpush1.msra.mxu0 0.0
    %3091 = vmatprep.subr.mxu0 0.0
    %3092 = vmatpush1.msra.mxu0 0.0
    %3093 = vmatprep.subr.mxu0 0.0
    %3094 = vmatpush1.msra.mxu0 0.0
    %3095 = vmatprep.subr.mxu0 0.0
    %3096 = vmatpush1.msra.mxu0 0.0
    %3097 = vmatprep.subr.mxu0 0.0
    %3098 = vmatpush1.msra.mxu0 0.0
    %3099 = vmatprep.subr.mxu0 0.0
    %3100 = vmatpush1.msra.mxu0 0.0
    %3101 = vmatprep.subr.mxu0 0.0
    %3102 = vmatpush1.msra.mxu0 0.0
    %3103 = vmatprep.subr.mxu0 0.0
    %3104 = vmatpush1.msra.mxu0 0.0
    %3105 = vmatprep.subr.mxu0 0.0
    %3106 = vmatpush1.msra.mxu0 0.0
    %3107 = vmatprep.subr.mxu0 0.0
    %3108 = vmatpush1.msra.mxu0 0.0
    %3109 = vmatprep.subr.mxu0 0.0
    %3110 = vmatpush1.msra.mxu0 0.0
    %3111 = vmatprep.subr.mxu0 0.0
    %3112 = vmatpush1.msra.mxu0 0.0
    %3113 = vmatprep.subr.mxu0 0.0
    %3114 = vmatpush1.msra.mxu0 0.0
    %3115 = vmatprep.subr.mxu0 0.0
    %3116 = vmatpush1.msra.mxu0 0.0
    %3117 = vmatprep.subr.mxu0 0.0
    %3118 = vmatpush1.msra.mxu0 0.0
    %3119 = vmatprep.subr.mxu0 0.0
    %3120 = vmatpush1.msra.mxu0 0.0
    %3121 = vmatprep.subr.mxu0 0.0
    %3122 = vmatpush1.msra.mxu0 0.0
    %3123 = vmatprep.subr.mxu0 0.0
    %3124 = vmatpush1.msra.mxu0 0.0
    %3125 = vmatprep.subr.mxu0 0.0
    %3126 = vmatpush1.msra.mxu0 0.0
    %3127 = vmatprep.subr.mxu0 0.0
    %3128 = vmatpush1.msra.mxu0 0.0
    %3129 = vmatprep.subr.mxu0 0.0
    %3130 = vmatpush1.msra.mxu0 0.0
    %3131 = vmatprep.subr.mxu0 0.0
    %3132 = vmatpush1.msra.mxu0 0.0
    %3133 = vmatprep.subr.mxu0 0.0
    %3134 = vmatpush1.msra.mxu0 0.0
    %3135 = vmatprep.subr.mxu0 0.0
    %3136 = vmatpush1.msra.mxu0 0.0
    %3137 = vmatprep.subr.mxu0 0.0
    %3138 = vmatpush1.msra.mxu0 0.0
    %3139 = vmatprep.subr.mxu0 0.0
    %3140 = vmatpush1.msra.mxu0 0.0
    %3141 = vmatprep.subr.mxu0 0.0
    %3142 = vmatpush1.msra.mxu0 0.0
    %3143 = vmatprep.subr.mxu0 0.0
    %3144 = vmatpush1.msra.mxu0 0.0
    %3145 = vmatprep.subr.mxu0 0.0
    %3146 = vmatpush1.msra.mxu0 0.0
    %3147 = vmatprep.subr.mxu0 0.0
    %3148 = vmatpush1.msra.mxu0 0.0
    %3149 = vmatprep.subr.mxu0 0.0
    %3150 = vmatpush1.msra.mxu0 0.0
    %3151 = vmatprep.mubr.f32.mxu0 0.0
    %3152 = vmatmul.mubr.f32.gmra.mrb[0].mxu0 %v3085
    %v3153 = vpop.f32.mrb[0].mxu0
    %v3154 = vadd.f32 0.0, %v3153
    %v3155 = vpop.f32.mrb[0].mxu0
    %3156 = vdwg.mxu0
    %v3158 = vsel %vm511, %v3083, 0
    %3160 = vmatprep.subr.mxu0 0.0
    %3161 = vmatpush1.msra.mxu0 %v127
    %3162 = vmatprep.subr.mxu0 0.0
    %3163 = vmatpush1.msra.mxu0 0.0
    %3164 = vmatprep.subr.mxu0 0.0
    %3165 = vmatpush1.msra.mxu0 0.0
    %3166 = vmatprep.subr.mxu0 0.0
    %3167 = vmatpush1.msra.mxu0 0.0
    %3168 = vmatprep.subr.mxu0 0.0
    %3169 = vmatpush1.msra.mxu0 0.0
    %3170 = vmatprep.subr.mxu0 0.0
    %3171 = vmatpush1.msra.mxu0 0.0
    %3172 = vmatprep.subr.mxu0 0.0
    %3173 = vmatpush1.msra.mxu0 0.0
    %3174 = vmatprep.subr.mxu0 0.0
    %3175 = vmatpush1.msra.mxu0 0.0
    %3176 = vmatprep.subr.mxu0 0.0
    %3177 = vmatpush1.msra.mxu0 0.0
    %3178 = vmatprep.subr.mxu0 0.0
    %3179 = vmatpush1.msra.mxu0 0.0
    %3180 = vmatprep.subr.mxu0 0.0
    %3181 = vmatpush1.msra.mxu0 0.0
    %3182 = vmatprep.subr.mxu0 0.0
    %3183 = vmatpush1.msra.mxu0 0.0
    %3184 = vmatprep.subr.mxu0 0.0
    %3185 = vmatpush1.msra.mxu0 0.0
    %3186 = vmatprep.subr.mxu0 0.0
    %3187 = vmatpush1.msra.mxu0 0.0
    %3188 = vmatprep.subr.mxu0 0.0
    %3189 = vmatpush1.msra.mxu0 0.0
    %3190 = vmatprep.subr.mxu0 0.0
    %3191 = vmatpush1.msra.mxu0 0.0
    %3192 = vmatprep.subr.mxu0 0.0
    %3193 = vmatpush1.msra.mxu0 0.0
    %3194 = vmatprep.subr.mxu0 0.0
    %3195 = vmatpush1.msra.mxu0 0.0
    %3196 = vmatprep.subr.mxu0 0.0
    %3197 = vmatpush1.msra.mxu0 0.0
    %3198 = vmatprep.subr.mxu0 0.0
    %3199 = vmatpush1.msra.mxu0 0.0
    %3200 = vmatprep.subr.mxu0 0.0
    %3201 = vmatpush1.msra.mxu0 0.0
    %3202 = vmatprep.subr.mxu0 0.0
    %3203 = vmatpush1.msra.mxu0 0.0
    %3204 = vmatprep.subr.mxu0 0.0
    %3205 = vmatpush1.msra.mxu0 0.0
    %3206 = vmatprep.subr.mxu0 0.0
    %3207 = vmatpush1.msra.mxu0 0.0
    %3208 = vmatprep.subr.mxu0 0.0
    %3209 = vmatpush1.msra.mxu0 0.0
    %3210 = vmatprep.subr.mxu0 0.0
    %3211 = vmatpush1.msra.mxu0 0.0
    %3212 = vmatprep.subr.mxu0 0.0
    %3213 = vmatpush1.msra.mxu0 0.0
    %3214 = vmatprep.subr.mxu0 0.0
    %3215 = vmatpush1.msra.mxu0 0.0
    %3216 = vmatprep.subr.mxu0 0.0
    %3217 = vmatpush1.msra.mxu0 0.0
    %3218 = vmatprep.subr.mxu0 0.0
    %3219 = vmatpush1.msra.mxu0 0.0
    %3220 = vmatprep.subr.mxu0 0.0
    %3221 = vmatpush1.msra.mxu0 0.0
    %3222 = vmatprep.subr.mxu0 0.0
    %3223 = vmatpush1.msra.mxu0 0.0
    %3224 = vmatprep.mubr.f32.mxu0 0.0
    %3225 = vmatmul.mubr.f32.gmra.mrb[0].mxu0 %v3158
    %v3226 = vpop.f32.mrb[0].mxu0
    %v3227 = vadd.f32 0.0, %v3226
    %v3228 = vpop.f32.mrb[0].mxu0
    %3229 = vdwg.mxu0
    %v3232 = vunpack.c.l.s4 1966171168
    %v3233 = vunpack.c.0.s8 %v3232
    %v3234 = vlaneseq
    %v3235 = vshrl.u32 %v3234, 7
    %v3236 = vsub.s32 %v3233, %v3235
    %v3237 = vrot.slane %v2872, %v3236
    %v3238 = vcombine.high %v3237, %v3237
    %v3240 = vunpack.c.l.s4 1966171168
    %v3241 = vunpack.c.0.s8 %v3240
    %v3242 = vlaneseq
    %v3243 = vshrl.u32 %v3242, 7
    %v3244 = vsub.s32 %v3241, %v3243
    %v3245 = vrot.slane %v3237, %v3244
    %v3247 = vunpack.c.l.s4 1966171168
    %v3248 = vunpack.c.0.s8 %v3247
    %v3249 = vlaneseq
    %v3250 = vshrl.u32 %v3249, 7
    %v3251 = vsub.s32 %v3248, %v3250
    %v3252 = vrot.slane %v3238, %v3251
    %3255 = vst.msk [vmem:[%s10 + $0x2] sm:$0x1] %vm216, %v3245
    %3256 = vst.msk [vmem:[%s10 + $0xa] sm:$0x1] %vm216, %v3252
    %v3257 = vlaneseq
    %v3258 = vshrl.u32 %v3257, 7
    %v3259 = vsub.s32 0, %v3258
    %v3260 = vrot.slane %v2892, %v3259
    %v3261 = vlaneseq
    %v3262 = vshrl.u32 %v3261, 7
    %v3263 = vsub.s32 1, %v3262
    %v3264 = vrot.slane %v2892, %v3263
    %3265 = vst.msk [vmem:[%s11 + $0x2] sm:$0x1] %vm219, %v3260
    %3266 = vst.msk [vmem:[%s11 + $0xa] sm:$0x1] %vm219, %v3264
    %3267 = vmatprep.subr.mxu0 0.0
    %3268 = vmatpush1.msra.mxu0 %v130
    %3269 = vmatprep.subr.mxu0 0.0
    %3270 = vmatpush1.msra.mxu0 %v131
    %3271 = vmatprep.subr.mxu0 0.0
    %3272 = vmatpush1.msra.mxu0 %v132
    %3273 = vmatprep.subr.mxu0 0.0
    %3274 = vmatpush1.msra.mxu0 %v133
    %3275 = vmatprep.subr.mxu0 0.0
    %3276 = vmatpush1.msra.mxu0 0.0
    %3277 = vmatprep.subr.mxu0 0.0
    %3278 = vmatpush1.msra.mxu0 0.0
    %3279 = vmatprep.subr.mxu0 0.0
    %3280 = vmatpush1.msra.mxu0 0.0
    %3281 = vmatprep.subr.mxu0 0.0
    %3282 = vmatpush1.msra.mxu0 0.0
    %3283 = vmatprep.subr.mxu0 0.0
    %3284 = vmatpush1.msra.mxu0 0.0
    %3285 = vmatprep.subr.mxu0 0.0
    %3286 = vmatpush1.msra.mxu0 0.0
    %3287 = vmatprep.subr.mxu0 0.0
    %3288 = vmatpush1.msra.mxu0 0.0
    %3289 = vmatprep.subr.mxu0 0.0
    %3290 = vmatpush1.msra.mxu0 0.0
    %3291 = vmatprep.subr.mxu0 0.0
    %3292 = vmatpush1.msra.mxu0 0.0
    %3293 = vmatprep.subr.mxu0 0.0
    %3294 = vmatpush1.msra.mxu0 0.0
    %3295 = vmatprep.subr.mxu0 0.0
    %3296 = vmatpush1.msra.mxu0 0.0
    %3297 = vmatprep.subr.mxu0 0.0
    %3298 = vmatpush1.msra.mxu0 0.0
    %3299 = vmatprep.subr.mxu0 0.0
    %3300 = vmatpush1.msra.mxu0 0.0
    %3301 = vmatprep.subr.mxu0 0.0
    %3302 = vmatpush1.msra.mxu0 0.0
    %3303 = vmatprep.subr.mxu0 0.0
    %3304 = vmatpush1.msra.mxu0 0.0
    %3305 = vmatprep.subr.mxu0 0.0
    %3306 = vmatpush1.msra.mxu0 0.0
    %3307 = vmatprep.subr.mxu0 0.0
    %3308 = vmatpush1.msra.mxu0 0.0
    %3309 = vmatprep.subr.mxu0 0.0
    %3310 = vmatpush1.msra.mxu0 0.0
    %3311 = vmatprep.subr.mxu0 0.0
    %3312 = vmatpush1.msra.mxu0 0.0
    %3313 = vmatprep.subr.mxu0 0.0
    %3314 = vmatpush1.msra.mxu0 0.0
    %3315 = vmatprep.subr.mxu0 0.0
    %3316 = vmatpush1.msra.mxu0 0.0
    %3317 = vmatprep.subr.mxu0 0.0
    %3318 = vmatpush1.msra.mxu0 0.0
    %3319 = vmatprep.subr.mxu0 0.0
    %3320 = vmatpush1.msra.mxu0 0.0
    %3321 = vmatprep.subr.mxu0 0.0
    %3322 = vmatpush1.msra.mxu0 0.0
    %3323 = vmatprep.subr.mxu0 0.0
    %3324 = vmatpush1.msra.mxu0 0.0
    %3325 = vmatprep.subr.mxu0 0.0
    %3326 = vmatpush1.msra.mxu0 0.0
    %3327 = vmatprep.subr.mxu0 0.0
    %3328 = vmatpush1.msra.mxu0 0.0
    %3329 = vmatprep.subr.mxu0 0.0
    %3330 = vmatpush1.msra.mxu0 0.0
    %3331 = vmatprep.mubr.f32.mxu0 0.0
    %3332 = vmatmul.mubr.f32.gmra.mrb[0].mxu0 %v2439
    %v3333 = vpop.f32.mrb[0].mxu0
    %v3334 = vadd.f32 %v226, %v3333
    %v3335 = vpop.f32.mrb[0].mxu0
    %3336 = vdwg.mxu0
    %v3339 = vunpack.c.l.s4 1966171168
    %v3340 = vunpack.c.0.s8 %v3339
    %v3341 = vlaneseq
    %v3342 = vshrl.u32 %v3341, 7
    %v3343 = vsub.s32 %v3340, %v3342
    %v3344 = vrot.slane %v3334, %v3343
    %v3345 = vcombine.high %v3344, %v3344
    %v3347 = vunpack.c.l.s4 1966171168
    %v3348 = vunpack.c.0.s8 %v3347
    %v3349 = vlaneseq
    %v3350 = vshrl.u32 %v3349, 7
    %v3351 = vsub.s32 %v3348, %v3350
    %v3352 = vrot.slane %v3344, %v3351
    %v3354 = vunpack.c.l.s4 1966171168
    %v3355 = vunpack.c.0.s8 %v3354
    %v3356 = vlaneseq
    %v3357 = vshrl.u32 %v3356, 7
    %v3358 = vsub.s32 %v3355, %v3357
    %v3359 = vrot.slane %v3345, %v3358
    %v3360 = vsel %vm228, %v3352, 0
    %3362 = vmatprep.subr.mxu0 0.0
    %3363 = vmatpush1.xpose.msra.mxu0 %v328
    %3364 = vmatprep.subr.mxu0 0.0
    %3365 = vmatpush1.xpose.msra.mxu0 0.0
    %3366 = vmatprep.subr.mxu0 0.0
    %3367 = vmatpush1.xpose.msra.mxu0 0.0
    %3368 = vmatprep.subr.mxu0 0.0
    %3369 = vmatpush1.xpose.msra.mxu0 0.0
    %3370 = vmatprep.subr.mxu0 0.0
    %3371 = vmatpush1.xpose.msra.mxu0 0.0
    %3372 = vmatprep.subr.mxu0 0.0
    %3373 = vmatpush1.xpose.msra.mxu0 0.0
    %3374 = vmatprep.subr.mxu0 0.0
    %3375 = vmatpush1.xpose.msra.mxu0 0.0
    %3376 = vmatprep.subr.mxu0 0.0
    %3377 = vmatpush1.xpose.msra.mxu0 0.0
    %3378 = vmatprep.subr.mxu0 0.0
    %3379 = vmatpush1.xpose.msra.mxu0 0.0
    %3380 = vmatprep.subr.mxu0 0.0
    %3381 = vmatpush1.xpose.msra.mxu0 0.0
    %3382 = vmatprep.subr.mxu0 0.0
    %3383 = vmatpush1.xpose.msra.mxu0 0.0
    %3384 = vmatprep.subr.mxu0 0.0
    %3385 = vmatpush1.xpose.msra.mxu0 0.0
    %3386 = vmatprep.subr.mxu0 0.0
    %3387 = vmatpush1.xpose.msra.mxu0 0.0
    %3388 = vmatprep.subr.mxu0 0.0
    %3389 = vmatpush1.xpose.msra.mxu0 0.0
    %3390 = vmatprep.subr.mxu0 0.0
    %3391 = vmatpush1.xpose.msra.mxu0 0.0
    %3392 = vmatprep.subr.mxu0 0.0
    %3393 = vmatpush1.xpose.msra.mxu0 0.0
    %3394 = vmatprep.subr.mxu0 0.0
    %3395 = vmatpush1.xpose.msra.mxu0 0.0
    %3396 = vmatprep.subr.mxu0 0.0
    %3397 = vmatpush1.xpose.msra.mxu0 0.0
    %3398 = vmatprep.subr.mxu0 0.0
    %3399 = vmatpush1.xpose.msra.mxu0 0.0
    %3400 = vmatprep.subr.mxu0 0.0
    %3401 = vmatpush1.xpose.msra.mxu0 0.0
    %3402 = vmatprep.subr.mxu0 0.0
    %3403 = vmatpush1.xpose.msra.mxu0 0.0
    %3404 = vmatprep.subr.mxu0 0.0
    %3405 = vmatpush1.xpose.msra.mxu0 0.0
    %3406 = vmatprep.subr.mxu0 0.0
    %3407 = vmatpush1.xpose.msra.mxu0 0.0
    %3408 = vmatprep.subr.mxu0 0.0
    %3409 = vmatpush1.xpose.msra.mxu0 0.0
    %3410 = vmatprep.subr.mxu0 0.0
    %3411 = vmatpush1.xpose.msra.mxu0 0.0
    %3412 = vmatprep.subr.mxu0 0.0
    %3413 = vmatpush1.xpose.msra.mxu0 0.0
    %3414 = vmatprep.subr.mxu0 0.0
    %3415 = vmatpush1.xpose.msra.mxu0 0.0
    %3416 = vmatprep.subr.mxu0 0.0
    %3417 = vmatpush1.xpose.msra.mxu0 0.0
    %3418 = vmatprep.subr.mxu0 0.0
    %3419 = vmatpush1.xpose.msra.mxu0 0.0
    %3420 = vmatprep.subr.mxu0 0.0
    %3421 = vmatpush1.xpose.msra.mxu0 0.0
    %3422 = vmatprep.subr.mxu0 0.0
    %3423 = vmatpush1.xpose.msra.mxu0 0.0
    %3424 = vmatprep.subr.mxu0 0.0
    %3425 = vmatpush1.xpose.msra.mxu0 0.0
    %3426 = vmatprep.mubr.f32.mxu0 0.0
    %3427 = vmatmul.mubr.f32.gmra.mrb[0].mxu0 %v3360
    %v3428 = vpop.f32.mrb[0].mxu0
    %v3429 = vadd.f32 0.0, %v3428
    %v3430 = vpop.f32.mrb[0].mxu0
    %3431 = vdwg.mxu0
    %v3432 = vsel %vm228, %v3359, 0
    %3434 = vmatprep.subr.mxu0 0.0
    %3435 = vmatpush1.xpose.msra.mxu0 %v403
    %3436 = vmatprep.subr.mxu0 0.0
    %3437 = vmatpush1.xpose.msra.mxu0 0.0
    %3438 = vmatprep.subr.mxu0 0.0
    %3439 = vmatpush1.xpose.msra.mxu0 0.0
    %3440 = vmatprep.subr.mxu0 0.0
    %3441 = vmatpush1.xpose.msra.mxu0 0.0
    %3442 = vmatprep.subr.mxu0 0.0
    %3443 = vmatpush1.xpose.msra.mxu0 0.0
    %3444 = vmatprep.subr.mxu0 0.0
    %3445 = vmatpush1.xpose.msra.mxu0 0.0
    %3446 = vmatprep.subr.mxu0 0.0
    %3447 = vmatpush1.xpose.msra.mxu0 0.0
    %3448 = vmatprep.subr.mxu0 0.0
    %3449 = vmatpush1.xpose.msra.mxu0 0.0
    %3450 = vmatprep.subr.mxu0 0.0
    %3451 = vmatpush1.xpose.msra.mxu0 0.0
    %3452 = vmatprep.subr.mxu0 0.0
    %3453 = vmatpush1.xpose.msra.mxu0 0.0
    %3454 = vmatprep.subr.mxu0 0.0
    %3455 = vmatpush1.xpose.msra.mxu0 0.0
    %3456 = vmatprep.subr.mxu0 0.0
    %3457 = vmatpush1.xpose.msra.mxu0 0.0
    %3458 = vmatprep.subr.mxu0 0.0
    %3459 = vmatpush1.xpose.msra.mxu0 0.0
    %3460 = vmatprep.subr.mxu0 0.0
    %3461 = vmatpush1.xpose.msra.mxu0 0.0
    %3462 = vmatprep.subr.mxu0 0.0
    %3463 = vmatpush1.xpose.msra.mxu0 0.0
    %3464 = vmatprep.subr.mxu0 0.0
    %3465 = vmatpush1.xpose.msra.mxu0 0.0
    %3466 = vmatprep.subr.mxu0 0.0
    %3467 = vmatpush1.xpose.msra.mxu0 0.0
    %3468 = vmatprep.subr.mxu0 0.0
    %3469 = vmatpush1.xpose.msra.mxu0 0.0
    %3470 = vmatprep.subr.mxu0 0.0
    %3471 = vmatpush1.xpose.msra.mxu0 0.0
    %3472 = vmatprep.subr.mxu0 0.0
    %3473 = vmatpush1.xpose.msra.mxu0 0.0
    %3474 = vmatprep.subr.mxu0 0.0
    %3475 = vmatpush1.xpose.msra.mxu0 0.0
    %3476 = vmatprep.subr.mxu0 0.0
    %3477 = vmatpush1.xpose.msra.mxu0 0.0
    %3478 = vmatprep.subr.mxu0 0.0
    %3479 = vmatpush1.xpose.msra.mxu0 0.0
    %3480 = vmatprep.subr.mxu0 0.0
    %3481 = vmatpush1.xpose.msra.mxu0 0.0
    %3482 = vmatprep.subr.mxu0 0.0
    %3483 = vmatpush1.xpose.msra.mxu0 0.0
    %3484 = vmatprep.subr.mxu0 0.0
    %3485 = vmatpush1.xpose.msra.mxu0 0.0
    %3486 = vmatprep.subr.mxu0 0.0
    %3487 = vmatpush1.xpose.msra.mxu0 0.0
    %3488 = vmatprep.subr.mxu0 0.0
    %3489 = vmatpush1.xpose.msra.mxu0 0.0
    %3490 = vmatprep.subr.mxu0 0.0
    %3491 = vmatpush1.xpose.msra.mxu0 0.0
    %3492 = vmatprep.subr.mxu0 0.0
    %3493 = vmatpush1.xpose.msra.mxu0 0.0
    %3494 = vmatprep.subr.mxu0 0.0
    %3495 = vmatpush1.xpose.msra.mxu0 0.0
    %3496 = vmatprep.subr.mxu0 0.0
    %3497 = vmatpush1.xpose.msra.mxu0 0.0
    %3498 = vmatprep.mubr.f32.mxu0 0.0
    %3499 = vmatmul.mubr.f32.gmra.mrb[0].mxu0 %v3432
    %v3500 = vpop.f32.mrb[0].mxu0
    %v3501 = vadd.f32 0.0, %v3500
    %v3502 = vpop.f32.mrb[0].mxu0
    %3503 = vdwg.mxu0
    %v3506 = vrot.slane %v3501, 7
    %v3507 = vsel %vm478, %v3506, %v3429
    %v3509 = vsel %vm481, %v3507, -inf
    %3510 = vmax.xlane.f32.xlu0 %v3509
    %v3511 = vpop.xlane.xlu0 %3510
    %v3513 = vrot.slane %v3511, 1
    %v3516 = vsub.f32 %v3429, %v3511
    %v3517 = vsub.f32 %v3501, %v3513
    %v3518 = vmul.f32 %v3516, 1.442695
    %v3519 = vpow.pop %v3518
    %v3520 = vmul.f32 %v3517, 1.442695
    %v3521 = vpow.pop %v3520
    %v3524 = vrot.slane %v3521, 7
    %v3525 = vsel %vm478, %v3524, %v3519
    %v3527 = vsel %vm481, %v3525, 0.0
    %3528 = vadd.xlane.f32.xlu0 %v3527
    %v3529 = vpop.xlane.xlu0 %3528
    %v3531 = vrot.slane %v3529, 1
    %v3534 = vrcp.pop %v3529
    %v3535 = vmul.f32 %v3519, %v3534
    %v3536 = vrcp.pop %v3531
    %v3537 = vmul.f32 %v3521, %v3536
    %v3539 = vsel %vm511, %v3535, 0
    %3541 = vmatprep.subr.mxu0 0.0
    %3542 = vmatpush1.msra.mxu0 %v126
    %3543 = vmatprep.subr.mxu0 0.0
    %3544 = vmatpush1.msra.mxu0 0.0
    %3545 = vmatprep.subr.mxu0 0.0
    %3546 = vmatpush1.msra.mxu0 0.0
    %3547 = vmatprep.subr.mxu0 0.0
    %3548 = vmatpush1.msra.mxu0 0.0
    %3549 = vmatprep.subr.mxu0 0.0
    %3550 = vmatpush1.msra.mxu0 0.0
    %3551 = vmatprep.subr.mxu0 0.0
    %3552 = vmatpush1.msra.mxu0 0.0
    %3553 = vmatprep.subr.mxu0 0.0
    %3554 = vmatpush1.msra.mxu0 0.0
    %3555 = vmatprep.subr.mxu0 0.0
    %3556 = vmatpush1.msra.mxu0 0.0
    %3557 = vmatprep.subr.mxu0 0.0
    %3558 = vmatpush1.msra.mxu0 0.0
    %3559 = vmatprep.subr.mxu0 0.0
    %3560 = vmatpush1.msra.mxu0 0.0
    %3561 = vmatprep.subr.mxu0 0.0
    %3562 = vmatpush1.msra.mxu0 0.0
    %3563 = vmatprep.subr.mxu0 0.0
    %3564 = vmatpush1.msra.mxu0 0.0
    %3565 = vmatprep.subr.mxu0 0.0
    %3566 = vmatpush1.msra.mxu0 0.0
    %3567 = vmatprep.subr.mxu0 0.0
    %3568 = vmatpush1.msra.mxu0 0.0
    %3569 = vmatprep.subr.mxu0 0.0
    %3570 = vmatpush1.msra.mxu0 0.0
    %3571 = vmatprep.subr.mxu0 0.0
    %3572 = vmatpush1.msra.mxu0 0.0
    %3573 = vmatprep.subr.mxu0 0.0
    %3574 = vmatpush1.msra.mxu0 0.0
    %3575 = vmatprep.subr.mxu0 0.0
    %3576 = vmatpush1.msra.mxu0 0.0
    %3577 = vmatprep.subr.mxu0 0.0
    %3578 = vmatpush1.msra.mxu0 0.0
    %3579 = vmatprep.subr.mxu0 0.0
    %3580 = vmatpush1.msra.mxu0 0.0
    %3581 = vmatprep.subr.mxu0 0.0
    %3582 = vmatpush1.msra.mxu0 0.0
    %3583 = vmatprep.subr.mxu0 0.0
    %3584 = vmatpush1.msra.mxu0 0.0
    %3585 = vmatprep.subr.mxu0 0.0
    %3586 = vmatpush1.msra.mxu0 0.0
    %3587 = vmatprep.subr.mxu0 0.0
    %3588 = vmatpush1.msra.mxu0 0.0
    %3589 = vmatprep.subr.mxu0 0.0
    %3590 = vmatpush1.msra.mxu0 0.0
    %3591 = vmatprep.subr.mxu0 0.0
    %3592 = vmatpush1.msra.mxu0 0.0
    %3593 = vmatprep.subr.mxu0 0.0
    %3594 = vmatpush1.msra.mxu0 0.0
    %3595 = vmatprep.subr.mxu0 0.0
    %3596 = vmatpush1.msra.mxu0 0.0
    %3597 = vmatprep.subr.mxu0 0.0
    %3598 = vmatpush1.msra.mxu0 0.0
    %3599 = vmatprep.subr.mxu0 0.0
    %3600 = vmatpush1.msra.mxu0 0.0
    %3601 = vmatprep.subr.mxu0 0.0
    %3602 = vmatpush1.msra.mxu0 0.0
    %3603 = vmatprep.subr.mxu0 0.0
    %3604 = vmatpush1.msra.mxu0 0.0
    %3605 = vmatprep.mubr.f32.mxu0 0.0
    %3606 = vmatmul.mubr.f32.gmra.mrb[0].mxu0 %v3539
    %v3607 = vpop.f32.mrb[0].mxu0
    %v3608 = vadd.f32 0.0, %v3607
    %v3609 = vpop.f32.mrb[0].mxu0
    %3610 = vdwg.mxu0
    %v3612 = vsel %vm511, %v3537, 0
    %3614 = vmatprep.subr.mxu0 0.0
    %3615 = vmatpush1.msra.mxu0 %v127
    %3616 = vmatprep.subr.mxu0 0.0
    %3617 = vmatpush1.msra.mxu0 0.0
    %3618 = vmatprep.subr.mxu0 0.0
    %3619 = vmatpush1.msra.mxu0 0.0
    %3620 = vmatprep.subr.mxu0 0.0
    %3621 = vmatpush1.msra.mxu0 0.0
    %3622 = vmatprep.subr.mxu0 0.0
    %3623 = vmatpush1.msra.mxu0 0.0
    %3624 = vmatprep.subr.mxu0 0.0
    %3625 = vmatpush1.msra.mxu0 0.0
    %3626 = vmatprep.subr.mxu0 0.0
    %3627 = vmatpush1.msra.mxu0 0.0
    %3628 = vmatprep.subr.mxu0 0.0
    %3629 = vmatpush1.msra.mxu0 0.0
    %3630 = vmatprep.subr.mxu0 0.0
    %3631 = vmatpush1.msra.mxu0 0.0
    %3632 = vmatprep.subr.mxu0 0.0
    %3633 = vmatpush1.msra.mxu0 0.0
    %3634 = vmatprep.subr.mxu0 0.0
    %3635 = vmatpush1.msra.mxu0 0.0
    %3636 = vmatprep.subr.mxu0 0.0
    %3637 = vmatpush1.msra.mxu0 0.0
    %3638 = vmatprep.subr.mxu0 0.0
    %3639 = vmatpush1.msra.mxu0 0.0
    %3640 = vmatprep.subr.mxu0 0.0
    %3641 = vmatpush1.msra.mxu0 0.0
    %3642 = vmatprep.subr.mxu0 0.0
    %3643 = vmatpush1.msra.mxu0 0.0
    %3644 = vmatprep.subr.mxu0 0.0
    %3645 = vmatpush1.msra.mxu0 0.0
    %3646 = vmatprep.subr.mxu0 0.0
    %3647 = vmatpush1.msra.mxu0 0.0
    %3648 = vmatprep.subr.mxu0 0.0
    %3649 = vmatpush1.msra.mxu0 0.0
    %3650 = vmatprep.subr.mxu0 0.0
    %3651 = vmatpush1.msra.mxu0 0.0
    %3652 = vmatprep.subr.mxu0 0.0
    %3653 = vmatpush1.msra.mxu0 0.0
    %3654 = vmatprep.subr.mxu0 0.0
    %3655 = vmatpush1.msra.mxu0 0.0
    %3656 = vmatprep.subr.mxu0 0.0
    %3657 = vmatpush1.msra.mxu0 0.0
    %3658 = vmatprep.subr.mxu0 0.0
    %3659 = vmatpush1.msra.mxu0 0.0
    %3660 = vmatprep.subr.mxu0 0.0
    %3661 = vmatpush1.msra.mxu0 0.0
    %3662 = vmatprep.subr.mxu0 0.0
    %3663 = vmatpush1.msra.mxu0 0.0
    %3664 = vmatprep.subr.mxu0 0.0
    %3665 = vmatpush1.msra.mxu0 0.0
    %3666 = vmatprep.subr.mxu0 0.0
    %3667 = vmatpush1.msra.mxu0 0.0
    %3668 = vmatprep.subr.mxu0 0.0
    %3669 = vmatpush1.msra.mxu0 0.0
    %3670 = vmatprep.subr.mxu0 0.0
    %3671 = vmatpush1.msra.mxu0 0.0
    %3672 = vmatprep.subr.mxu0 0.0
    %3673 = vmatpush1.msra.mxu0 0.0
    %3674 = vmatprep.subr.mxu0 0.0
    %3675 = vmatpush1.msra.mxu0 0.0
    %3676 = vmatprep.subr.mxu0 0.0
    %3677 = vmatpush1.msra.mxu0 0.0
    %3678 = vmatprep.mubr.f32.mxu0 0.0
    %3679 = vmatmul.mubr.f32.gmra.mrb[0].mxu0 %v3612
    %v3680 = vpop.f32.mrb[0].mxu0
    %v3681 = vadd.f32 0.0, %v3680
    %v3682 = vpop.f32.mrb[0].mxu0
    %3683 = vdwg.mxu0
    %vm3684 = vcmp.gt.s32.totalorder %v2892, 32
    %v3685 = vsel %vm3684, 3, %v2892
    %vm3686 = vcmp.eq.s32.totalorder %v154, %v3685
    %v3687 = vsel %vm3686, 1, 0
    %v3688 = vcvt.s32.f32 %v3687
    %v3691 = vrot.slane %v3227, 7
    %v3692 = vsel %vm478, %v3691, %v3154
    %v3693 = vsel %vm228, %v3692, 0
    %3695 = vmatprep.subr.mxu0 0.0
    %3696 = vmatpush1.msra.mxu0 %v139
    %3697 = vmatprep.subr.mxu0 0.0
    %3698 = vmatpush1.msra.mxu0 %v140
    %3699 = vmatprep.subr.mxu0 0.0
    %3700 = vmatpush1.msra.mxu0 %v141
    %3701 = vmatprep.subr.mxu0 0.0
    %3702 = vmatpush1.msra.mxu0 %v142
    %3703 = vmatprep.subr.mxu0 0.0
    %3704 = vmatpush1.msra.mxu0 0.0
    %3705 = vmatprep.subr.mxu0 0.0
    %3706 = vmatpush1.msra.mxu0 0.0
    %3707 = vmatprep.subr.mxu0 0.0
    %3708 = vmatpush1.msra.mxu0 0.0
    %3709 = vmatprep.subr.mxu0 0.0
    %3710 = vmatpush1.msra.mxu0 0.0
    %3711 = vmatprep.subr.mxu0 0.0
    %3712 = vmatpush1.msra.mxu0 0.0
    %3713 = vmatprep.subr.mxu0 0.0
    %3714 = vmatpush1.msra.mxu0 0.0
    %3715 = vmatprep.subr.mxu0 0.0
    %3716 = vmatpush1.msra.mxu0 0.0
    %3717 = vmatprep.subr.mxu0 0.0
    %3718 = vmatpush1.msra.mxu0 0.0
    %3719 = vmatprep.subr.mxu0 0.0
    %3720 = vmatpush1.msra.mxu0 0.0
    %3721 = vmatprep.subr.mxu0 0.0
    %3722 = vmatpush1.msra.mxu0 0.0
    %3723 = vmatprep.subr.mxu0 0.0
    %3724 = vmatpush1.msra.mxu0 0.0
    %3725 = vmatprep.subr.mxu0 0.0
    %3726 = vmatpush1.msra.mxu0 0.0
    %3727 = vmatprep.subr.mxu0 0.0
    %3728 = vmatpush1.msra.mxu0 0.0
    %3729 = vmatprep.subr.mxu0 0.0
    %3730 = vmatpush1.msra.mxu0 0.0
    %3731 = vmatprep.subr.mxu0 0.0
    %3732 = vmatpush1.msra.mxu0 0.0
    %3733 = vmatprep.subr.mxu0 0.0
    %3734 = vmatpush1.msra.mxu0 0.0
    %3735 = vmatprep.subr.mxu0 0.0
    %3736 = vmatpush1.msra.mxu0 0.0
    %3737 = vmatprep.subr.mxu0 0.0
    %3738 = vmatpush1.msra.mxu0 0.0
    %3739 = vmatprep.subr.mxu0 0.0
    %3740 = vmatpush1.msra.mxu0 0.0
    %3741 = vmatprep.subr.mxu0 0.0
    %3742 = vmatpush1.msra.mxu0 0.0
    %3743 = vmatprep.subr.mxu0 0.0
    %3744 = vmatpush1.msra.mxu0 0.0
    %3745 = vmatprep.subr.mxu0 0.0
    %3746 = vmatpush1.msra.mxu0 0.0
    %3747 = vmatprep.subr.mxu0 0.0
    %3748 = vmatpush1.msra.mxu0 0.0
    %3749 = vmatprep.subr.mxu0 0.0
    %3750 = vmatpush1.msra.mxu0 0.0
    %3751 = vmatprep.subr.mxu0 0.0
    %3752 = vmatpush1.msra.mxu0 0.0
    %3753 = vmatprep.subr.mxu0 0.0
    %3754 = vmatpush1.msra.mxu0 0.0
    %3755 = vmatprep.subr.mxu0 0.0
    %3756 = vmatpush1.msra.mxu0 0.0
    %3757 = vmatprep.subr.mxu0 0.0
    %3758 = vmatpush1.msra.mxu0 0.0
    %3759 = vmatprep.mubr.f32.mxu0 0.0
    %3760 = vmatmul.mubr.f32.gmra.mrb[0].mxu0 %v3693
    %v3761 = vpop.f32.mrb[0].mxu0
    %v3762 = vadd.f32 0.0, %v3761
    %v3763 = vpop.f32.mrb[0].mxu0
    %3764 = vdwg.mxu0
    %v3767 = vrot.slane %v3681, 7
    %v3768 = vsel %vm478, %v3767, %v3608
    %v3769 = vsel %vm228, %v3768, 0
    %3771 = vmatprep.subr.mxu0 0.0
    %3772 = vmatpush1.msra.mxu0 %v135
    %3773 = vmatprep.subr.mxu0 0.0
    %3774 = vmatpush1.msra.mxu0 %v136
    %3775 = vmatprep.subr.mxu0 0.0
    %3776 = vmatpush1.msra.mxu0 %v137
    %3777 = vmatprep.subr.mxu0 0.0
    %3778 = vmatpush1.msra.mxu0 %v138
    %3779 = vmatprep.subr.mxu0 0.0
    %3780 = vmatpush1.msra.mxu0 0.0
    %3781 = vmatprep.subr.mxu0 0.0
    %3782 = vmatpush1.msra.mxu0 0.0
    %3783 = vmatprep.subr.mxu0 0.0
    %3784 = vmatpush1.msra.mxu0 0.0
    %3785 = vmatprep.subr.mxu0 0.0
    %3786 = vmatpush1.msra.mxu0 0.0
    %3787 = vmatprep.subr.mxu0 0.0
    %3788 = vmatpush1.msra.mxu0 0.0
    %3789 = vmatprep.subr.mxu0 0.0
    %3790 = vmatpush1.msra.mxu0 0.0
    %3791 = vmatprep.subr.mxu0 0.0
    %3792 = vmatpush1.msra.mxu0 0.0
    %3793 = vmatprep.subr.mxu0 0.0
    %3794 = vmatpush1.msra.mxu0 0.0
    %3795 = vmatprep.subr.mxu0 0.0
    %3796 = vmatpush1.msra.mxu0 0.0
    %3797 = vmatprep.subr.mxu0 0.0
    %3798 = vmatpush1.msra.mxu0 0.0
    %3799 = vmatprep.subr.mxu0 0.0
    %3800 = vmatpush1.msra.mxu0 0.0
    %3801 = vmatprep.subr.mxu0 0.0
    %3802 = vmatpush1.msra.mxu0 0.0
    %3803 = vmatprep.subr.mxu0 0.0
    %3804 = vmatpush1.msra.mxu0 0.0
    %3805 = vmatprep.subr.mxu0 0.0
    %3806 = vmatpush1.msra.mxu0 0.0
    %3807 = vmatprep.subr.mxu0 0.0
    %3808 = vmatpush1.msra.mxu0 0.0
    %3809 = vmatprep.subr.mxu0 0.0
    %3810 = vmatpush1.msra.mxu0 0.0
    %3811 = vmatprep.subr.mxu0 0.0
    %3812 = vmatpush1.msra.mxu0 0.0
    %3813 = vmatprep.subr.mxu0 0.0
    %3814 = vmatpush1.msra.mxu0 0.0
    %3815 = vmatprep.subr.mxu0 0.0
    %3816 = vmatpush1.msra.mxu0 0.0
    %3817 = vmatprep.subr.mxu0 0.0
    %3818 = vmatpush1.msra.mxu0 0.0
    %3819 = vmatprep.subr.mxu0 0.0
    %3820 = vmatpush1.msra.mxu0 0.0
    %3821 = vmatprep.subr.mxu0 0.0
    %3822 = vmatpush1.msra.mxu0 0.0
    %3823 = vmatprep.subr.mxu0 0.0
    %3824 = vmatpush1.msra.mxu0 0.0
    %3825 = vmatprep.subr.mxu0 0.0
    %3826 = vmatpush1.msra.mxu0 0.0
    %3827 = vmatprep.subr.mxu0 0.0
    %3828 = vmatpush1.msra.mxu0 0.0
    %3829 = vmatprep.subr.mxu0 0.0
    %3830 = vmatpush1.msra.mxu0 0.0
    %3831 = vmatprep.subr.mxu0 0.0
    %3832 = vmatpush1.msra.mxu0 0.0
    %3833 = vmatprep.subr.mxu0 0.0
    %3834 = vmatpush1.msra.mxu0 0.0
    %3835 = vmatprep.mubr.f32.mxu0 0.0
    %3836 = vmatmul.mubr.f32.gmra.mrb[0].mxu0 %v3769
    %v3837 = vpop.f32.mrb[0].mxu0
    %v3838 = vadd.f32 %v3762, %v3837
    %v3839 = vpop.f32.mrb[0].mxu0
    %3840 = vdwg.mxu0
    %v3842 = vsel %vm228, %v3688, 0
    %3844 = vmatprep.subr.mxu0 0.0
    %3845 = vmatpush1.msra.mxu0 %v143
    %3846 = vmatprep.subr.mxu0 0.0
    %3847 = vmatpush1.msra.mxu0 %v144
    %3848 = vmatprep.subr.mxu0 0.0
    %3849 = vmatpush1.msra.mxu0 %v145
    %3850 = vmatprep.subr.mxu0 0.0
    %3851 = vmatpush1.msra.mxu0 %v146
    %3852 = vmatprep.subr.mxu0 0.0
    %3853 = vmatpush1.msra.mxu0 0.0
    %3854 = vmatprep.subr.mxu0 0.0
    %3855 = vmatpush1.msra.mxu0 0.0
    %3856 = vmatprep.subr.mxu0 0.0
    %3857 = vmatpush1.msra.mxu0 0.0
    %3858 = vmatprep.subr.mxu0 0.0
    %3859 = vmatpush1.msra.mxu0 0.0
    %3860 = vmatprep.subr.mxu0 0.0
    %3861 = vmatpush1.msra.mxu0 0.0
    %3862 = vmatprep.subr.mxu0 0.0
    %3863 = vmatpush1.msra.mxu0 0.0
    %3864 = vmatprep.subr.mxu0 0.0
    %3865 = vmatpush1.msra.mxu0 0.0
    %3866 = vmatprep.subr.mxu0 0.0
    %3867 = vmatpush1.msra.mxu0 0.0
    %3868 = vmatprep.subr.mxu0 0.0
    %3869 = vmatpush1.msra.mxu0 0.0
    %3870 = vmatprep.subr.mxu0 0.0
    %3871 = vmatpush1.msra.mxu0 0.0
    %3872 = vmatprep.subr.mxu0 0.0
    %3873 = vmatpush1.msra.mxu0 0.0
    %3874 = vmatprep.subr.mxu0 0.0
    %3875 = vmatpush1.msra.mxu0 0.0
    %3876 = vmatprep.subr.mxu0 0.0
    %3877 = vmatpush1.msra.mxu0 0.0
    %3878 = vmatprep.subr.mxu0 0.0
    %3879 = vmatpush1.msra.mxu0 0.0
    %3880 = vmatprep.subr.mxu0 0.0
    %3881 = vmatpush1.msra.mxu0 0.0
    %3882 = vmatprep.subr.mxu0 0.0
    %3883 = vmatpush1.msra.mxu0 0.0
    %3884 = vmatprep.subr.mxu0 0.0
    %3885 = vmatpush1.msra.mxu0 0.0
    %3886 = vmatprep.subr.mxu0 0.0
    %3887 = vmatpush1.msra.mxu0 0.0
    %3888 = vmatprep.subr.mxu0 0.0
    %3889 = vmatpush1.msra.mxu0 0.0
    %3890 = vmatprep.subr.mxu0 0.0
    %3891 = vmatpush1.msra.mxu0 0.0
    %3892 = vmatprep.subr.mxu0 0.0
    %3893 = vmatpush1.msra.mxu0 0.0
    %3894 = vmatprep.subr.mxu0 0.0
    %3895 = vmatpush1.msra.mxu0 0.0
    %3896 = vmatprep.subr.mxu0 0.0
    %3897 = vmatpush1.msra.mxu0 0.0
    %3898 = vmatprep.subr.mxu0 0.0
    %3899 = vmatpush1.msra.mxu0 0.0
    %3900 = vmatprep.subr.mxu0 0.0
    %3901 = vmatpush1.msra.mxu0 0.0
    %3902 = vmatprep.subr.mxu0 0.0
    %3903 = vmatpush1.msra.mxu0 0.0
    %3904 = vmatprep.subr.mxu0 0.0
    %3905 = vmatpush1.msra.mxu0 0.0
    %3906 = vmatprep.subr.mxu0 0.0
    %3907 = vmatpush1.msra.mxu0 0.0
    %3908 = vmatprep.mubr.f32.mxu0 0.0
    %3909 = vmatmul.mubr.f32.gmra.mrb[0].mxu0 %v3842
    %v3910 = vpop.f32.mrb[0].mxu0
    %v3911 = vadd.f32 0.0, %v3910
    %v3912 = vpop.f32.mrb[0].mxu0
    %3913 = vdwg.mxu0
    %v3914 = vadd.f32 %v3838, %v3911
    %v3915 = vadd.f32 %v3914, %v884
    %3916 = vrot.lane.b32.xlu0 %v3334, 96
    %v3917 = vpop.permute.xlu0 %3916
    %v3919 = vadd.f32 %v3915, %v3917
    %v3920 = vxor.u32 %v3919, 2147483648
    %v3921 = vmul.f32 %v3920, 1.442695
    %v3922 = vpow.pop %v3921
    %v3923 = vadd.f32 %v3922, 1.0
    %v3924 = vrcp.pop %v3923
    %v3925 = vmul.f32 1.0, %v3924
    %3926 = vrot.lane.b32.xlu0 %v3334, 32
    %v3927 = vpop.permute.xlu0 %3926
    %v3929 = vmul.f32 %v3925, %v3927
    %3931 = vrot.lane.b32.xlu0 %v3929, 64
    %v3932 = vpop.permute.xlu0 %3931
    %v3934 = vadd.f32 %v3915, %v3932
    %v3935 = vtanh.pop %v3934
    %v3936 = vsub.f32 1.0, %v3925
    %3938 = vrot.lane.b32.xlu0 %v3935, 96
    %v3939 = vpop.permute.xlu0 %3938
    %v3941 = vmul.f32 %v3936, %v3939
    %v3942 = vmul.f32 %v3925, %v2435
    %v3943 = vadd.f32 %v3941, %v3942
    %3945 = vrot.lane.b32.xlu0 %v3943, 96
    %v3946 = vpop.permute.xlu0 %3945
    %v3947 = vsel %vm228, %v3946, 0
    %3949 = vmatprep.subr.mxu0 0.0
    %3950 = vmatpush1.msra.mxu0 %v148
    %3951 = vmatprep.subr.mxu0 0.0
    %3952 = vmatpush1.msra.mxu0 %v149
    %3953 = vmatprep.subr.mxu0 0.0
    %3954 = vmatpush1.msra.mxu0 %v150
    %3955 = vmatprep.subr.mxu0 0.0
    %3956 = vmatpush1.msra.mxu0 %v151
    %3957 = vmatprep.subr.mxu0 0.0
    %3958 = vmatpush1.msra.mxu0 0.0
    %3959 = vmatprep.subr.mxu0 0.0
    %3960 = vmatpush1.msra.mxu0 0.0
    %3961 = vmatprep.subr.mxu0 0.0
    %3962 = vmatpush1.msra.mxu0 0.0
    %3963 = vmatprep.subr.mxu0 0.0
    %3964 = vmatpush1.msra.mxu0 0.0
    %3965 = vmatprep.subr.mxu0 0.0
    %3966 = vmatpush1.msra.mxu0 0.0
    %3967 = vmatprep.subr.mxu0 0.0
    %3968 = vmatpush1.msra.mxu0 0.0
    %3969 = vmatprep.subr.mxu0 0.0
    %3970 = vmatpush1.msra.mxu0 0.0
    %3971 = vmatprep.subr.mxu0 0.0
    %3972 = vmatpush1.msra.mxu0 0.0
    %3973 = vmatprep.subr.mxu0 0.0
    %3974 = vmatpush1.msra.mxu0 0.0
    %3975 = vmatprep.subr.mxu0 0.0
    %3976 = vmatpush1.msra.mxu0 0.0
    %3977 = vmatprep.subr.mxu0 0.0
    %3978 = vmatpush1.msra.mxu0 0.0
    %3979 = vmatprep.subr.mxu0 0.0
    %3980 = vmatpush1.msra.mxu0 0.0
    %3981 = vmatprep.subr.mxu0 0.0
    %3982 = vmatpush1.msra.mxu0 0.0
    %3983 = vmatprep.subr.mxu0 0.0
    %3984 = vmatpush1.msra.mxu0 0.0
    %3985 = vmatprep.subr.mxu0 0.0
    %3986 = vmatpush1.msra.mxu0 0.0
    %3987 = vmatprep.subr.mxu0 0.0
    %3988 = vmatpush1.msra.mxu0 0.0
    %3989 = vmatprep.subr.mxu0 0.0
    %3990 = vmatpush1.msra.mxu0 0.0
    %3991 = vmatprep.subr.mxu0 0.0
    %3992 = vmatpush1.msra.mxu0 0.0
    %3993 = vmatprep.subr.mxu0 0.0
    %3994 = vmatpush1.msra.mxu0 0.0
    %3995 = vmatprep.subr.mxu0 0.0
    %3996 = vmatpush1.msra.mxu0 0.0
    %3997 = vmatprep.subr.mxu0 0.0
    %3998 = vmatpush1.msra.mxu0 0.0
    %3999 = vmatprep.subr.mxu0 0.0
    %4000 = vmatpush1.msra.mxu0 0.0
    %4001 = vmatprep.subr.mxu0 0.0
    %4002 = vmatpush1.msra.mxu0 0.0
    %4003 = vmatprep.subr.mxu0 0.0
    %4004 = vmatpush1.msra.mxu0 0.0
    %4005 = vmatprep.subr.mxu0 0.0
    %4006 = vmatpush1.msra.mxu0 0.0
    %4007 = vmatprep.subr.mxu0 0.0
    %4008 = vmatpush1.msra.mxu0 0.0
    %4009 = vmatprep.subr.mxu0 0.0
    %4010 = vmatpush1.msra.mxu0 0.0
    %4011 = vmatprep.subr.mxu0 0.0
    %4012 = vmatpush1.msra.mxu0 0.0
    %4013 = vmatprep.mubr.f32.mxu0 0.0
    %4014 = vmatmul.mubr.f32.gmra.mrb[0].mxu0 %v3947
    %v4015 = vpop.f32.mrb[0].mxu0
    %v4016 = vadd.f32 %v919, %v4015
    %v4017 = vpop.f32.mrb[0].mxu0
    %4018 = vdwg.mxu0
    %4020 = vrot.lane.b32.xlu0 %v4016, 96
    %v4021 = vpop.permute.xlu0 %4020
    %v4023 = vsel %vm188, -1000000.0, %v4021
    %v4025 = vunpack.c.l.s4 1966171168
    %v4026 = vunpack.c.0.s8 %v4025
    %v4027 = vlaneseq
    %v4028 = vshrl.u32 %v4027, 7
    %v4029 = vsub.s32 %v4026, %v4028
    %v4030 = vrot.slane %v4016, %v4029
    %v4031 = vcombine.high %v4030, %v4030
    %v4033 = vunpack.c.l.s4 1966171168
    %v4034 = vunpack.c.0.s8 %v4033
    %v4035 = vlaneseq
    %v4036 = vshrl.u32 %v4035, 7
    %v4037 = vsub.s32 %v4034, %v4036
    %v4038 = vrot.slane %v4030, %v4037
    %v4040 = vunpack.c.l.s4 1966171168
    %v4041 = vunpack.c.0.s8 %v4040
    %v4042 = vlaneseq
    %v4043 = vshrl.u32 %v4042, 7
    %v4044 = vsub.s32 %v4041, %v4043
    %v4045 = vrot.slane %v4031, %v4044
    %v4046 = vsel %vm228, %v4038, 0
    %4048 = vmatprep.subr.mxu0 0.0
    %4049 = vmatpush1.xpose.msra.mxu0 %v328
    %4050 = vmatprep.subr.mxu0 0.0
    %4051 = vmatpush1.xpose.msra.mxu0 0.0
    %4052 = vmatprep.subr.mxu0 0.0
    %4053 = vmatpush1.xpose.msra.mxu0 0.0
    %4054 = vmatprep.subr.mxu0 0.0
    %4055 = vmatpush1.xpose.msra.mxu0 0.0
    %4056 = vmatprep.subr.mxu0 0.0
    %4057 = vmatpush1.xpose.msra.mxu0 0.0
    %4058 = vmatprep.subr.mxu0 0.0
    %4059 = vmatpush1.xpose.msra.mxu0 0.0
    %4060 = vmatprep.subr.mxu0 0.0
    %4061 = vmatpush1.xpose.msra.mxu0 0.0
    %4062 = vmatprep.subr.mxu0 0.0
    %4063 = vmatpush1.xpose.msra.mxu0 0.0
    %4064 = vmatprep.subr.mxu0 0.0
    %4065 = vmatpush1.xpose.msra.mxu0 0.0
    %4066 = vmatprep.subr.mxu0 0.0
    %4067 = vmatpush1.xpose.msra.mxu0 0.0
    %4068 = vmatprep.subr.mxu0 0.0
    %4069 = vmatpush1.xpose.msra.mxu0 0.0
    %4070 = vmatprep.subr.mxu0 0.0
    %4071 = vmatpush1.xpose.msra.mxu0 0.0
    %4072 = vmatprep.subr.mxu0 0.0
    %4073 = vmatpush1.xpose.msra.mxu0 0.0
    %4074 = vmatprep.subr.mxu0 0.0
    %4075 = vmatpush1.xpose.msra.mxu0 0.0
    %4076 = vmatprep.subr.mxu0 0.0
    %4077 = vmatpush1.xpose.msra.mxu0 0.0
    %4078 = vmatprep.subr.mxu0 0.0
    %4079 = vmatpush1.xpose.msra.mxu0 0.0
    %4080 = vmatprep.subr.mxu0 0.0
    %4081 = vmatpush1.xpose.msra.mxu0 0.0
    %4082 = vmatprep.subr.mxu0 0.0
    %4083 = vmatpush1.xpose.msra.mxu0 0.0
    %4084 = vmatprep.subr.mxu0 0.0
    %4085 = vmatpush1.xpose.msra.mxu0 0.0
    %4086 = vmatprep.subr.mxu0 0.0
    %4087 = vmatpush1.xpose.msra.mxu0 0.0
    %4088 = vmatprep.subr.mxu0 0.0
    %4089 = vmatpush1.xpose.msra.mxu0 0.0
    %4090 = vmatprep.subr.mxu0 0.0
    %4091 = vmatpush1.xpose.msra.mxu0 0.0
    %4092 = vmatprep.subr.mxu0 0.0
    %4093 = vmatpush1.xpose.msra.mxu0 0.0
    %4094 = vmatprep.subr.mxu0 0.0
    %4095 = vmatpush1.xpose.msra.mxu0 0.0
    %4096 = vmatprep.subr.mxu0 0.0
    %4097 = vmatpush1.xpose.msra.mxu0 0.0
    %4098 = vmatprep.subr.mxu0 0.0
    %4099 = vmatpush1.xpose.msra.mxu0 0.0
    %4100 = vmatprep.subr.mxu0 0.0
    %4101 = vmatpush1.xpose.msra.mxu0 0.0
    %4102 = vmatprep.subr.mxu0 0.0
    %4103 = vmatpush1.xpose.msra.mxu0 0.0
    %4104 = vmatprep.subr.mxu0 0.0
    %4105 = vmatpush1.xpose.msra.mxu0 0.0
    %4106 = vmatprep.subr.mxu0 0.0
    %4107 = vmatpush1.xpose.msra.mxu0 0.0
    %4108 = vmatprep.subr.mxu0 0.0
    %4109 = vmatpush1.xpose.msra.mxu0 0.0
    %4110 = vmatprep.subr.mxu0 0.0
    %4111 = vmatpush1.xpose.msra.mxu0 0.0
    %4112 = vmatprep.mubr.f32.mxu0 0.0
    %4113 = vmatmul.mubr.f32.gmra.mrb[0].mxu0 %v4046
    %v4114 = vpop.f32.mrb[0].mxu0
    %v4115 = vadd.f32 0.0, %v4114
    %v4116 = vpop.f32.mrb[0].mxu0
    %4117 = vdwg.mxu0
    %v4118 = vsel %vm228, %v4045, 0
    %4120 = vmatprep.subr.mxu0 0.0
    %4121 = vmatpush1.xpose.msra.mxu0 %v403
    %4122 = vmatprep.subr.mxu0 0.0
    %4123 = vmatpush1.xpose.msra.mxu0 0.0
    %4124 = vmatprep.subr.mxu0 0.0
    %4125 = vmatpush1.xpose.msra.mxu0 0.0
    %4126 = vmatprep.subr.mxu0 0.0
    %4127 = vmatpush1.xpose.msra.mxu0 0.0
    %4128 = vmatprep.subr.mxu0 0.0
    %4129 = vmatpush1.xpose.msra.mxu0 0.0
    %4130 = vmatprep.subr.mxu0 0.0
    %4131 = vmatpush1.xpose.msra.mxu0 0.0
    %4132 = vmatprep.subr.mxu0 0.0
    %4133 = vmatpush1.xpose.msra.mxu0 0.0
    %4134 = vmatprep.subr.mxu0 0.0
    %4135 = vmatpush1.xpose.msra.mxu0 0.0
    %4136 = vmatprep.subr.mxu0 0.0
    %4137 = vmatpush1.xpose.msra.mxu0 0.0
    %4138 = vmatprep.subr.mxu0 0.0
    %4139 = vmatpush1.xpose.msra.mxu0 0.0
    %4140 = vmatprep.subr.mxu0 0.0
    %4141 = vmatpush1.xpose.msra.mxu0 0.0
    %4142 = vmatprep.subr.mxu0 0.0
    %4143 = vmatpush1.xpose.msra.mxu0 0.0
    %4144 = vmatprep.subr.mxu0 0.0
    %4145 = vmatpush1.xpose.msra.mxu0 0.0
    %4146 = vmatprep.subr.mxu0 0.0
    %4147 = vmatpush1.xpose.msra.mxu0 0.0
    %4148 = vmatprep.subr.mxu0 0.0
    %4149 = vmatpush1.xpose.msra.mxu0 0.0
    %4150 = vmatprep.subr.mxu0 0.0
    %4151 = vmatpush1.xpose.msra.mxu0 0.0
    %4152 = vmatprep.subr.mxu0 0.0
    %4153 = vmatpush1.xpose.msra.mxu0 0.0
    %4154 = vmatprep.subr.mxu0 0.0
    %4155 = vmatpush1.xpose.msra.mxu0 0.0
    %4156 = vmatprep.subr.mxu0 0.0
    %4157 = vmatpush1.xpose.msra.mxu0 0.0
    %4158 = vmatprep.subr.mxu0 0.0
    %4159 = vmatpush1.xpose.msra.mxu0 0.0
    %4160 = vmatprep.subr.mxu0 0.0
    %4161 = vmatpush1.xpose.msra.mxu0 0.0
    %4162 = vmatprep.subr.mxu0 0.0
    %4163 = vmatpush1.xpose.msra.mxu0 0.0
    %4164 = vmatprep.subr.mxu0 0.0
    %4165 = vmatpush1.xpose.msra.mxu0 0.0
    %4166 = vmatprep.subr.mxu0 0.0
    %4167 = vmatpush1.xpose.msra.mxu0 0.0
    %4168 = vmatprep.subr.mxu0 0.0
    %4169 = vmatpush1.xpose.msra.mxu0 0.0
    %4170 = vmatprep.subr.mxu0 0.0
    %4171 = vmatpush1.xpose.msra.mxu0 0.0
    %4172 = vmatprep.subr.mxu0 0.0
    %4173 = vmatpush1.xpose.msra.mxu0 0.0
    %4174 = vmatprep.subr.mxu0 0.0
    %4175 = vmatpush1.xpose.msra.mxu0 0.0
    %4176 = vmatprep.subr.mxu0 0.0
    %4177 = vmatpush1.xpose.msra.mxu0 0.0
    %4178 = vmatprep.subr.mxu0 0.0
    %4179 = vmatpush1.xpose.msra.mxu0 0.0
    %4180 = vmatprep.subr.mxu0 0.0
    %4181 = vmatpush1.xpose.msra.mxu0 0.0
    %4182 = vmatprep.subr.mxu0 0.0
    %4183 = vmatpush1.xpose.msra.mxu0 0.0
    %4184 = vmatprep.mubr.f32.mxu0 0.0
    %4185 = vmatmul.mubr.f32.gmra.mrb[0].mxu0 %v4118
    %v4186 = vpop.f32.mrb[0].mxu0
    %v4187 = vadd.f32 0.0, %v4186
    %v4188 = vpop.f32.mrb[0].mxu0
    %4189 = vdwg.mxu0
    %v4191 = vsel %vm511, %v4115, 0
    %4193 = vmatprep.subr.mxu0 0.0
    %4194 = vmatpush1.msra.mxu0 %v165
    %4195 = vmatprep.subr.mxu0 0.0
    %4196 = vmatpush1.msra.mxu0 0.0
    %4197 = vmatprep.subr.mxu0 0.0
    %4198 = vmatpush1.msra.mxu0 0.0
    %4199 = vmatprep.subr.mxu0 0.0
    %4200 = vmatpush1.msra.mxu0 0.0
    %4201 = vmatprep.subr.mxu0 0.0
    %4202 = vmatpush1.msra.mxu0 0.0
    %4203 = vmatprep.subr.mxu0 0.0
    %4204 = vmatpush1.msra.mxu0 0.0
    %4205 = vmatprep.subr.mxu0 0.0
    %4206 = vmatpush1.msra.mxu0 0.0
    %4207 = vmatprep.subr.mxu0 0.0
    %4208 = vmatpush1.msra.mxu0 0.0
    %4209 = vmatprep.subr.mxu0 0.0
    %4210 = vmatpush1.msra.mxu0 0.0
    %4211 = vmatprep.subr.mxu0 0.0
    %4212 = vmatpush1.msra.mxu0 0.0
    %4213 = vmatprep.subr.mxu0 0.0
    %4214 = vmatpush1.msra.mxu0 0.0
    %4215 = vmatprep.subr.mxu0 0.0
    %4216 = vmatpush1.msra.mxu0 0.0
    %4217 = vmatprep.subr.mxu0 0.0
    %4218 = vmatpush1.msra.mxu0 0.0
    %4219 = vmatprep.subr.mxu0 0.0
    %4220 = vmatpush1.msra.mxu0 0.0
    %4221 = vmatprep.subr.mxu0 0.0
    %4222 = vmatpush1.msra.mxu0 0.0
    %4223 = vmatprep.subr.mxu0 0.0
    %4224 = vmatpush1.msra.mxu0 0.0
    %4225 = vmatprep.subr.mxu0 0.0
    %4226 = vmatpush1.msra.mxu0 0.0
    %4227 = vmatprep.subr.mxu0 0.0
    %4228 = vmatpush1.msra.mxu0 0.0
    %4229 = vmatprep.subr.mxu0 0.0
    %4230 = vmatpush1.msra.mxu0 0.0
    %4231 = vmatprep.subr.mxu0 0.0
    %4232 = vmatpush1.msra.mxu0 0.0
    %4233 = vmatprep.subr.mxu0 0.0
    %4234 = vmatpush1.msra.mxu0 0.0
    %4235 = vmatprep.subr.mxu0 0.0
    %4236 = vmatpush1.msra.mxu0 0.0
    %4237 = vmatprep.subr.mxu0 0.0
    %4238 = vmatpush1.msra.mxu0 0.0
    %4239 = vmatprep.subr.mxu0 0.0
    %4240 = vmatpush1.msra.mxu0 0.0
    %4241 = vmatprep.subr.mxu0 0.0
    %4242 = vmatpush1.msra.mxu0 0.0
    %4243 = vmatprep.subr.mxu0 0.0
    %4244 = vmatpush1.msra.mxu0 0.0
    %4245 = vmatprep.subr.mxu0 0.0
    %4246 = vmatpush1.msra.mxu0 0.0
    %4247 = vmatprep.subr.mxu0 0.0
    %4248 = vmatpush1.msra.mxu0 0.0
    %4249 = vmatprep.subr.mxu0 0.0
    %4250 = vmatpush1.msra.mxu0 0.0
    %4251 = vmatprep.subr.mxu0 0.0
    %4252 = vmatpush1.msra.mxu0 0.0
    %4253 = vmatprep.subr.mxu0 0.0
    %4254 = vmatpush1.msra.mxu0 0.0
    %4255 = vmatprep.subr.mxu0 0.0
    %4256 = vmatpush1.msra.mxu0 0.0
    %4257 = vmatprep.mubr.f32.mxu0 0.0
    %4258 = vmatmul.mubr.f32.gmra.mrb[0].mxu0 %v4191
    %v4259 = vpop.f32.mrb[0].mxu0
    %v4260 = vadd.f32 0.0, %v4259
    %v4261 = vpop.f32.mrb[0].mxu0
    %4262 = vdwg.mxu0
    %v4264 = vsel %vm511, %v4187, 0
    %4266 = vmatprep.subr.mxu0 0.0
    %4267 = vmatpush1.msra.mxu0 %v166
    %4268 = vmatprep.subr.mxu0 0.0
    %4269 = vmatpush1.msra.mxu0 0.0
    %4270 = vmatprep.subr.mxu0 0.0
    %4271 = vmatpush1.msra.mxu0 0.0
    %4272 = vmatprep.subr.mxu0 0.0
    %4273 = vmatpush1.msra.mxu0 0.0
    %4274 = vmatprep.subr.mxu0 0.0
    %4275 = vmatpush1.msra.mxu0 0.0
    %4276 = vmatprep.subr.mxu0 0.0
    %4277 = vmatpush1.msra.mxu0 0.0
    %4278 = vmatprep.subr.mxu0 0.0
    %4279 = vmatpush1.msra.mxu0 0.0
    %4280 = vmatprep.subr.mxu0 0.0
    %4281 = vmatpush1.msra.mxu0 0.0
    %4282 = vmatprep.subr.mxu0 0.0
    %4283 = vmatpush1.msra.mxu0 0.0
    %4284 = vmatprep.subr.mxu0 0.0
    %4285 = vmatpush1.msra.mxu0 0.0
    %4286 = vmatprep.subr.mxu0 0.0
    %4287 = vmatpush1.msra.mxu0 0.0
    %4288 = vmatprep.subr.mxu0 0.0
    %4289 = vmatpush1.msra.mxu0 0.0
    %4290 = vmatprep.subr.mxu0 0.0
    %4291 = vmatpush1.msra.mxu0 0.0
    %4292 = vmatprep.subr.mxu0 0.0
    %4293 = vmatpush1.msra.mxu0 0.0
    %4294 = vmatprep.subr.mxu0 0.0
    %4295 = vmatpush1.msra.mxu0 0.0
    %4296 = vmatprep.subr.mxu0 0.0
    %4297 = vmatpush1.msra.mxu0 0.0
    %4298 = vmatprep.subr.mxu0 0.0
    %4299 = vmatpush1.msra.mxu0 0.0
    %4300 = vmatprep.subr.mxu0 0.0
    %4301 = vmatpush1.msra.mxu0 0.0
    %4302 = vmatprep.subr.mxu0 0.0
    %4303 = vmatpush1.msra.mxu0 0.0
    %4304 = vmatprep.subr.mxu0 0.0
    %4305 = vmatpush1.msra.mxu0 0.0
    %4306 = vmatprep.subr.mxu0 0.0
    %4307 = vmatpush1.msra.mxu0 0.0
    %4308 = vmatprep.subr.mxu0 0.0
    %4309 = vmatpush1.msra.mxu0 0.0
    %4310 = vmatprep.subr.mxu0 0.0
    %4311 = vmatpush1.msra.mxu0 0.0
    %4312 = vmatprep.subr.mxu0 0.0
    %4313 = vmatpush1.msra.mxu0 0.0
    %4314 = vmatprep.subr.mxu0 0.0
    %4315 = vmatpush1.msra.mxu0 0.0
    %4316 = vmatprep.subr.mxu0 0.0
    %4317 = vmatpush1.msra.mxu0 0.0
    %4318 = vmatprep.subr.mxu0 0.0
    %4319 = vmatpush1.msra.mxu0 0.0
    %4320 = vmatprep.subr.mxu0 0.0
    %4321 = vmatpush1.msra.mxu0 0.0
    %4322 = vmatprep.subr.mxu0 0.0
    %4323 = vmatpush1.msra.mxu0 0.0
    %4324 = vmatprep.subr.mxu0 0.0
    %4325 = vmatpush1.msra.mxu0 0.0
    %4326 = vmatprep.subr.mxu0 0.0
    %4327 = vmatpush1.msra.mxu0 0.0
    %4328 = vmatprep.subr.mxu0 0.0
    %4329 = vmatpush1.msra.mxu0 0.0
    %4330 = vmatprep.mubr.f32.mxu0 0.0
    %4331 = vmatmul.mubr.f32.gmra.mrb[0].mxu0 %v4264
    %v4332 = vpop.f32.mrb[0].mxu0
    %v4333 = vadd.f32 0.0, %v4332
    %v4334 = vpop.f32.mrb[0].mxu0
    %4335 = vdwg.mxu0
    %v4336 = vsel %vm185, -1000000.0, %v4260
    %v4337 = vsel %vm186, -1000000.0, %v4333
    %v4338 = vsel %vm1315, %v4023, -inf
    %4339 = vmax.xlane.f32.xlu0 %v4338
    %v4340 = vpop.xlane.xlu0 %4339
    %v4343 = vrot.slane %v4337, 7
    %v4344 = vsel %vm478, %v4343, %v4336
    %v4346 = vsel %vm1315, %v4344, -inf
    %4347 = vmax.xlane.f32.xlu0 %v4346
    %v4348 = vpop.xlane.xlu0 %4347
    %v4349 = vmax.f32 %v4340, %v4348
    %v4350 = vsub.f32 %v4023, %v4349
    %v4351 = vmul.f32 %v4350, 1.442695
    %v4352 = vpow.pop %v4351
    %v4354 = vrot.slane %v4349, 1
    %v4357 = vsub.f32 %v4336, %v4349
    %v4358 = vsub.f32 %v4337, %v4354
    %v4359 = vmul.f32 %v4357, 1.442695
    %v4360 = vpow.pop %v4359
    %v4361 = vmul.f32 %v4358, 1.442695
    %v4362 = vpow.pop %v4361
    %v4363 = vsel %vm1315, %v4352, 0.0
    %4364 = vadd.xlane.f32.xlu0 %v4363
    %v4365 = vpop.xlane.xlu0 %4364
    %v4368 = vrot.slane %v4362, 7
    %v4369 = vsel %vm478, %v4368, %v4360
    %v4371 = vsel %vm1315, %v4369, 0.0
    %4372 = vadd.xlane.f32.xlu0 %v4371
    %v4373 = vpop.xlane.xlu0 %4372
    %v4374 = vadd.f32 %v4365, %v4373
    %v4375 = vadd.f32 %v4352, %v4369
    %v4376 = vrcp.pop %v4374
    %v4377 = vmul.f32 %v4375, %v4376
    %v4378 = vadd.f32 %v4377, 1e-10
    %v4379 = vlog2.pop %v4378
    %v4380 = vmul.f32 %v4379, 0.6931472
    %v4381 = vsel %vm1315, %v4380, -inf
    %4382 = vmax.xlane.f32.xlu0 %v4381
    %v4383 = vpop.xlane.xlu0 %4382
    %vm4384 = vcmp.eq.f32.partialorder %v4380, %v4383
    %v4385 = vsel %vm4384, %v154, 40
    %v4386 = vsel %vm1315, %v4385, 2147483647
    %v4387 = vand.u32 %v4386, 65535
    %v4388 = vshra.s32 %v4386, 16
    %v4389 = vcvt.s32.f32 %v4387
    %v4390 = vcvt.s32.f32 %v4388
    %4391 = vmin.xlane.f32.xlu0 %v4390
    %v4392 = vpop.xlane.xlu0 %4391
    %vm4393 = vcmp.eq.f32.partialorder %v4390, %v4392
    %v4394 = vsel %vm4393, %v4389, inf
    %4395 = vmin.xlane.f32.xlu0 %v4394
    %v4396 = vpop.xlane.xlu0 %4395
    %v4397 = vcvt.f32.s32 %v4396
    %v4398 = vcvt.f32.s32 %v4392
    %v4399 = vshll.u32 %v4398, 16
    %v4400 = vadd.s32 %v4399, %v4397
    %vm4401 = vcmp.eq.s32.totalorder %v154, %v4400
    %v4402 = vsel %vm4401, 1, 0
    %v4403 = vcvt.s32.f32 %v4402
    %v4406 = vunpack.c.l.s4 1966171168
    %v4407 = vunpack.c.0.s8 %v4406
    %v4408 = vlaneseq
    %v4409 = vshrl.u32 %v4408, 7
    %v4410 = vsub.s32 %v4407, %v4409
    %v4411 = vrot.slane %v4403, %v4410
    %v4412 = vcombine.high %v4411, %v4411
    %v4414 = vunpack.c.l.s4 1966171168
    %v4415 = vunpack.c.0.s8 %v4414
    %v4416 = vlaneseq
    %v4417 = vshrl.u32 %v4416, 7
    %v4418 = vsub.s32 %v4415, %v4417
    %v4419 = vrot.slane %v4411, %v4418
    %v4421 = vunpack.c.l.s4 1966171168
    %v4422 = vunpack.c.0.s8 %v4421
    %v4423 = vlaneseq
    %v4424 = vshrl.u32 %v4423, 7
    %v4425 = vsub.s32 %v4422, %v4424
    %v4426 = vrot.slane %v4412, %v4425
    %v4427 = vsel %vm167, %v4419, 0
    %4429 = vmatprep.subr.mxu0 0.0
    %4430 = vmatpush1.xpose.msra.mxu0 %v1408
    %4431 = vmatprep.subr.mxu0 0.0
    %4432 = vmatpush1.xpose.msra.mxu0 0.0
    %4433 = vmatprep.subr.mxu0 0.0
    %4434 = vmatpush1.xpose.msra.mxu0 0.0
    %4435 = vmatprep.subr.mxu0 0.0
    %4436 = vmatpush1.xpose.msra.mxu0 0.0
    %4437 = vmatprep.subr.mxu0 0.0
    %4438 = vmatpush1.xpose.msra.mxu0 0.0
    %4439 = vmatprep.subr.mxu0 0.0
    %4440 = vmatpush1.xpose.msra.mxu0 0.0
    %4441 = vmatprep.subr.mxu0 0.0
    %4442 = vmatpush1.xpose.msra.mxu0 0.0
    %4443 = vmatprep.subr.mxu0 0.0
    %4444 = vmatpush1.xpose.msra.mxu0 0.0
    %4445 = vmatprep.subr.mxu0 0.0
    %4446 = vmatpush1.xpose.msra.mxu0 0.0
    %4447 = vmatprep.subr.mxu0 0.0
    %4448 = vmatpush1.xpose.msra.mxu0 0.0
    %4449 = vmatprep.subr.mxu0 0.0
    %4450 = vmatpush1.xpose.msra.mxu0 0.0
    %4451 = vmatprep.subr.mxu0 0.0
    %4452 = vmatpush1.xpose.msra.mxu0 0.0
    %4453 = vmatprep.subr.mxu0 0.0
    %4454 = vmatpush1.xpose.msra.mxu0 0.0
    %4455 = vmatprep.subr.mxu0 0.0
    %4456 = vmatpush1.xpose.msra.mxu0 0.0
    %4457 = vmatprep.subr.mxu0 0.0
    %4458 = vmatpush1.xpose.msra.mxu0 0.0
    %4459 = vmatprep.subr.mxu0 0.0
    %4460 = vmatpush1.xpose.msra.mxu0 0.0
    %4461 = vmatprep.subr.mxu0 0.0
    %4462 = vmatpush1.xpose.msra.mxu0 0.0
    %4463 = vmatprep.subr.mxu0 0.0
    %4464 = vmatpush1.xpose.msra.mxu0 0.0
    %4465 = vmatprep.subr.mxu0 0.0
    %4466 = vmatpush1.xpose.msra.mxu0 0.0
    %4467 = vmatprep.subr.mxu0 0.0
    %4468 = vmatpush1.xpose.msra.mxu0 0.0
    %4469 = vmatprep.subr.mxu0 0.0
    %4470 = vmatpush1.xpose.msra.mxu0 0.0
    %4471 = vmatprep.subr.mxu0 0.0
    %4472 = vmatpush1.xpose.msra.mxu0 0.0
    %4473 = vmatprep.subr.mxu0 0.0
    %4474 = vmatpush1.xpose.msra.mxu0 0.0
    %4475 = vmatprep.subr.mxu0 0.0
    %4476 = vmatpush1.xpose.msra.mxu0 0.0
    %4477 = vmatprep.subr.mxu0 0.0
    %4478 = vmatpush1.xpose.msra.mxu0 0.0
    %4479 = vmatprep.subr.mxu0 0.0
    %4480 = vmatpush1.xpose.msra.mxu0 0.0
    %4481 = vmatprep.subr.mxu0 0.0
    %4482 = vmatpush1.xpose.msra.mxu0 0.0
    %4483 = vmatprep.subr.mxu0 0.0
    %4484 = vmatpush1.xpose.msra.mxu0 0.0
    %4485 = vmatprep.subr.mxu0 0.0
    %4486 = vmatpush1.xpose.msra.mxu0 0.0
    %4487 = vmatprep.subr.mxu0 0.0
    %4488 = vmatpush1.xpose.msra.mxu0 0.0
    %4489 = vmatprep.subr.mxu0 0.0
    %4490 = vmatpush1.xpose.msra.mxu0 0.0
    %4491 = vmatprep.subr.mxu0 0.0
    %4492 = vmatpush1.xpose.msra.mxu0 0.0
    %4493 = vmatprep.mubr.f32.mxu0 0.0
    %4494 = vmatmul.mubr.f32.gmra.mrb[0].mxu0 %v4427
    %v4495 = vpop.f32.mrb[0].mxu0
    %v4496 = vadd.f32 0.0, %v4495
    %v4497 = vpop.f32.mrb[0].mxu0
    %4498 = vdwg.mxu0
    %v4499 = vsel %vm167, %v4426, 0
    %4501 = vmatprep.subr.mxu0 0.0
    %4502 = vmatpush1.xpose.msra.mxu0 %v1483
    %4503 = vmatprep.subr.mxu0 0.0
    %4504 = vmatpush1.xpose.msra.mxu0 0.0
    %4505 = vmatprep.subr.mxu0 0.0
    %4506 = vmatpush1.xpose.msra.mxu0 0.0
    %4507 = vmatprep.subr.mxu0 0.0
    %4508 = vmatpush1.xpose.msra.mxu0 0.0
    %4509 = vmatprep.subr.mxu0 0.0
    %4510 = vmatpush1.xpose.msra.mxu0 0.0
    %4511 = vmatprep.subr.mxu0 0.0
    %4512 = vmatpush1.xpose.msra.mxu0 0.0
    %4513 = vmatprep.subr.mxu0 0.0
    %4514 = vmatpush1.xpose.msra.mxu0 0.0
    %4515 = vmatprep.subr.mxu0 0.0
    %4516 = vmatpush1.xpose.msra.mxu0 0.0
    %4517 = vmatprep.subr.mxu0 0.0
    %4518 = vmatpush1.xpose.msra.mxu0 0.0
    %4519 = vmatprep.subr.mxu0 0.0
    %4520 = vmatpush1.xpose.msra.mxu0 0.0
    %4521 = vmatprep.subr.mxu0 0.0
    %4522 = vmatpush1.xpose.msra.mxu0 0.0
    %4523 = vmatprep.subr.mxu0 0.0
    %4524 = vmatpush1.xpose.msra.mxu0 0.0
    %4525 = vmatprep.subr.mxu0 0.0
    %4526 = vmatpush1.xpose.msra.mxu0 0.0
    %4527 = vmatprep.subr.mxu0 0.0
    %4528 = vmatpush1.xpose.msra.mxu0 0.0
    %4529 = vmatprep.subr.mxu0 0.0
    %4530 = vmatpush1.xpose.msra.mxu0 0.0
    %4531 = vmatprep.subr.mxu0 0.0
    %4532 = vmatpush1.xpose.msra.mxu0 0.0
    %4533 = vmatprep.subr.mxu0 0.0
    %4534 = vmatpush1.xpose.msra.mxu0 0.0
    %4535 = vmatprep.subr.mxu0 0.0
    %4536 = vmatpush1.xpose.msra.mxu0 0.0
    %4537 = vmatprep.subr.mxu0 0.0
    %4538 = vmatpush1.xpose.msra.mxu0 0.0
    %4539 = vmatprep.subr.mxu0 0.0
    %4540 = vmatpush1.xpose.msra.mxu0 0.0
    %4541 = vmatprep.subr.mxu0 0.0
    %4542 = vmatpush1.xpose.msra.mxu0 0.0
    %4543 = vmatprep.subr.mxu0 0.0
    %4544 = vmatpush1.xpose.msra.mxu0 0.0
    %4545 = vmatprep.subr.mxu0 0.0
    %4546 = vmatpush1.xpose.msra.mxu0 0.0
    %4547 = vmatprep.subr.mxu0 0.0
    %4548 = vmatpush1.xpose.msra.mxu0 0.0
    %4549 = vmatprep.subr.mxu0 0.0
    %4550 = vmatpush1.xpose.msra.mxu0 0.0
    %4551 = vmatprep.subr.mxu0 0.0
    %4552 = vmatpush1.xpose.msra.mxu0 0.0
    %4553 = vmatprep.subr.mxu0 0.0
    %4554 = vmatpush1.xpose.msra.mxu0 0.0
    %4555 = vmatprep.subr.mxu0 0.0
    %4556 = vmatpush1.xpose.msra.mxu0 0.0
    %4557 = vmatprep.subr.mxu0 0.0
    %4558 = vmatpush1.xpose.msra.mxu0 0.0
    %4559 = vmatprep.subr.mxu0 0.0
    %4560 = vmatpush1.xpose.msra.mxu0 0.0
    %4561 = vmatprep.subr.mxu0 0.0
    %4562 = vmatpush1.xpose.msra.mxu0 0.0
    %4563 = vmatprep.subr.mxu0 0.0
    %4564 = vmatpush1.xpose.msra.mxu0 0.0
    %4565 = vmatprep.mubr.f32.mxu0 0.0
    %4566 = vmatmul.mubr.f32.gmra.mrb[0].mxu0 %v4499
    %v4567 = vpop.f32.mrb[0].mxu0
    %v4568 = vadd.f32 0.0, %v4567
    %v4569 = vpop.f32.mrb[0].mxu0
    %4570 = vdwg.mxu0
    %v4571 = vmul.f32 %v4496, %v4115
    %v4572 = vmul.f32 %v4568, %v4187
    %v4573 = vand.u32 2147483647, %v4571
    %v4574 = vand.u32 2147483647, %v4572
    %v4577 = vrot.slane %v4574, 7
    %v4578 = vsel %vm478, %v4577, %v4573
    %v4580 = vsel %vm481, %v4578, 0.0
    %4581 = vadd.xlane.f32.xlu0 %v4580
    %v4582 = vpop.xlane.xlu0 %4581
    %v4583 = vmax.f32 %v4582, 1e-12
    %v4585 = vrot.slane %v4583, 1
    %v4588 = vrcp.pop %v4583
    %v4589 = vmul.f32 %v4571, %v4588
    %v4590 = vrcp.pop %v4585
    %v4591 = vmul.f32 %v4572, %v4590
    %v4593 = vsel %vm511, %v4589, 0
    %4595 = vmatprep.subr.mxu0 0.0
    %4596 = vmatpush1.msra.mxu0 %v126
    %4597 = vmatprep.subr.mxu0 0.0
    %4598 = vmatpush1.msra.mxu0 0.0
    %4599 = vmatprep.subr.mxu0 0.0
    %4600 = vmatpush1.msra.mxu0 0.0
    %4601 = vmatprep.subr.mxu0 0.0
    %4602 = vmatpush1.msra.mxu0 0.0
    %4603 = vmatprep.subr.mxu0 0.0
    %4604 = vmatpush1.msra.mxu0 0.0
    %4605 = vmatprep.subr.mxu0 0.0
    %4606 = vmatpush1.msra.mxu0 0.0
    %4607 = vmatprep.subr.mxu0 0.0
    %4608 = vmatpush1.msra.mxu0 0.0
    %4609 = vmatprep.subr.mxu0 0.0
    %4610 = vmatpush1.msra.mxu0 0.0
    %4611 = vmatprep.subr.mxu0 0.0
    %4612 = vmatpush1.msra.mxu0 0.0
    %4613 = vmatprep.subr.mxu0 0.0
    %4614 = vmatpush1.msra.mxu0 0.0
    %4615 = vmatprep.subr.mxu0 0.0
    %4616 = vmatpush1.msra.mxu0 0.0
    %4617 = vmatprep.subr.mxu0 0.0
    %4618 = vmatpush1.msra.mxu0 0.0
    %4619 = vmatprep.subr.mxu0 0.0
    %4620 = vmatpush1.msra.mxu0 0.0
    %4621 = vmatprep.subr.mxu0 0.0
    %4622 = vmatpush1.msra.mxu0 0.0
    %4623 = vmatprep.subr.mxu0 0.0
    %4624 = vmatpush1.msra.mxu0 0.0
    %4625 = vmatprep.subr.mxu0 0.0
    %4626 = vmatpush1.msra.mxu0 0.0
    %4627 = vmatprep.subr.mxu0 0.0
    %4628 = vmatpush1.msra.mxu0 0.0
    %4629 = vmatprep.subr.mxu0 0.0
    %4630 = vmatpush1.msra.mxu0 0.0
    %4631 = vmatprep.subr.mxu0 0.0
    %4632 = vmatpush1.msra.mxu0 0.0
    %4633 = vmatprep.subr.mxu0 0.0
    %4634 = vmatpush1.msra.mxu0 0.0
    %4635 = vmatprep.subr.mxu0 0.0
    %4636 = vmatpush1.msra.mxu0 0.0
    %4637 = vmatprep.subr.mxu0 0.0
    %4638 = vmatpush1.msra.mxu0 0.0
    %4639 = vmatprep.subr.mxu0 0.0
    %4640 = vmatpush1.msra.mxu0 0.0
    %4641 = vmatprep.subr.mxu0 0.0
    %4642 = vmatpush1.msra.mxu0 0.0
    %4643 = vmatprep.subr.mxu0 0.0
    %4644 = vmatpush1.msra.mxu0 0.0
    %4645 = vmatprep.subr.mxu0 0.0
    %4646 = vmatpush1.msra.mxu0 0.0
    %4647 = vmatprep.subr.mxu0 0.0
    %4648 = vmatpush1.msra.mxu0 0.0
    %4649 = vmatprep.subr.mxu0 0.0
    %4650 = vmatpush1.msra.mxu0 0.0
    %4651 = vmatprep.subr.mxu0 0.0
    %4652 = vmatpush1.msra.mxu0 0.0
    %4653 = vmatprep.subr.mxu0 0.0
    %4654 = vmatpush1.msra.mxu0 0.0
    %4655 = vmatprep.subr.mxu0 0.0
    %4656 = vmatpush1.msra.mxu0 0.0
    %4657 = vmatprep.subr.mxu0 0.0
    %4658 = vmatpush1.msra.mxu0 0.0
    %4659 = vmatprep.mubr.f32.mxu0 0.0
    %4660 = vmatmul.mubr.f32.gmra.mrb[0].mxu0 %v4593
    %v4661 = vpop.f32.mrb[0].mxu0
    %v4662 = vadd.f32 0.0, %v4661
    %v4663 = vpop.f32.mrb[0].mxu0
    %4664 = vdwg.mxu0
    %v4666 = vsel %vm511, %v4591, 0
    %4668 = vmatprep.subr.mxu0 0.0
    %4669 = vmatpush1.msra.mxu0 %v127
    %4670 = vmatprep.subr.mxu0 0.0
    %4671 = vmatpush1.msra.mxu0 0.0
    %4672 = vmatprep.subr.mxu0 0.0
    %4673 = vmatpush1.msra.mxu0 0.0
    %4674 = vmatprep.subr.mxu0 0.0
    %4675 = vmatpush1.msra.mxu0 0.0
    %4676 = vmatprep.subr.mxu0 0.0
    %4677 = vmatpush1.msra.mxu0 0.0
    %4678 = vmatprep.subr.mxu0 0.0
    %4679 = vmatpush1.msra.mxu0 0.0
    %4680 = vmatprep.subr.mxu0 0.0
    %4681 = vmatpush1.msra.mxu0 0.0
    %4682 = vmatprep.subr.mxu0 0.0
    %4683 = vmatpush1.msra.mxu0 0.0
    %4684 = vmatprep.subr.mxu0 0.0
    %4685 = vmatpush1.msra.mxu0 0.0
    %4686 = vmatprep.subr.mxu0 0.0
    %4687 = vmatpush1.msra.mxu0 0.0
    %4688 = vmatprep.subr.mxu0 0.0
    %4689 = vmatpush1.msra.mxu0 0.0
    %4690 = vmatprep.subr.mxu0 0.0
    %4691 = vmatpush1.msra.mxu0 0.0
    %4692 = vmatprep.subr.mxu0 0.0
    %4693 = vmatpush1.msra.mxu0 0.0
    %4694 = vmatprep.subr.mxu0 0.0
    %4695 = vmatpush1.msra.mxu0 0.0
    %4696 = vmatprep.subr.mxu0 0.0
    %4697 = vmatpush1.msra.mxu0 0.0
    %4698 = vmatprep.subr.mxu0 0.0
    %4699 = vmatpush1.msra.mxu0 0.0
    %4700 = vmatprep.subr.mxu0 0.0
    %4701 = vmatpush1.msra.mxu0 0.0
    %4702 = vmatprep.subr.mxu0 0.0
    %4703 = vmatpush1.msra.mxu0 0.0
    %4704 = vmatprep.subr.mxu0 0.0
    %4705 = vmatpush1.msra.mxu0 0.0
    %4706 = vmatprep.subr.mxu0 0.0
    %4707 = vmatpush1.msra.mxu0 0.0
    %4708 = vmatprep.subr.mxu0 0.0
    %4709 = vmatpush1.msra.mxu0 0.0
    %4710 = vmatprep.subr.mxu0 0.0
    %4711 = vmatpush1.msra.mxu0 0.0
    %4712 = vmatprep.subr.mxu0 0.0
    %4713 = vmatpush1.msra.mxu0 0.0
    %4714 = vmatprep.subr.mxu0 0.0
    %4715 = vmatpush1.msra.mxu0 0.0
    %4716 = vmatprep.subr.mxu0 0.0
    %4717 = vmatpush1.msra.mxu0 0.0
    %4718 = vmatprep.subr.mxu0 0.0
    %4719 = vmatpush1.msra.mxu0 0.0
    %4720 = vmatprep.subr.mxu0 0.0
    %4721 = vmatpush1.msra.mxu0 0.0
    %4722 = vmatprep.subr.mxu0 0.0
    %4723 = vmatpush1.msra.mxu0 0.0
    %4724 = vmatprep.subr.mxu0 0.0
    %4725 = vmatpush1.msra.mxu0 0.0
    %4726 = vmatprep.subr.mxu0 0.0
    %4727 = vmatpush1.msra.mxu0 0.0
    %4728 = vmatprep.subr.mxu0 0.0
    %4729 = vmatpush1.msra.mxu0 0.0
    %4730 = vmatprep.subr.mxu0 0.0
    %4731 = vmatpush1.msra.mxu0 0.0
    %4732 = vmatprep.mubr.f32.mxu0 0.0
    %4733 = vmatmul.mubr.f32.gmra.mrb[0].mxu0 %v4666
    %v4734 = vpop.f32.mrb[0].mxu0
    %v4735 = vadd.f32 0.0, %v4734
    %v4736 = vpop.f32.mrb[0].mxu0
    %4737 = vdwg.mxu0
    %v4740 = vunpack.c.l.s4 1966171168
    %v4741 = vunpack.c.0.s8 %v4740
    %v4742 = vlaneseq
    %v4743 = vshrl.u32 %v4742, 7
    %v4744 = vsub.s32 %v4741, %v4743
    %v4745 = vrot.slane %v4380, %v4744
    %v4746 = vcombine.high %v4745, %v4745
    %v4748 = vunpack.c.l.s4 1966171168
    %v4749 = vunpack.c.0.s8 %v4748
    %v4750 = vlaneseq
    %v4751 = vshrl.u32 %v4750, 7
    %v4752 = vsub.s32 %v4749, %v4751
    %v4753 = vrot.slane %v4745, %v4752
    %v4755 = vunpack.c.l.s4 1966171168
    %v4756 = vunpack.c.0.s8 %v4755
    %v4757 = vlaneseq
    %v4758 = vshrl.u32 %v4757, 7
    %v4759 = vsub.s32 %v4756, %v4758
    %v4760 = vrot.slane %v4746, %v4759
    %4763 = vst.msk [vmem:[%s10 + $0x3] sm:$0x1] %vm216, %v4753
    %4764 = vst.msk [vmem:[%s10 + $0xb] sm:$0x1] %vm216, %v4760
    %v4765 = vlaneseq
    %v4766 = vshrl.u32 %v4765, 7
    %v4767 = vsub.s32 0, %v4766
    %v4768 = vrot.slane %v4400, %v4767
    %v4769 = vlaneseq
    %v4770 = vshrl.u32 %v4769, 7
    %v4771 = vsub.s32 1, %v4770
    %v4772 = vrot.slane %v4400, %v4771
    %4773 = vst.msk [vmem:[%s11 + $0x3] sm:$0x1] %vm219, %v4768
    %4774 = vst.msk [vmem:[%s11 + $0xb] sm:$0x1] %vm219, %v4772
    %4775 = vmatprep.subr.mxu0 0.0
    %4776 = vmatpush1.msra.mxu0 %v130
    %4777 = vmatprep.subr.mxu0 0.0
    %4778 = vmatpush1.msra.mxu0 %v131
    %4779 = vmatprep.subr.mxu0 0.0
    %4780 = vmatpush1.msra.mxu0 %v132
    %4781 = vmatprep.subr.mxu0 0.0
    %4782 = vmatpush1.msra.mxu0 %v133
    %4783 = vmatprep.subr.mxu0 0.0
    %4784 = vmatpush1.msra.mxu0 0.0
    %4785 = vmatprep.subr.mxu0 0.0
    %4786 = vmatpush1.msra.mxu0 0.0
    %4787 = vmatprep.subr.mxu0 0.0
    %4788 = vmatpush1.msra.mxu0 0.0
    %4789 = vmatprep.subr.mxu0 0.0
    %4790 = vmatpush1.msra.mxu0 0.0
    %4791 = vmatprep.subr.mxu0 0.0
    %4792 = vmatpush1.msra.mxu0 0.0
    %4793 = vmatprep.subr.mxu0 0.0
    %4794 = vmatpush1.msra.mxu0 0.0
    %4795 = vmatprep.subr.mxu0 0.0
    %4796 = vmatpush1.msra.mxu0 0.0
    %4797 = vmatprep.subr.mxu0 0.0
    %4798 = vmatpush1.msra.mxu0 0.0
    %4799 = vmatprep.subr.mxu0 0.0
    %4800 = vmatpush1.msra.mxu0 0.0
    %4801 = vmatprep.subr.mxu0 0.0
    %4802 = vmatpush1.msra.mxu0 0.0
    %4803 = vmatprep.subr.mxu0 0.0
    %4804 = vmatpush1.msra.mxu0 0.0
    %4805 = vmatprep.subr.mxu0 0.0
    %4806 = vmatpush1.msra.mxu0 0.0
    %4807 = vmatprep.subr.mxu0 0.0
    %4808 = vmatpush1.msra.mxu0 0.0
    %4809 = vmatprep.subr.mxu0 0.0
    %4810 = vmatpush1.msra.mxu0 0.0
    %4811 = vmatprep.subr.mxu0 0.0
    %4812 = vmatpush1.msra.mxu0 0.0
    %4813 = vmatprep.subr.mxu0 0.0
    %4814 = vmatpush1.msra.mxu0 0.0
    %4815 = vmatprep.subr.mxu0 0.0
    %4816 = vmatpush1.msra.mxu0 0.0
    %4817 = vmatprep.subr.mxu0 0.0
    %4818 = vmatpush1.msra.mxu0 0.0
    %4819 = vmatprep.subr.mxu0 0.0
    %4820 = vmatpush1.msra.mxu0 0.0
    %4821 = vmatprep.subr.mxu0 0.0
    %4822 = vmatpush1.msra.mxu0 0.0
    %4823 = vmatprep.subr.mxu0 0.0
    %4824 = vmatpush1.msra.mxu0 0.0
    %4825 = vmatprep.subr.mxu0 0.0
    %4826 = vmatpush1.msra.mxu0 0.0
    %4827 = vmatprep.subr.mxu0 0.0
    %4828 = vmatpush1.msra.mxu0 0.0
    %4829 = vmatprep.subr.mxu0 0.0
    %4830 = vmatpush1.msra.mxu0 0.0
    %4831 = vmatprep.subr.mxu0 0.0
    %4832 = vmatpush1.msra.mxu0 0.0
    %4833 = vmatprep.subr.mxu0 0.0
    %4834 = vmatpush1.msra.mxu0 0.0
    %4835 = vmatprep.subr.mxu0 0.0
    %4836 = vmatpush1.msra.mxu0 0.0
    %4837 = vmatprep.subr.mxu0 0.0
    %4838 = vmatpush1.msra.mxu0 0.0
    %4839 = vmatprep.mubr.f32.mxu0 0.0
    %4840 = vmatmul.mubr.f32.gmra.mrb[0].mxu0 %v3947
    %v4841 = vpop.f32.mrb[0].mxu0
    %v4842 = vadd.f32 %v226, %v4841
    %v4843 = vpop.f32.mrb[0].mxu0
    %4844 = vdwg.mxu0
    %v4847 = vunpack.c.l.s4 1966171168
    %v4848 = vunpack.c.0.s8 %v4847
    %v4849 = vlaneseq
    %v4850 = vshrl.u32 %v4849, 7
    %v4851 = vsub.s32 %v4848, %v4850
    %v4852 = vrot.slane %v4842, %v4851
    %v4853 = vcombine.high %v4852, %v4852
    %v4855 = vunpack.c.l.s4 1966171168
    %v4856 = vunpack.c.0.s8 %v4855
    %v4857 = vlaneseq
    %v4858 = vshrl.u32 %v4857, 7
    %v4859 = vsub.s32 %v4856, %v4858
    %v4860 = vrot.slane %v4852, %v4859
    %v4862 = vunpack.c.l.s4 1966171168
    %v4863 = vunpack.c.0.s8 %v4862
    %v4864 = vlaneseq
    %v4865 = vshrl.u32 %v4864, 7
    %v4866 = vsub.s32 %v4863, %v4865
    %v4867 = vrot.slane %v4853, %v4866
    %v4868 = vsel %vm228, %v4860, 0
    %4870 = vmatprep.subr.mxu0 0.0
    %4871 = vmatpush1.xpose.msra.mxu0 %v328
    %4872 = vmatprep.subr.mxu0 0.0
    %4873 = vmatpush1.xpose.msra.mxu0 0.0
    %4874 = vmatprep.subr.mxu0 0.0
    %4875 = vmatpush1.xpose.msra.mxu0 0.0
    %4876 = vmatprep.subr.mxu0 0.0
    %4877 = vmatpush1.xpose.msra.mxu0 0.0
    %4878 = vmatprep.subr.mxu0 0.0
    %4879 = vmatpush1.xpose.msra.mxu0 0.0
    %4880 = vmatprep.subr.mxu0 0.0
    %4881 = vmatpush1.xpose.msra.mxu0 0.0
    %4882 = vmatprep.subr.mxu0 0.0
    %4883 = vmatpush1.xpose.msra.mxu0 0.0
    %4884 = vmatprep.subr.mxu0 0.0
    %4885 = vmatpush1.xpose.msra.mxu0 0.0
    %4886 = vmatprep.subr.mxu0 0.0
    %4887 = vmatpush1.xpose.msra.mxu0 0.0
    %4888 = vmatprep.subr.mxu0 0.0
    %4889 = vmatpush1.xpose.msra.mxu0 0.0
    %4890 = vmatprep.subr.mxu0 0.0
    %4891 = vmatpush1.xpose.msra.mxu0 0.0
    %4892 = vmatprep.subr.mxu0 0.0
    %4893 = vmatpush1.xpose.msra.mxu0 0.0
    %4894 = vmatprep.subr.mxu0 0.0
    %4895 = vmatpush1.xpose.msra.mxu0 0.0
    %4896 = vmatprep.subr.mxu0 0.0
    %4897 = vmatpush1.xpose.msra.mxu0 0.0
    %4898 = vmatprep.subr.mxu0 0.0
    %4899 = vmatpush1.xpose.msra.mxu0 0.0
    %4900 = vmatprep.subr.mxu0 0.0
    %4901 = vmatpush1.xpose.msra.mxu0 0.0
    %4902 = vmatprep.subr.mxu0 0.0
    %4903 = vmatpush1.xpose.msra.mxu0 0.0
    %4904 = vmatprep.subr.mxu0 0.0
    %4905 = vmatpush1.xpose.msra.mxu0 0.0
    %4906 = vmatprep.subr.mxu0 0.0
    %4907 = vmatpush1.xpose.msra.mxu0 0.0
    %4908 = vmatprep.subr.mxu0 0.0
    %4909 = vmatpush1.xpose.msra.mxu0 0.0
    %4910 = vmatprep.subr.mxu0 0.0
    %4911 = vmatpush1.xpose.msra.mxu0 0.0
    %4912 = vmatprep.subr.mxu0 0.0
    %4913 = vmatpush1.xpose.msra.mxu0 0.0
    %4914 = vmatprep.subr.mxu0 0.0
    %4915 = vmatpush1.xpose.msra.mxu0 0.0
    %4916 = vmatprep.subr.mxu0 0.0
    %4917 = vmatpush1.xpose.msra.mxu0 0.0
    %4918 = vmatprep.subr.mxu0 0.0
    %4919 = vmatpush1.xpose.msra.mxu0 0.0
    %4920 = vmatprep.subr.mxu0 0.0
    %4921 = vmatpush1.xpose.msra.mxu0 0.0
    %4922 = vmatprep.subr.mxu0 0.0
    %4923 = vmatpush1.xpose.msra.mxu0 0.0
    %4924 = vmatprep.subr.mxu0 0.0
    %4925 = vmatpush1.xpose.msra.mxu0 0.0
    %4926 = vmatprep.subr.mxu0 0.0
    %4927 = vmatpush1.xpose.msra.mxu0 0.0
    %4928 = vmatprep.subr.mxu0 0.0
    %4929 = vmatpush1.xpose.msra.mxu0 0.0
    %4930 = vmatprep.subr.mxu0 0.0
    %4931 = vmatpush1.xpose.msra.mxu0 0.0
    %4932 = vmatprep.subr.mxu0 0.0
    %4933 = vmatpush1.xpose.msra.mxu0 0.0
    %4934 = vmatprep.mubr.f32.mxu0 0.0
    %4935 = vmatmul.mubr.f32.gmra.mrb[0].mxu0 %v4868
    %v4936 = vpop.f32.mrb[0].mxu0
    %v4937 = vadd.f32 0.0, %v4936
    %v4938 = vpop.f32.mrb[0].mxu0
    %4939 = vdwg.mxu0
    %v4940 = vsel %vm228, %v4867, 0
    %4942 = vmatprep.subr.mxu0 0.0
    %4943 = vmatpush1.xpose.msra.mxu0 %v403
    %4944 = vmatprep.subr.mxu0 0.0
    %4945 = vmatpush1.xpose.msra.mxu0 0.0
    %4946 = vmatprep.subr.mxu0 0.0
    %4947 = vmatpush1.xpose.msra.mxu0 0.0
    %4948 = vmatprep.subr.mxu0 0.0
    %4949 = vmatpush1.xpose.msra.mxu0 0.0
    %4950 = vmatprep.subr.mxu0 0.0
    %4951 = vmatpush1.xpose.msra.mxu0 0.0
    %4952 = vmatprep.subr.mxu0 0.0
    %4953 = vmatpush1.xpose.msra.mxu0 0.0
    %4954 = vmatprep.subr.mxu0 0.0
    %4955 = vmatpush1.xpose.msra.mxu0 0.0
    %4956 = vmatprep.subr.mxu0 0.0
    %4957 = vmatpush1.xpose.msra.mxu0 0.0
    %4958 = vmatprep.subr.mxu0 0.0
    %4959 = vmatpush1.xpose.msra.mxu0 0.0
    %4960 = vmatprep.subr.mxu0 0.0
    %4961 = vmatpush1.xpose.msra.mxu0 0.0
    %4962 = vmatprep.subr.mxu0 0.0
    %4963 = vmatpush1.xpose.msra.mxu0 0.0
    %4964 = vmatprep.subr.mxu0 0.0
    %4965 = vmatpush1.xpose.msra.mxu0 0.0
    %4966 = vmatprep.subr.mxu0 0.0
    %4967 = vmatpush1.xpose.msra.mxu0 0.0
    %4968 = vmatprep.subr.mxu0 0.0
    %4969 = vmatpush1.xpose.msra.mxu0 0.0
    %4970 = vmatprep.subr.mxu0 0.0
    %4971 = vmatpush1.xpose.msra.mxu0 0.0
    %4972 = vmatprep.subr.mxu0 0.0
    %4973 = vmatpush1.xpose.msra.mxu0 0.0
    %4974 = vmatprep.subr.mxu0 0.0
    %4975 = vmatpush1.xpose.msra.mxu0 0.0
    %4976 = vmatprep.subr.mxu0 0.0
    %4977 = vmatpush1.xpose.msra.mxu0 0.0
    %4978 = vmatprep.subr.mxu0 0.0
    %4979 = vmatpush1.xpose.msra.mxu0 0.0
    %4980 = vmatprep.subr.mxu0 0.0
    %4981 = vmatpush1.xpose.msra.mxu0 0.0
    %4982 = vmatprep.subr.mxu0 0.0
    %4983 = vmatpush1.xpose.msra.mxu0 0.0
    %4984 = vmatprep.subr.mxu0 0.0
    %4985 = vmatpush1.xpose.msra.mxu0 0.0
    %4986 = vmatprep.subr.mxu0 0.0
    %4987 = vmatpush1.xpose.msra.mxu0 0.0
    %4988 = vmatprep.subr.mxu0 0.0
    %4989 = vmatpush1.xpose.msra.mxu0 0.0
    %4990 = vmatprep.subr.mxu0 0.0
    %4991 = vmatpush1.xpose.msra.mxu0 0.0
    %4992 = vmatprep.subr.mxu0 0.0
    %4993 = vmatpush1.xpose.msra.mxu0 0.0
    %4994 = vmatprep.subr.mxu0 0.0
    %4995 = vmatpush1.xpose.msra.mxu0 0.0
    %4996 = vmatprep.subr.mxu0 0.0
    %4997 = vmatpush1.xpose.msra.mxu0 0.0
    %4998 = vmatprep.subr.mxu0 0.0
    %4999 = vmatpush1.xpose.msra.mxu0 0.0
    %5000 = vmatprep.subr.mxu0 0.0
    %5001 = vmatpush1.xpose.msra.mxu0 0.0
    %5002 = vmatprep.subr.mxu0 0.0
    %5003 = vmatpush1.xpose.msra.mxu0 0.0
    %5004 = vmatprep.subr.mxu0 0.0
    %5005 = vmatpush1.xpose.msra.mxu0 0.0
    %5006 = vmatprep.mubr.f32.mxu0 0.0
    %5007 = vmatmul.mubr.f32.gmra.mrb[0].mxu0 %v4940
    %v5008 = vpop.f32.mrb[0].mxu0
    %v5009 = vadd.f32 0.0, %v5008
    %v5010 = vpop.f32.mrb[0].mxu0
    %5011 = vdwg.mxu0
    %v5014 = vrot.slane %v5009, 7
    %v5015 = vsel %vm478, %v5014, %v4937
    %v5017 = vsel %vm481, %v5015, -inf
    %5018 = vmax.xlane.f32.xlu0 %v5017
    %v5019 = vpop.xlane.xlu0 %5018
    %v5021 = vrot.slane %v5019, 1
    %v5024 = vsub.f32 %v4937, %v5019
    %v5025 = vsub.f32 %v5009, %v5021
    %v5026 = vmul.f32 %v5024, 1.442695
    %v5027 = vpow.pop %v5026
    %v5028 = vmul.f32 %v5025, 1.442695
    %v5029 = vpow.pop %v5028
    %v5032 = vrot.slane %v5029, 7
    %v5033 = vsel %vm478, %v5032, %v5027
    %v5035 = vsel %vm481, %v5033, 0.0
    %5036 = vadd.xlane.f32.xlu0 %v5035
    %v5037 = vpop.xlane.xlu0 %5036
    %v5039 = vrot.slane %v5037, 1
    %v5042 = vrcp.pop %v5037
    %v5043 = vmul.f32 %v5027, %v5042
    %v5044 = vrcp.pop %v5039
    %v5045 = vmul.f32 %v5029, %v5044
    %v5047 = vsel %vm511, %v5043, 0
    %5049 = vmatprep.subr.mxu0 0.0
    %5050 = vmatpush1.msra.mxu0 %v126
    %5051 = vmatprep.subr.mxu0 0.0
    %5052 = vmatpush1.msra.mxu0 0.0
    %5053 = vmatprep.subr.mxu0 0.0
    %5054 = vmatpush1.msra.mxu0 0.0
    %5055 = vmatprep.subr.mxu0 0.0
    %5056 = vmatpush1.msra.mxu0 0.0
    %5057 = vmatprep.subr.mxu0 0.0
    %5058 = vmatpush1.msra.mxu0 0.0
    %5059 = vmatprep.subr.mxu0 0.0
    %5060 = vmatpush1.msra.mxu0 0.0
    %5061 = vmatprep.subr.mxu0 0.0
    %5062 = vmatpush1.msra.mxu0 0.0
    %5063 = vmatprep.subr.mxu0 0.0
    %5064 = vmatpush1.msra.mxu0 0.0
    %5065 = vmatprep.subr.mxu0 0.0
    %5066 = vmatpush1.msra.mxu0 0.0
    %5067 = vmatprep.subr.mxu0 0.0
    %5068 = vmatpush1.msra.mxu0 0.0
    %5069 = vmatprep.subr.mxu0 0.0
    %5070 = vmatpush1.msra.mxu0 0.0
    %5071 = vmatprep.subr.mxu0 0.0
    %5072 = vmatpush1.msra.mxu0 0.0
    %5073 = vmatprep.subr.mxu0 0.0
    %5074 = vmatpush1.msra.mxu0 0.0
    %5075 = vmatprep.subr.mxu0 0.0
    %5076 = vmatpush1.msra.mxu0 0.0
    %5077 = vmatprep.subr.mxu0 0.0
    %5078 = vmatpush1.msra.mxu0 0.0
    %5079 = vmatprep.subr.mxu0 0.0
    %5080 = vmatpush1.msra.mxu0 0.0
    %5081 = vmatprep.subr.mxu0 0.0
    %5082 = vmatpush1.msra.mxu0 0.0
    %5083 = vmatprep.subr.mxu0 0.0
    %5084 = vmatpush1.msra.mxu0 0.0
    %5085 = vmatprep.subr.mxu0 0.0
    %5086 = vmatpush1.msra.mxu0 0.0
    %5087 = vmatprep.subr.mxu0 0.0
    %5088 = vmatpush1.msra.mxu0 0.0
    %5089 = vmatprep.subr.mxu0 0.0
    %5090 = vmatpush1.msra.mxu0 0.0
    %5091 = vmatprep.subr.mxu0 0.0
    %5092 = vmatpush1.msra.mxu0 0.0
    %5093 = vmatprep.subr.mxu0 0.0
    %5094 = vmatpush1.msra.mxu0 0.0
    %5095 = vmatprep.subr.mxu0 0.0
    %5096 = vmatpush1.msra.mxu0 0.0
    %5097 = vmatprep.subr.mxu0 0.0
    %5098 = vmatpush1.msra.mxu0 0.0
    %5099 = vmatprep.subr.mxu0 0.0
    %5100 = vmatpush1.msra.mxu0 0.0
    %5101 = vmatprep.subr.mxu0 0.0
    %5102 = vmatpush1.msra.mxu0 0.0
    %5103 = vmatprep.subr.mxu0 0.0
    %5104 = vmatpush1.msra.mxu0 0.0
    %5105 = vmatprep.subr.mxu0 0.0
    %5106 = vmatpush1.msra.mxu0 0.0
    %5107 = vmatprep.subr.mxu0 0.0
    %5108 = vmatpush1.msra.mxu0 0.0
    %5109 = vmatprep.subr.mxu0 0.0
    %5110 = vmatpush1.msra.mxu0 0.0
    %5111 = vmatprep.subr.mxu0 0.0
    %5112 = vmatpush1.msra.mxu0 0.0
    %5113 = vmatprep.mubr.f32.mxu0 0.0
    %5114 = vmatmul.mubr.f32.gmra.mrb[0].mxu0 %v5047
    %v5115 = vpop.f32.mrb[0].mxu0
    %v5116 = vadd.f32 0.0, %v5115
    %v5117 = vpop.f32.mrb[0].mxu0
    %5118 = vdwg.mxu0
    %v5120 = vsel %vm511, %v5045, 0
    %5122 = vmatprep.subr.mxu0 0.0
    %5123 = vmatpush1.msra.mxu0 %v127
    %5124 = vmatprep.subr.mxu0 0.0
    %5125 = vmatpush1.msra.mxu0 0.0
    %5126 = vmatprep.subr.mxu0 0.0
    %5127 = vmatpush1.msra.mxu0 0.0
    %5128 = vmatprep.subr.mxu0 0.0
    %5129 = vmatpush1.msra.mxu0 0.0
    %5130 = vmatprep.subr.mxu0 0.0
    %5131 = vmatpush1.msra.mxu0 0.0
    %5132 = vmatprep.subr.mxu0 0.0
    %5133 = vmatpush1.msra.mxu0 0.0
    %5134 = vmatprep.subr.mxu0 0.0
    %5135 = vmatpush1.msra.mxu0 0.0
    %5136 = vmatprep.subr.mxu0 0.0
    %5137 = vmatpush1.msra.mxu0 0.0
    %5138 = vmatprep.subr.mxu0 0.0
    %5139 = vmatpush1.msra.mxu0 0.0
    %5140 = vmatprep.subr.mxu0 0.0
    %5141 = vmatpush1.msra.mxu0 0.0
    %5142 = vmatprep.subr.mxu0 0.0
    %5143 = vmatpush1.msra.mxu0 0.0
    %5144 = vmatprep.subr.mxu0 0.0
    %5145 = vmatpush1.msra.mxu0 0.0
    %5146 = vmatprep.subr.mxu0 0.0
    %5147 = vmatpush1.msra.mxu0 0.0
    %5148 = vmatprep.subr.mxu0 0.0
    %5149 = vmatpush1.msra.mxu0 0.0
    %5150 = vmatprep.subr.mxu0 0.0
    %5151 = vmatpush1.msra.mxu0 0.0
    %5152 = vmatprep.subr.mxu0 0.0
    %5153 = vmatpush1.msra.mxu0 0.0
    %5154 = vmatprep.subr.mxu0 0.0
    %5155 = vmatpush1.msra.mxu0 0.0
    %5156 = vmatprep.subr.mxu0 0.0
    %5157 = vmatpush1.msra.mxu0 0.0
    %5158 = vmatprep.subr.mxu0 0.0
    %5159 = vmatpush1.msra.mxu0 0.0
    %5160 = vmatprep.subr.mxu0 0.0
    %5161 = vmatpush1.msra.mxu0 0.0
    %5162 = vmatprep.subr.mxu0 0.0
    %5163 = vmatpush1.msra.mxu0 0.0
    %5164 = vmatprep.subr.mxu0 0.0
    %5165 = vmatpush1.msra.mxu0 0.0
    %5166 = vmatprep.subr.mxu0 0.0
    %5167 = vmatpush1.msra.mxu0 0.0
    %5168 = vmatprep.subr.mxu0 0.0
    %5169 = vmatpush1.msra.mxu0 0.0
    %5170 = vmatprep.subr.mxu0 0.0
    %5171 = vmatpush1.msra.mxu0 0.0
    %5172 = vmatprep.subr.mxu0 0.0
    %5173 = vmatpush1.msra.mxu0 0.0
    %5174 = vmatprep.subr.mxu0 0.0
    %5175 = vmatpush1.msra.mxu0 0.0
    %5176 = vmatprep.subr.mxu0 0.0
    %5177 = vmatpush1.msra.mxu0 0.0
    %5178 = vmatprep.subr.mxu0 0.0
    %5179 = vmatpush1.msra.mxu0 0.0
    %5180 = vmatprep.subr.mxu0 0.0
    %5181 = vmatpush1.msra.mxu0 0.0
    %5182 = vmatprep.subr.mxu0 0.0
    %5183 = vmatpush1.msra.mxu0 0.0
    %5184 = vmatprep.subr.mxu0 0.0
    %5185 = vmatpush1.msra.mxu0 0.0
    %5186 = vmatprep.mubr.f32.mxu0 0.0
    %5187 = vmatmul.mubr.f32.gmra.mrb[0].mxu0 %v5120
    %v5188 = vpop.f32.mrb[0].mxu0
    %v5189 = vadd.f32 0.0, %v5188
    %v5190 = vpop.f32.mrb[0].mxu0
    %5191 = vdwg.mxu0
    %vm5192 = vcmp.gt.s32.totalorder %v4400, 32
    %v5193 = vsel %vm5192, 3, %v4400
    %vm5194 = vcmp.eq.s32.totalorder %v154, %v5193
    %v5195 = vsel %vm5194, 1, 0
    %v5196 = vcvt.s32.f32 %v5195
    %v5199 = vrot.slane %v4735, 7
    %v5200 = vsel %vm478, %v5199, %v4662
    %v5201 = vsel %vm228, %v5200, 0
    %5203 = vmatprep.subr.mxu0 0.0
    %5204 = vmatpush1.msra.mxu0 %v139
    %5205 = vmatprep.subr.mxu0 0.0
    %5206 = vmatpush1.msra.mxu0 %v140
    %5207 = vmatprep.subr.mxu0 0.0
    %5208 = vmatpush1.msra.mxu0 %v141
    %5209 = vmatprep.subr.mxu0 0.0
    %5210 = vmatpush1.msra.mxu0 %v142
    %5211 = vmatprep.subr.mxu0 0.0
    %5212 = vmatpush1.msra.mxu0 0.0
    %5213 = vmatprep.subr.mxu0 0.0
    %5214 = vmatpush1.msra.mxu0 0.0
    %5215 = vmatprep.subr.mxu0 0.0
    %5216 = vmatpush1.msra.mxu0 0.0
    %5217 = vmatprep.subr.mxu0 0.0
    %5218 = vmatpush1.msra.mxu0 0.0
    %5219 = vmatprep.subr.mxu0 0.0
    %5220 = vmatpush1.msra.mxu0 0.0
    %5221 = vmatprep.subr.mxu0 0.0
    %5222 = vmatpush1.msra.mxu0 0.0
    %5223 = vmatprep.subr.mxu0 0.0
    %5224 = vmatpush1.msra.mxu0 0.0
    %5225 = vmatprep.subr.mxu0 0.0
    %5226 = vmatpush1.msra.mxu0 0.0
    %5227 = vmatprep.subr.mxu0 0.0
    %5228 = vmatpush1.msra.mxu0 0.0
    %5229 = vmatprep.subr.mxu0 0.0
    %5230 = vmatpush1.msra.mxu0 0.0
    %5231 = vmatprep.subr.mxu0 0.0
    %5232 = vmatpush1.msra.mxu0 0.0
    %5233 = vmatprep.subr.mxu0 0.0
    %5234 = vmatpush1.msra.mxu0 0.0
    %5235 = vmatprep.subr.mxu0 0.0
    %5236 = vmatpush1.msra.mxu0 0.0
    %5237 = vmatprep.subr.mxu0 0.0
    %5238 = vmatpush1.msra.mxu0 0.0
    %5239 = vmatprep.subr.mxu0 0.0
    %5240 = vmatpush1.msra.mxu0 0.0
    %5241 = vmatprep.subr.mxu0 0.0
    %5242 = vmatpush1.msra.mxu0 0.0
    %5243 = vmatprep.subr.mxu0 0.0
    %5244 = vmatpush1.msra.mxu0 0.0
    %5245 = vmatprep.subr.mxu0 0.0
    %5246 = vmatpush1.msra.mxu0 0.0
    %5247 = vmatprep.subr.mxu0 0.0
    %5248 = vmatpush1.msra.mxu0 0.0
    %5249 = vmatprep.subr.mxu0 0.0
    %5250 = vmatpush1.msra.mxu0 0.0
    %5251 = vmatprep.subr.mxu0 0.0
    %5252 = vmatpush1.msra.mxu0 0.0
    %5253 = vmatprep.subr.mxu0 0.0
    %5254 = vmatpush1.msra.mxu0 0.0
    %5255 = vmatprep.subr.mxu0 0.0
    %5256 = vmatpush1.msra.mxu0 0.0
    %5257 = vmatprep.subr.mxu0 0.0
    %5258 = vmatpush1.msra.mxu0 0.0
    %5259 = vmatprep.subr.mxu0 0.0
    %5260 = vmatpush1.msra.mxu0 0.0
    %5261 = vmatprep.subr.mxu0 0.0
    %5262 = vmatpush1.msra.mxu0 0.0
    %5263 = vmatprep.subr.mxu0 0.0
    %5264 = vmatpush1.msra.mxu0 0.0
    %5265 = vmatprep.subr.mxu0 0.0
    %5266 = vmatpush1.msra.mxu0 0.0
    %5267 = vmatprep.mubr.f32.mxu0 0.0
    %5268 = vmatmul.mubr.f32.gmra.mrb[0].mxu0 %v5201
    %v5269 = vpop.f32.mrb[0].mxu0
    %v5270 = vadd.f32 0.0, %v5269
    %v5271 = vpop.f32.mrb[0].mxu0
    %5272 = vdwg.mxu0
    %v5275 = vrot.slane %v5189, 7
    %v5276 = vsel %vm478, %v5275, %v5116
    %v5277 = vsel %vm228, %v5276, 0
    %5279 = vmatprep.subr.mxu0 0.0
    %5280 = vmatpush1.msra.mxu0 %v135
    %5281 = vmatprep.subr.mxu0 0.0
    %5282 = vmatpush1.msra.mxu0 %v136
    %5283 = vmatprep.subr.mxu0 0.0
    %5284 = vmatpush1.msra.mxu0 %v137
    %5285 = vmatprep.subr.mxu0 0.0
    %5286 = vmatpush1.msra.mxu0 %v138
    %5287 = vmatprep.subr.mxu0 0.0
    %5288 = vmatpush1.msra.mxu0 0.0
    %5289 = vmatprep.subr.mxu0 0.0
    %5290 = vmatpush1.msra.mxu0 0.0
    %5291 = vmatprep.subr.mxu0 0.0
    %5292 = vmatpush1.msra.mxu0 0.0
    %5293 = vmatprep.subr.mxu0 0.0
    %5294 = vmatpush1.msra.mxu0 0.0
    %5295 = vmatprep.subr.mxu0 0.0
    %5296 = vmatpush1.msra.mxu0 0.0
    %5297 = vmatprep.subr.mxu0 0.0
    %5298 = vmatpush1.msra.mxu0 0.0
    %5299 = vmatprep.subr.mxu0 0.0
    %5300 = vmatpush1.msra.mxu0 0.0
    %5301 = vmatprep.subr.mxu0 0.0
    %5302 = vmatpush1.msra.mxu0 0.0
    %5303 = vmatprep.subr.mxu0 0.0
    %5304 = vmatpush1.msra.mxu0 0.0
    %5305 = vmatprep.subr.mxu0 0.0
    %5306 = vmatpush1.msra.mxu0 0.0
    %5307 = vmatprep.subr.mxu0 0.0
    %5308 = vmatpush1.msra.mxu0 0.0
    %5309 = vmatprep.subr.mxu0 0.0
    %5310 = vmatpush1.msra.mxu0 0.0
    %5311 = vmatprep.subr.mxu0 0.0
    %5312 = vmatpush1.msra.mxu0 0.0
    %5313 = vmatprep.subr.mxu0 0.0
    %5314 = vmatpush1.msra.mxu0 0.0
    %5315 = vmatprep.subr.mxu0 0.0
    %5316 = vmatpush1.msra.mxu0 0.0
    %5317 = vmatprep.subr.mxu0 0.0
    %5318 = vmatpush1.msra.mxu0 0.0
    %5319 = vmatprep.subr.mxu0 0.0
    %5320 = vmatpush1.msra.mxu0 0.0
    %5321 = vmatprep.subr.mxu0 0.0
    %5322 = vmatpush1.msra.mxu0 0.0
    %5323 = vmatprep.subr.mxu0 0.0
    %5324 = vmatpush1.msra.mxu0 0.0
    %5325 = vmatprep.subr.mxu0 0.0
    %5326 = vmatpush1.msra.mxu0 0.0
    %5327 = vmatprep.subr.mxu0 0.0
    %5328 = vmatpush1.msra.mxu0 0.0
    %5329 = vmatprep.subr.mxu0 0.0
    %5330 = vmatpush1.msra.mxu0 0.0
    %5331 = vmatprep.subr.mxu0 0.0
    %5332 = vmatpush1.msra.mxu0 0.0
    %5333 = vmatprep.subr.mxu0 0.0
    %5334 = vmatpush1.msra.mxu0 0.0
    %5335 = vmatprep.subr.mxu0 0.0
    %5336 = vmatpush1.msra.mxu0 0.0
    %5337 = vmatprep.subr.mxu0 0.0
    %5338 = vmatpush1.msra.mxu0 0.0
    %5339 = vmatprep.subr.mxu0 0.0
    %5340 = vmatpush1.msra.mxu0 0.0
    %5341 = vmatprep.subr.mxu0 0.0
    %5342 = vmatpush1.msra.mxu0 0.0
    %5343 = vmatprep.mubr.f32.mxu0 0.0
    %5344 = vmatmul.mubr.f32.gmra.mrb[0].mxu0 %v5277
    %v5345 = vpop.f32.mrb[0].mxu0
    %v5346 = vadd.f32 %v5270, %v5345
    %v5347 = vpop.f32.mrb[0].mxu0
    %5348 = vdwg.mxu0
    %v5350 = vsel %vm228, %v5196, 0
    %5352 = vmatprep.subr.mxu0 0.0
    %5353 = vmatpush1.msra.mxu0 %v143
    %5354 = vmatprep.subr.mxu0 0.0
    %5355 = vmatpush1.msra.mxu0 %v144
    %5356 = vmatprep.subr.mxu0 0.0
    %5357 = vmatpush1.msra.mxu0 %v145
    %5358 = vmatprep.subr.mxu0 0.0
    %5359 = vmatpush1.msra.mxu0 %v146
    %5360 = vmatprep.subr.mxu0 0.0
    %5361 = vmatpush1.msra.mxu0 0.0
    %5362 = vmatprep.subr.mxu0 0.0
    %5363 = vmatpush1.msra.mxu0 0.0
    %5364 = vmatprep.subr.mxu0 0.0
    %5365 = vmatpush1.msra.mxu0 0.0
    %5366 = vmatprep.subr.mxu0 0.0
    %5367 = vmatpush1.msra.mxu0 0.0
    %5368 = vmatprep.subr.mxu0 0.0
    %5369 = vmatpush1.msra.mxu0 0.0
    %5370 = vmatprep.subr.mxu0 0.0
    %5371 = vmatpush1.msra.mxu0 0.0
    %5372 = vmatprep.subr.mxu0 0.0
    %5373 = vmatpush1.msra.mxu0 0.0
    %5374 = vmatprep.subr.mxu0 0.0
    %5375 = vmatpush1.msra.mxu0 0.0
    %5376 = vmatprep.subr.mxu0 0.0
    %5377 = vmatpush1.msra.mxu0 0.0
    %5378 = vmatprep.subr.mxu0 0.0
    %5379 = vmatpush1.msra.mxu0 0.0
    %5380 = vmatprep.subr.mxu0 0.0
    %5381 = vmatpush1.msra.mxu0 0.0
    %5382 = vmatprep.subr.mxu0 0.0
    %5383 = vmatpush1.msra.mxu0 0.0
    %5384 = vmatprep.subr.mxu0 0.0
    %5385 = vmatpush1.msra.mxu0 0.0
    %5386 = vmatprep.subr.mxu0 0.0
    %5387 = vmatpush1.msra.mxu0 0.0
    %5388 = vmatprep.subr.mxu0 0.0
    %5389 = vmatpush1.msra.mxu0 0.0
    %5390 = vmatprep.subr.mxu0 0.0
    %5391 = vmatpush1.msra.mxu0 0.0
    %5392 = vmatprep.subr.mxu0 0.0
    %5393 = vmatpush1.msra.mxu0 0.0
    %5394 = vmatprep.subr.mxu0 0.0
    %5395 = vmatpush1.msra.mxu0 0.0
    %5396 = vmatprep.subr.mxu0 0.0
    %5397 = vmatpush1.msra.mxu0 0.0
    %5398 = vmatprep.subr.mxu0 0.0
    %5399 = vmatpush1.msra.mxu0 0.0
    %5400 = vmatprep.subr.mxu0 0.0
    %5401 = vmatpush1.msra.mxu0 0.0
    %5402 = vmatprep.subr.mxu0 0.0
    %5403 = vmatpush1.msra.mxu0 0.0
    %5404 = vmatprep.subr.mxu0 0.0
    %5405 = vmatpush1.msra.mxu0 0.0
    %5406 = vmatprep.subr.mxu0 0.0
    %5407 = vmatpush1.msra.mxu0 0.0
    %5408 = vmatprep.subr.mxu0 0.0
    %5409 = vmatpush1.msra.mxu0 0.0
    %5410 = vmatprep.subr.mxu0 0.0
    %5411 = vmatpush1.msra.mxu0 0.0
    %5412 = vmatprep.subr.mxu0 0.0
    %5413 = vmatpush1.msra.mxu0 0.0
    %5414 = vmatprep.subr.mxu0 0.0
    %5415 = vmatpush1.msra.mxu0 0.0
    %5416 = vmatprep.mubr.f32.mxu0 0.0
    %5417 = vmatmul.mubr.f32.gmra.mrb[0].mxu0 %v5350
    %v5418 = vpop.f32.mrb[0].mxu0
    %v5419 = vadd.f32 0.0, %v5418
    %v5420 = vpop.f32.mrb[0].mxu0
    %5421 = vdwg.mxu0
    %v5422 = vadd.f32 %v5346, %v5419
    %v5423 = vadd.f32 %v5422, %v884
    %5424 = vrot.lane.b32.xlu0 %v4842, 96
    %v5425 = vpop.permute.xlu0 %5424
    %v5427 = vadd.f32 %v5423, %v5425
    %v5428 = vxor.u32 %v5427, 2147483648
    %v5429 = vmul.f32 %v5428, 1.442695
    %v5430 = vpow.pop %v5429
    %v5431 = vadd.f32 %v5430, 1.0
    %v5432 = vrcp.pop %v5431
    %v5433 = vmul.f32 1.0, %v5432
    %5434 = vrot.lane.b32.xlu0 %v4842, 32
    %v5435 = vpop.permute.xlu0 %5434
    %v5437 = vmul.f32 %v5433, %v5435
    %5439 = vrot.lane.b32.xlu0 %v5437, 64
    %v5440 = vpop.permute.xlu0 %5439
    %v5442 = vadd.f32 %v5423, %v5440
    %v5443 = vtanh.pop %v5442
    %v5444 = vsub.f32 1.0, %v5433
    %5446 = vrot.lane.b32.xlu0 %v5443, 96
    %v5447 = vpop.permute.xlu0 %5446
    %v5449 = vmul.f32 %v5444, %v5447
    %v5450 = vmul.f32 %v5433, %v3943
    %v5451 = vadd.f32 %v5449, %v5450
    %5453 = vrot.lane.b32.xlu0 %v5451, 96
    %v5454 = vpop.permute.xlu0 %5453
    %v5455 = vsel %vm228, %v5454, 0
    %5457 = vmatprep.subr.mxu0 0.0
    %5458 = vmatpush1.msra.mxu0 %v148
    %5459 = vmatprep.subr.mxu0 0.0
    %5460 = vmatpush1.msra.mxu0 %v149
    %5461 = vmatprep.subr.mxu0 0.0
    %5462 = vmatpush1.msra.mxu0 %v150
    %5463 = vmatprep.subr.mxu0 0.0
    %5464 = vmatpush1.msra.mxu0 %v151
    %5465 = vmatprep.subr.mxu0 0.0
    %5466 = vmatpush1.msra.mxu0 0.0
    %5467 = vmatprep.subr.mxu0 0.0
    %5468 = vmatpush1.msra.mxu0 0.0
    %5469 = vmatprep.subr.mxu0 0.0
    %5470 = vmatpush1.msra.mxu0 0.0
    %5471 = vmatprep.subr.mxu0 0.0
    %5472 = vmatpush1.msra.mxu0 0.0
    %5473 = vmatprep.subr.mxu0 0.0
    %5474 = vmatpush1.msra.mxu0 0.0
    %5475 = vmatprep.subr.mxu0 0.0
    %5476 = vmatpush1.msra.mxu0 0.0
    %5477 = vmatprep.subr.mxu0 0.0
    %5478 = vmatpush1.msra.mxu0 0.0
    %5479 = vmatprep.subr.mxu0 0.0
    %5480 = vmatpush1.msra.mxu0 0.0
    %5481 = vmatprep.subr.mxu0 0.0
    %5482 = vmatpush1.msra.mxu0 0.0
    %5483 = vmatprep.subr.mxu0 0.0
    %5484 = vmatpush1.msra.mxu0 0.0
    %5485 = vmatprep.subr.mxu0 0.0
    %5486 = vmatpush1.msra.mxu0 0.0
    %5487 = vmatprep.subr.mxu0 0.0
    %5488 = vmatpush1.msra.mxu0 0.0
    %5489 = vmatprep.subr.mxu0 0.0
    %5490 = vmatpush1.msra.mxu0 0.0
    %5491 = vmatprep.subr.mxu0 0.0
    %5492 = vmatpush1.msra.mxu0 0.0
    %5493 = vmatprep.subr.mxu0 0.0
    %5494 = vmatpush1.msra.mxu0 0.0
    %5495 = vmatprep.subr.mxu0 0.0
    %5496 = vmatpush1.msra.mxu0 0.0
    %5497 = vmatprep.subr.mxu0 0.0
    %5498 = vmatpush1.msra.mxu0 0.0
    %5499 = vmatprep.subr.mxu0 0.0
    %5500 = vmatpush1.msra.mxu0 0.0
    %5501 = vmatprep.subr.mxu0 0.0
    %5502 = vmatpush1.msra.mxu0 0.0
    %5503 = vmatprep.subr.mxu0 0.0
    %5504 = vmatpush1.msra.mxu0 0.0
    %5505 = vmatprep.subr.mxu0 0.0
    %5506 = vmatpush1.msra.mxu0 0.0
    %5507 = vmatprep.subr.mxu0 0.0
    %5508 = vmatpush1.msra.mxu0 0.0
    %5509 = vmatprep.subr.mxu0 0.0
    %5510 = vmatpush1.msra.mxu0 0.0
    %5511 = vmatprep.subr.mxu0 0.0
    %5512 = vmatpush1.msra.mxu0 0.0
    %5513 = vmatprep.subr.mxu0 0.0
    %5514 = vmatpush1.msra.mxu0 0.0
    %5515 = vmatprep.subr.mxu0 0.0
    %5516 = vmatpush1.msra.mxu0 0.0
    %5517 = vmatprep.subr.mxu0 0.0
    %5518 = vmatpush1.msra.mxu0 0.0
    %5519 = vmatprep.subr.mxu0 0.0
    %5520 = vmatpush1.msra.mxu0 0.0
    %5521 = vmatprep.mubr.f32.mxu0 0.0
    %5522 = vmatmul.mubr.f32.gmra.mrb[0].mxu0 %v5455
    %v5523 = vpop.f32.mrb[0].mxu0
    %v5524 = vadd.f32 %v919, %v5523
    %v5525 = vpop.f32.mrb[0].mxu0
    %5526 = vdwg.mxu0
    %5528 = vrot.lane.b32.xlu0 %v5524, 96
    %v5529 = vpop.permute.xlu0 %5528
    %v5531 = vsel %vm188, -1000000.0, %v5529
    %v5533 = vunpack.c.l.s4 1966171168
    %v5534 = vunpack.c.0.s8 %v5533
    %v5535 = vlaneseq
    %v5536 = vshrl.u32 %v5535, 7
    %v5537 = vsub.s32 %v5534, %v5536
    %v5538 = vrot.slane %v5524, %v5537
    %v5539 = vcombine.high %v5538, %v5538
    %v5541 = vunpack.c.l.s4 1966171168
    %v5542 = vunpack.c.0.s8 %v5541
    %v5543 = vlaneseq
    %v5544 = vshrl.u32 %v5543, 7
    %v5545 = vsub.s32 %v5542, %v5544
    %v5546 = vrot.slane %v5538, %v5545
    %v5548 = vunpack.c.l.s4 1966171168
    %v5549 = vunpack.c.0.s8 %v5548
    %v5550 = vlaneseq
    %v5551 = vshrl.u32 %v5550, 7
    %v5552 = vsub.s32 %v5549, %v5551
    %v5553 = vrot.slane %v5539, %v5552
    %v5554 = vsel %vm228, %v5546, 0
    %5556 = vmatprep.subr.mxu0 0.0
    %5557 = vmatpush1.xpose.msra.mxu0 %v328
    %5558 = vmatprep.subr.mxu0 0.0
    %5559 = vmatpush1.xpose.msra.mxu0 0.0
    %5560 = vmatprep.subr.mxu0 0.0
    %5561 = vmatpush1.xpose.msra.mxu0 0.0
    %5562 = vmatprep.subr.mxu0 0.0
    %5563 = vmatpush1.xpose.msra.mxu0 0.0
    %5564 = vmatprep.subr.mxu0 0.0
    %5565 = vmatpush1.xpose.msra.mxu0 0.0
    %5566 = vmatprep.subr.mxu0 0.0
    %5567 = vmatpush1.xpose.msra.mxu0 0.0
    %5568 = vmatprep.subr.mxu0 0.0
    %5569 = vmatpush1.xpose.msra.mxu0 0.0
    %5570 = vmatprep.subr.mxu0 0.0
    %5571 = vmatpush1.xpose.msra.mxu0 0.0
    %5572 = vmatprep.subr.mxu0 0.0
    %5573 = vmatpush1.xpose.msra.mxu0 0.0
    %5574 = vmatprep.subr.mxu0 0.0
    %5575 = vmatpush1.xpose.msra.mxu0 0.0
    %5576 = vmatprep.subr.mxu0 0.0
    %5577 = vmatpush1.xpose.msra.mxu0 0.0
    %5578 = vmatprep.subr.mxu0 0.0
    %5579 = vmatpush1.xpose.msra.mxu0 0.0
    %5580 = vmatprep.subr.mxu0 0.0
    %5581 = vmatpush1.xpose.msra.mxu0 0.0
    %5582 = vmatprep.subr.mxu0 0.0
    %5583 = vmatpush1.xpose.msra.mxu0 0.0
    %5584 = vmatprep.subr.mxu0 0.0
    %5585 = vmatpush1.xpose.msra.mxu0 0.0
    %5586 = vmatprep.subr.mxu0 0.0
    %5587 = vmatpush1.xpose.msra.mxu0 0.0
    %5588 = vmatprep.subr.mxu0 0.0
    %5589 = vmatpush1.xpose.msra.mxu0 0.0
    %5590 = vmatprep.subr.mxu0 0.0
    %5591 = vmatpush1.xpose.msra.mxu0 0.0
    %5592 = vmatprep.subr.mxu0 0.0
    %5593 = vmatpush1.xpose.msra.mxu0 0.0
    %5594 = vmatprep.subr.mxu0 0.0
    %5595 = vmatpush1.xpose.msra.mxu0 0.0
    %5596 = vmatprep.subr.mxu0 0.0
    %5597 = vmatpush1.xpose.msra.mxu0 0.0
    %5598 = vmatprep.subr.mxu0 0.0
    %5599 = vmatpush1.xpose.msra.mxu0 0.0
    %5600 = vmatprep.subr.mxu0 0.0
    %5601 = vmatpush1.xpose.msra.mxu0 0.0
    %5602 = vmatprep.subr.mxu0 0.0
    %5603 = vmatpush1.xpose.msra.mxu0 0.0
    %5604 = vmatprep.subr.mxu0 0.0
    %5605 = vmatpush1.xpose.msra.mxu0 0.0
    %5606 = vmatprep.subr.mxu0 0.0
    %5607 = vmatpush1.xpose.msra.mxu0 0.0
    %5608 = vmatprep.subr.mxu0 0.0
    %5609 = vmatpush1.xpose.msra.mxu0 0.0
    %5610 = vmatprep.subr.mxu0 0.0
    %5611 = vmatpush1.xpose.msra.mxu0 0.0
    %5612 = vmatprep.subr.mxu0 0.0
    %5613 = vmatpush1.xpose.msra.mxu0 0.0
    %5614 = vmatprep.subr.mxu0 0.0
    %5615 = vmatpush1.xpose.msra.mxu0 0.0
    %5616 = vmatprep.subr.mxu0 0.0
    %5617 = vmatpush1.xpose.msra.mxu0 0.0
    %5618 = vmatprep.subr.mxu0 0.0
    %5619 = vmatpush1.xpose.msra.mxu0 0.0
    %5620 = vmatprep.mubr.f32.mxu0 0.0
    %5621 = vmatmul.mubr.f32.gmra.mrb[0].mxu0 %v5554
    %v5622 = vpop.f32.mrb[0].mxu0
    %v5623 = vadd.f32 0.0, %v5622
    %v5624 = vpop.f32.mrb[0].mxu0
    %5625 = vdwg.mxu0
    %v5626 = vsel %vm228, %v5553, 0
    %5628 = vmatprep.subr.mxu0 0.0
    %5629 = vmatpush1.xpose.msra.mxu0 %v403
    %5630 = vmatprep.subr.mxu0 0.0
    %5631 = vmatpush1.xpose.msra.mxu0 0.0
    %5632 = vmatprep.subr.mxu0 0.0
    %5633 = vmatpush1.xpose.msra.mxu0 0.0
    %5634 = vmatprep.subr.mxu0 0.0
    %5635 = vmatpush1.xpose.msra.mxu0 0.0
    %5636 = vmatprep.subr.mxu0 0.0
    %5637 = vmatpush1.xpose.msra.mxu0 0.0
    %5638 = vmatprep.subr.mxu0 0.0
    %5639 = vmatpush1.xpose.msra.mxu0 0.0
    %5640 = vmatprep.subr.mxu0 0.0
    %5641 = vmatpush1.xpose.msra.mxu0 0.0
    %5642 = vmatprep.subr.mxu0 0.0
    %5643 = vmatpush1.xpose.msra.mxu0 0.0
    %5644 = vmatprep.subr.mxu0 0.0
    %5645 = vmatpush1.xpose.msra.mxu0 0.0
    %5646 = vmatprep.subr.mxu0 0.0
    %5647 = vmatpush1.xpose.msra.mxu0 0.0
    %5648 = vmatprep.subr.mxu0 0.0
    %5649 = vmatpush1.xpose.msra.mxu0 0.0
    %5650 = vmatprep.subr.mxu0 0.0
    %5651 = vmatpush1.xpose.msra.mxu0 0.0
    %5652 = vmatprep.subr.mxu0 0.0
    %5653 = vmatpush1.xpose.msra.mxu0 0.0
    %5654 = vmatprep.subr.mxu0 0.0
    %5655 = vmatpush1.xpose.msra.mxu0 0.0
    %5656 = vmatprep.subr.mxu0 0.0
    %5657 = vmatpush1.xpose.msra.mxu0 0.0
    %5658 = vmatprep.subr.mxu0 0.0
    %5659 = vmatpush1.xpose.msra.mxu0 0.0
    %5660 = vmatprep.subr.mxu0 0.0
    %5661 = vmatpush1.xpose.msra.mxu0 0.0
    %5662 = vmatprep.subr.mxu0 0.0
    %5663 = vmatpush1.xpose.msra.mxu0 0.0
    %5664 = vmatprep.subr.mxu0 0.0
    %5665 = vmatpush1.xpose.msra.mxu0 0.0
    %5666 = vmatprep.subr.mxu0 0.0
    %5667 = vmatpush1.xpose.msra.mxu0 0.0
    %5668 = vmatprep.subr.mxu0 0.0
    %5669 = vmatpush1.xpose.msra.mxu0 0.0
    %5670 = vmatprep.subr.mxu0 0.0
    %5671 = vmatpush1.xpose.msra.mxu0 0.0
    %5672 = vmatprep.subr.mxu0 0.0
    %5673 = vmatpush1.xpose.msra.mxu0 0.0
    %5674 = vmatprep.subr.mxu0 0.0
    %5675 = vmatpush1.xpose.msra.mxu0 0.0
    %5676 = vmatprep.subr.mxu0 0.0
    %5677 = vmatpush1.xpose.msra.mxu0 0.0
    %5678 = vmatprep.subr.mxu0 0.0
    %5679 = vmatpush1.xpose.msra.mxu0 0.0
    %5680 = vmatprep.subr.mxu0 0.0
    %5681 = vmatpush1.xpose.msra.mxu0 0.0
    %5682 = vmatprep.subr.mxu0 0.0
    %5683 = vmatpush1.xpose.msra.mxu0 0.0
    %5684 = vmatprep.subr.mxu0 0.0
    %5685 = vmatpush1.xpose.msra.mxu0 0.0
    %5686 = vmatprep.subr.mxu0 0.0
    %5687 = vmatpush1.xpose.msra.mxu0 0.0
    %5688 = vmatprep.subr.mxu0 0.0
    %5689 = vmatpush1.xpose.msra.mxu0 0.0
    %5690 = vmatprep.subr.mxu0 0.0
    %5691 = vmatpush1.xpose.msra.mxu0 0.0
    %5692 = vmatprep.mubr.f32.mxu0 0.0
    %5693 = vmatmul.mubr.f32.gmra.mrb[0].mxu0 %v5626
    %v5694 = vpop.f32.mrb[0].mxu0
    %v5695 = vadd.f32 0.0, %v5694
    %v5696 = vpop.f32.mrb[0].mxu0
    %5697 = vdwg.mxu0
    %v5699 = vsel %vm511, %v5623, 0
    %5701 = vmatprep.subr.mxu0 0.0
    %5702 = vmatpush1.msra.mxu0 %v165
    %5703 = vmatprep.subr.mxu0 0.0
    %5704 = vmatpush1.msra.mxu0 0.0
    %5705 = vmatprep.subr.mxu0 0.0
    %5706 = vmatpush1.msra.mxu0 0.0
    %5707 = vmatprep.subr.mxu0 0.0
    %5708 = vmatpush1.msra.mxu0 0.0
    %5709 = vmatprep.subr.mxu0 0.0
    %5710 = vmatpush1.msra.mxu0 0.0
    %5711 = vmatprep.subr.mxu0 0.0
    %5712 = vmatpush1.msra.mxu0 0.0
    %5713 = vmatprep.subr.mxu0 0.0
    %5714 = vmatpush1.msra.mxu0 0.0
    %5715 = vmatprep.subr.mxu0 0.0
    %5716 = vmatpush1.msra.mxu0 0.0
    %5717 = vmatprep.subr.mxu0 0.0
    %5718 = vmatpush1.msra.mxu0 0.0
    %5719 = vmatprep.subr.mxu0 0.0
    %5720 = vmatpush1.msra.mxu0 0.0
    %5721 = vmatprep.subr.mxu0 0.0
    %5722 = vmatpush1.msra.mxu0 0.0
    %5723 = vmatprep.subr.mxu0 0.0
    %5724 = vmatpush1.msra.mxu0 0.0
    %5725 = vmatprep.subr.mxu0 0.0
    %5726 = vmatpush1.msra.mxu0 0.0
    %5727 = vmatprep.subr.mxu0 0.0
    %5728 = vmatpush1.msra.mxu0 0.0
    %5729 = vmatprep.subr.mxu0 0.0
    %5730 = vmatpush1.msra.mxu0 0.0
    %5731 = vmatprep.subr.mxu0 0.0
    %5732 = vmatpush1.msra.mxu0 0.0
    %5733 = vmatprep.subr.mxu0 0.0
    %5734 = vmatpush1.msra.mxu0 0.0
    %5735 = vmatprep.subr.mxu0 0.0
    %5736 = vmatpush1.msra.mxu0 0.0
    %5737 = vmatprep.subr.mxu0 0.0
    %5738 = vmatpush1.msra.mxu0 0.0
    %5739 = vmatprep.subr.mxu0 0.0
    %5740 = vmatpush1.msra.mxu0 0.0
    %5741 = vmatprep.subr.mxu0 0.0
    %5742 = vmatpush1.msra.mxu0 0.0
    %5743 = vmatprep.subr.mxu0 0.0
    %5744 = vmatpush1.msra.mxu0 0.0
    %5745 = vmatprep.subr.mxu0 0.0
    %5746 = vmatpush1.msra.mxu0 0.0
    %5747 = vmatprep.subr.mxu0 0.0
    %5748 = vmatpush1.msra.mxu0 0.0
    %5749 = vmatprep.subr.mxu0 0.0
    %5750 = vmatpush1.msra.mxu0 0.0
    %5751 = vmatprep.subr.mxu0 0.0
    %5752 = vmatpush1.msra.mxu0 0.0
    %5753 = vmatprep.subr.mxu0 0.0
    %5754 = vmatpush1.msra.mxu0 0.0
    %5755 = vmatprep.subr.mxu0 0.0
    %5756 = vmatpush1.msra.mxu0 0.0
    %5757 = vmatprep.subr.mxu0 0.0
    %5758 = vmatpush1.msra.mxu0 0.0
    %5759 = vmatprep.subr.mxu0 0.0
    %5760 = vmatpush1.msra.mxu0 0.0
    %5761 = vmatprep.subr.mxu0 0.0
    %5762 = vmatpush1.msra.mxu0 0.0
    %5763 = vmatprep.subr.mxu0 0.0
    %5764 = vmatpush1.msra.mxu0 0.0
    %5765 = vmatprep.mubr.f32.mxu0 0.0
    %5766 = vmatmul.mubr.f32.gmra.mrb[0].mxu0 %v5699
    %v5767 = vpop.f32.mrb[0].mxu0
    %v5768 = vadd.f32 0.0, %v5767
    %v5769 = vpop.f32.mrb[0].mxu0
    %5770 = vdwg.mxu0
    %v5772 = vsel %vm511, %v5695, 0
    %5774 = vmatprep.subr.mxu0 0.0
    %5775 = vmatpush1.msra.mxu0 %v166
    %5776 = vmatprep.subr.mxu0 0.0
    %5777 = vmatpush1.msra.mxu0 0.0
    %5778 = vmatprep.subr.mxu0 0.0
    %5779 = vmatpush1.msra.mxu0 0.0
    %5780 = vmatprep.subr.mxu0 0.0
    %5781 = vmatpush1.msra.mxu0 0.0
    %5782 = vmatprep.subr.mxu0 0.0
    %5783 = vmatpush1.msra.mxu0 0.0
    %5784 = vmatprep.subr.mxu0 0.0
    %5785 = vmatpush1.msra.mxu0 0.0
    %5786 = vmatprep.subr.mxu0 0.0
    %5787 = vmatpush1.msra.mxu0 0.0
    %5788 = vmatprep.subr.mxu0 0.0
    %5789 = vmatpush1.msra.mxu0 0.0
    %5790 = vmatprep.subr.mxu0 0.0
    %5791 = vmatpush1.msra.mxu0 0.0
    %5792 = vmatprep.subr.mxu0 0.0
    %5793 = vmatpush1.msra.mxu0 0.0
    %5794 = vmatprep.subr.mxu0 0.0
    %5795 = vmatpush1.msra.mxu0 0.0
    %5796 = vmatprep.subr.mxu0 0.0
    %5797 = vmatpush1.msra.mxu0 0.0
    %5798 = vmatprep.subr.mxu0 0.0
    %5799 = vmatpush1.msra.mxu0 0.0
    %5800 = vmatprep.subr.mxu0 0.0
    %5801 = vmatpush1.msra.mxu0 0.0
    %5802 = vmatprep.subr.mxu0 0.0
    %5803 = vmatpush1.msra.mxu0 0.0
    %5804 = vmatprep.subr.mxu0 0.0
    %5805 = vmatpush1.msra.mxu0 0.0
    %5806 = vmatprep.subr.mxu0 0.0
    %5807 = vmatpush1.msra.mxu0 0.0
    %5808 = vmatprep.subr.mxu0 0.0
    %5809 = vmatpush1.msra.mxu0 0.0
    %5810 = vmatprep.subr.mxu0 0.0
    %5811 = vmatpush1.msra.mxu0 0.0
    %5812 = vmatprep.subr.mxu0 0.0
    %5813 = vmatpush1.msra.mxu0 0.0
    %5814 = vmatprep.subr.mxu0 0.0
    %5815 = vmatpush1.msra.mxu0 0.0
    %5816 = vmatprep.subr.mxu0 0.0
    %5817 = vmatpush1.msra.mxu0 0.0
    %5818 = vmatprep.subr.mxu0 0.0
    %5819 = vmatpush1.msra.mxu0 0.0
    %5820 = vmatprep.subr.mxu0 0.0
    %5821 = vmatpush1.msra.mxu0 0.0
    %5822 = vmatprep.subr.mxu0 0.0
    %5823 = vmatpush1.msra.mxu0 0.0
    %5824 = vmatprep.subr.mxu0 0.0
    %5825 = vmatpush1.msra.mxu0 0.0
    %5826 = vmatprep.subr.mxu0 0.0
    %5827 = vmatpush1.msra.mxu0 0.0
    %5828 = vmatprep.subr.mxu0 0.0
    %5829 = vmatpush1.msra.mxu0 0.0
    %5830 = vmatprep.subr.mxu0 0.0
    %5831 = vmatpush1.msra.mxu0 0.0
    %5832 = vmatprep.subr.mxu0 0.0
    %5833 = vmatpush1.msra.mxu0 0.0
    %5834 = vmatprep.subr.mxu0 0.0
    %5835 = vmatpush1.msra.mxu0 0.0
    %5836 = vmatprep.subr.mxu0 0.0
    %5837 = vmatpush1.msra.mxu0 0.0
    %5838 = vmatprep.mubr.f32.mxu0 0.0
    %5839 = vmatmul.mubr.f32.gmra.mrb[0].mxu0 %v5772
    %v5840 = vpop.f32.mrb[0].mxu0
    %v5841 = vadd.f32 0.0, %v5840
    %v5842 = vpop.f32.mrb[0].mxu0
    %5843 = vdwg.mxu0
    %v5844 = vsel %vm185, -1000000.0, %v5768
    %v5845 = vsel %vm186, -1000000.0, %v5841
    %v5846 = vsel %vm1315, %v5531, -inf
    %5847 = vmax.xlane.f32.xlu0 %v5846
    %v5848 = vpop.xlane.xlu0 %5847
    %v5851 = vrot.slane %v5845, 7
    %v5852 = vsel %vm478, %v5851, %v5844
    %v5854 = vsel %vm1315, %v5852, -inf
    %5855 = vmax.xlane.f32.xlu0 %v5854
    %v5856 = vpop.xlane.xlu0 %5855
    %v5857 = vmax.f32 %v5848, %v5856
    %v5858 = vsub.f32 %v5531, %v5857
    %v5859 = vmul.f32 %v5858, 1.442695
    %v5860 = vpow.pop %v5859
    %v5862 = vrot.slane %v5857, 1
    %v5865 = vsub.f32 %v5844, %v5857
    %v5866 = vsub.f32 %v5845, %v5862
    %v5867 = vmul.f32 %v5865, 1.442695
    %v5868 = vpow.pop %v5867
    %v5869 = vmul.f32 %v5866, 1.442695
    %v5870 = vpow.pop %v5869
    %v5871 = vsel %vm1315, %v5860, 0.0
    %5872 = vadd.xlane.f32.xlu0 %v5871
    %v5873 = vpop.xlane.xlu0 %5872
    %v5876 = vrot.slane %v5870, 7
    %v5877 = vsel %vm478, %v5876, %v5868
    %v5879 = vsel %vm1315, %v5877, 0.0
    %5880 = vadd.xlane.f32.xlu0 %v5879
    %v5881 = vpop.xlane.xlu0 %5880
    %v5882 = vadd.f32 %v5873, %v5881
    %v5883 = vadd.f32 %v5860, %v5877
    %v5884 = vrcp.pop %v5882
    %v5885 = vmul.f32 %v5883, %v5884
    %v5886 = vadd.f32 %v5885, 1e-10
    %v5887 = vlog2.pop %v5886
    %v5888 = vmul.f32 %v5887, 0.6931472
    %v5889 = vsel %vm1315, %v5888, -inf
    %5890 = vmax.xlane.f32.xlu0 %v5889
    %v5891 = vpop.xlane.xlu0 %5890
    %vm5892 = vcmp.eq.f32.partialorder %v5888, %v5891
    %v5893 = vsel %vm5892, %v154, 40
    %v5894 = vsel %vm1315, %v5893, 2147483647
    %v5895 = vand.u32 %v5894, 65535
    %v5896 = vshra.s32 %v5894, 16
    %v5897 = vcvt.s32.f32 %v5895
    %v5898 = vcvt.s32.f32 %v5896
    %5899 = vmin.xlane.f32.xlu0 %v5898
    %v5900 = vpop.xlane.xlu0 %5899
    %vm5901 = vcmp.eq.f32.partialorder %v5898, %v5900
    %v5902 = vsel %vm5901, %v5897, inf
    %5903 = vmin.xlane.f32.xlu0 %v5902
    %v5904 = vpop.xlane.xlu0 %5903
    %v5905 = vcvt.f32.s32 %v5904
    %v5906 = vcvt.f32.s32 %v5900
    %v5907 = vshll.u32 %v5906, 16
    %v5908 = vadd.s32 %v5907, %v5905
    %vm5909 = vcmp.eq.s32.totalorder %v154, %v5908
    %v5910 = vsel %vm5909, 1, 0
    %v5911 = vcvt.s32.f32 %v5910
    %v5914 = vunpack.c.l.s4 1966171168
    %v5915 = vunpack.c.0.s8 %v5914
    %v5916 = vlaneseq
    %v5917 = vshrl.u32 %v5916, 7
    %v5918 = vsub.s32 %v5915, %v5917
    %v5919 = vrot.slane %v5911, %v5918
    %v5920 = vcombine.high %v5919, %v5919
    %v5922 = vunpack.c.l.s4 1966171168
    %v5923 = vunpack.c.0.s8 %v5922
    %v5924 = vlaneseq
    %v5925 = vshrl.u32 %v5924, 7
    %v5926 = vsub.s32 %v5923, %v5925
    %v5927 = vrot.slane %v5919, %v5926
    %v5929 = vunpack.c.l.s4 1966171168
    %v5930 = vunpack.c.0.s8 %v5929
    %v5931 = vlaneseq
    %v5932 = vshrl.u32 %v5931, 7
    %v5933 = vsub.s32 %v5930, %v5932
    %v5934 = vrot.slane %v5920, %v5933
    %v5935 = vsel %vm167, %v5927, 0
    %5937 = vmatprep.subr.mxu0 0.0
    %5938 = vmatpush1.xpose.msra.mxu0 %v1408
    %5939 = vmatprep.subr.mxu0 0.0
    %5940 = vmatpush1.xpose.msra.mxu0 0.0
    %5941 = vmatprep.subr.mxu0 0.0
    %5942 = vmatpush1.xpose.msra.mxu0 0.0
    %5943 = vmatprep.subr.mxu0 0.0
    %5944 = vmatpush1.xpose.msra.mxu0 0.0
    %5945 = vmatprep.subr.mxu0 0.0
    %5946 = vmatpush1.xpose.msra.mxu0 0.0
    %5947 = vmatprep.subr.mxu0 0.0
    %5948 = vmatpush1.xpose.msra.mxu0 0.0
    %5949 = vmatprep.subr.mxu0 0.0
    %5950 = vmatpush1.xpose.msra.mxu0 0.0
    %5951 = vmatprep.subr.mxu0 0.0
    %5952 = vmatpush1.xpose.msra.mxu0 0.0
    %5953 = vmatprep.subr.mxu0 0.0
    %5954 = vmatpush1.xpose.msra.mxu0 0.0
    %5955 = vmatprep.subr.mxu0 0.0
    %5956 = vmatpush1.xpose.msra.mxu0 0.0
    %5957 = vmatprep.subr.mxu0 0.0
    %5958 = vmatpush1.xpose.msra.mxu0 0.0
    %5959 = vmatprep.subr.mxu0 0.0
    %5960 = vmatpush1.xpose.msra.mxu0 0.0
    %5961 = vmatprep.subr.mxu0 0.0
    %5962 = vmatpush1.xpose.msra.mxu0 0.0
    %5963 = vmatprep.subr.mxu0 0.0
    %5964 = vmatpush1.xpose.msra.mxu0 0.0
    %5965 = vmatprep.subr.mxu0 0.0
    %5966 = vmatpush1.xpose.msra.mxu0 0.0
    %5967 = vmatprep.subr.mxu0 0.0
    %5968 = vmatpush1.xpose.msra.mxu0 0.0
    %5969 = vmatprep.subr.mxu0 0.0
    %5970 = vmatpush1.xpose.msra.mxu0 0.0
    %5971 = vmatprep.subr.mxu0 0.0
    %5972 = vmatpush1.xpose.msra.mxu0 0.0
    %5973 = vmatprep.subr.mxu0 0.0
    %5974 = vmatpush1.xpose.msra.mxu0 0.0
    %5975 = vmatprep.subr.mxu0 0.0
    %5976 = vmatpush1.xpose.msra.mxu0 0.0
    %5977 = vmatprep.subr.mxu0 0.0
    %5978 = vmatpush1.xpose.msra.mxu0 0.0
    %5979 = vmatprep.subr.mxu0 0.0
    %5980 = vmatpush1.xpose.msra.mxu0 0.0
    %5981 = vmatprep.subr.mxu0 0.0
    %5982 = vmatpush1.xpose.msra.mxu0 0.0
    %5983 = vmatprep.subr.mxu0 0.0
    %5984 = vmatpush1.xpose.msra.mxu0 0.0
    %5985 = vmatprep.subr.mxu0 0.0
    %5986 = vmatpush1.xpose.msra.mxu0 0.0
    %5987 = vmatprep.subr.mxu0 0.0
    %5988 = vmatpush1.xpose.msra.mxu0 0.0
    %5989 = vmatprep.subr.mxu0 0.0
    %5990 = vmatpush1.xpose.msra.mxu0 0.0
    %5991 = vmatprep.subr.mxu0 0.0
    %5992 = vmatpush1.xpose.msra.mxu0 0.0
    %5993 = vmatprep.subr.mxu0 0.0
    %5994 = vmatpush1.xpose.msra.mxu0 0.0
    %5995 = vmatprep.subr.mxu0 0.0
    %5996 = vmatpush1.xpose.msra.mxu0 0.0
    %5997 = vmatprep.subr.mxu0 0.0
    %5998 = vmatpush1.xpose.msra.mxu0 0.0
    %5999 = vmatprep.subr.mxu0 0.0
    %6000 = vmatpush1.xpose.msra.mxu0 0.0
    %6001 = vmatprep.mubr.f32.mxu0 0.0
    %6002 = vmatmul.mubr.f32.gmra.mrb[0].mxu0 %v5935
    %v6003 = vpop.f32.mrb[0].mxu0
    %v6004 = vadd.f32 0.0, %v6003
    %v6005 = vpop.f32.mrb[0].mxu0
    %6006 = vdwg.mxu0
    %v6007 = vsel %vm167, %v5934, 0
    %6009 = vmatprep.subr.mxu0 0.0
    %6010 = vmatpush1.xpose.msra.mxu0 %v1483
    %6011 = vmatprep.subr.mxu0 0.0
    %6012 = vmatpush1.xpose.msra.mxu0 0.0
    %6013 = vmatprep.subr.mxu0 0.0
    %6014 = vmatpush1.xpose.msra.mxu0 0.0
    %6015 = vmatprep.subr.mxu0 0.0
    %6016 = vmatpush1.xpose.msra.mxu0 0.0
    %6017 = vmatprep.subr.mxu0 0.0
    %6018 = vmatpush1.xpose.msra.mxu0 0.0
    %6019 = vmatprep.subr.mxu0 0.0
    %6020 = vmatpush1.xpose.msra.mxu0 0.0
    %6021 = vmatprep.subr.mxu0 0.0
    %6022 = vmatpush1.xpose.msra.mxu0 0.0
    %6023 = vmatprep.subr.mxu0 0.0
    %6024 = vmatpush1.xpose.msra.mxu0 0.0
    %6025 = vmatprep.subr.mxu0 0.0
    %6026 = vmatpush1.xpose.msra.mxu0 0.0
    %6027 = vmatprep.subr.mxu0 0.0
    %6028 = vmatpush1.xpose.msra.mxu0 0.0
    %6029 = vmatprep.subr.mxu0 0.0
    %6030 = vmatpush1.xpose.msra.mxu0 0.0
    %6031 = vmatprep.subr.mxu0 0.0
    %6032 = vmatpush1.xpose.msra.mxu0 0.0
    %6033 = vmatprep.subr.mxu0 0.0
    %6034 = vmatpush1.xpose.msra.mxu0 0.0
    %6035 = vmatprep.subr.mxu0 0.0
    %6036 = vmatpush1.xpose.msra.mxu0 0.0
    %6037 = vmatprep.subr.mxu0 0.0
    %6038 = vmatpush1.xpose.msra.mxu0 0.0
    %6039 = vmatprep.subr.mxu0 0.0
    %6040 = vmatpush1.xpose.msra.mxu0 0.0
    %6041 = vmatprep.subr.mxu0 0.0
    %6042 = vmatpush1.xpose.msra.mxu0 0.0
    %6043 = vmatprep.subr.mxu0 0.0
    %6044 = vmatpush1.xpose.msra.mxu0 0.0
    %6045 = vmatprep.subr.mxu0 0.0
    %6046 = vmatpush1.xpose.msra.mxu0 0.0
    %6047 = vmatprep.subr.mxu0 0.0
    %6048 = vmatpush1.xpose.msra.mxu0 0.0
    %6049 = vmatprep.subr.mxu0 0.0
    %6050 = vmatpush1.xpose.msra.mxu0 0.0
    %6051 = vmatprep.subr.mxu0 0.0
    %6052 = vmatpush1.xpose.msra.mxu0 0.0
    %6053 = vmatprep.subr.mxu0 0.0
    %6054 = vmatpush1.xpose.msra.mxu0 0.0
    %6055 = vmatprep.subr.mxu0 0.0
    %6056 = vmatpush1.xpose.msra.mxu0 0.0
    %6057 = vmatprep.subr.mxu0 0.0
    %6058 = vmatpush1.xpose.msra.mxu0 0.0
    %6059 = vmatprep.subr.mxu0 0.0
    %6060 = vmatpush1.xpose.msra.mxu0 0.0
    %6061 = vmatprep.subr.mxu0 0.0
    %6062 = vmatpush1.xpose.msra.mxu0 0.0
    %6063 = vmatprep.subr.mxu0 0.0
    %6064 = vmatpush1.xpose.msra.mxu0 0.0
    %6065 = vmatprep.subr.mxu0 0.0
    %6066 = vmatpush1.xpose.msra.mxu0 0.0
    %6067 = vmatprep.subr.mxu0 0.0
    %6068 = vmatpush1.xpose.msra.mxu0 0.0
    %6069 = vmatprep.subr.mxu0 0.0
    %6070 = vmatpush1.xpose.msra.mxu0 0.0
    %6071 = vmatprep.subr.mxu0 0.0
    %6072 = vmatpush1.xpose.msra.mxu0 0.0
    %6073 = vmatprep.mubr.f32.mxu0 0.0
    %6074 = vmatmul.mubr.f32.gmra.mrb[0].mxu0 %v6007
    %v6075 = vpop.f32.mrb[0].mxu0
    %v6076 = vadd.f32 0.0, %v6075
    %v6077 = vpop.f32.mrb[0].mxu0
    %6078 = vdwg.mxu0
    %v6079 = vmul.f32 %v6004, %v5623
    %v6080 = vmul.f32 %v6076, %v5695
    %v6081 = vand.u32 2147483647, %v6079
    %v6082 = vand.u32 2147483647, %v6080
    %v6085 = vrot.slane %v6082, 7
    %v6086 = vsel %vm478, %v6085, %v6081
    %v6088 = vsel %vm481, %v6086, 0.0
    %6089 = vadd.xlane.f32.xlu0 %v6088
    %v6090 = vpop.xlane.xlu0 %6089
    %v6091 = vmax.f32 %v6090, 1e-12
    %v6093 = vrot.slane %v6091, 1
    %v6096 = vrcp.pop %v6091
    %v6097 = vmul.f32 %v6079, %v6096
    %v6098 = vrcp.pop %v6093
    %v6099 = vmul.f32 %v6080, %v6098
    %v6101 = vsel %vm511, %v6097, 0
    %6103 = vmatprep.subr.mxu0 0.0
    %6104 = vmatpush1.msra.mxu0 %v126
    %6105 = vmatprep.subr.mxu0 0.0
    %6106 = vmatpush1.msra.mxu0 0.0
    %6107 = vmatprep.subr.mxu0 0.0
    %6108 = vmatpush1.msra.mxu0 0.0
    %6109 = vmatprep.subr.mxu0 0.0
    %6110 = vmatpush1.msra.mxu0 0.0
    %6111 = vmatprep.subr.mxu0 0.0
    %6112 = vmatpush1.msra.mxu0 0.0
    %6113 = vmatprep.subr.mxu0 0.0
    %6114 = vmatpush1.msra.mxu0 0.0
    %6115 = vmatprep.subr.mxu0 0.0
    %6116 = vmatpush1.msra.mxu0 0.0
    %6117 = vmatprep.subr.mxu0 0.0
    %6118 = vmatpush1.msra.mxu0 0.0
    %6119 = vmatprep.subr.mxu0 0.0
    %6120 = vmatpush1.msra.mxu0 0.0
    %6121 = vmatprep.subr.mxu0 0.0
    %6122 = vmatpush1.msra.mxu0 0.0
    %6123 = vmatprep.subr.mxu0 0.0
    %6124 = vmatpush1.msra.mxu0 0.0
    %6125 = vmatprep.subr.mxu0 0.0
    %6126 = vmatpush1.msra.mxu0 0.0
    %6127 = vmatprep.subr.mxu0 0.0
    %6128 = vmatpush1.msra.mxu0 0.0
    %6129 = vmatprep.subr.mxu0 0.0
    %6130 = vmatpush1.msra.mxu0 0.0
    %6131 = vmatprep.subr.mxu0 0.0
    %6132 = vmatpush1.msra.mxu0 0.0
    %6133 = vmatprep.subr.mxu0 0.0
    %6134 = vmatpush1.msra.mxu0 0.0
    %6135 = vmatprep.subr.mxu0 0.0
    %6136 = vmatpush1.msra.mxu0 0.0
    %6137 = vmatprep.subr.mxu0 0.0
    %6138 = vmatpush1.msra.mxu0 0.0
    %6139 = vmatprep.subr.mxu0 0.0
    %6140 = vmatpush1.msra.mxu0 0.0
    %6141 = vmatprep.subr.mxu0 0.0
    %6142 = vmatpush1.msra.mxu0 0.0
    %6143 = vmatprep.subr.mxu0 0.0
    %6144 = vmatpush1.msra.mxu0 0.0
    %6145 = vmatprep.subr.mxu0 0.0
    %6146 = vmatpush1.msra.mxu0 0.0
    %6147 = vmatprep.subr.mxu0 0.0
    %6148 = vmatpush1.msra.mxu0 0.0
    %6149 = vmatprep.subr.mxu0 0.0
    %6150 = vmatpush1.msra.mxu0 0.0
    %6151 = vmatprep.subr.mxu0 0.0
    %6152 = vmatpush1.msra.mxu0 0.0
    %6153 = vmatprep.subr.mxu0 0.0
    %6154 = vmatpush1.msra.mxu0 0.0
    %6155 = vmatprep.subr.mxu0 0.0
    %6156 = vmatpush1.msra.mxu0 0.0
    %6157 = vmatprep.subr.mxu0 0.0
    %6158 = vmatpush1.msra.mxu0 0.0
    %6159 = vmatprep.subr.mxu0 0.0
    %6160 = vmatpush1.msra.mxu0 0.0
    %6161 = vmatprep.subr.mxu0 0.0
    %6162 = vmatpush1.msra.mxu0 0.0
    %6163 = vmatprep.subr.mxu0 0.0
    %6164 = vmatpush1.msra.mxu0 0.0
    %6165 = vmatprep.subr.mxu0 0.0
    %6166 = vmatpush1.msra.mxu0 0.0
    %6167 = vmatprep.mubr.f32.mxu0 0.0
    %6168 = vmatmul.mubr.f32.gmra.mrb[0].mxu0 %v6101
    %v6169 = vpop.f32.mrb[0].mxu0
    %v6170 = vadd.f32 0.0, %v6169
    %v6171 = vpop.f32.mrb[0].mxu0
    %6172 = vdwg.mxu0
    %v6174 = vsel %vm511, %v6099, 0
    %6176 = vmatprep.subr.mxu0 0.0
    %6177 = vmatpush1.msra.mxu0 %v127
    %6178 = vmatprep.subr.mxu0 0.0
    %6179 = vmatpush1.msra.mxu0 0.0
    %6180 = vmatprep.subr.mxu0 0.0
    %6181 = vmatpush1.msra.mxu0 0.0
    %6182 = vmatprep.subr.mxu0 0.0
    %6183 = vmatpush1.msra.mxu0 0.0
    %6184 = vmatprep.subr.mxu0 0.0
    %6185 = vmatpush1.msra.mxu0 0.0
    %6186 = vmatprep.subr.mxu0 0.0
    %6187 = vmatpush1.msra.mxu0 0.0
    %6188 = vmatprep.subr.mxu0 0.0
    %6189 = vmatpush1.msra.mxu0 0.0
    %6190 = vmatprep.subr.mxu0 0.0
    %6191 = vmatpush1.msra.mxu0 0.0
    %6192 = vmatprep.subr.mxu0 0.0
    %6193 = vmatpush1.msra.mxu0 0.0
    %6194 = vmatprep.subr.mxu0 0.0
    %6195 = vmatpush1.msra.mxu0 0.0
    %6196 = vmatprep.subr.mxu0 0.0
    %6197 = vmatpush1.msra.mxu0 0.0
    %6198 = vmatprep.subr.mxu0 0.0
    %6199 = vmatpush1.msra.mxu0 0.0
    %6200 = vmatprep.subr.mxu0 0.0
    %6201 = vmatpush1.msra.mxu0 0.0
    %6202 = vmatprep.subr.mxu0 0.0
    %6203 = vmatpush1.msra.mxu0 0.0
    %6204 = vmatprep.subr.mxu0 0.0
    %6205 = vmatpush1.msra.mxu0 0.0
    %6206 = vmatprep.subr.mxu0 0.0
    %6207 = vmatpush1.msra.mxu0 0.0
    %6208 = vmatprep.subr.mxu0 0.0
    %6209 = vmatpush1.msra.mxu0 0.0
    %6210 = vmatprep.subr.mxu0 0.0
    %6211 = vmatpush1.msra.mxu0 0.0
    %6212 = vmatprep.subr.mxu0 0.0
    %6213 = vmatpush1.msra.mxu0 0.0
    %6214 = vmatprep.subr.mxu0 0.0
    %6215 = vmatpush1.msra.mxu0 0.0
    %6216 = vmatprep.subr.mxu0 0.0
    %6217 = vmatpush1.msra.mxu0 0.0
    %6218 = vmatprep.subr.mxu0 0.0
    %6219 = vmatpush1.msra.mxu0 0.0
    %6220 = vmatprep.subr.mxu0 0.0
    %6221 = vmatpush1.msra.mxu0 0.0
    %6222 = vmatprep.subr.mxu0 0.0
    %6223 = vmatpush1.msra.mxu0 0.0
    %6224 = vmatprep.subr.mxu0 0.0
    %6225 = vmatpush1.msra.mxu0 0.0
    %6226 = vmatprep.subr.mxu0 0.0
    %6227 = vmatpush1.msra.mxu0 0.0
    %6228 = vmatprep.subr.mxu0 0.0
    %6229 = vmatpush1.msra.mxu0 0.0
    %6230 = vmatprep.subr.mxu0 0.0
    %6231 = vmatpush1.msra.mxu0 0.0
    %6232 = vmatprep.subr.mxu0 0.0
    %6233 = vmatpush1.msra.mxu0 0.0
    %6234 = vmatprep.subr.mxu0 0.0
    %6235 = vmatpush1.msra.mxu0 0.0
    %6236 = vmatprep.subr.mxu0 0.0
    %6237 = vmatpush1.msra.mxu0 0.0
    %6238 = vmatprep.subr.mxu0 0.0
    %6239 = vmatpush1.msra.mxu0 0.0
    %6240 = vmatprep.mubr.f32.mxu0 0.0
    %6241 = vmatmul.mubr.f32.gmra.mrb[0].mxu0 %v6174
    %v6242 = vpop.f32.mrb[0].mxu0
    %v6243 = vadd.f32 0.0, %v6242
    %v6244 = vpop.f32.mrb[0].mxu0
    %6245 = vdwg.mxu0
    %v6248 = vunpack.c.l.s4 1966171168
    %v6249 = vunpack.c.0.s8 %v6248
    %v6250 = vlaneseq
    %v6251 = vshrl.u32 %v6250, 7
    %v6252 = vsub.s32 %v6249, %v6251
    %v6253 = vrot.slane %v5888, %v6252
    %v6254 = vcombine.high %v6253, %v6253
    %v6256 = vunpack.c.l.s4 1966171168
    %v6257 = vunpack.c.0.s8 %v6256
    %v6258 = vlaneseq
    %v6259 = vshrl.u32 %v6258, 7
    %v6260 = vsub.s32 %v6257, %v6259
    %v6261 = vrot.slane %v6253, %v6260
    %v6263 = vunpack.c.l.s4 1966171168
    %v6264 = vunpack.c.0.s8 %v6263
    %v6265 = vlaneseq
    %v6266 = vshrl.u32 %v6265, 7
    %v6267 = vsub.s32 %v6264, %v6266
    %v6268 = vrot.slane %v6254, %v6267
    %6271 = vst.msk [vmem:[%s10 + $0x4] sm:$0x1] %vm216, %v6261
    %6272 = vst.msk [vmem:[%s10 + $0xc] sm:$0x1] %vm216, %v6268
    %v6273 = vlaneseq
    %v6274 = vshrl.u32 %v6273, 7
    %v6275 = vsub.s32 0, %v6274
    %v6276 = vrot.slane %v5908, %v6275
    %v6277 = vlaneseq
    %v6278 = vshrl.u32 %v6277, 7
    %v6279 = vsub.s32 1, %v6278
    %v6280 = vrot.slane %v5908, %v6279
    %6281 = vst.msk [vmem:[%s11 + $0x4] sm:$0x1] %vm219, %v6276
    %6282 = vst.msk [vmem:[%s11 + $0xc] sm:$0x1] %vm219, %v6280
    %6283 = vmatprep.subr.mxu0 0.0
    %6284 = vmatpush1.msra.mxu0 %v130
    %6285 = vmatprep.subr.mxu0 0.0
    %6286 = vmatpush1.msra.mxu0 %v131
    %6287 = vmatprep.subr.mxu0 0.0
    %6288 = vmatpush1.msra.mxu0 %v132
    %6289 = vmatprep.subr.mxu0 0.0
    %6290 = vmatpush1.msra.mxu0 %v133
    %6291 = vmatprep.subr.mxu0 0.0
    %6292 = vmatpush1.msra.mxu0 0.0
    %6293 = vmatprep.subr.mxu0 0.0
    %6294 = vmatpush1.msra.mxu0 0.0
    %6295 = vmatprep.subr.mxu0 0.0
    %6296 = vmatpush1.msra.mxu0 0.0
    %6297 = vmatprep.subr.mxu0 0.0
    %6298 = vmatpush1.msra.mxu0 0.0
    %6299 = vmatprep.subr.mxu0 0.0
    %6300 = vmatpush1.msra.mxu0 0.0
    %6301 = vmatprep.subr.mxu0 0.0
    %6302 = vmatpush1.msra.mxu0 0.0
    %6303 = vmatprep.subr.mxu0 0.0
    %6304 = vmatpush1.msra.mxu0 0.0
    %6305 = vmatprep.subr.mxu0 0.0
    %6306 = vmatpush1.msra.mxu0 0.0
    %6307 = vmatprep.subr.mxu0 0.0
    %6308 = vmatpush1.msra.mxu0 0.0
    %6309 = vmatprep.subr.mxu0 0.0
    %6310 = vmatpush1.msra.mxu0 0.0
    %6311 = vmatprep.subr.mxu0 0.0
    %6312 = vmatpush1.msra.mxu0 0.0
    %6313 = vmatprep.subr.mxu0 0.0
    %6314 = vmatpush1.msra.mxu0 0.0
    %6315 = vmatprep.subr.mxu0 0.0
    %6316 = vmatpush1.msra.mxu0 0.0
    %6317 = vmatprep.subr.mxu0 0.0
    %6318 = vmatpush1.msra.mxu0 0.0
    %6319 = vmatprep.subr.mxu0 0.0
    %6320 = vmatpush1.msra.mxu0 0.0
    %6321 = vmatprep.subr.mxu0 0.0
    %6322 = vmatpush1.msra.mxu0 0.0
    %6323 = vmatprep.subr.mxu0 0.0
    %6324 = vmatpush1.msra.mxu0 0.0
    %6325 = vmatprep.subr.mxu0 0.0
    %6326 = vmatpush1.msra.mxu0 0.0
    %6327 = vmatprep.subr.mxu0 0.0
    %6328 = vmatpush1.msra.mxu0 0.0
    %6329 = vmatprep.subr.mxu0 0.0
    %6330 = vmatpush1.msra.mxu0 0.0
    %6331 = vmatprep.subr.mxu0 0.0
    %6332 = vmatpush1.msra.mxu0 0.0
    %6333 = vmatprep.subr.mxu0 0.0
    %6334 = vmatpush1.msra.mxu0 0.0
    %6335 = vmatprep.subr.mxu0 0.0
    %6336 = vmatpush1.msra.mxu0 0.0
    %6337 = vmatprep.subr.mxu0 0.0
    %6338 = vmatpush1.msra.mxu0 0.0
    %6339 = vmatprep.subr.mxu0 0.0
    %6340 = vmatpush1.msra.mxu0 0.0
    %6341 = vmatprep.subr.mxu0 0.0
    %6342 = vmatpush1.msra.mxu0 0.0
    %6343 = vmatprep.subr.mxu0 0.0
    %6344 = vmatpush1.msra.mxu0 0.0
    %6345 = vmatprep.subr.mxu0 0.0
    %6346 = vmatpush1.msra.mxu0 0.0
    %6347 = vmatprep.mubr.f32.mxu0 0.0
    %6348 = vmatmul.mubr.f32.gmra.mrb[0].mxu0 %v5455
    %v6349 = vpop.f32.mrb[0].mxu0
    %v6350 = vadd.f32 %v226, %v6349
    %v6351 = vpop.f32.mrb[0].mxu0
    %6352 = vdwg.mxu0
    %v6355 = vunpack.c.l.s4 1966171168
    %v6356 = vunpack.c.0.s8 %v6355
    %v6357 = vlaneseq
    %v6358 = vshrl.u32 %v6357, 7
    %v6359 = vsub.s32 %v6356, %v6358
    %v6360 = vrot.slane %v6350, %v6359
    %v6361 = vcombine.high %v6360, %v6360
    %v6363 = vunpack.c.l.s4 1966171168
    %v6364 = vunpack.c.0.s8 %v6363
    %v6365 = vlaneseq
    %v6366 = vshrl.u32 %v6365, 7
    %v6367 = vsub.s32 %v6364, %v6366
    %v6368 = vrot.slane %v6360, %v6367
    %v6370 = vunpack.c.l.s4 1966171168
    %v6371 = vunpack.c.0.s8 %v6370
    %v6372 = vlaneseq
    %v6373 = vshrl.u32 %v6372, 7
    %v6374 = vsub.s32 %v6371, %v6373
    %v6375 = vrot.slane %v6361, %v6374
    %v6376 = vsel %vm228, %v6368, 0
    %6378 = vmatprep.subr.mxu0 0.0
    %6379 = vmatpush1.xpose.msra.mxu0 %v328
    %6380 = vmatprep.subr.mxu0 0.0
    %6381 = vmatpush1.xpose.msra.mxu0 0.0
    %6382 = vmatprep.subr.mxu0 0.0
    %6383 = vmatpush1.xpose.msra.mxu0 0.0
    %6384 = vmatprep.subr.mxu0 0.0
    %6385 = vmatpush1.xpose.msra.mxu0 0.0
    %6386 = vmatprep.subr.mxu0 0.0
    %6387 = vmatpush1.xpose.msra.mxu0 0.0
    %6388 = vmatprep.subr.mxu0 0.0
    %6389 = vmatpush1.xpose.msra.mxu0 0.0
    %6390 = vmatprep.subr.mxu0 0.0
    %6391 = vmatpush1.xpose.msra.mxu0 0.0
    %6392 = vmatprep.subr.mxu0 0.0
    %6393 = vmatpush1.xpose.msra.mxu0 0.0
    %6394 = vmatprep.subr.mxu0 0.0
    %6395 = vmatpush1.xpose.msra.mxu0 0.0
    %6396 = vmatprep.subr.mxu0 0.0
    %6397 = vmatpush1.xpose.msra.mxu0 0.0
    %6398 = vmatprep.subr.mxu0 0.0
    %6399 = vmatpush1.xpose.msra.mxu0 0.0
    %6400 = vmatprep.subr.mxu0 0.0
    %6401 = vmatpush1.xpose.msra.mxu0 0.0
    %6402 = vmatprep.subr.mxu0 0.0
    %6403 = vmatpush1.xpose.msra.mxu0 0.0
    %6404 = vmatprep.subr.mxu0 0.0
    %6405 = vmatpush1.xpose.msra.mxu0 0.0
    %6406 = vmatprep.subr.mxu0 0.0
    %6407 = vmatpush1.xpose.msra.mxu0 0.0
    %6408 = vmatprep.subr.mxu0 0.0
    %6409 = vmatpush1.xpose.msra.mxu0 0.0
    %6410 = vmatprep.subr.mxu0 0.0
    %6411 = vmatpush1.xpose.msra.mxu0 0.0
    %6412 = vmatprep.subr.mxu0 0.0
    %6413 = vmatpush1.xpose.msra.mxu0 0.0
    %6414 = vmatprep.subr.mxu0 0.0
    %6415 = vmatpush1.xpose.msra.mxu0 0.0
    %6416 = vmatprep.subr.mxu0 0.0
    %6417 = vmatpush1.xpose.msra.mxu0 0.0
    %6418 = vmatprep.subr.mxu0 0.0
    %6419 = vmatpush1.xpose.msra.mxu0 0.0
    %6420 = vmatprep.subr.mxu0 0.0
    %6421 = vmatpush1.xpose.msra.mxu0 0.0
    %6422 = vmatprep.subr.mxu0 0.0
    %6423 = vmatpush1.xpose.msra.mxu0 0.0
    %6424 = vmatprep.subr.mxu0 0.0
    %6425 = vmatpush1.xpose.msra.mxu0 0.0
    %6426 = vmatprep.subr.mxu0 0.0
    %6427 = vmatpush1.xpose.msra.mxu0 0.0
    %6428 = vmatprep.subr.mxu0 0.0
    %6429 = vmatpush1.xpose.msra.mxu0 0.0
    %6430 = vmatprep.subr.mxu0 0.0
    %6431 = vmatpush1.xpose.msra.mxu0 0.0
    %6432 = vmatprep.subr.mxu0 0.0
    %6433 = vmatpush1.xpose.msra.mxu0 0.0
    %6434 = vmatprep.subr.mxu0 0.0
    %6435 = vmatpush1.xpose.msra.mxu0 0.0
    %6436 = vmatprep.subr.mxu0 0.0
    %6437 = vmatpush1.xpose.msra.mxu0 0.0
    %6438 = vmatprep.subr.mxu0 0.0
    %6439 = vmatpush1.xpose.msra.mxu0 0.0
    %6440 = vmatprep.subr.mxu0 0.0
    %6441 = vmatpush1.xpose.msra.mxu0 0.0
    %6442 = vmatprep.mubr.f32.mxu0 0.0
    %6443 = vmatmul.mubr.f32.gmra.mrb[0].mxu0 %v6376
    %v6444 = vpop.f32.mrb[0].mxu0
    %v6445 = vadd.f32 0.0, %v6444
    %v6446 = vpop.f32.mrb[0].mxu0
    %6447 = vdwg.mxu0
    %v6448 = vsel %vm228, %v6375, 0
    %6450 = vmatprep.subr.mxu0 0.0
    %6451 = vmatpush1.xpose.msra.mxu0 %v403
    %6452 = vmatprep.subr.mxu0 0.0
    %6453 = vmatpush1.xpose.msra.mxu0 0.0
    %6454 = vmatprep.subr.mxu0 0.0
    %6455 = vmatpush1.xpose.msra.mxu0 0.0
    %6456 = vmatprep.subr.mxu0 0.0
    %6457 = vmatpush1.xpose.msra.mxu0 0.0
    %6458 = vmatprep.subr.mxu0 0.0
    %6459 = vmatpush1.xpose.msra.mxu0 0.0
    %6460 = vmatprep.subr.mxu0 0.0
    %6461 = vmatpush1.xpose.msra.mxu0 0.0
    %6462 = vmatprep.subr.mxu0 0.0
    %6463 = vmatpush1.xpose.msra.mxu0 0.0
    %6464 = vmatprep.subr.mxu0 0.0
    %6465 = vmatpush1.xpose.msra.mxu0 0.0
    %6466 = vmatprep.subr.mxu0 0.0
    %6467 = vmatpush1.xpose.msra.mxu0 0.0
    %6468 = vmatprep.subr.mxu0 0.0
    %6469 = vmatpush1.xpose.msra.mxu0 0.0
    %6470 = vmatprep.subr.mxu0 0.0
    %6471 = vmatpush1.xpose.msra.mxu0 0.0
    %6472 = vmatprep.subr.mxu0 0.0
    %6473 = vmatpush1.xpose.msra.mxu0 0.0
    %6474 = vmatprep.subr.mxu0 0.0
    %6475 = vmatpush1.xpose.msra.mxu0 0.0
    %6476 = vmatprep.subr.mxu0 0.0
    %6477 = vmatpush1.xpose.msra.mxu0 0.0
    %6478 = vmatprep.subr.mxu0 0.0
    %6479 = vmatpush1.xpose.msra.mxu0 0.0
    %6480 = vmatprep.subr.mxu0 0.0
    %6481 = vmatpush1.xpose.msra.mxu0 0.0
    %6482 = vmatprep.subr.mxu0 0.0
    %6483 = vmatpush1.xpose.msra.mxu0 0.0
    %6484 = vmatprep.subr.mxu0 0.0
    %6485 = vmatpush1.xpose.msra.mxu0 0.0
    %6486 = vmatprep.subr.mxu0 0.0
    %6487 = vmatpush1.xpose.msra.mxu0 0.0
    %6488 = vmatprep.subr.mxu0 0.0
    %6489 = vmatpush1.xpose.msra.mxu0 0.0
    %6490 = vmatprep.subr.mxu0 0.0
    %6491 = vmatpush1.xpose.msra.mxu0 0.0
    %6492 = vmatprep.subr.mxu0 0.0
    %6493 = vmatpush1.xpose.msra.mxu0 0.0
    %6494 = vmatprep.subr.mxu0 0.0
    %6495 = vmatpush1.xpose.msra.mxu0 0.0
    %6496 = vmatprep.subr.mxu0 0.0
    %6497 = vmatpush1.xpose.msra.mxu0 0.0
    %6498 = vmatprep.subr.mxu0 0.0
    %6499 = vmatpush1.xpose.msra.mxu0 0.0
    %6500 = vmatprep.subr.mxu0 0.0
    %6501 = vmatpush1.xpose.msra.mxu0 0.0
    %6502 = vmatprep.subr.mxu0 0.0
    %6503 = vmatpush1.xpose.msra.mxu0 0.0
    %6504 = vmatprep.subr.mxu0 0.0
    %6505 = vmatpush1.xpose.msra.mxu0 0.0
    %6506 = vmatprep.subr.mxu0 0.0
    %6507 = vmatpush1.xpose.msra.mxu0 0.0
    %6508 = vmatprep.subr.mxu0 0.0
    %6509 = vmatpush1.xpose.msra.mxu0 0.0
    %6510 = vmatprep.subr.mxu0 0.0
    %6511 = vmatpush1.xpose.msra.mxu0 0.0
    %6512 = vmatprep.subr.mxu0 0.0
    %6513 = vmatpush1.xpose.msra.mxu0 0.0
    %6514 = vmatprep.mubr.f32.mxu0 0.0
    %6515 = vmatmul.mubr.f32.gmra.mrb[0].mxu0 %v6448
    %v6516 = vpop.f32.mrb[0].mxu0
    %v6517 = vadd.f32 0.0, %v6516
    %v6518 = vpop.f32.mrb[0].mxu0
    %6519 = vdwg.mxu0
    %v6522 = vrot.slane %v6517, 7
    %v6523 = vsel %vm478, %v6522, %v6445
    %v6525 = vsel %vm481, %v6523, -inf
    %6526 = vmax.xlane.f32.xlu0 %v6525
    %v6527 = vpop.xlane.xlu0 %6526
    %v6529 = vrot.slane %v6527, 1
    %v6532 = vsub.f32 %v6445, %v6527
    %v6533 = vsub.f32 %v6517, %v6529
    %v6534 = vmul.f32 %v6532, 1.442695
    %v6535 = vpow.pop %v6534
    %v6536 = vmul.f32 %v6533, 1.442695
    %v6537 = vpow.pop %v6536
    %v6540 = vrot.slane %v6537, 7
    %v6541 = vsel %vm478, %v6540, %v6535
    %v6543 = vsel %vm481, %v6541, 0.0
    %6544 = vadd.xlane.f32.xlu0 %v6543
    %v6545 = vpop.xlane.xlu0 %6544
    %v6547 = vrot.slane %v6545, 1
    %v6550 = vrcp.pop %v6545
    %v6551 = vmul.f32 %v6535, %v6550
    %v6552 = vrcp.pop %v6547
    %v6553 = vmul.f32 %v6537, %v6552
    %v6555 = vsel %vm511, %v6551, 0
    %6557 = vmatprep.subr.mxu0 0.0
    %6558 = vmatpush1.msra.mxu0 %v126
    %6559 = vmatprep.subr.mxu0 0.0
    %6560 = vmatpush1.msra.mxu0 0.0
    %6561 = vmatprep.subr.mxu0 0.0
    %6562 = vmatpush1.msra.mxu0 0.0
    %6563 = vmatprep.subr.mxu0 0.0
    %6564 = vmatpush1.msra.mxu0 0.0
    %6565 = vmatprep.subr.mxu0 0.0
    %6566 = vmatpush1.msra.mxu0 0.0
    %6567 = vmatprep.subr.mxu0 0.0
    %6568 = vmatpush1.msra.mxu0 0.0
    %6569 = vmatprep.subr.mxu0 0.0
    %6570 = vmatpush1.msra.mxu0 0.0
    %6571 = vmatprep.subr.mxu0 0.0
    %6572 = vmatpush1.msra.mxu0 0.0
    %6573 = vmatprep.subr.mxu0 0.0
    %6574 = vmatpush1.msra.mxu0 0.0
    %6575 = vmatprep.subr.mxu0 0.0
    %6576 = vmatpush1.msra.mxu0 0.0
    %6577 = vmatprep.subr.mxu0 0.0
    %6578 = vmatpush1.msra.mxu0 0.0
    %6579 = vmatprep.subr.mxu0 0.0
    %6580 = vmatpush1.msra.mxu0 0.0
    %6581 = vmatprep.subr.mxu0 0.0
    %6582 = vmatpush1.msra.mxu0 0.0
    %6583 = vmatprep.subr.mxu0 0.0
    %6584 = vmatpush1.msra.mxu0 0.0
    %6585 = vmatprep.subr.mxu0 0.0
    %6586 = vmatpush1.msra.mxu0 0.0
    %6587 = vmatprep.subr.mxu0 0.0
    %6588 = vmatpush1.msra.mxu0 0.0
    %6589 = vmatprep.subr.mxu0 0.0
    %6590 = vmatpush1.msra.mxu0 0.0
    %6591 = vmatprep.subr.mxu0 0.0
    %6592 = vmatpush1.msra.mxu0 0.0
    %6593 = vmatprep.subr.mxu0 0.0
    %6594 = vmatpush1.msra.mxu0 0.0
    %6595 = vmatprep.subr.mxu0 0.0
    %6596 = vmatpush1.msra.mxu0 0.0
    %6597 = vmatprep.subr.mxu0 0.0
    %6598 = vmatpush1.msra.mxu0 0.0
    %6599 = vmatprep.subr.mxu0 0.0
    %6600 = vmatpush1.msra.mxu0 0.0
    %6601 = vmatprep.subr.mxu0 0.0
    %6602 = vmatpush1.msra.mxu0 0.0
    %6603 = vmatprep.subr.mxu0 0.0
    %6604 = vmatpush1.msra.mxu0 0.0
    %6605 = vmatprep.subr.mxu0 0.0
    %6606 = vmatpush1.msra.mxu0 0.0
    %6607 = vmatprep.subr.mxu0 0.0
    %6608 = vmatpush1.msra.mxu0 0.0
    %6609 = vmatprep.subr.mxu0 0.0
    %6610 = vmatpush1.msra.mxu0 0.0
    %6611 = vmatprep.subr.mxu0 0.0
    %6612 = vmatpush1.msra.mxu0 0.0
    %6613 = vmatprep.subr.mxu0 0.0
    %6614 = vmatpush1.msra.mxu0 0.0
    %6615 = vmatprep.subr.mxu0 0.0
    %6616 = vmatpush1.msra.mxu0 0.0
    %6617 = vmatprep.subr.mxu0 0.0
    %6618 = vmatpush1.msra.mxu0 0.0
    %6619 = vmatprep.subr.mxu0 0.0
    %6620 = vmatpush1.msra.mxu0 0.0
    %6621 = vmatprep.mubr.f32.mxu0 0.0
    %6622 = vmatmul.mubr.f32.gmra.mrb[0].mxu0 %v6555
    %v6623 = vpop.f32.mrb[0].mxu0
    %v6624 = vadd.f32 0.0, %v6623
    %v6625 = vpop.f32.mrb[0].mxu0
    %6626 = vdwg.mxu0
    %v6628 = vsel %vm511, %v6553, 0
    %6630 = vmatprep.subr.mxu0 0.0
    %6631 = vmatpush1.msra.mxu0 %v127
    %6632 = vmatprep.subr.mxu0 0.0
    %6633 = vmatpush1.msra.mxu0 0.0
    %6634 = vmatprep.subr.mxu0 0.0
    %6635 = vmatpush1.msra.mxu0 0.0
    %6636 = vmatprep.subr.mxu0 0.0
    %6637 = vmatpush1.msra.mxu0 0.0
    %6638 = vmatprep.subr.mxu0 0.0
    %6639 = vmatpush1.msra.mxu0 0.0
    %6640 = vmatprep.subr.mxu0 0.0
    %6641 = vmatpush1.msra.mxu0 0.0
    %6642 = vmatprep.subr.mxu0 0.0
    %6643 = vmatpush1.msra.mxu0 0.0
    %6644 = vmatprep.subr.mxu0 0.0
    %6645 = vmatpush1.msra.mxu0 0.0
    %6646 = vmatprep.subr.mxu0 0.0
    %6647 = vmatpush1.msra.mxu0 0.0
    %6648 = vmatprep.subr.mxu0 0.0
    %6649 = vmatpush1.msra.mxu0 0.0
    %6650 = vmatprep.subr.mxu0 0.0
    %6651 = vmatpush1.msra.mxu0 0.0
    %6652 = vmatprep.subr.mxu0 0.0
    %6653 = vmatpush1.msra.mxu0 0.0
    %6654 = vmatprep.subr.mxu0 0.0
    %6655 = vmatpush1.msra.mxu0 0.0
    %6656 = vmatprep.subr.mxu0 0.0
    %6657 = vmatpush1.msra.mxu0 0.0
    %6658 = vmatprep.subr.mxu0 0.0
    %6659 = vmatpush1.msra.mxu0 0.0
    %6660 = vmatprep.subr.mxu0 0.0
    %6661 = vmatpush1.msra.mxu0 0.0
    %6662 = vmatprep.subr.mxu0 0.0
    %6663 = vmatpush1.msra.mxu0 0.0
    %6664 = vmatprep.subr.mxu0 0.0
    %6665 = vmatpush1.msra.mxu0 0.0
    %6666 = vmatprep.subr.mxu0 0.0
    %6667 = vmatpush1.msra.mxu0 0.0
    %6668 = vmatprep.subr.mxu0 0.0
    %6669 = vmatpush1.msra.mxu0 0.0
    %6670 = vmatprep.subr.mxu0 0.0
    %6671 = vmatpush1.msra.mxu0 0.0
    %6672 = vmatprep.subr.mxu0 0.0
    %6673 = vmatpush1.msra.mxu0 0.0
    %6674 = vmatprep.subr.mxu0 0.0
    %6675 = vmatpush1.msra.mxu0 0.0
    %6676 = vmatprep.subr.mxu0 0.0
    %6677 = vmatpush1.msra.mxu0 0.0
    %6678 = vmatprep.subr.mxu0 0.0
    %6679 = vmatpush1.msra.mxu0 0.0
    %6680 = vmatprep.subr.mxu0 0.0
    %6681 = vmatpush1.msra.mxu0 0.0
    %6682 = vmatprep.subr.mxu0 0.0
    %6683 = vmatpush1.msra.mxu0 0.0
    %6684 = vmatprep.subr.mxu0 0.0
    %6685 = vmatpush1.msra.mxu0 0.0
    %6686 = vmatprep.subr.mxu0 0.0
    %6687 = vmatpush1.msra.mxu0 0.0
    %6688 = vmatprep.subr.mxu0 0.0
    %6689 = vmatpush1.msra.mxu0 0.0
    %6690 = vmatprep.subr.mxu0 0.0
    %6691 = vmatpush1.msra.mxu0 0.0
    %6692 = vmatprep.subr.mxu0 0.0
    %6693 = vmatpush1.msra.mxu0 0.0
    %6694 = vmatprep.mubr.f32.mxu0 0.0
    %6695 = vmatmul.mubr.f32.gmra.mrb[0].mxu0 %v6628
    %v6696 = vpop.f32.mrb[0].mxu0
    %v6697 = vadd.f32 0.0, %v6696
    %v6698 = vpop.f32.mrb[0].mxu0
    %6699 = vdwg.mxu0
    %vm6700 = vcmp.gt.s32.totalorder %v5908, 32
    %v6701 = vsel %vm6700, 3, %v5908
    %vm6702 = vcmp.eq.s32.totalorder %v154, %v6701
    %v6703 = vsel %vm6702, 1, 0
    %v6704 = vcvt.s32.f32 %v6703
    %v6707 = vrot.slane %v6243, 7
    %v6708 = vsel %vm478, %v6707, %v6170
    %v6709 = vsel %vm228, %v6708, 0
    %6711 = vmatprep.subr.mxu0 0.0
    %6712 = vmatpush1.msra.mxu0 %v139
    %6713 = vmatprep.subr.mxu0 0.0
    %6714 = vmatpush1.msra.mxu0 %v140
    %6715 = vmatprep.subr.mxu0 0.0
    %6716 = vmatpush1.msra.mxu0 %v141
    %6717 = vmatprep.subr.mxu0 0.0
    %6718 = vmatpush1.msra.mxu0 %v142
    %6719 = vmatprep.subr.mxu0 0.0
    %6720 = vmatpush1.msra.mxu0 0.0
    %6721 = vmatprep.subr.mxu0 0.0
    %6722 = vmatpush1.msra.mxu0 0.0
    %6723 = vmatprep.subr.mxu0 0.0
    %6724 = vmatpush1.msra.mxu0 0.0
    %6725 = vmatprep.subr.mxu0 0.0
    %6726 = vmatpush1.msra.mxu0 0.0
    %6727 = vmatprep.subr.mxu0 0.0
    %6728 = vmatpush1.msra.mxu0 0.0
    %6729 = vmatprep.subr.mxu0 0.0
    %6730 = vmatpush1.msra.mxu0 0.0
    %6731 = vmatprep.subr.mxu0 0.0
    %6732 = vmatpush1.msra.mxu0 0.0
    %6733 = vmatprep.subr.mxu0 0.0
    %6734 = vmatpush1.msra.mxu0 0.0
    %6735 = vmatprep.subr.mxu0 0.0
    %6736 = vmatpush1.msra.mxu0 0.0
    %6737 = vmatprep.subr.mxu0 0.0
    %6738 = vmatpush1.msra.mxu0 0.0
    %6739 = vmatprep.subr.mxu0 0.0
    %6740 = vmatpush1.msra.mxu0 0.0
    %6741 = vmatprep.subr.mxu0 0.0
    %6742 = vmatpush1.msra.mxu0 0.0
    %6743 = vmatprep.subr.mxu0 0.0
    %6744 = vmatpush1.msra.mxu0 0.0
    %6745 = vmatprep.subr.mxu0 0.0
    %6746 = vmatpush1.msra.mxu0 0.0
    %6747 = vmatprep.subr.mxu0 0.0
    %6748 = vmatpush1.msra.mxu0 0.0
    %6749 = vmatprep.subr.mxu0 0.0
    %6750 = vmatpush1.msra.mxu0 0.0
    %6751 = vmatprep.subr.mxu0 0.0
    %6752 = vmatpush1.msra.mxu0 0.0
    %6753 = vmatprep.subr.mxu0 0.0
    %6754 = vmatpush1.msra.mxu0 0.0
    %6755 = vmatprep.subr.mxu0 0.0
    %6756 = vmatpush1.msra.mxu0 0.0
    %6757 = vmatprep.subr.mxu0 0.0
    %6758 = vmatpush1.msra.mxu0 0.0
    %6759 = vmatprep.subr.mxu0 0.0
    %6760 = vmatpush1.msra.mxu0 0.0
    %6761 = vmatprep.subr.mxu0 0.0
    %6762 = vmatpush1.msra.mxu0 0.0
    %6763 = vmatprep.subr.mxu0 0.0
    %6764 = vmatpush1.msra.mxu0 0.0
    %6765 = vmatprep.subr.mxu0 0.0
    %6766 = vmatpush1.msra.mxu0 0.0
    %6767 = vmatprep.subr.mxu0 0.0
    %6768 = vmatpush1.msra.mxu0 0.0
    %6769 = vmatprep.subr.mxu0 0.0
    %6770 = vmatpush1.msra.mxu0 0.0
    %6771 = vmatprep.subr.mxu0 0.0
    %6772 = vmatpush1.msra.mxu0 0.0
    %6773 = vmatprep.subr.mxu0 0.0
    %6774 = vmatpush1.msra.mxu0 0.0
    %6775 = vmatprep.mubr.f32.mxu0 0.0
    %6776 = vmatmul.mubr.f32.gmra.mrb[0].mxu0 %v6709
    %v6777 = vpop.f32.mrb[0].mxu0
    %v6778 = vadd.f32 0.0, %v6777
    %v6779 = vpop.f32.mrb[0].mxu0
    %6780 = vdwg.mxu0
    %v6783 = vrot.slane %v6697, 7
    %v6784 = vsel %vm478, %v6783, %v6624
    %v6785 = vsel %vm228, %v6784, 0
    %6787 = vmatprep.subr.mxu0 0.0
    %6788 = vmatpush1.msra.mxu0 %v135
    %6789 = vmatprep.subr.mxu0 0.0
    %6790 = vmatpush1.msra.mxu0 %v136
    %6791 = vmatprep.subr.mxu0 0.0
    %6792 = vmatpush1.msra.mxu0 %v137
    %6793 = vmatprep.subr.mxu0 0.0
    %6794 = vmatpush1.msra.mxu0 %v138
    %6795 = vmatprep.subr.mxu0 0.0
    %6796 = vmatpush1.msra.mxu0 0.0
    %6797 = vmatprep.subr.mxu0 0.0
    %6798 = vmatpush1.msra.mxu0 0.0
    %6799 = vmatprep.subr.mxu0 0.0
    %6800 = vmatpush1.msra.mxu0 0.0
    %6801 = vmatprep.subr.mxu0 0.0
    %6802 = vmatpush1.msra.mxu0 0.0
    %6803 = vmatprep.subr.mxu0 0.0
    %6804 = vmatpush1.msra.mxu0 0.0
    %6805 = vmatprep.subr.mxu0 0.0
    %6806 = vmatpush1.msra.mxu0 0.0
    %6807 = vmatprep.subr.mxu0 0.0
    %6808 = vmatpush1.msra.mxu0 0.0
    %6809 = vmatprep.subr.mxu0 0.0
    %6810 = vmatpush1.msra.mxu0 0.0
    %6811 = vmatprep.subr.mxu0 0.0
    %6812 = vmatpush1.msra.mxu0 0.0
    %6813 = vmatprep.subr.mxu0 0.0
    %6814 = vmatpush1.msra.mxu0 0.0
    %6815 = vmatprep.subr.mxu0 0.0
    %6816 = vmatpush1.msra.mxu0 0.0
    %6817 = vmatprep.subr.mxu0 0.0
    %6818 = vmatpush1.msra.mxu0 0.0
    %6819 = vmatprep.subr.mxu0 0.0
    %6820 = vmatpush1.msra.mxu0 0.0
    %6821 = vmatprep.subr.mxu0 0.0
    %6822 = vmatpush1.msra.mxu0 0.0
    %6823 = vmatprep.subr.mxu0 0.0
    %6824 = vmatpush1.msra.mxu0 0.0
    %6825 = vmatprep.subr.mxu0 0.0
    %6826 = vmatpush1.msra.mxu0 0.0
    %6827 = vmatprep.subr.mxu0 0.0
    %6828 = vmatpush1.msra.mxu0 0.0
    %6829 = vmatprep.subr.mxu0 0.0
    %6830 = vmatpush1.msra.mxu0 0.0
    %6831 = vmatprep.subr.mxu0 0.0
    %6832 = vmatpush1.msra.mxu0 0.0
    %6833 = vmatprep.subr.mxu0 0.0
    %6834 = vmatpush1.msra.mxu0 0.0
    %6835 = vmatprep.subr.mxu0 0.0
    %6836 = vmatpush1.msra.mxu0 0.0
    %6837 = vmatprep.subr.mxu0 0.0
    %6838 = vmatpush1.msra.mxu0 0.0
    %6839 = vmatprep.subr.mxu0 0.0
    %6840 = vmatpush1.msra.mxu0 0.0
    %6841 = vmatprep.subr.mxu0 0.0
    %6842 = vmatpush1.msra.mxu0 0.0
    %6843 = vmatprep.subr.mxu0 0.0
    %6844 = vmatpush1.msra.mxu0 0.0
    %6845 = vmatprep.subr.mxu0 0.0
    %6846 = vmatpush1.msra.mxu0 0.0
    %6847 = vmatprep.subr.mxu0 0.0
    %6848 = vmatpush1.msra.mxu0 0.0
    %6849 = vmatprep.subr.mxu0 0.0
    %6850 = vmatpush1.msra.mxu0 0.0
    %6851 = vmatprep.mubr.f32.mxu0 0.0
    %6852 = vmatmul.mubr.f32.gmra.mrb[0].mxu0 %v6785
    %v6853 = vpop.f32.mrb[0].mxu0
    %v6854 = vadd.f32 %v6778, %v6853
    %v6855 = vpop.f32.mrb[0].mxu0
    %6856 = vdwg.mxu0
    %v6858 = vsel %vm228, %v6704, 0
    %6860 = vmatprep.subr.mxu0 0.0
    %6861 = vmatpush1.msra.mxu0 %v143
    %6862 = vmatprep.subr.mxu0 0.0
    %6863 = vmatpush1.msra.mxu0 %v144
    %6864 = vmatprep.subr.mxu0 0.0
    %6865 = vmatpush1.msra.mxu0 %v145
    %6866 = vmatprep.subr.mxu0 0.0
    %6867 = vmatpush1.msra.mxu0 %v146
    %6868 = vmatprep.subr.mxu0 0.0
    %6869 = vmatpush1.msra.mxu0 0.0
    %6870 = vmatprep.subr.mxu0 0.0
    %6871 = vmatpush1.msra.mxu0 0.0
    %6872 = vmatprep.subr.mxu0 0.0
    %6873 = vmatpush1.msra.mxu0 0.0
    %6874 = vmatprep.subr.mxu0 0.0
    %6875 = vmatpush1.msra.mxu0 0.0
    %6876 = vmatprep.subr.mxu0 0.0
    %6877 = vmatpush1.msra.mxu0 0.0
    %6878 = vmatprep.subr.mxu0 0.0
    %6879 = vmatpush1.msra.mxu0 0.0
    %6880 = vmatprep.subr.mxu0 0.0
    %6881 = vmatpush1.msra.mxu0 0.0
    %6882 = vmatprep.subr.mxu0 0.0
    %6883 = vmatpush1.msra.mxu0 0.0
    %6884 = vmatprep.subr.mxu0 0.0
    %6885 = vmatpush1.msra.mxu0 0.0
    %6886 = vmatprep.subr.mxu0 0.0
    %6887 = vmatpush1.msra.mxu0 0.0
    %6888 = vmatprep.subr.mxu0 0.0
    %6889 = vmatpush1.msra.mxu0 0.0
    %6890 = vmatprep.subr.mxu0 0.0
    %6891 = vmatpush1.msra.mxu0 0.0
    %6892 = vmatprep.subr.mxu0 0.0
    %6893 = vmatpush1.msra.mxu0 0.0
    %6894 = vmatprep.subr.mxu0 0.0
    %6895 = vmatpush1.msra.mxu0 0.0
    %6896 = vmatprep.subr.mxu0 0.0
    %6897 = vmatpush1.msra.mxu0 0.0
    %6898 = vmatprep.subr.mxu0 0.0
    %6899 = vmatpush1.msra.mxu0 0.0
    %6900 = vmatprep.subr.mxu0 0.0
    %6901 = vmatpush1.msra.mxu0 0.0
    %6902 = vmatprep.subr.mxu0 0.0
    %6903 = vmatpush1.msra.mxu0 0.0
    %6904 = vmatprep.subr.mxu0 0.0
    %6905 = vmatpush1.msra.mxu0 0.0
    %6906 = vmatprep.subr.mxu0 0.0
    %6907 = vmatpush1.msra.mxu0 0.0
    %6908 = vmatprep.subr.mxu0 0.0
    %6909 = vmatpush1.msra.mxu0 0.0
    %6910 = vmatprep.subr.mxu0 0.0
    %6911 = vmatpush1.msra.mxu0 0.0
    %6912 = vmatprep.subr.mxu0 0.0
    %6913 = vmatpush1.msra.mxu0 0.0
    %6914 = vmatprep.subr.mxu0 0.0
    %6915 = vmatpush1.msra.mxu0 0.0
    %6916 = vmatprep.subr.mxu0 0.0
    %6917 = vmatpush1.msra.mxu0 0.0
    %6918 = vmatprep.subr.mxu0 0.0
    %6919 = vmatpush1.msra.mxu0 0.0
    %6920 = vmatprep.subr.mxu0 0.0
    %6921 = vmatpush1.msra.mxu0 0.0
    %6922 = vmatprep.subr.mxu0 0.0
    %6923 = vmatpush1.msra.mxu0 0.0
    %6924 = vmatprep.mubr.f32.mxu0 0.0
    %6925 = vmatmul.mubr.f32.gmra.mrb[0].mxu0 %v6858
    %v6926 = vpop.f32.mrb[0].mxu0
    %v6927 = vadd.f32 0.0, %v6926
    %v6928 = vpop.f32.mrb[0].mxu0
    %6929 = vdwg.mxu0
    %v6930 = vadd.f32 %v6854, %v6927
    %v6931 = vadd.f32 %v6930, %v884
    %6932 = vrot.lane.b32.xlu0 %v6350, 96
    %v6933 = vpop.permute.xlu0 %6932
    %v6935 = vadd.f32 %v6931, %v6933
    %v6936 = vxor.u32 %v6935, 2147483648
    %v6937 = vmul.f32 %v6936, 1.442695
    %v6938 = vpow.pop %v6937
    %v6939 = vadd.f32 %v6938, 1.0
    %v6940 = vrcp.pop %v6939
    %v6941 = vmul.f32 1.0, %v6940
    %6942 = vrot.lane.b32.xlu0 %v6350, 32
    %v6943 = vpop.permute.xlu0 %6942
    %v6945 = vmul.f32 %v6941, %v6943
    %6947 = vrot.lane.b32.xlu0 %v6945, 64
    %v6948 = vpop.permute.xlu0 %6947
    %v6950 = vadd.f32 %v6931, %v6948
    %v6951 = vtanh.pop %v6950
    %v6952 = vsub.f32 1.0, %v6941
    %6954 = vrot.lane.b32.xlu0 %v6951, 96
    %v6955 = vpop.permute.xlu0 %6954
    %v6957 = vmul.f32 %v6952, %v6955
    %v6958 = vmul.f32 %v6941, %v5451
    %v6959 = vadd.f32 %v6957, %v6958
    %6961 = vrot.lane.b32.xlu0 %v6959, 96
    %v6962 = vpop.permute.xlu0 %6961
    %v6963 = vsel %vm228, %v6962, 0
    %6965 = vmatprep.subr.mxu0 0.0
    %6966 = vmatpush1.msra.mxu0 %v148
    %6967 = vmatprep.subr.mxu0 0.0
    %6968 = vmatpush1.msra.mxu0 %v149
    %6969 = vmatprep.subr.mxu0 0.0
    %6970 = vmatpush1.msra.mxu0 %v150
    %6971 = vmatprep.subr.mxu0 0.0
    %6972 = vmatpush1.msra.mxu0 %v151
    %6973 = vmatprep.subr.mxu0 0.0
    %6974 = vmatpush1.msra.mxu0 0.0
    %6975 = vmatprep.subr.mxu0 0.0
    %6976 = vmatpush1.msra.mxu0 0.0
    %6977 = vmatprep.subr.mxu0 0.0
    %6978 = vmatpush1.msra.mxu0 0.0
    %6979 = vmatprep.subr.mxu0 0.0
    %6980 = vmatpush1.msra.mxu0 0.0
    %6981 = vmatprep.subr.mxu0 0.0
    %6982 = vmatpush1.msra.mxu0 0.0
    %6983 = vmatprep.subr.mxu0 0.0
    %6984 = vmatpush1.msra.mxu0 0.0
    %6985 = vmatprep.subr.mxu0 0.0
    %6986 = vmatpush1.msra.mxu0 0.0
    %6987 = vmatprep.subr.mxu0 0.0
    %6988 = vmatpush1.msra.mxu0 0.0
    %6989 = vmatprep.subr.mxu0 0.0
    %6990 = vmatpush1.msra.mxu0 0.0
    %6991 = vmatprep.subr.mxu0 0.0
    %6992 = vmatpush1.msra.mxu0 0.0
    %6993 = vmatprep.subr.mxu0 0.0
    %6994 = vmatpush1.msra.mxu0 0.0
    %6995 = vmatprep.subr.mxu0 0.0
    %6996 = vmatpush1.msra.mxu0 0.0
    %6997 = vmatprep.subr.mxu0 0.0
    %6998 = vmatpush1.msra.mxu0 0.0
    %6999 = vmatprep.subr.mxu0 0.0
    %7000 = vmatpush1.msra.mxu0 0.0
    %7001 = vmatprep.subr.mxu0 0.0
    %7002 = vmatpush1.msra.mxu0 0.0
    %7003 = vmatprep.subr.mxu0 0.0
    %7004 = vmatpush1.msra.mxu0 0.0
    %7005 = vmatprep.subr.mxu0 0.0
    %7006 = vmatpush1.msra.mxu0 0.0
    %7007 = vmatprep.subr.mxu0 0.0
    %7008 = vmatpush1.msra.mxu0 0.0
    %7009 = vmatprep.subr.mxu0 0.0
    %7010 = vmatpush1.msra.mxu0 0.0
    %7011 = vmatprep.subr.mxu0 0.0
    %7012 = vmatpush1.msra.mxu0 0.0
    %7013 = vmatprep.subr.mxu0 0.0
    %7014 = vmatpush1.msra.mxu0 0.0
    %7015 = vmatprep.subr.mxu0 0.0
    %7016 = vmatpush1.msra.mxu0 0.0
    %7017 = vmatprep.subr.mxu0 0.0
    %7018 = vmatpush1.msra.mxu0 0.0
    %7019 = vmatprep.subr.mxu0 0.0
    %7020 = vmatpush1.msra.mxu0 0.0
    %7021 = vmatprep.subr.mxu0 0.0
    %7022 = vmatpush1.msra.mxu0 0.0
    %7023 = vmatprep.subr.mxu0 0.0
    %7024 = vmatpush1.msra.mxu0 0.0
    %7025 = vmatprep.subr.mxu0 0.0
    %7026 = vmatpush1.msra.mxu0 0.0
    %7027 = vmatprep.subr.mxu0 0.0
    %7028 = vmatpush1.msra.mxu0 0.0
    %7029 = vmatprep.mubr.f32.mxu0 0.0
    %7030 = vmatmul.mubr.f32.gmra.mrb[0].mxu0 %v6963
    %v7031 = vpop.f32.mrb[0].mxu0
    %v7032 = vadd.f32 %v919, %v7031
    %v7033 = vpop.f32.mrb[0].mxu0
    %7034 = vdwg.mxu0
    %7036 = vrot.lane.b32.xlu0 %v7032, 96
    %v7037 = vpop.permute.xlu0 %7036
    %v7039 = vsel %vm188, -1000000.0, %v7037
    %v7041 = vunpack.c.l.s4 1966171168
    %v7042 = vunpack.c.0.s8 %v7041
    %v7043 = vlaneseq
    %v7044 = vshrl.u32 %v7043, 7
    %v7045 = vsub.s32 %v7042, %v7044
    %v7046 = vrot.slane %v7032, %v7045
    %v7047 = vcombine.high %v7046, %v7046
    %v7049 = vunpack.c.l.s4 1966171168
    %v7050 = vunpack.c.0.s8 %v7049
    %v7051 = vlaneseq
    %v7052 = vshrl.u32 %v7051, 7
    %v7053 = vsub.s32 %v7050, %v7052
    %v7054 = vrot.slane %v7046, %v7053
    %v7056 = vunpack.c.l.s4 1966171168
    %v7057 = vunpack.c.0.s8 %v7056
    %v7058 = vlaneseq
    %v7059 = vshrl.u32 %v7058, 7
    %v7060 = vsub.s32 %v7057, %v7059
    %v7061 = vrot.slane %v7047, %v7060
    %v7062 = vsel %vm228, %v7054, 0
    %7064 = vmatprep.subr.mxu0 0.0
    %7065 = vmatpush1.xpose.msra.mxu0 %v328
    %7066 = vmatprep.subr.mxu0 0.0
    %7067 = vmatpush1.xpose.msra.mxu0 0.0
    %7068 = vmatprep.subr.mxu0 0.0
    %7069 = vmatpush1.xpose.msra.mxu0 0.0
    %7070 = vmatprep.subr.mxu0 0.0
    %7071 = vmatpush1.xpose.msra.mxu0 0.0
    %7072 = vmatprep.subr.mxu0 0.0
    %7073 = vmatpush1.xpose.msra.mxu0 0.0
    %7074 = vmatprep.subr.mxu0 0.0
    %7075 = vmatpush1.xpose.msra.mxu0 0.0
    %7076 = vmatprep.subr.mxu0 0.0
    %7077 = vmatpush1.xpose.msra.mxu0 0.0
    %7078 = vmatprep.subr.mxu0 0.0
    %7079 = vmatpush1.xpose.msra.mxu0 0.0
    %7080 = vmatprep.subr.mxu0 0.0
    %7081 = vmatpush1.xpose.msra.mxu0 0.0
    %7082 = vmatprep.subr.mxu0 0.0
    %7083 = vmatpush1.xpose.msra.mxu0 0.0
    %7084 = vmatprep.subr.mxu0 0.0
    %7085 = vmatpush1.xpose.msra.mxu0 0.0
    %7086 = vmatprep.subr.mxu0 0.0
    %7087 = vmatpush1.xpose.msra.mxu0 0.0
    %7088 = vmatprep.subr.mxu0 0.0
    %7089 = vmatpush1.xpose.msra.mxu0 0.0
    %7090 = vmatprep.subr.mxu0 0.0
    %7091 = vmatpush1.xpose.msra.mxu0 0.0
    %7092 = vmatprep.subr.mxu0 0.0
    %7093 = vmatpush1.xpose.msra.mxu0 0.0
    %7094 = vmatprep.subr.mxu0 0.0
    %7095 = vmatpush1.xpose.msra.mxu0 0.0
    %7096 = vmatprep.subr.mxu0 0.0
    %7097 = vmatpush1.xpose.msra.mxu0 0.0
    %7098 = vmatprep.subr.mxu0 0.0
    %7099 = vmatpush1.xpose.msra.mxu0 0.0
    %7100 = vmatprep.subr.mxu0 0.0
    %7101 = vmatpush1.xpose.msra.mxu0 0.0
    %7102 = vmatprep.subr.mxu0 0.0
    %7103 = vmatpush1.xpose.msra.mxu0 0.0
    %7104 = vmatprep.subr.mxu0 0.0
    %7105 = vmatpush1.xpose.msra.mxu0 0.0
    %7106 = vmatprep.subr.mxu0 0.0
    %7107 = vmatpush1.xpose.msra.mxu0 0.0
    %7108 = vmatprep.subr.mxu0 0.0
    %7109 = vmatpush1.xpose.msra.mxu0 0.0
    %7110 = vmatprep.subr.mxu0 0.0
    %7111 = vmatpush1.xpose.msra.mxu0 0.0
    %7112 = vmatprep.subr.mxu0 0.0
    %7113 = vmatpush1.xpose.msra.mxu0 0.0
    %7114 = vmatprep.subr.mxu0 0.0
    %7115 = vmatpush1.xpose.msra.mxu0 0.0
    %7116 = vmatprep.subr.mxu0 0.0
    %7117 = vmatpush1.xpose.msra.mxu0 0.0
    %7118 = vmatprep.subr.mxu0 0.0
    %7119 = vmatpush1.xpose.msra.mxu0 0.0
    %7120 = vmatprep.subr.mxu0 0.0
    %7121 = vmatpush1.xpose.msra.mxu0 0.0
    %7122 = vmatprep.subr.mxu0 0.0
    %7123 = vmatpush1.xpose.msra.mxu0 0.0
    %7124 = vmatprep.subr.mxu0 0.0
    %7125 = vmatpush1.xpose.msra.mxu0 0.0
    %7126 = vmatprep.subr.mxu0 0.0
    %7127 = vmatpush1.xpose.msra.mxu0 0.0
    %7128 = vmatprep.mubr.f32.mxu0 0.0
    %7129 = vmatmul.mubr.f32.gmra.mrb[0].mxu0 %v7062
    %v7130 = vpop.f32.mrb[0].mxu0
    %v7131 = vadd.f32 0.0, %v7130
    %v7132 = vpop.f32.mrb[0].mxu0
    %7133 = vdwg.mxu0
    %v7134 = vsel %vm228, %v7061, 0
    %7136 = vmatprep.subr.mxu0 0.0
    %7137 = vmatpush1.xpose.msra.mxu0 %v403
    %7138 = vmatprep.subr.mxu0 0.0
    %7139 = vmatpush1.xpose.msra.mxu0 0.0
    %7140 = vmatprep.subr.mxu0 0.0
    %7141 = vmatpush1.xpose.msra.mxu0 0.0
    %7142 = vmatprep.subr.mxu0 0.0
    %7143 = vmatpush1.xpose.msra.mxu0 0.0
    %7144 = vmatprep.subr.mxu0 0.0
    %7145 = vmatpush1.xpose.msra.mxu0 0.0
    %7146 = vmatprep.subr.mxu0 0.0
    %7147 = vmatpush1.xpose.msra.mxu0 0.0
    %7148 = vmatprep.subr.mxu0 0.0
    %7149 = vmatpush1.xpose.msra.mxu0 0.0
    %7150 = vmatprep.subr.mxu0 0.0
    %7151 = vmatpush1.xpose.msra.mxu0 0.0
    %7152 = vmatprep.subr.mxu0 0.0
    %7153 = vmatpush1.xpose.msra.mxu0 0.0
    %7154 = vmatprep.subr.mxu0 0.0
    %7155 = vmatpush1.xpose.msra.mxu0 0.0
    %7156 = vmatprep.subr.mxu0 0.0
    %7157 = vmatpush1.xpose.msra.mxu0 0.0
    %7158 = vmatprep.subr.mxu0 0.0
    %7159 = vmatpush1.xpose.msra.mxu0 0.0
    %7160 = vmatprep.subr.mxu0 0.0
    %7161 = vmatpush1.xpose.msra.mxu0 0.0
    %7162 = vmatprep.subr.mxu0 0.0
    %7163 = vmatpush1.xpose.msra.mxu0 0.0
    %7164 = vmatprep.subr.mxu0 0.0
    %7165 = vmatpush1.xpose.msra.mxu0 0.0
    %7166 = vmatprep.subr.mxu0 0.0
    %7167 = vmatpush1.xpose.msra.mxu0 0.0
    %7168 = vmatprep.subr.mxu0 0.0
    %7169 = vmatpush1.xpose.msra.mxu0 0.0
    %7170 = vmatprep.subr.mxu0 0.0
    %7171 = vmatpush1.xpose.msra.mxu0 0.0
    %7172 = vmatprep.subr.mxu0 0.0
    %7173 = vmatpush1.xpose.msra.mxu0 0.0
    %7174 = vmatprep.subr.mxu0 0.0
    %7175 = vmatpush1.xpose.msra.mxu0 0.0
    %7176 = vmatprep.subr.mxu0 0.0
    %7177 = vmatpush1.xpose.msra.mxu0 0.0
    %7178 = vmatprep.subr.mxu0 0.0
    %7179 = vmatpush1.xpose.msra.mxu0 0.0
    %7180 = vmatprep.subr.mxu0 0.0
    %7181 = vmatpush1.xpose.msra.mxu0 0.0
    %7182 = vmatprep.subr.mxu0 0.0
    %7183 = vmatpush1.xpose.msra.mxu0 0.0
    %7184 = vmatprep.subr.mxu0 0.0
    %7185 = vmatpush1.xpose.msra.mxu0 0.0
    %7186 = vmatprep.subr.mxu0 0.0
    %7187 = vmatpush1.xpose.msra.mxu0 0.0
    %7188 = vmatprep.subr.mxu0 0.0
    %7189 = vmatpush1.xpose.msra.mxu0 0.0
    %7190 = vmatprep.subr.mxu0 0.0
    %7191 = vmatpush1.xpose.msra.mxu0 0.0
    %7192 = vmatprep.subr.mxu0 0.0
    %7193 = vmatpush1.xpose.msra.mxu0 0.0
    %7194 = vmatprep.subr.mxu0 0.0
    %7195 = vmatpush1.xpose.msra.mxu0 0.0
    %7196 = vmatprep.subr.mxu0 0.0
    %7197 = vmatpush1.xpose.msra.mxu0 0.0
    %7198 = vmatprep.subr.mxu0 0.0
    %7199 = vmatpush1.xpose.msra.mxu0 0.0
    %7200 = vmatprep.mubr.f32.mxu0 0.0
    %7201 = vmatmul.mubr.f32.gmra.mrb[0].mxu0 %v7134
    %v7202 = vpop.f32.mrb[0].mxu0
    %v7203 = vadd.f32 0.0, %v7202
    %v7204 = vpop.f32.mrb[0].mxu0
    %7205 = vdwg.mxu0
    %v7207 = vsel %vm511, %v7131, 0
    %7209 = vmatprep.subr.mxu0 0.0
    %7210 = vmatpush1.msra.mxu0 %v165
    %7211 = vmatprep.subr.mxu0 0.0
    %7212 = vmatpush1.msra.mxu0 0.0
    %7213 = vmatprep.subr.mxu0 0.0
    %7214 = vmatpush1.msra.mxu0 0.0
    %7215 = vmatprep.subr.mxu0 0.0
    %7216 = vmatpush1.msra.mxu0 0.0
    %7217 = vmatprep.subr.mxu0 0.0
    %7218 = vmatpush1.msra.mxu0 0.0
    %7219 = vmatprep.subr.mxu0 0.0
    %7220 = vmatpush1.msra.mxu0 0.0
    %7221 = vmatprep.subr.mxu0 0.0
    %7222 = vmatpush1.msra.mxu0 0.0
    %7223 = vmatprep.subr.mxu0 0.0
    %7224 = vmatpush1.msra.mxu0 0.0
    %7225 = vmatprep.subr.mxu0 0.0
    %7226 = vmatpush1.msra.mxu0 0.0
    %7227 = vmatprep.subr.mxu0 0.0
    %7228 = vmatpush1.msra.mxu0 0.0
    %7229 = vmatprep.subr.mxu0 0.0
    %7230 = vmatpush1.msra.mxu0 0.0
    %7231 = vmatprep.subr.mxu0 0.0
    %7232 = vmatpush1.msra.mxu0 0.0
    %7233 = vmatprep.subr.mxu0 0.0
    %7234 = vmatpush1.msra.mxu0 0.0
    %7235 = vmatprep.subr.mxu0 0.0
    %7236 = vmatpush1.msra.mxu0 0.0
    %7237 = vmatprep.subr.mxu0 0.0
    %7238 = vmatpush1.msra.mxu0 0.0
    %7239 = vmatprep.subr.mxu0 0.0
    %7240 = vmatpush1.msra.mxu0 0.0
    %7241 = vmatprep.subr.mxu0 0.0
    %7242 = vmatpush1.msra.mxu0 0.0
    %7243 = vmatprep.subr.mxu0 0.0
    %7244 = vmatpush1.msra.mxu0 0.0
    %7245 = vmatprep.subr.mxu0 0.0
    %7246 = vmatpush1.msra.mxu0 0.0
    %7247 = vmatprep.subr.mxu0 0.0
    %7248 = vmatpush1.msra.mxu0 0.0
    %7249 = vmatprep.subr.mxu0 0.0
    %7250 = vmatpush1.msra.mxu0 0.0
    %7251 = vmatprep.subr.mxu0 0.0
    %7252 = vmatpush1.msra.mxu0 0.0
    %7253 = vmatprep.subr.mxu0 0.0
    %7254 = vmatpush1.msra.mxu0 0.0
    %7255 = vmatprep.subr.mxu0 0.0
    %7256 = vmatpush1.msra.mxu0 0.0
    %7257 = vmatprep.subr.mxu0 0.0
    %7258 = vmatpush1.msra.mxu0 0.0
    %7259 = vmatprep.subr.mxu0 0.0
    %7260 = vmatpush1.msra.mxu0 0.0
    %7261 = vmatprep.subr.mxu0 0.0
    %7262 = vmatpush1.msra.mxu0 0.0
    %7263 = vmatprep.subr.mxu0 0.0
    %7264 = vmatpush1.msra.mxu0 0.0
    %7265 = vmatprep.subr.mxu0 0.0
    %7266 = vmatpush1.msra.mxu0 0.0
    %7267 = vmatprep.subr.mxu0 0.0
    %7268 = vmatpush1.msra.mxu0 0.0
    %7269 = vmatprep.subr.mxu0 0.0
    %7270 = vmatpush1.msra.mxu0 0.0
    %7271 = vmatprep.subr.mxu0 0.0
    %7272 = vmatpush1.msra.mxu0 0.0
    %7273 = vmatprep.mubr.f32.mxu0 0.0
    %7274 = vmatmul.mubr.f32.gmra.mrb[0].mxu0 %v7207
    %v7275 = vpop.f32.mrb[0].mxu0
    %v7276 = vadd.f32 0.0, %v7275
    %v7277 = vpop.f32.mrb[0].mxu0
    %7278 = vdwg.mxu0
    %v7280 = vsel %vm511, %v7203, 0
    %7282 = vmatprep.subr.mxu0 0.0
    %7283 = vmatpush1.msra.mxu0 %v166
    %7284 = vmatprep.subr.mxu0 0.0
    %7285 = vmatpush1.msra.mxu0 0.0
    %7286 = vmatprep.subr.mxu0 0.0
    %7287 = vmatpush1.msra.mxu0 0.0
    %7288 = vmatprep.subr.mxu0 0.0
    %7289 = vmatpush1.msra.mxu0 0.0
    %7290 = vmatprep.subr.mxu0 0.0
    %7291 = vmatpush1.msra.mxu0 0.0
    %7292 = vmatprep.subr.mxu0 0.0
    %7293 = vmatpush1.msra.mxu0 0.0
    %7294 = vmatprep.subr.mxu0 0.0
    %7295 = vmatpush1.msra.mxu0 0.0
    %7296 = vmatprep.subr.mxu0 0.0
    %7297 = vmatpush1.msra.mxu0 0.0
    %7298 = vmatprep.subr.mxu0 0.0
    %7299 = vmatpush1.msra.mxu0 0.0
    %7300 = vmatprep.subr.mxu0 0.0
    %7301 = vmatpush1.msra.mxu0 0.0
    %7302 = vmatprep.subr.mxu0 0.0
    %7303 = vmatpush1.msra.mxu0 0.0
    %7304 = vmatprep.subr.mxu0 0.0
    %7305 = vmatpush1.msra.mxu0 0.0
    %7306 = vmatprep.subr.mxu0 0.0
    %7307 = vmatpush1.msra.mxu0 0.0
    %7308 = vmatprep.subr.mxu0 0.0
    %7309 = vmatpush1.msra.mxu0 0.0
    %7310 = vmatprep.subr.mxu0 0.0
    %7311 = vmatpush1.msra.mxu0 0.0
    %7312 = vmatprep.subr.mxu0 0.0
    %7313 = vmatpush1.msra.mxu0 0.0
    %7314 = vmatprep.subr.mxu0 0.0
    %7315 = vmatpush1.msra.mxu0 0.0
    %7316 = vmatprep.subr.mxu0 0.0
    %7317 = vmatpush1.msra.mxu0 0.0
    %7318 = vmatprep.subr.mxu0 0.0
    %7319 = vmatpush1.msra.mxu0 0.0
    %7320 = vmatprep.subr.mxu0 0.0
    %7321 = vmatpush1.msra.mxu0 0.0
    %7322 = vmatprep.subr.mxu0 0.0
    %7323 = vmatpush1.msra.mxu0 0.0
    %7324 = vmatprep.subr.mxu0 0.0
    %7325 = vmatpush1.msra.mxu0 0.0
    %7326 = vmatprep.subr.mxu0 0.0
    %7327 = vmatpush1.msra.mxu0 0.0
    %7328 = vmatprep.subr.mxu0 0.0
    %7329 = vmatpush1.msra.mxu0 0.0
    %7330 = vmatprep.subr.mxu0 0.0
    %7331 = vmatpush1.msra.mxu0 0.0
    %7332 = vmatprep.subr.mxu0 0.0
    %7333 = vmatpush1.msra.mxu0 0.0
    %7334 = vmatprep.subr.mxu0 0.0
    %7335 = vmatpush1.msra.mxu0 0.0
    %7336 = vmatprep.subr.mxu0 0.0
    %7337 = vmatpush1.msra.mxu0 0.0
    %7338 = vmatprep.subr.mxu0 0.0
    %7339 = vmatpush1.msra.mxu0 0.0
    %7340 = vmatprep.subr.mxu0 0.0
    %7341 = vmatpush1.msra.mxu0 0.0
    %7342 = vmatprep.subr.mxu0 0.0
    %7343 = vmatpush1.msra.mxu0 0.0
    %7344 = vmatprep.subr.mxu0 0.0
    %7345 = vmatpush1.msra.mxu0 0.0
    %7346 = vmatprep.mubr.f32.mxu0 0.0
    %7347 = vmatmul.mubr.f32.gmra.mrb[0].mxu0 %v7280
    %v7348 = vpop.f32.mrb[0].mxu0
    %v7349 = vadd.f32 0.0, %v7348
    %v7350 = vpop.f32.mrb[0].mxu0
    %7351 = vdwg.mxu0
    %v7352 = vsel %vm185, -1000000.0, %v7276
    %v7353 = vsel %vm186, -1000000.0, %v7349
    %v7354 = vsel %vm1315, %v7039, -inf
    %7355 = vmax.xlane.f32.xlu0 %v7354
    %v7356 = vpop.xlane.xlu0 %7355
    %v7359 = vrot.slane %v7353, 7
    %v7360 = vsel %vm478, %v7359, %v7352
    %v7362 = vsel %vm1315, %v7360, -inf
    %7363 = vmax.xlane.f32.xlu0 %v7362
    %v7364 = vpop.xlane.xlu0 %7363
    %v7365 = vmax.f32 %v7356, %v7364
    %v7366 = vsub.f32 %v7039, %v7365
    %v7367 = vmul.f32 %v7366, 1.442695
    %v7368 = vpow.pop %v7367
    %v7370 = vrot.slane %v7365, 1
    %v7373 = vsub.f32 %v7352, %v7365
    %v7374 = vsub.f32 %v7353, %v7370
    %v7375 = vmul.f32 %v7373, 1.442695
    %v7376 = vpow.pop %v7375
    %v7377 = vmul.f32 %v7374, 1.442695
    %v7378 = vpow.pop %v7377
    %v7379 = vsel %vm1315, %v7368, 0.0
    %7380 = vadd.xlane.f32.xlu0 %v7379
    %v7381 = vpop.xlane.xlu0 %7380
    %v7384 = vrot.slane %v7378, 7
    %v7385 = vsel %vm478, %v7384, %v7376
    %v7387 = vsel %vm1315, %v7385, 0.0
    %7388 = vadd.xlane.f32.xlu0 %v7387
    %v7389 = vpop.xlane.xlu0 %7388
    %v7390 = vadd.f32 %v7381, %v7389
    %v7391 = vadd.f32 %v7368, %v7385
    %v7392 = vrcp.pop %v7390
    %v7393 = vmul.f32 %v7391, %v7392
    %v7394 = vadd.f32 %v7393, 1e-10
    %v7395 = vlog2.pop %v7394
    %v7396 = vmul.f32 %v7395, 0.6931472
    %v7397 = vsel %vm1315, %v7396, -inf
    %7398 = vmax.xlane.f32.xlu0 %v7397
    %v7399 = vpop.xlane.xlu0 %7398
    %vm7400 = vcmp.eq.f32.partialorder %v7396, %v7399
    %v7401 = vsel %vm7400, %v154, 40
    %v7402 = vsel %vm1315, %v7401, 2147483647
    %v7403 = vand.u32 %v7402, 65535
    %v7404 = vshra.s32 %v7402, 16
    %v7405 = vcvt.s32.f32 %v7403
    %v7406 = vcvt.s32.f32 %v7404
    %7407 = vmin.xlane.f32.xlu0 %v7406
    %v7408 = vpop.xlane.xlu0 %7407
    %vm7409 = vcmp.eq.f32.partialorder %v7406, %v7408
    %v7410 = vsel %vm7409, %v7405, inf
    %7411 = vmin.xlane.f32.xlu0 %v7410
    %v7412 = vpop.xlane.xlu0 %7411
    %v7413 = vcvt.f32.s32 %v7412
    %v7414 = vcvt.f32.s32 %v7408
    %v7415 = vshll.u32 %v7414, 16
    %v7416 = vadd.s32 %v7415, %v7413
    %v7419 = vunpack.c.l.s4 1966171168
    %v7420 = vunpack.c.0.s8 %v7419
    %v7421 = vlaneseq
    %v7422 = vshrl.u32 %v7421, 7
    %v7423 = vsub.s32 %v7420, %v7422
    %v7424 = vrot.slane %v7396, %v7423
    %v7425 = vcombine.high %v7424, %v7424
    %v7427 = vunpack.c.l.s4 1966171168
    %v7428 = vunpack.c.0.s8 %v7427
    %v7429 = vlaneseq
    %v7430 = vshrl.u32 %v7429, 7
    %v7431 = vsub.s32 %v7428, %v7430
    %v7432 = vrot.slane %v7424, %v7431
    %v7434 = vunpack.c.l.s4 1966171168
    %v7435 = vunpack.c.0.s8 %v7434
    %v7436 = vlaneseq
    %v7437 = vshrl.u32 %v7436, 7
    %v7438 = vsub.s32 %v7435, %v7437
    %v7439 = vrot.slane %v7425, %v7438
    %7442 = vst.msk [vmem:[%s10 + $0x5] sm:$0x1] %vm216, %v7432
    %7443 = vst.msk [vmem:[%s10 + $0xd] sm:$0x1] %vm216, %v7439
    %v7444 = vlaneseq
    %v7445 = vshrl.u32 %v7444, 7
    %v7446 = vsub.s32 0, %v7445
    %v7447 = vrot.slane %v7416, %v7446
    %v7448 = vlaneseq
    %v7449 = vshrl.u32 %v7448, 7
    %v7450 = vsub.s32 1, %v7449
    %v7451 = vrot.slane %v7416, %v7450
    %7452 = vst.msk [vmem:[%s11 + $0x5] sm:$0x1] %vm219, %v7447
    %7453 = vst.msk [vmem:[%s11 + $0xd] sm:$0x1] %vm219, %v7451
    // Predicated region
    $region70: #{copynet_decode.1} parent=1 // pred_check
      _
    $region71: #{copynet_decode.1} parent=1 // pred_check_branch
      %7455 = sbr.rel (0) target = $region73
    $region72: #{copynet_decode.1} parent=1 // pred_region
      _
    $region73: #{copynet_decode.1} parent=1 // pred_fallthru
      _
    // Predicated region
    $region74: #{copynet_decode.1} parent=1 // pred_check
      _
    $region75: #{copynet_decode.1} parent=1 // pred_check_branch
      %7457 = sbr.rel (0) target = $region77
    $region76: #{copynet_decode.1} parent=1 // pred_region
      _
    $region77: #{copynet_decode.1} parent=1 // pred_fallthru
      _
    // Predicated region
    $region78: #{copynet_decode.1} parent=1 // pred_check
      _
    $region79: #{copynet_decode.1} parent=1 // pred_check_branch
      %7459 = sbr.rel (0) target = $region81
    $region80: #{copynet_decode.1} parent=1 // pred_region
      _
    $region81: #{copynet_decode.1} parent=1 // pred_fallthru
      _
    // Predicated region
    $region82: #{copynet_decode.1} parent=1 // pred_check
      _
    $region83: #{copynet_decode.1} parent=1 // pred_check_branch
      %7461 = sbr.rel (0) target = $region85
    $region84: #{copynet_decode.1} parent=1 // pred_region
      _
    $region85: #{copynet_decode.1} parent=1 // pred_fallthru
      _
    %7462 = vsyncpa [#allocation3], 1
    %7463 = vsyncpa [#allocation5], 1
    %7464 = vsyncpa [#allocation8], 1
    %7465 = vsyncpa [#allocation11], 1

</llo_original>
